<compile_context>
chip_gen: v7x
topology: tpu7x:2x2x1
jax: 0.10.0
libtpu: 0.0.40
codegen_flags: <defaults>
</compile_context>

<pallas_src>
import jax
import jax.numpy as jnp
from jax.experimental import pallas as pl
from jax.experimental.pallas import tpu as pltpu

_PAD = 8  # spare scratch rows before/after the halo'd window (absorbs the +-1 kw shifts)


def _round_up(x, m):
    return (x + m - 1) // m * m


def _vmem_budget_and_limit():
    """Generation-aware VMEM sizing: large tiles on 128-MiB parts (v5e/v6e),
    conservative budget on 64-MiB parts (v7x)."""
    try:
        cap = pltpu.get_tpu_info().vmem_capacity_bytes
    except Exception:
        cap = 64 * 1024 * 1024
    if cap >= 128 * 1024 * 1024:
        return 64 * 1024 * 1024, 100 * 1024 * 1024
    return 26 * 1024 * 1024, 48 * 1024 * 1024


def _chunk_rows(tile_h, W, Cp_out):
    """Flat rows per register-resident accumulator chunk.  Multiple of W so the
    column-edge masks are chunk-invariant; targets a <=128 KiB f32 accumulator
    (128-256 rows at Cp_out=128)."""
    gh = max(1, (128 * 1024) // (W * Cp_out * 4))
    gh = min(gh, tile_h)
    while tile_h % gh:
        gh -= 1
    return gh * W


def _conv_footprint(tile_h, W, Cp_in, Cp_out):
    tw = tile_h * W
    b = 2 * tw * Cp_in * 2                                 # main input block (bf16, 2-buf)
    b += 2 * 2 * W * Cp_in * 2                             # halo row blocks (2-buf)
    b += 9 * Cp_in * Cp_out * 2                            # weights: single VMEM copy
    b += 2 * Cp_in * 4                                     # input-BN scale/shift: single copy
    b += 2 * tw * Cp_out * 2                               # y output block (bf16, 2-buf)
    b += 2 * 2 * Cp_out * 4                                # stats output block
    b += (2 * _PAD + (tile_h + 2) * W) * Cp_in * 2         # window scratch
    b += 2 * _chunk_rows(tile_h, W, Cp_out) * Cp_out * 4   # chunk accumulator headroom
    return b


def _bn_footprint(tile_h, W, Cp, Cout):
    tw = tile_h * W
    return 2 * tw * Cp * 2 + 2 * tw * Cout * 4 + 2 * Cp * 4


def _choose_tile_h(H, N, budget, footprint_fn):
    """Largest divisor of H fitting the VMEM budget; prefer >=2 (and even) total grid
    steps so both v7x TensorCores get work."""
    fitting = [th for th in range(1, H + 1) if H % th == 0 and footprint_fn(th) <= budget]
    if not fitting:
        return 1
    even = [th for th in fitting if N * (H // th) >= 2 and (N * (H // th)) % 2 == 0]
    ge2 = [th for th in fitting if N * (H // th) >= 2]
    pool = even or ge2 or fitting
    return max(pool)


# ---------------------------------------------------------------------------
# Pallas kernels
# ---------------------------------------------------------------------------

def _make_conv_kernel(tile_h, W, Cp_in, Cp_out, apply_input_bn_relu, chunk_rows):
    """Fused (input BN+ReLU) -> 3x3 conv -> (partial batch stats) kernel."""
    TW = tile_h * W
    n_chunks = TW // chunk_rows

    def kernel(xm_ref, xt_ref, xb_ref, w_ref, inbn_ref, y_ref, st_ref, win_ref):
        i = pl.program_id(1)
        nt = pl.num_programs(1)

        def prep(v):                                   # (rows, Cp_in) -> bf16
            if not apply_input_bn_relu:
                return v                               # layer 0: already bf16, no f32 trip
            v = jnp.maximum(v.astype(jnp.float32) * inbn_ref[0:1, :] + inbn_ref[1:2, :], 0.0)
            return v.astype(jnp.bfloat16)

        # Assemble the (tile_h + 2) * W flat-row window (row-major h*W + w order):
        # [top halo row | tile rows | bottom halo row], halo zeroed at image edges.
        win_ref[_PAD + W:_PAD + W + TW, :] = prep(xm_ref[0])

        zrow = jnp.zeros((W, Cp_in), jnp.bfloat16)

        @pl.when(i == 0)
        def _():
            win_ref[_PAD:_PAD + W, :] = zrow

        @pl.when(i > 0)
        def _():
            win_ref[_PAD:_PAD + W, :] = prep(xt_ref[0])

        @pl.when(i == nt - 1)
        def _():
            win_ref[_PAD + W + TW:_PAD + 2 * W + TW, :] = zrow

        @pl.when(i < nt - 1)
        def _():
            win_ref[_PAD + W + TW:_PAD + 2 * W + TW, :] = prep(xb_ref[0])

        # Column-edge masks: in the flat layout the kw=0 / kw=2 taps wrap across row
        # boundaries; masking those rows reproduces the conv's zero padding in W.
        # NOTE: the (kh=0, kw=0) and (kh=2, kw=2) taps read one row of *uninitialized*
        # scratch (rows _PAD-1 and _PAD+2W+TW); those rows only ever feed masked-out
        # output columns, so the jnp.where below must stay ahead of the dot.
        # (These selects are VPU filler under MXU slack -- review #10.)
        col = jax.lax.broadcasted_iota(jnp.int32, (chunk_rows, 1), 0) % W
        left_ok = col != 0           # valid output positions for kw == 0 taps
        right_ok = col != W - 1      # valid output positions for kw == 2 taps

        def chunk_body(base, carry):
            s1, s2 = carry
            # 9 back-to-back MXU dots into one register/MRB-resident accumulator,
            # a single bf16 store per chunk (no full-tile f32 VMEM round trip).
            acc = jnp.zeros((chunk_rows, Cp_out), jnp.float32)
            for kh in range(3):
                for kw in range(3):
                    start = _PAD + kh * W + (kw - 1) + base
                    a = win_ref[pl.ds(start, chunk_rows), :]
                    if kw == 0:
                        a = jnp.where(left_ok, a, jnp.zeros_like(a))
                    elif kw == 2:
                        a = jnp.where(right_ok, a, jnp.zeros_like(a))
                    acc = acc + jnp.dot(a, w_ref[kh * 3 + kw],
                                        preferred_element_type=jnp.float32)
            y_ref[0, pl.ds(base, chunk_rows), :] = acc.astype(y_ref.dtype)
            return (s1 + jnp.sum(acc, axis=0, keepdims=True),
                    s2 + jnp.sum(acc * acc, axis=0, keepdims=True))

        zero_stat = jnp.zeros((1, Cp_out), jnp.float32)
        if n_chunks <= 8:
            carry = (zero_stat, zero_stat)
            for c in range(n_chunks):
                carry = chunk_body(c * chunk_rows, carry)
            s1, s2 = carry
        else:
            def body(c, carry):
                return chunk_body(pl.multiple_of(c * chunk_rows, 8), carry)
            s1, s2 = jax.lax.fori_loop(0, n_chunks, body, (zero_stat, zero_stat))

        # Single (2, Cp_out) store instead of two 1-row partial stores.
        st_ref[0] = jnp.concatenate([s1, s2], axis=0)

    return kernel


def _make_bn_relu_kernel(Cp, Cout):
    def kernel(y_ref, inbn_ref, o_ref):
        v = jnp.maximum(y_ref[0].astype(jnp.float32) * inbn_ref[0:1, :] + inbn_ref[1:2, :],
                        0.0)
        o_ref[0] = v[:, :Cout] if Cout < Cp else v      # fused channel de-pad
    return kernel


# ---------------------------------------------------------------------------
# pallas_call wrappers
# ---------------------------------------------------------------------------

def conv3x3_bn_stats(act, wk, inbn, *, N, H, W, apply_input_bn_relu, budget, vmem_limit):
    """act: (N, H*W, Cp_in) bf16; wk: (9, Cp_in, Cp_out) bf16; inbn: (2, Cp_in) f32.

    Returns (y, stats): y (N, H*W, Cp_out) bf16 pre-BN conv output,
    stats (N*nt, 2, Cp_out) f32 per-tile [sum, sum-of-squares]."""
    _, HW, Cp_in = act.shape
    _, _, Cp_out = wk.shape
    assert HW == H * W
    assert W % 8 == 0, "supported regime: W % 8 == 0"
    # TODO(synk): generalize to W % 8 != 0 (would need padded-width blocks).

    tile_h = _choose_tile_h(H, N, budget, lambda th: _conv_footprint(th, W, Cp_in, Cp_out))
    nt = H // tile_h
    TW = tile_h * W
    chunk_rows = _chunk_rows(tile_h, W, Cp_out)
    kernel = _make_conv_kernel(tile_h, W, Cp_in, Cp_out, apply_input_bn_relu, chunk_rows)
    # TODO(synk): for v6e/v7x 256-deep MXUs, concatenate the 3 kh taps along K
    # (win layout (rows, 3*Cp_in)) to raise MXU utilization on 128-channel layers.

    y, stats = pl.pallas_call(
        kernel,
        out_shape=(jax.ShapeDtypeStruct((N, HW, Cp_out), jnp.bfloat16),
                   jax.ShapeDtypeStruct((N * nt, 2, Cp_out), jnp.float32)),
        grid_spec=pltpu.PrefetchScalarGridSpec(
            num_scalar_prefetch=0,
            grid=(N, nt),
            in_specs=[
                # main row-tile of the activation
                pl.BlockSpec((1, TW, Cp_in), lambda n, i: (n, i, 0)),
                # 1-row halo above (clamped; zeroed in-kernel at the top edge)
                pl.BlockSpec((1, W, Cp_in),
                             lambda n, i: (n, jnp.maximum(i * tile_h - 1, 0), 0)),
                # 1-row halo below (clamped; zeroed in-kernel at the bottom edge)
                pl.BlockSpec((1, W, Cp_in),
                             lambda n, i: (n, jnp.minimum((i + 1) * tile_h, H - 1), 0)),
                # grid-invariant operands: whole-array VMEM, single copy (no 2x buffering)
                pl.BlockSpec(memory_space=pltpu.MemorySpace.VMEM),
                pl.BlockSpec(memory_space=pltpu.MemorySpace.VMEM),
            ],
            out_specs=(
                pl.BlockSpec((1, TW, Cp_out), lambda n, i: (n, i, 0)),
                pl.BlockSpec((1, 2, Cp_out), lambda n, i: (n * nt + i, 0, 0)),
            ),
            scratch_shapes=[
                pltpu.VMEM((2 * _PAD + (tile_h + 2) * W, Cp_in), jnp.bfloat16)],
        ),
        compiler_params=pltpu.CompilerParams(
            dimension_semantics=("parallel", "parallel"),
            vmem_limit_bytes=vmem_limit),
    )(act, act, act, wk, inbn)
    return y, stats


def bn_relu(act, inbn, Cout, *, N, H, W, budget, vmem_limit):
    """Final normalize + ReLU with fused channel de-pad:
    act (N, H*W, Cp) bf16 -> (N, H*W, Cout) f32."""
    _, HW, Cp = act.shape
    tile_h = _choose_tile_h(H, N, budget, lambda th: _bn_footprint(th, W, Cp, Cout))
    nt = H // tile_h
    TW = tile_h * W
    return pl.pallas_call(
        _make_bn_relu_kernel(Cp, Cout),
        out_shape=jax.ShapeDtypeStruct((N, HW, Cout), jnp.float32),
        grid_spec=pltpu.PrefetchScalarGridSpec(
            num_scalar_prefetch=0,
            grid=(N, nt),
            in_specs=[pl.BlockSpec((1, TW, Cp), lambda n, i: (n, i, 0)),
                      pl.BlockSpec(memory_space=pltpu.MemorySpace.VMEM)],
            out_specs=pl.BlockSpec((1, TW, Cout), lambda n, i: (n, i, 0)),
        ),
        compiler_params=pltpu.CompilerParams(
            dimension_semantics=("parallel", "parallel"),
            vmem_limit_bytes=vmem_limit),
    )(act, inbn)


# ---------------------------------------------------------------------------
# Parameter handling + UpBlock forward (glue in plain JAX)
# ---------------------------------------------------------------------------

def init_upblock_params(key, in_channels, out_channels, nb_conv):
    """Deterministic synthetic parameters (PyTorch conv shapes: (Cout, Cin, 3, 3))."""
    params = []
    cin = in_channels
    for i in range(nb_conv):
        kw_key, kb_key = jax.random.split(jax.random.fold_in(key, i))
        fan_in = cin * 9
        bound = 1.0 / jnp.sqrt(fan_in)
        w = jax.random.uniform(kw_key, (out_channels, cin, 3, 3),
                               jnp.float32, -bound, bound)
        b = jax.random.uniform(kb_key, (out_channels,), jnp.float32, -bound, bound)
        gamma = jnp.ones((out_channels,), jnp.float32)
        beta = jnp.zeros((out_channels,), jnp.float32)
        params.append((w, b, gamma, beta))
        cin = out_channels
    return params


def upblock_forward(x_nchw, skip_nchw, params, eps=1e-5):
    """UpBlock.forward: body(cat([skip_x, Upsample2x(x)], dim=1)), training-mode BN."""
    N, Cx, hh, ww = x_nchw.shape
    Ns, Cs, H, W = skip_nchw.shape
    assert Ns == N and H == 2 * hh and W == 2 * ww

    budget, vmem_limit = _vmem_budget_and_limit()

    # NHWC + bf16 *before* concat/pad so the single staged input tensor is written once
    # in bf16, already flattened for the kernel's (N, H*W, C) layout.
    x = jnp.transpose(x_nchw, (0, 2, 3, 1)).astype(jnp.bfloat16)
    skip = jnp.transpose(skip_nchw, (0, 2, 3, 1)).astype(jnp.bfloat16)
    up = jnp.repeat(jnp.repeat(x, 2, axis=1), 2, axis=2)     # nn.Upsample(2, 'nearest')
    h0 = jnp.concatenate([skip, up], axis=-1)                 # cat([skip_x, up(x)], dim=1)

    Cin = Cs + Cx
    Cp_in = _round_up(Cin, 128)
    act = jnp.pad(h0.reshape(N, H * W, Cin), ((0, 0), (0, 0), (0, Cp_in - Cin)))
    # TODO(synk): fuse upsample+concat+channel-pad into the first conv's window assembly
    # (separate skip / x inputs, layer-0 weight split along K) so the staged activation
    # never hits HBM at all.

    M = N * H * W
    inbn = None
    for li, (wt, _b, gamma, beta) in enumerate(params):
        Cout, Cin_l = wt.shape[0], wt.shape[1]
        Cp_in = act.shape[-1]
        Cp_out = _round_up(Cout, 128)

        # (Cout, Cin, 3, 3) -> (9, Cin, Cout) in (kh, kw) tap order; zero-pad channels.
        wk = jnp.transpose(wt, (2, 3, 1, 0)).reshape(9, Cin_l, Cout)
        wk = jnp.pad(wk, ((0, 0), (0, Cp_in - Cin_l), (0, Cp_out - Cout)))
        wk = wk.astype(jnp.bfloat16)
        # Conv bias `_b` is intentionally unused: training-mode BatchNorm subtracts the
        # batch mean, which cancels a per-channel bias exactly (eval-mode BN would differ).

        if inbn is None:
            inbn_arg = jnp.zeros((2, Cp_in), jnp.float32)
            apply_in = False
        else:
            inbn_arg = inbn
            apply_in = True

        y, stats = conv3x3_bn_stats(act, wk, inbn_arg, N=N, H=H, W=W,
                                    apply_input_bn_relu=apply_in,
                                    budget=budget, vmem_limit=vmem_limit)

        # BatchNorm2d training-mode batch statistics (biased variance) from the per-tile
        # partial sums emitted by the conv kernel.  (Stats come from the f32 accumulator;
        # the next layer normalizes the bf16-rounded y -> tiny, documented mismatch.)
        s1 = jnp.sum(stats[:, 0, :], axis=0)
        s2 = jnp.sum(stats[:, 1, :], axis=0)
        mean = s1 / M
        var = jnp.maximum(s2 / M - mean * mean, 0.0)
        gamma_p = jnp.pad(gamma, (0, Cp_out - Cout), constant_values=1.0)
        beta_p = jnp.pad(beta, (0, Cp_out - Cout))
        scale = gamma_p / jnp.sqrt(var + eps)
        shift = beta_p - mean * scale
        inbn = jnp.stack([scale, shift], axis=0)              # (2, Cp_out) f32

        act = y                                               # (N, H*W, Cp_out) bf16

    Cout_last = params[-1][0].shape[0]
    out = bn_relu(act, inbn, Cout_last, N=N, H=H, W=W,
                  budget=budget, vmem_limit=vmem_limit)       # (N, H*W, Cout_last) f32
    out = out.reshape(N, H, W, Cout_last)
    return jnp.transpose(out, (0, 3, 1, 2))                   # NHWC -> NCHW


# ---------------------------------------------------------------------------
if __name__ == "__main__":
    key = jax.random.PRNGKey(0)
    kx, ks, kp = jax.random.split(key, 3)

    # x at half resolution, skip at full resolution (UNet decoder convention)
    x = jax.random.normal(kx, (2, 4, 8, 8), jnp.float32)          # NCHW
    skip_x = jax.random.normal(ks, (2, 4, 16, 16), jnp.float32)   # NCHW

    in_channels = 4 + 4     # skip channels + upsampled channels
    out_channels = 4
    nb_conv = 2
    params = init_upblock_params(kp, in_channels, out_channels, nb_conv)

    out = jax.jit(upblock_forward)(x, skip_x, params)
    jax.block_until_ready(out)
    assert out.shape == (2, out_channels, 16, 16)
    assert bool(jnp.all(jnp.isfinite(out)))
    print("KERNEL_OK")
</pallas_src>

<mosaic_0001>
module attributes {stable_mosaic.version = 11 : i64} {
  func.func @kernel(%arg0: i32, %arg1: i32, %arg2: memref<1x256x128xbf16, #tpu.memory_space<vmem>>, %arg3: memref<1x16x128xbf16, #tpu.memory_space<vmem>>, %arg4: memref<1x16x128xbf16, #tpu.memory_space<vmem>>, %arg5: memref<9x128x128xbf16, #tpu.memory_space<vmem>>, %arg6: memref<2x128xf32, #tpu.memory_space<vmem>>, %arg7: memref<1x256x128xbf16, #tpu.memory_space<vmem>>, %arg8: memref<1x2x128xf32, #tpu.memory_space<vmem>>, %arg9: memref<304x128xbf16, #tpu.memory_space<vmem>>) attributes {dimension_semantics = [#tpu.dimension_semantics<parallel>, #tpu.dimension_semantics<parallel>], iteration_bounds = array<i64: 2, 1>, scalar_prefetch = 0 : i64, scratch_operands = 1 : i64, tpu.core_type = #tpu.core_type<tc>, window_params = [{transform_indices = @transform_0, window_bounds = array<i64: 1, 256, 128>}, {transform_indices = @transform_1, window_bounds = array<i64: 1, 16, 128>}, {transform_indices = @transform_2, window_bounds = array<i64: 1, 16, 128>}, {pipeline_mode = #tpu.pipeline_mode<synchronous>, transform_indices = @transform_3, window_bounds = array<i64: 9, 128, 128>}, {pipeline_mode = #tpu.pipeline_mode<synchronous>, transform_indices = @transform_4, window_bounds = array<i64: 2, 128>}, {transform_indices = @transform_5, window_bounds = array<i64: 1, 256, 128>}, {transform_indices = @transform_6, window_bounds = array<i64: 1, 2, 128>}]} {
    %c0 = arith.constant 0 : index
    %c0_0 = arith.constant 0 : index
    %c0_1 = arith.constant 0 : index
    %0 = vector.load %arg2[%c0, %c0_0, %c0_1] : memref<1x256x128xbf16, #tpu.memory_space<vmem>>, vector<1x256x128xbf16>
    %1 = vector.shape_cast %0 : vector<1x256x128xbf16> to vector<256x128xbf16>
    %c24 = arith.constant 24 : index
    %c0_2 = arith.constant 0 : index
    %2 = vector.load %arg9[%c24, %c0_2] : memref<304x128xbf16, #tpu.memory_space<vmem>>, vector<256x128xbf16>
    tpu.vector_store %arg9[%c24, %c0_2], %1 {strides = array<i32>} : memref<304x128xbf16, #tpu.memory_space<vmem>>, vector<256x128xbf16>,
    %cst = arith.constant 0.000000e+00 : bf16
    %3 = vector.broadcast %cst : bf16 to vector<16x128xbf16>
    %c0_i32 = arith.constant 0 : i32
    %4 = arith.cmpi eq, %arg1, %c0_i32 : i32
    %5 = arith.extui %4 : i1 to i32
    %c0_i32_3 = arith.constant 0 : i32
    %6 = arith.cmpi ne, %5, %c0_i32_3 : i32
    scf.if %6 {
      %c8_71 = arith.constant 8 : index
      %c0_72 = arith.constant 0 : index
      %123 = vector.load %arg9[%c8_71, %c0_72] : memref<304x128xbf16, #tpu.memory_space<vmem>>, vector<16x128xbf16>
      tpu.vector_store %arg9[%c8_71, %c0_72], %3 {strides = array<i32>} : memref<304x128xbf16, #tpu.memory_space<vmem>>, vector<16x128xbf16>,
    } else {
    }
    %c0_i32_4 = arith.constant 0 : i32
    %7 = arith.cmpi sgt, %arg1, %c0_i32_4 : i32
    %8 = arith.extui %7 : i1 to i32
    %c0_i32_5 = arith.constant 0 : i32
    %9 = arith.cmpi ne, %8, %c0_i32_5 : i32
    scf.if %9 {
      %c0_71 = arith.constant 0 : index
      %c0_72 = arith.constant 0 : index
      %c0_73 = arith.constant 0 : index
      %123 = vector.load %arg3[%c0_71, %c0_72, %c0_73] : memref<1x16x128xbf16, #tpu.memory_space<vmem>>, vector<1x16x128xbf16>
      %124 = vector.shape_cast %123 : vector<1x16x128xbf16> to vector<16x128xbf16>
      %c8_74 = arith.constant 8 : index
      %c0_75 = arith.constant 0 : index
      %125 = vector.load %arg9[%c8_74, %c0_75] : memref<304x128xbf16, #tpu.memory_space<vmem>>, vector<16x128xbf16>
      tpu.vector_store %arg9[%c8_74, %c0_75], %124 {strides = array<i32>} : memref<304x128xbf16, #tpu.memory_space<vmem>>, vector<16x128xbf16>,
    } else {
    }
    %c0_i32_6 = arith.constant 0 : i32
    %10 = arith.cmpi eq, %arg1, %c0_i32_6 : i32
    %11 = arith.extui %10 : i1 to i32
    %c0_i32_7 = arith.constant 0 : i32
    %12 = arith.cmpi ne, %11, %c0_i32_7 : i32
    scf.if %12 {
      %c280 = arith.constant 280 : index
      %c0_71 = arith.constant 0 : index
      %123 = vector.load %arg9[%c280, %c0_71] : memref<304x128xbf16, #tpu.memory_space<vmem>>, vector<16x128xbf16>
      tpu.vector_store %arg9[%c280, %c0_71], %3 {strides = array<i32>} : memref<304x128xbf16, #tpu.memory_space<vmem>>, vector<16x128xbf16>,
    } else {
    }
    %c0_i32_8 = arith.constant 0 : i32
    %13 = arith.cmpi slt, %arg1, %c0_i32_8 : i32
    %14 = arith.extui %13 : i1 to i32
    %c0_i32_9 = arith.constant 0 : i32
    %15 = arith.cmpi ne, %14, %c0_i32_9 : i32
    scf.if %15 {
      %c0_71 = arith.constant 0 : index
      %c0_72 = arith.constant 0 : index
      %c0_73 = arith.constant 0 : index
      %123 = vector.load %arg4[%c0_71, %c0_72, %c0_73] : memref<1x16x128xbf16, #tpu.memory_space<vmem>>, vector<1x16x128xbf16>
      %124 = vector.shape_cast %123 : vector<1x16x128xbf16> to vector<16x128xbf16>
      %c280 = arith.constant 280 : index
      %c0_74 = arith.constant 0 : index
      %125 = vector.load %arg9[%c280, %c0_74] : memref<304x128xbf16, #tpu.memory_space<vmem>>, vector<16x128xbf16>
      tpu.vector_store %arg9[%c280, %c0_74], %124 {strides = array<i32>} : memref<304x128xbf16, #tpu.memory_space<vmem>>, vector<16x128xbf16>,
    } else {
    }
    %16 = tpu.iota {dimensions = array<i32: 0>} : vector<256x1xi32>
    %c16_i32 = arith.constant 16 : i32
    %c0_i32_10 = arith.constant 0 : i32
    %17 = arith.cmpi eq, %c16_i32, %c0_i32_10 : i32
    %c1_i32 = arith.constant 1 : i32
    %18 = arith.select %17, %c1_i32, %c16_i32 : i32
    %19 = vector.broadcast %18 : i32 to vector<256x1xi32>
    %20 = arith.remsi %16, %19 : vector<256x1xi32>
    %c0_i32_11 = arith.constant 0 : i32
    %21 = vector.broadcast %c0_i32_11 : i32 to vector<256x1xi32>
    %22 = arith.cmpi ne, %20, %21 : vector<256x1xi32>
    %c0_i32_12 = arith.constant 0 : i32
    %23 = vector.broadcast %c0_i32_12 : i32 to vector<256x1xi32>
    %24 = arith.cmpi slt, %20, %23 : vector<256x1xi32>
    %c0_i32_13 = arith.constant 0 : i32
    %25 = arith.cmpi slt, %18, %c0_i32_13 : i32
    %26 = vector.broadcast %25 : i1 to vector<256x1xi1>
    %27 = vector.broadcast %26 : vector<256x1xi1> to vector<256x1xi1>
    %28 = arith.xori %24, %27 : vector<256x1xi1>
    %29 = arith.andi %28, %22 : vector<256x1xi1>
    %30 = vector.broadcast %18 : i32 to vector<256x1xi32>
    %31 = arith.addi %20, %30 : vector<256x1xi32>
    %32 = arith.select %29, %31, %20 : vector<256x1xi1>, vector<256x1xi32>
    %c0_i32_14 = arith.constant 0 : i32
    %33 = vector.broadcast %c0_i32_14 : i32 to vector<256x1xi32>
    %34 = arith.cmpi ne, %32, %33 : vector<256x1xi32>
    %c15_i32 = arith.constant 15 : i32
    %35 = vector.broadcast %c15_i32 : i32 to vector<256x1xi32>
    %36 = arith.cmpi ne, %32, %35 : vector<256x1xi32>
    %cst_15 = arith.constant 0.000000e+00 : f32
    %37 = vector.broadcast %cst_15 : f32 to vector<1x128xf32>
    %cst_16 = arith.constant 0.000000e+00 : f32
    %38 = vector.broadcast %cst_16 : f32 to vector<256x128xf32>
    %c7 = arith.constant 7 : index
    %c0_17 = arith.constant 0 : index
    %39 = vector.load %arg9[%c7, %c0_17] : memref<304x128xbf16, #tpu.memory_space<vmem>>, vector<256x128xbf16>
    %cst_18 = arith.constant 0.000000e+00 : bf16
    %40 = vector.broadcast %cst_18 : bf16 to vector<256x128xbf16>
    %41 = vector.shape_cast %34 : vector<256x1xi1> to vector<256x1xi1>
    %42 = vector.broadcast %41 : vector<256x1xi1> to vector<256x128xi1>
    %43 = arith.select %42, %39, %40 : vector<256x128xi1>, vector<256x128xbf16>
    %c0_19 = arith.constant 0 : index
    %c0_20 = arith.constant 0 : index
    %c0_21 = arith.constant 0 : index
    %44 = vector.load %arg5[%c0_19, %c0_20, %c0_21] : memref<9x128x128xbf16, #tpu.memory_space<vmem>>, vector<1x128x128xbf16>
    %45 = vector.shape_cast %44 : vector<1x128x128xbf16> to vector<128x128xbf16>
    %cst_22 = arith.constant dense<0.000000e+00> : vector<256x128xf32>
    %46 = tpu.matmul %43, %45, %cst_22 {dimension_numbers = #tpu.dot_dimension_numbers<[1], [0], [0], [1], [0, 0, 1, 1], [], []>} : vector<256x128xbf16>, vector<128x128xbf16>, vector<256x128xf32> -> vector<256x128xf32>
    %47 = arith.addf %38, %46 : vector<256x128xf32>
    %c8 = arith.constant 8 : index
    %c0_23 = arith.constant 0 : index
    %48 = vector.load %arg9[%c8, %c0_23] : memref<304x128xbf16, #tpu.memory_space<vmem>>, vector<256x128xbf16>
    %c1 = arith.constant 1 : index
    %c0_24 = arith.constant 0 : index
    %c0_25 = arith.constant 0 : index
    %49 = vector.load %arg5[%c1, %c0_24, %c0_25] : memref<9x128x128xbf16, #tpu.memory_space<vmem>>, vector<1x128x128xbf16>
    %50 = vector.shape_cast %49 : vector<1x128x128xbf16> to vector<128x128xbf16>
    %cst_26 = arith.constant dense<0.000000e+00> : vector<256x128xf32>
    %51 = tpu.matmul %48, %50, %cst_26 {dimension_numbers = #tpu.dot_dimension_numbers<[1], [0], [0], [1], [0, 0, 1, 1], [], []>} : vector<256x128xbf16>, vector<128x128xbf16>, vector<256x128xf32> -> vector<256x128xf32>
    %52 = arith.addf %47, %51 : vector<256x128xf32>
    %c9 = arith.constant 9 : index
    %c0_27 = arith.constant 0 : index
    %53 = vector.load %arg9[%c9, %c0_27] : memref<304x128xbf16, #tpu.memory_space<vmem>>, vector<256x128xbf16>
    %cst_28 = arith.constant 0.000000e+00 : bf16
    %54 = vector.broadcast %cst_28 : bf16 to vector<256x128xbf16>
    %55 = vector.shape_cast %36 : vector<256x1xi1> to vector<256x1xi1>
    %56 = vector.broadcast %55 : vector<256x1xi1> to vector<256x128xi1>
    %57 = arith.select %56, %53, %54 : vector<256x128xi1>, vector<256x128xbf16>
    %c2 = arith.constant 2 : index
    %c0_29 = arith.constant 0 : index
    %c0_30 = arith.constant 0 : index
    %58 = vector.load %arg5[%c2, %c0_29, %c0_30] : memref<9x128x128xbf16, #tpu.memory_space<vmem>>, vector<1x128x128xbf16>
    %59 = vector.shape_cast %58 : vector<1x128x128xbf16> to vector<128x128xbf16>
    %cst_31 = arith.constant dense<0.000000e+00> : vector<256x128xf32>
    %60 = tpu.matmul %57, %59, %cst_31 {dimension_numbers = #tpu.dot_dimension_numbers<[1], [0], [0], [1], [0, 0, 1, 1], [], []>} : vector<256x128xbf16>, vector<128x128xbf16>, vector<256x128xf32> -> vector<256x128xf32>
    %61 = arith.addf %52, %60 : vector<256x128xf32>
    %c23 = arith.constant 23 : index
    %c0_32 = arith.constant 0 : index
    %62 = vector.load %arg9[%c23, %c0_32] : memref<304x128xbf16, #tpu.memory_space<vmem>>, vector<256x128xbf16>
    %cst_33 = arith.constant 0.000000e+00 : bf16
    %63 = vector.broadcast %cst_33 : bf16 to vector<256x128xbf16>
    %64 = vector.shape_cast %34 : vector<256x1xi1> to vector<256x1xi1>
    %65 = vector.broadcast %64 : vector<256x1xi1> to vector<256x128xi1>
    %66 = arith.select %65, %62, %63 : vector<256x128xi1>, vector<256x128xbf16>
    %c3 = arith.constant 3 : index
    %c0_34 = arith.constant 0 : index
    %c0_35 = arith.constant 0 : index
    %67 = vector.load %arg5[%c3, %c0_34, %c0_35] : memref<9x128x128xbf16, #tpu.memory_space<vmem>>, vector<1x128x128xbf16>
    %68 = vector.shape_cast %67 : vector<1x128x128xbf16> to vector<128x128xbf16>
    %cst_36 = arith.constant dense<0.000000e+00> : vector<256x128xf32>
    %69 = tpu.matmul %66, %68, %cst_36 {dimension_numbers = #tpu.dot_dimension_numbers<[1], [0], [0], [1], [0, 0, 1, 1], [], []>} : vector<256x128xbf16>, vector<128x128xbf16>, vector<256x128xf32> -> vector<256x128xf32>
    %70 = arith.addf %61, %69 : vector<256x128xf32>
    %c24_37 = arith.constant 24 : index
    %c0_38 = arith.constant 0 : index
    %71 = vector.load %arg9[%c24_37, %c0_38] : memref<304x128xbf16, #tpu.memory_space<vmem>>, vector<256x128xbf16>
    %c4 = arith.constant 4 : index
    %c0_39 = arith.constant 0 : index
    %c0_40 = arith.constant 0 : index
    %72 = vector.load %arg5[%c4, %c0_39, %c0_40] : memref<9x128x128xbf16, #tpu.memory_space<vmem>>, vector<1x128x128xbf16>
    %73 = vector.shape_cast %72 : vector<1x128x128xbf16> to vector<128x128xbf16>
    %cst_41 = arith.constant dense<0.000000e+00> : vector<256x128xf32>
    %74 = tpu.matmul %71, %73, %cst_41 {dimension_numbers = #tpu.dot_dimension_numbers<[1], [0], [0], [1], [0, 0, 1, 1], [], []>} : vector<256x128xbf16>, vector<128x128xbf16>, vector<256x128xf32> -> vector<256x128xf32>
    %75 = arith.addf %70, %74 : vector<256x128xf32>
    %c25 = arith.constant 25 : index
    %c0_42 = arith.constant 0 : index
    %76 = vector.load %arg9[%c25, %c0_42] : memref<304x128xbf16, #tpu.memory_space<vmem>>, vector<256x128xbf16>
    %cst_43 = arith.constant 0.000000e+00 : bf16
    %77 = vector.broadcast %cst_43 : bf16 to vector<256x128xbf16>
    %78 = vector.shape_cast %36 : vector<256x1xi1> to vector<256x1xi1>
    %79 = vector.broadcast %78 : vector<256x1xi1> to vector<256x128xi1>
    %80 = arith.select %79, %76, %77 : vector<256x128xi1>, vector<256x128xbf16>
    %c5 = arith.constant 5 : index
    %c0_44 = arith.constant 0 : index
    %c0_45 = arith.constant 0 : index
    %81 = vector.load %arg5[%c5, %c0_44, %c0_45] : memref<9x128x128xbf16, #tpu.memory_space<vmem>>, vector<1x128x128xbf16>
    %82 = vector.shape_cast %81 : vector<1x128x128xbf16> to vector<128x128xbf16>
    %cst_46 = arith.constant dense<0.000000e+00> : vector<256x128xf32>
    %83 = tpu.matmul %80, %82, %cst_46 {dimension_numbers = #tpu.dot_dimension_numbers<[1], [0], [0], [1], [0, 0, 1, 1], [], []>} : vector<256x128xbf16>, vector<128x128xbf16>, vector<256x128xf32> -> vector<256x128xf32>
    %84 = arith.addf %75, %83 : vector<256x128xf32>
    %c39 = arith.constant 39 : index
    %c0_47 = arith.constant 0 : index
    %85 = vector.load %arg9[%c39, %c0_47] : memref<304x128xbf16, #tpu.memory_space<vmem>>, vector<256x128xbf16>
    %cst_48 = arith.constant 0.000000e+00 : bf16
    %86 = vector.broadcast %cst_48 : bf16 to vector<256x128xbf16>
    %87 = vector.shape_cast %34 : vector<256x1xi1> to vector<256x1xi1>
    %88 = vector.broadcast %87 : vector<256x1xi1> to vector<256x128xi1>
    %89 = arith.select %88, %85, %86 : vector<256x128xi1>, vector<256x128xbf16>
    %c6 = arith.constant 6 : index
    %c0_49 = arith.constant 0 : index
    %c0_50 = arith.constant 0 : index
    %90 = vector.load %arg5[%c6, %c0_49, %c0_50] : memref<9x128x128xbf16, #tpu.memory_space<vmem>>, vector<1x128x128xbf16>
    %91 = vector.shape_cast %90 : vector<1x128x128xbf16> to vector<128x128xbf16>
    %cst_51 = arith.constant dense<0.000000e+00> : vector<256x128xf32>
    %92 = tpu.matmul %89, %91, %cst_51 {dimension_numbers = #tpu.dot_dimension_numbers<[1], [0], [0], [1], [0, 0, 1, 1], [], []>} : vector<256x128xbf16>, vector<128x128xbf16>, vector<256x128xf32> -> vector<256x128xf32>
    %93 = arith.addf %84, %92 : vector<256x128xf32>
    %c40 = arith.constant 40 : index
    %c0_52 = arith.constant 0 : index
    %94 = vector.load %arg9[%c40, %c0_52] : memref<304x128xbf16, #tpu.memory_space<vmem>>, vector<256x128xbf16>
    %c7_53 = arith.constant 7 : index
    %c0_54 = arith.constant 0 : index
    %c0_55 = arith.constant 0 : index
    %95 = vector.load %arg5[%c7_53, %c0_54, %c0_55] : memref<9x128x128xbf16, #tpu.memory_space<vmem>>, vector<1x128x128xbf16>
    %96 = vector.shape_cast %95 : vector<1x128x128xbf16> to vector<128x128xbf16>
    %cst_56 = arith.constant dense<0.000000e+00> : vector<256x128xf32>
    %97 = tpu.matmul %94, %96, %cst_56 {dimension_numbers = #tpu.dot_dimension_numbers<[1], [0], [0], [1], [0, 0, 1, 1], [], []>} : vector<256x128xbf16>, vector<128x128xbf16>, vector<256x128xf32> -> vector<256x128xf32>
    %98 = arith.addf %93, %97 : vector<256x128xf32>
    %c41 = arith.constant 41 : index
    %c0_57 = arith.constant 0 : index
    %99 = vector.load %arg9[%c41, %c0_57] : memref<304x128xbf16, #tpu.memory_space<vmem>>, vector<256x128xbf16>
    %cst_58 = arith.constant 0.000000e+00 : bf16
    %100 = vector.broadcast %cst_58 : bf16 to vector<256x128xbf16>
    %101 = vector.shape_cast %36 : vector<256x1xi1> to vector<256x1xi1>
    %102 = vector.broadcast %101 : vector<256x1xi1> to vector<256x128xi1>
    %103 = arith.select %102, %99, %100 : vector<256x128xi1>, vector<256x128xbf16>
    %c8_59 = arith.constant 8 : index
    %c0_60 = arith.constant 0 : index
    %c0_61 = arith.constant 0 : index
    %104 = vector.load %arg5[%c8_59, %c0_60, %c0_61] : memref<9x128x128xbf16, #tpu.memory_space<vmem>>, vector<1x128x128xbf16>
    %105 = vector.shape_cast %104 : vector<1x128x128xbf16> to vector<128x128xbf16>
    %cst_62 = arith.constant dense<0.000000e+00> : vector<256x128xf32>
    %106 = tpu.matmul %103, %105, %cst_62 {dimension_numbers = #tpu.dot_dimension_numbers<[1], [0], [0], [1], [0, 0, 1, 1], [], []>} : vector<256x128xbf16>, vector<128x128xbf16>, vector<256x128xf32> -> vector<256x128xf32>
    %107 = arith.addf %98, %106 : vector<256x128xf32>
    %108 = arith.truncf %107 : vector<256x128xf32> to vector<256x128xbf16>
    %c0_63 = arith.constant 0 : index
    %c0_64 = arith.constant 0 : index
    %c0_65 = arith.constant 0 : index
    %109 = vector.load %arg7[%c0_63, %c0_64, %c0_65] : memref<1x256x128xbf16, #tpu.memory_space<vmem>>, vector<1x256x128xbf16>
    %110 = vector.shape_cast %109 : vector<1x256x128xbf16> to vector<256x128xbf16>
    %111 = vector.shape_cast %108 : vector<256x128xbf16> to vector<1x256x128xbf16>
    tpu.vector_store %arg7[%c0_63, %c0_64, %c0_65], %111 {strides = array<i32>} : memref<1x256x128xbf16, #tpu.memory_space<vmem>>, vector<1x256x128xbf16>,
    %cst_66 = arith.constant dense<0.000000e+00> : vector<128xf32>
    %112 = vector.multi_reduction <add>, %107, %cst_66 [0] : vector<256x128xf32> to vector<128xf32>
    %113 = vector.shape_cast %112 : vector<128xf32> to vector<1x128xf32>
    %114 = arith.addf %37, %113 : vector<1x128xf32>
    %115 = arith.mulf %107, %107 : vector<256x128xf32>
    %cst_67 = arith.constant dense<0.000000e+00> : vector<128xf32>
    %116 = vector.multi_reduction <add>, %115, %cst_67 [0] : vector<256x128xf32> to vector<128xf32>
    %117 = vector.shape_cast %116 : vector<128xf32> to vector<1x128xf32>
    %118 = arith.addf %37, %117 : vector<1x128xf32>
    %119 = tpu.concatenate %114, %118 in 0 : vector<1x128xf32>, vector<1x128xf32> -> vector<2x128xf32>
    %c0_68 = arith.constant 0 : index
    %c0_69 = arith.constant 0 : index
    %c0_70 = arith.constant 0 : index
    %120 = vector.load %arg8[%c0_68, %c0_69, %c0_70] : memref<1x2x128xf32, #tpu.memory_space<vmem>>, vector<1x2x128xf32>
    %121 = vector.shape_cast %120 : vector<1x2x128xf32> to vector<2x128xf32>
    %122 = vector.shape_cast %119 : vector<2x128xf32> to vector<1x2x128xf32>
    tpu.vector_store %arg8[%c0_68, %c0_69, %c0_70], %122 {strides = array<i32>} : memref<1x2x128xf32, #tpu.memory_space<vmem>>, vector<1x2x128xf32>,
    return
  }
  func.func @transform_0(%arg0: i32, %arg1: i32) -> (i32, i32, i32) {
    %c0_i32 = arith.constant 0 : i32
    %c0_i32_0 = arith.constant 0 : i32
    return %arg0, %arg1, %c0_i32 : i32, i32, i32
  }
  func.func @transform_1(%arg0: i32, %arg1: i32) -> (i32, i32, i32) {
    %c16_i32 = arith.constant 16 : i32
    %0 = arith.muli %arg1, %c16_i32 : i32
    %c1_i32 = arith.constant 1 : i32
    %1 = arith.subi %0, %c1_i32 : i32
    %c0_i32 = arith.constant 0 : i32
    %2 = arith.maxsi %1, %c0_i32 : i32
    %c0_i32_0 = arith.constant 0 : i32
    %c0_i32_1 = arith.constant 0 : i32
    return %arg0, %2, %c0_i32_0 : i32, i32, i32
  }
  func.func @transform_2(%arg0: i32, %arg1: i32) -> (i32, i32, i32) {
    %c1_i32 = arith.constant 1 : i32
    %0 = arith.addi %arg1, %c1_i32 : i32
    %c16_i32 = arith.constant 16 : i32
    %1 = arith.muli %0, %c16_i32 : i32
    %c15_i32 = arith.constant 15 : i32
    %2 = arith.minsi %1, %c15_i32 : i32
    %c0_i32 = arith.constant 0 : i32
    %c0_i32_0 = arith.constant 0 : i32
    return %arg0, %2, %c0_i32 : i32, i32, i32
  }
  func.func @transform_3(%arg0: i32, %arg1: i32) -> (i32, i32, i32) {
    %c0_i32 = arith.constant 0 : i32
    %c0_i32_0 = arith.constant 0 : i32
    %c0_i32_1 = arith.constant 0 : i32
    %c0_i32_2 = arith.constant 0 : i32
    return %c0_i32, %c0_i32_0, %c0_i32_1 : i32, i32, i32
  }
  func.func @transform_4(%arg0: i32, %arg1: i32) -> (i32, i32) {
    %c0_i32 = arith.constant 0 : i32
    %c0_i32_0 = arith.constant 0 : i32
    %c0_i32_1 = arith.constant 0 : i32
    return %c0_i32, %c0_i32_0 : i32, i32
  }
  func.func @transform_5(%arg0: i32, %arg1: i32) -> (i32, i32, i32) {
    %c0_i32 = arith.constant 0 : i32
    %c0_i32_0 = arith.constant 0 : i32
    return %arg0, %arg1, %c0_i32 : i32, i32, i32
  }
  func.func @transform_6(%arg0: i32, %arg1: i32) -> (i32, i32, i32) {
    %c1_i32 = arith.constant 1 : i32
    %0 = arith.muli %arg0, %c1_i32 : i32
    %1 = arith.addi %0, %arg1 : i32
    %c0_i32 = arith.constant 0 : i32
    %c0_i32_0 = arith.constant 0 : i32
    %c0_i32_1 = arith.constant 0 : i32
    return %1, %c0_i32, %c0_i32_0 : i32, i32, i32
  }
}

module attributes {stable_mosaic.version = 11 : i64} {
  func.func @kernel(%arg0: i32, %arg1: i32, %arg2: memref<1x256x128xbf16, #tpu.memory_space<vmem>>, %arg3: memref<1x16x128xbf16, #tpu.memory_space<vmem>>, %arg4: memref<1x16x128xbf16, #tpu.memory_space<vmem>>, %arg5: memref<9x128x128xbf16, #tpu.memory_space<vmem>>, %arg6: memref<2x128xf32, #tpu.memory_space<vmem>>, %arg7: memref<1x256x128xbf16, #tpu.memory_space<vmem>>, %arg8: memref<1x2x128xf32, #tpu.memory_space<vmem>>, %arg9: memref<304x128xbf16, #tpu.memory_space<vmem>>) attributes {dimension_semantics = [#tpu.dimension_semantics<parallel>, #tpu.dimension_semantics<parallel>], iteration_bounds = array<i64: 2, 1>, scalar_prefetch = 0 : i64, scratch_operands = 1 : i64, tpu.core_type = #tpu.core_type<tc>, window_params = [{transform_indices = @transform_0, window_bounds = array<i64: 1, 256, 128>}, {transform_indices = @transform_1, window_bounds = array<i64: 1, 16, 128>}, {transform_indices = @transform_2, window_bounds = array<i64: 1, 16, 128>}, {pipeline_mode = #tpu.pipeline_mode<synchronous>, transform_indices = @transform_3, window_bounds = array<i64: 9, 128, 128>}, {pipeline_mode = #tpu.pipeline_mode<synchronous>, transform_indices = @transform_4, window_bounds = array<i64: 2, 128>}, {transform_indices = @transform_5, window_bounds = array<i64: 1, 256, 128>}, {transform_indices = @transform_6, window_bounds = array<i64: 1, 2, 128>}]} {
    %c0 = arith.constant 0 : index
    %c0_0 = arith.constant 0 : index
    %c0_1 = arith.constant 0 : index
    %0 = vector.load %arg2[%c0, %c0_0, %c0_1] : memref<1x256x128xbf16, #tpu.memory_space<vmem>>, vector<1x256x128xbf16>
    %1 = vector.shape_cast %0 : vector<1x256x128xbf16> to vector<256x128xbf16>
    %2 = arith.extf %1 : vector<256x128xbf16> to vector<256x128xf32>
    %c0_2 = arith.constant 0 : index
    %c0_3 = arith.constant 0 : index
    %3 = vector.load %arg6[%c0_2, %c0_3] : memref<2x128xf32, #tpu.memory_space<vmem>>, vector<1x128xf32>
    %4 = vector.broadcast %3 : vector<1x128xf32> to vector<256x128xf32>
    %5 = arith.mulf %2, %4 : vector<256x128xf32>
    %c1 = arith.constant 1 : index
    %c0_4 = arith.constant 0 : index
    %6 = vector.load %arg6[%c1, %c0_4] : memref<2x128xf32, #tpu.memory_space<vmem>>, vector<1x128xf32>
    %7 = vector.broadcast %6 : vector<1x128xf32> to vector<256x128xf32>
    %8 = arith.addf %5, %7 : vector<256x128xf32>
    %cst = arith.constant 0.000000e+00 : f32
    %9 = vector.broadcast %cst : f32 to vector<256x128xf32>
    %10 = arith.maximumf %8, %9 : vector<256x128xf32>
    %11 = arith.truncf %10 : vector<256x128xf32> to vector<256x128xbf16>
    %c24 = arith.constant 24 : index
    %c0_5 = arith.constant 0 : index
    %12 = vector.load %arg9[%c24, %c0_5] : memref<304x128xbf16, #tpu.memory_space<vmem>>, vector<256x128xbf16>
    tpu.vector_store %arg9[%c24, %c0_5], %11 {strides = array<i32>} : memref<304x128xbf16, #tpu.memory_space<vmem>>, vector<256x128xbf16>,
    %cst_6 = arith.constant 0.000000e+00 : bf16
    %13 = vector.broadcast %cst_6 : bf16 to vector<16x128xbf16>
    %c0_i32 = arith.constant 0 : i32
    %14 = arith.cmpi eq, %arg1, %c0_i32 : i32
    %15 = arith.extui %14 : i1 to i32
    %c0_i32_7 = arith.constant 0 : i32
    %16 = arith.cmpi ne, %15, %c0_i32_7 : i32
    scf.if %16 {
      %c8_76 = arith.constant 8 : index
      %c0_77 = arith.constant 0 : index
      %133 = vector.load %arg9[%c8_76, %c0_77] : memref<304x128xbf16, #tpu.memory_space<vmem>>, vector<16x128xbf16>
      tpu.vector_store %arg9[%c8_76, %c0_77], %13 {strides = array<i32>} : memref<304x128xbf16, #tpu.memory_space<vmem>>, vector<16x128xbf16>,
    } else {
    }
    %c0_i32_8 = arith.constant 0 : i32
    %17 = arith.cmpi sgt, %arg1, %c0_i32_8 : i32
    %18 = arith.extui %17 : i1 to i32
    %c0_i32_9 = arith.constant 0 : i32
    %19 = arith.cmpi ne, %18, %c0_i32_9 : i32
    scf.if %19 {
      %c0_76 = arith.constant 0 : index
      %c0_77 = arith.constant 0 : index
      %c0_78 = arith.constant 0 : index
      %133 = vector.load %arg3[%c0_76, %c0_77, %c0_78] : memref<1x16x128xbf16, #tpu.memory_space<vmem>>, vector<1x16x128xbf16>
      %134 = vector.shape_cast %133 : vector<1x16x128xbf16> to vector<16x128xbf16>
      %135 = arith.extf %134 : vector<16x128xbf16> to vector<16x128xf32>
      %c0_79 = arith.constant 0 : index
      %c0_80 = arith.constant 0 : index
      %136 = vector.load %arg6[%c0_79, %c0_80] : memref<2x128xf32, #tpu.memory_space<vmem>>, vector<1x128xf32>
      %137 = vector.broadcast %136 : vector<1x128xf32> to vector<16x128xf32>
      %138 = arith.mulf %135, %137 : vector<16x128xf32>
      %c1_81 = arith.constant 1 : index
      %c0_82 = arith.constant 0 : index
      %139 = vector.load %arg6[%c1_81, %c0_82] : memref<2x128xf32, #tpu.memory_space<vmem>>, vector<1x128xf32>
      %140 = vector.broadcast %139 : vector<1x128xf32> to vector<16x128xf32>
      %141 = arith.addf %138, %140 : vector<16x128xf32>
      %cst_83 = arith.constant 0.000000e+00 : f32
      %142 = vector.broadcast %cst_83 : f32 to vector<16x128xf32>
      %143 = arith.maximumf %141, %142 : vector<16x128xf32>
      %144 = arith.truncf %143 : vector<16x128xf32> to vector<16x128xbf16>
      %c8_84 = arith.constant 8 : index
      %c0_85 = arith.constant 0 : index
      %145 = vector.load %arg9[%c8_84, %c0_85] : memref<304x128xbf16, #tpu.memory_space<vmem>>, vector<16x128xbf16>
      tpu.vector_store %arg9[%c8_84, %c0_85], %144 {strides = array<i32>} : memref<304x128xbf16, #tpu.memory_space<vmem>>, vector<16x128xbf16>,
    } else {
    }
    %c0_i32_10 = arith.constant 0 : i32
    %20 = arith.cmpi eq, %arg1, %c0_i32_10 : i32
    %21 = arith.extui %20 : i1 to i32
    %c0_i32_11 = arith.constant 0 : i32
    %22 = arith.cmpi ne, %21, %c0_i32_11 : i32
    scf.if %22 {
      %c280 = arith.constant 280 : index
      %c0_76 = arith.constant 0 : index
      %133 = vector.load %arg9[%c280, %c0_76] : memref<304x128xbf16, #tpu.memory_space<vmem>>, vector<16x128xbf16>
      tpu.vector_store %arg9[%c280, %c0_76], %13 {strides = array<i32>} : memref<304x128xbf16, #tpu.memory_space<vmem>>, vector<16x128xbf16>,
    } else {
    }
    %c0_i32_12 = arith.constant 0 : i32
    %23 = arith.cmpi slt, %arg1, %c0_i32_12 : i32
    %24 = arith.extui %23 : i1 to i32
    %c0_i32_13 = arith.constant 0 : i32
    %25 = arith.cmpi ne, %24, %c0_i32_13 : i32
    scf.if %25 {
      %c0_76 = arith.constant 0 : index
      %c0_77 = arith.constant 0 : index
      %c0_78 = arith.constant 0 : index
      %133 = vector.load %arg4[%c0_76, %c0_77, %c0_78] : memref<1x16x128xbf16, #tpu.memory_space<vmem>>, vector<1x16x128xbf16>
      %134 = vector.shape_cast %133 : vector<1x16x128xbf16> to vector<16x128xbf16>
      %135 = arith.extf %134 : vector<16x128xbf16> to vector<16x128xf32>
      %c0_79 = arith.constant 0 : index
      %c0_80 = arith.constant 0 : index
      %136 = vector.load %arg6[%c0_79, %c0_80] : memref<2x128xf32, #tpu.memory_space<vmem>>, vector<1x128xf32>
      %137 = vector.broadcast %136 : vector<1x128xf32> to vector<16x128xf32>
      %138 = arith.mulf %135, %137 : vector<16x128xf32>
      %c1_81 = arith.constant 1 : index
      %c0_82 = arith.constant 0 : index
      %139 = vector.load %arg6[%c1_81, %c0_82] : memref<2x128xf32, #tpu.memory_space<vmem>>, vector<1x128xf32>
      %140 = vector.broadcast %139 : vector<1x128xf32> to vector<16x128xf32>
      %141 = arith.addf %138, %140 : vector<16x128xf32>
      %cst_83 = arith.constant 0.000000e+00 : f32
      %142 = vector.broadcast %cst_83 : f32 to vector<16x128xf32>
      %143 = arith.maximumf %141, %142 : vector<16x128xf32>
      %144 = arith.truncf %143 : vector<16x128xf32> to vector<16x128xbf16>
      %c280 = arith.constant 280 : index
      %c0_84 = arith.constant 0 : index
      %145 = vector.load %arg9[%c280, %c0_84] : memref<304x128xbf16, #tpu.memory_space<vmem>>, vector<16x128xbf16>
      tpu.vector_store %arg9[%c280, %c0_84], %144 {strides = array<i32>} : memref<304x128xbf16, #tpu.memory_space<vmem>>, vector<16x128xbf16>,
    } else {
    }
    %26 = tpu.iota {dimensions = array<i32: 0>} : vector<256x1xi32>
    %c16_i32 = arith.constant 16 : i32
    %c0_i32_14 = arith.constant 0 : i32
    %27 = arith.cmpi eq, %c16_i32, %c0_i32_14 : i32
    %c1_i32 = arith.constant 1 : i32
    %28 = arith.select %27, %c1_i32, %c16_i32 : i32
    %29 = vector.broadcast %28 : i32 to vector<256x1xi32>
    %30 = arith.remsi %26, %29 : vector<256x1xi32>
    %c0_i32_15 = arith.constant 0 : i32
    %31 = vector.broadcast %c0_i32_15 : i32 to vector<256x1xi32>
    %32 = arith.cmpi ne, %30, %31 : vector<256x1xi32>
    %c0_i32_16 = arith.constant 0 : i32
    %33 = vector.broadcast %c0_i32_16 : i32 to vector<256x1xi32>
    %34 = arith.cmpi slt, %30, %33 : vector<256x1xi32>
    %c0_i32_17 = arith.constant 0 : i32
    %35 = arith.cmpi slt, %28, %c0_i32_17 : i32
    %36 = vector.broadcast %35 : i1 to vector<256x1xi1>
    %37 = vector.broadcast %36 : vector<256x1xi1> to vector<256x1xi1>
    %38 = arith.xori %34, %37 : vector<256x1xi1>
    %39 = arith.andi %38, %32 : vector<256x1xi1>
    %40 = vector.broadcast %28 : i32 to vector<256x1xi32>
    %41 = arith.addi %30, %40 : vector<256x1xi32>
    %42 = arith.select %39, %41, %30 : vector<256x1xi1>, vector<256x1xi32>
    %c0_i32_18 = arith.constant 0 : i32
    %43 = vector.broadcast %c0_i32_18 : i32 to vector<256x1xi32>
    %44 = arith.cmpi ne, %42, %43 : vector<256x1xi32>
    %c15_i32 = arith.constant 15 : i32
    %45 = vector.broadcast %c15_i32 : i32 to vector<256x1xi32>
    %46 = arith.cmpi ne, %42, %45 : vector<256x1xi32>
    %cst_19 = arith.constant 0.000000e+00 : f32
    %47 = vector.broadcast %cst_19 : f32 to vector<1x128xf32>
    %cst_20 = arith.constant 0.000000e+00 : f32
    %48 = vector.broadcast %cst_20 : f32 to vector<256x128xf32>
    %c7 = arith.constant 7 : index
    %c0_21 = arith.constant 0 : index
    %49 = vector.load %arg9[%c7, %c0_21] : memref<304x128xbf16, #tpu.memory_space<vmem>>, vector<256x128xbf16>
    %cst_22 = arith.constant 0.000000e+00 : bf16
    %50 = vector.broadcast %cst_22 : bf16 to vector<256x128xbf16>
    %51 = vector.shape_cast %44 : vector<256x1xi1> to vector<256x1xi1>
    %52 = vector.broadcast %51 : vector<256x1xi1> to vector<256x128xi1>
    %53 = arith.select %52, %49, %50 : vector<256x128xi1>, vector<256x128xbf16>
    %c0_23 = arith.constant 0 : index
    %c0_24 = arith.constant 0 : index
    %c0_25 = arith.constant 0 : index
    %54 = vector.load %arg5[%c0_23, %c0_24, %c0_25] : memref<9x128x128xbf16, #tpu.memory_space<vmem>>, vector<1x128x128xbf16>
    %55 = vector.shape_cast %54 : vector<1x128x128xbf16> to vector<128x128xbf16>
    %cst_26 = arith.constant dense<0.000000e+00> : vector<256x128xf32>
    %56 = tpu.matmul %53, %55, %cst_26 {dimension_numbers = #tpu.dot_dimension_numbers<[1], [0], [0], [1], [0, 0, 1, 1], [], []>} : vector<256x128xbf16>, vector<128x128xbf16>, vector<256x128xf32> -> vector<256x128xf32>
    %57 = arith.addf %48, %56 : vector<256x128xf32>
    %c8 = arith.constant 8 : index
    %c0_27 = arith.constant 0 : index
    %58 = vector.load %arg9[%c8, %c0_27] : memref<304x128xbf16, #tpu.memory_space<vmem>>, vector<256x128xbf16>
    %c1_28 = arith.constant 1 : index
    %c0_29 = arith.constant 0 : index
    %c0_30 = arith.constant 0 : index
    %59 = vector.load %arg5[%c1_28, %c0_29, %c0_30] : memref<9x128x128xbf16, #tpu.memory_space<vmem>>, vector<1x128x128xbf16>
    %60 = vector.shape_cast %59 : vector<1x128x128xbf16> to vector<128x128xbf16>
    %cst_31 = arith.constant dense<0.000000e+00> : vector<256x128xf32>
    %61 = tpu.matmul %58, %60, %cst_31 {dimension_numbers = #tpu.dot_dimension_numbers<[1], [0], [0], [1], [0, 0, 1, 1], [], []>} : vector<256x128xbf16>, vector<128x128xbf16>, vector<256x128xf32> -> vector<256x128xf32>
    %62 = arith.addf %57, %61 : vector<256x128xf32>
    %c9 = arith.constant 9 : index
    %c0_32 = arith.constant 0 : index
    %63 = vector.load %arg9[%c9, %c0_32] : memref<304x128xbf16, #tpu.memory_space<vmem>>, vector<256x128xbf16>
    %cst_33 = arith.constant 0.000000e+00 : bf16
    %64 = vector.broadcast %cst_33 : bf16 to vector<256x128xbf16>
    %65 = vector.shape_cast %46 : vector<256x1xi1> to vector<256x1xi1>
    %66 = vector.broadcast %65 : vector<256x1xi1> to vector<256x128xi1>
    %67 = arith.select %66, %63, %64 : vector<256x128xi1>, vector<256x128xbf16>
    %c2 = arith.constant 2 : index
    %c0_34 = arith.constant 0 : index
    %c0_35 = arith.constant 0 : index
    %68 = vector.load %arg5[%c2, %c0_34, %c0_35] : memref<9x128x128xbf16, #tpu.memory_space<vmem>>, vector<1x128x128xbf16>
    %69 = vector.shape_cast %68 : vector<1x128x128xbf16> to vector<128x128xbf16>
    %cst_36 = arith.constant dense<0.000000e+00> : vector<256x128xf32>
    %70 = tpu.matmul %67, %69, %cst_36 {dimension_numbers = #tpu.dot_dimension_numbers<[1], [0], [0], [1], [0, 0, 1, 1], [], []>} : vector<256x128xbf16>, vector<128x128xbf16>, vector<256x128xf32> -> vector<256x128xf32>
    %71 = arith.addf %62, %70 : vector<256x128xf32>
    %c23 = arith.constant 23 : index
    %c0_37 = arith.constant 0 : index
    %72 = vector.load %arg9[%c23, %c0_37] : memref<304x128xbf16, #tpu.memory_space<vmem>>, vector<256x128xbf16>
    %cst_38 = arith.constant 0.000000e+00 : bf16
    %73 = vector.broadcast %cst_38 : bf16 to vector<256x128xbf16>
    %74 = vector.shape_cast %44 : vector<256x1xi1> to vector<256x1xi1>
    %75 = vector.broadcast %74 : vector<256x1xi1> to vector<256x128xi1>
    %76 = arith.select %75, %72, %73 : vector<256x128xi1>, vector<256x128xbf16>
    %c3 = arith.constant 3 : index
    %c0_39 = arith.constant 0 : index
    %c0_40 = arith.constant 0 : index
    %77 = vector.load %arg5[%c3, %c0_39, %c0_40] : memref<9x128x128xbf16, #tpu.memory_space<vmem>>, vector<1x128x128xbf16>
    %78 = vector.shape_cast %77 : vector<1x128x128xbf16> to vector<128x128xbf16>
    %cst_41 = arith.constant dense<0.000000e+00> : vector<256x128xf32>
    %79 = tpu.matmul %76, %78, %cst_41 {dimension_numbers = #tpu.dot_dimension_numbers<[1], [0], [0], [1], [0, 0, 1, 1], [], []>} : vector<256x128xbf16>, vector<128x128xbf16>, vector<256x128xf32> -> vector<256x128xf32>
    %80 = arith.addf %71, %79 : vector<256x128xf32>
    %c24_42 = arith.constant 24 : index
    %c0_43 = arith.constant 0 : index
    %81 = vector.load %arg9[%c24_42, %c0_43] : memref<304x128xbf16, #tpu.memory_space<vmem>>, vector<256x128xbf16>
    %c4 = arith.constant 4 : index
    %c0_44 = arith.constant 0 : index
    %c0_45 = arith.constant 0 : index
    %82 = vector.load %arg5[%c4, %c0_44, %c0_45] : memref<9x128x128xbf16, #tpu.memory_space<vmem>>, vector<1x128x128xbf16>
    %83 = vector.shape_cast %82 : vector<1x128x128xbf16> to vector<128x128xbf16>
    %cst_46 = arith.constant dense<0.000000e+00> : vector<256x128xf32>
    %84 = tpu.matmul %81, %83, %cst_46 {dimension_numbers = #tpu.dot_dimension_numbers<[1], [0], [0], [1], [0, 0, 1, 1], [], []>} : vector<256x128xbf16>, vector<128x128xbf16>, vector<256x128xf32> -> vector<256x128xf32>
    %85 = arith.addf %80, %84 : vector<256x128xf32>
    %c25 = arith.constant 25 : index
    %c0_47 = arith.constant 0 : index
    %86 = vector.load %arg9[%c25, %c0_47] : memref<304x128xbf16, #tpu.memory_space<vmem>>, vector<256x128xbf16>
    %cst_48 = arith.constant 0.000000e+00 : bf16
    %87 = vector.broadcast %cst_48 : bf16 to vector<256x128xbf16>
    %88 = vector.shape_cast %46 : vector<256x1xi1> to vector<256x1xi1>
    %89 = vector.broadcast %88 : vector<256x1xi1> to vector<256x128xi1>
    %90 = arith.select %89, %86, %87 : vector<256x128xi1>, vector<256x128xbf16>
    %c5 = arith.constant 5 : index
    %c0_49 = arith.constant 0 : index
    %c0_50 = arith.constant 0 : index
    %91 = vector.load %arg5[%c5, %c0_49, %c0_50] : memref<9x128x128xbf16, #tpu.memory_space<vmem>>, vector<1x128x128xbf16>
    %92 = vector.shape_cast %91 : vector<1x128x128xbf16> to vector<128x128xbf16>
    %cst_51 = arith.constant dense<0.000000e+00> : vector<256x128xf32>
    %93 = tpu.matmul %90, %92, %cst_51 {dimension_numbers = #tpu.dot_dimension_numbers<[1], [0], [0], [1], [0, 0, 1, 1], [], []>} : vector<256x128xbf16>, vector<128x128xbf16>, vector<256x128xf32> -> vector<256x128xf32>
    %94 = arith.addf %85, %93 : vector<256x128xf32>
    %c39 = arith.constant 39 : index
    %c0_52 = arith.constant 0 : index
    %95 = vector.load %arg9[%c39, %c0_52] : memref<304x128xbf16, #tpu.memory_space<vmem>>, vector<256x128xbf16>
    %cst_53 = arith.constant 0.000000e+00 : bf16
    %96 = vector.broadcast %cst_53 : bf16 to vector<256x128xbf16>
    %97 = vector.shape_cast %44 : vector<256x1xi1> to vector<256x1xi1>
    %98 = vector.broadcast %97 : vector<256x1xi1> to vector<256x128xi1>
    %99 = arith.select %98, %95, %96 : vector<256x128xi1>, vector<256x128xbf16>
    %c6 = arith.constant 6 : index
    %c0_54 = arith.constant 0 : index
    %c0_55 = arith.constant 0 : index
    %100 = vector.load %arg5[%c6, %c0_54, %c0_55] : memref<9x128x128xbf16, #tpu.memory_space<vmem>>, vector<1x128x128xbf16>
    %101 = vector.shape_cast %100 : vector<1x128x128xbf16> to vector<128x128xbf16>
    %cst_56 = arith.constant dense<0.000000e+00> : vector<256x128xf32>
    %102 = tpu.matmul %99, %101, %cst_56 {dimension_numbers = #tpu.dot_dimension_numbers<[1], [0], [0], [1], [0, 0, 1, 1], [], []>} : vector<256x128xbf16>, vector<128x128xbf16>, vector<256x128xf32> -> vector<256x128xf32>
    %103 = arith.addf %94, %102 : vector<256x128xf32>
    %c40 = arith.constant 40 : index
    %c0_57 = arith.constant 0 : index
    %104 = vector.load %arg9[%c40, %c0_57] : memref<304x128xbf16, #tpu.memory_space<vmem>>, vector<256x128xbf16>
    %c7_58 = arith.constant 7 : index
    %c0_59 = arith.constant 0 : index
    %c0_60 = arith.constant 0 : index
    %105 = vector.load %arg5[%c7_58, %c0_59, %c0_60] : memref<9x128x128xbf16, #tpu.memory_space<vmem>>, vector<1x128x128xbf16>
    %106 = vector.shape_cast %105 : vector<1x128x128xbf16> to vector<128x128xbf16>
    %cst_61 = arith.constant dense<0.000000e+00> : vector<256x128xf32>
    %107 = tpu.matmul %104, %106, %cst_61 {dimension_numbers = #tpu.dot_dimension_numbers<[1], [0], [0], [1], [0, 0, 1, 1], [], []>} : vector<256x128xbf16>, vector<128x128xbf16>, vector<256x128xf32> -> vector<256x128xf32>
    %108 = arith.addf %103, %107 : vector<256x128xf32>
    %c41 = arith.constant 41 : index
    %c0_62 = arith.constant 0 : index
    %109 = vector.load %arg9[%c41, %c0_62] : memref<304x128xbf16, #tpu.memory_space<vmem>>, vector<256x128xbf16>
    %cst_63 = arith.constant 0.000000e+00 : bf16
    %110 = vector.broadcast %cst_63 : bf16 to vector<256x128xbf16>
    %111 = vector.shape_cast %46 : vector<256x1xi1> to vector<256x1xi1>
    %112 = vector.broadcast %111 : vector<256x1xi1> to vector<256x128xi1>
    %113 = arith.select %112, %109, %110 : vector<256x128xi1>, vector<256x128xbf16>
    %c8_64 = arith.constant 8 : index
    %c0_65 = arith.constant 0 : index
    %c0_66 = arith.constant 0 : index
    %114 = vector.load %arg5[%c8_64, %c0_65, %c0_66] : memref<9x128x128xbf16, #tpu.memory_space<vmem>>, vector<1x128x128xbf16>
    %115 = vector.shape_cast %114 : vector<1x128x128xbf16> to vector<128x128xbf16>
    %cst_67 = arith.constant dense<0.000000e+00> : vector<256x128xf32>
    %116 = tpu.matmul %113, %115, %cst_67 {dimension_numbers = #tpu.dot_dimension_numbers<[1], [0], [0], [1], [0, 0, 1, 1], [], []>} : vector<256x128xbf16>, vector<128x128xbf16>, vector<256x128xf32> -> vector<256x128xf32>
    %117 = arith.addf %108, %116 : vector<256x128xf32>
    %118 = arith.truncf %117 : vector<256x128xf32> to vector<256x128xbf16>
    %c0_68 = arith.constant 0 : index
    %c0_69 = arith.constant 0 : index
    %c0_70 = arith.constant 0 : index
    %119 = vector.load %arg7[%c0_68, %c0_69, %c0_70] : memref<1x256x128xbf16, #tpu.memory_space<vmem>>, vector<1x256x128xbf16>
    %120 = vector.shape_cast %119 : vector<1x256x128xbf16> to vector<256x128xbf16>
    %121 = vector.shape_cast %118 : vector<256x128xbf16> to vector<1x256x128xbf16>
    tpu.vector_store %arg7[%c0_68, %c0_69, %c0_70], %121 {strides = array<i32>} : memref<1x256x128xbf16, #tpu.memory_space<vmem>>, vector<1x256x128xbf16>,
    %cst_71 = arith.constant dense<0.000000e+00> : vector<128xf32>
    %122 = vector.multi_reduction <add>, %117, %cst_71 [0] : vector<256x128xf32> to vector<128xf32>
    %123 = vector.shape_cast %122 : vector<128xf32> to vector<1x128xf32>
    %124 = arith.addf %47, %123 : vector<1x128xf32>
    %125 = arith.mulf %117, %117 : vector<256x128xf32>
    %cst_72 = arith.constant dense<0.000000e+00> : vector<128xf32>
    %126 = vector.multi_reduction <add>, %125, %cst_72 [0] : vector<256x128xf32> to vector<128xf32>
    %127 = vector.shape_cast %126 : vector<128xf32> to vector<1x128xf32>
    %128 = arith.addf %47, %127 : vector<1x128xf32>
    %129 = tpu.concatenate %124, %128 in 0 : vector<1x128xf32>, vector<1x128xf32> -> vector<2x128xf32>
    %c0_73 = arith.constant 0 : index
    %c0_74 = arith.constant 0 : index
    %c0_75 = arith.constant 0 : index
    %130 = vector.load %arg8[%c0_73, %c0_74, %c0_75] : memref<1x2x128xf32, #tpu.memory_space<vmem>>, vector<1x2x128xf32>
    %131 = vector.shape_cast %130 : vector<1x2x128xf32> to vector<2x128xf32>
    %132 = vector.shape_cast %129 : vector<2x128xf32> to vector<1x2x128xf32>
    tpu.vector_store %arg8[%c0_73, %c0_74, %c0_75], %132 {strides = array<i32>} : memref<1x2x128xf32, #tpu.memory_space<vmem>>, vector<1x2x128xf32>,
    return
  }
  func.func @transform_0(%arg0: i32, %arg1: i32) -> (i32, i32, i32) {
    %c0_i32 = arith.constant 0 : i32
    %c0_i32_0 = arith.constant 0 : i32
    return %arg0, %arg1, %c0_i32 : i32, i32, i32
  }
  func.func @transform_1(%arg0: i32, %arg1: i32) -> (i32, i32, i32) {
    %c16_i32 = arith.constant 16 : i32
    %0 = arith.muli %arg1, %c16_i32 : i32
    %c1_i32 = arith.constant 1 : i32
    %1 = arith.subi %0, %c1_i32 : i32
    %c0_i32 = arith.constant 0 : i32
    %2 = arith.maxsi %1, %c0_i32 : i32
    %c0_i32_0 = arith.constant 0 : i32
    %c0_i32_1 = arith.constant 0 : i32
    return %arg0, %2, %c0_i32_0 : i32, i32, i32
  }
  func.func @transform_2(%arg0: i32, %arg1: i32) -> (i32, i32, i32) {
    %c1_i32 = arith.constant 1 : i32
    %0 = arith.addi %arg1, %c1_i32 : i32
    %c16_i32 = arith.constant 16 : i32
    %1 = arith.muli %0, %c16_i32 : i32
    %c15_i32 = arith.constant 15 : i32
    %2 = arith.minsi %1, %c15_i32 : i32
    %c0_i32 = arith.constant 0 : i32
    %c0_i32_0 = arith.constant 0 : i32
    return %arg0, %2, %c0_i32 : i32, i32, i32
  }
  func.func @transform_3(%arg0: i32, %arg1: i32) -> (i32, i32, i32) {
    %c0_i32 = arith.constant 0 : i32
    %c0_i32_0 = arith.constant 0 : i32
    %c0_i32_1 = arith.constant 0 : i32
    %c0_i32_2 = arith.constant 0 : i32
    return %c0_i32, %c0_i32_0, %c0_i32_1 : i32, i32, i32
  }
  func.func @transform_4(%arg0: i32, %arg1: i32) -> (i32, i32) {
    %c0_i32 = arith.constant 0 : i32
    %c0_i32_0 = arith.constant 0 : i32
    %c0_i32_1 = arith.constant 0 : i32
    return %c0_i32, %c0_i32_0 : i32, i32
  }
  func.func @transform_5(%arg0: i32, %arg1: i32) -> (i32, i32, i32) {
    %c0_i32 = arith.constant 0 : i32
    %c0_i32_0 = arith.constant 0 : i32
    return %arg0, %arg1, %c0_i32 : i32, i32, i32
  }
  func.func @transform_6(%arg0: i32, %arg1: i32) -> (i32, i32, i32) {
    %c1_i32 = arith.constant 1 : i32
    %0 = arith.muli %arg0, %c1_i32 : i32
    %1 = arith.addi %0, %arg1 : i32
    %c0_i32 = arith.constant 0 : i32
    %c0_i32_0 = arith.constant 0 : i32
    %c0_i32_1 = arith.constant 0 : i32
    return %1, %c0_i32, %c0_i32_0 : i32, i32, i32
  }
}

module attributes {stable_mosaic.version = 11 : i64} {
  func.func @kernel(%arg0: i32, %arg1: i32, %arg2: memref<1x256x128xbf16, #tpu.memory_space<vmem>>, %arg3: memref<2x128xf32, #tpu.memory_space<vmem>>, %arg4: memref<1x256x4xf32, #tpu.memory_space<vmem>>) attributes {dimension_semantics = [#tpu.dimension_semantics<parallel>, #tpu.dimension_semantics<parallel>], iteration_bounds = array<i64: 2, 1>, scalar_prefetch = 0 : i64, scratch_operands = 0 : i64, tpu.core_type = #tpu.core_type<tc>, window_params = [{transform_indices = @transform_0, window_bounds = array<i64: 1, 256, 128>}, {pipeline_mode = #tpu.pipeline_mode<synchronous>, transform_indices = @transform_1, window_bounds = array<i64: 2, 128>}, {transform_indices = @transform_2, window_bounds = array<i64: 1, 256, 4>}]} {
    %c0 = arith.constant 0 : index
    %c0_0 = arith.constant 0 : index
    %c0_1 = arith.constant 0 : index
    %0 = vector.load %arg2[%c0, %c0_0, %c0_1] : memref<1x256x128xbf16, #tpu.memory_space<vmem>>, vector<1x256x128xbf16>
    %1 = vector.shape_cast %0 : vector<1x256x128xbf16> to vector<256x128xbf16>
    %2 = arith.extf %1 : vector<256x128xbf16> to vector<256x128xf32>
    %c0_2 = arith.constant 0 : index
    %c0_3 = arith.constant 0 : index
    %3 = vector.load %arg3[%c0_2, %c0_3] : memref<2x128xf32, #tpu.memory_space<vmem>>, vector<1x128xf32>
    %4 = vector.broadcast %3 : vector<1x128xf32> to vector<256x128xf32>
    %5 = arith.mulf %2, %4 : vector<256x128xf32>
    %c1 = arith.constant 1 : index
    %c0_4 = arith.constant 0 : index
    %6 = vector.load %arg3[%c1, %c0_4] : memref<2x128xf32, #tpu.memory_space<vmem>>, vector<1x128xf32>
    %7 = vector.broadcast %6 : vector<1x128xf32> to vector<256x128xf32>
    %8 = arith.addf %5, %7 : vector<256x128xf32>
    %cst = arith.constant 0.000000e+00 : f32
    %9 = vector.broadcast %cst : f32 to vector<256x128xf32>
    %10 = arith.maximumf %8, %9 : vector<256x128xf32>
    %11 = vector.extract_strided_slice %10 {offsets = [0, 0], sizes = [256, 4], strides = [1, 1]} : vector<256x128xf32> to vector<256x4xf32>
    %c0_5 = arith.constant 0 : index
    %c0_6 = arith.constant 0 : index
    %c0_7 = arith.constant 0 : index
    %12 = vector.load %arg4[%c0_5, %c0_6, %c0_7] : memref<1x256x4xf32, #tpu.memory_space<vmem>>, vector<1x256x4xf32>
    %13 = vector.shape_cast %12 : vector<1x256x4xf32> to vector<256x4xf32>
    %14 = vector.shape_cast %11 : vector<256x4xf32> to vector<1x256x4xf32>
    tpu.vector_store %arg4[%c0_5, %c0_6, %c0_7], %14 {strides = array<i32>} : memref<1x256x4xf32, #tpu.memory_space<vmem>>, vector<1x256x4xf32>,
    return
  }
  func.func @transform_0(%arg0: i32, %arg1: i32) -> (i32, i32, i32) {
    %c0_i32 = arith.constant 0 : i32
    %c0_i32_0 = arith.constant 0 : i32
    return %arg0, %arg1, %c0_i32 : i32, i32, i32
  }
  func.func @transform_1(%arg0: i32, %arg1: i32) -> (i32, i32) {
    %c0_i32 = arith.constant 0 : i32
    %c0_i32_0 = arith.constant 0 : i32
    %c0_i32_1 = arith.constant 0 : i32
    return %c0_i32, %c0_i32_0 : i32, i32
  }
  func.func @transform_2(%arg0: i32, %arg1: i32) -> (i32, i32, i32) {
    %c0_i32 = arith.constant 0 : i32
    %c0_i32_0 = arith.constant 0 : i32
    return %arg0, %arg1, %c0_i32 : i32, i32, i32
  }
}

</mosaic_0001>

<llo_original>
// kernel: upblock_forward.5
$region0: #{upblock_forward.5}
  #allocation0 [shape = 'u32[]', space=smem, size = 0x4, offset = 0x4, fixed_abs, tag = 'smem constant byte address 0x4 - core index']
  #allocation1 [shape = 'u32[144,128]{1,0:T(1,128)}', space=vmem, size = 0x12000, scoped, tag = 'internal scratch']
  %s0 = inlined_call_operand.vmem [shape: bf16[2,256,128], index: 0, kind: input, shape index: {}]
  %s1 = inlined_call_operand.vmem [shape: f32[2,128], index: 1, kind: input, shape index: {}]
  %s2 = inlined_call_operand.vmem [shape: f32[2,256,4], index: 2, kind: output, shape index: {}]
  %s3 = sld [smem:[#allocation0]]
  $region41: #{upblock_forward.5} parent=0
    _
  %s5 = ssub.s32 1, %s3
  %s6 = scalar_select 0, %s5, %s3
  loop: start=0, step=1, limit=4
  $region2: #{upblock_forward.5} parent=0 // loop_pre_header
    _
  $region3: #{upblock_forward.5} parent=0 // loop_header
    %s8 = sphi 0, %s12
    %p9 = scmp.ge.s32.totalorder %s8, 4
    %s15 = sphi 0, %s27
    %s16 = sphi 0, %s23
    %s17 = sphi 0, %s15
    %s18 = sphi 0, %s16
    %s19 = sphi 0, %s17
    %s20 = sphi 0, %s18
    %s32 = sphi 0, %s34
    %s35 = sphi 0, %s32
    %s36 = sphi 0, %s35
    %s52 = sphi 0, %s36
    %s56 = sphi 0, %s56
    %s58 = sphi 0, %s56
    %s59 = sphi 0, %s58
    %s73 = sphi 0, %s59
    %s81 = sphi 0, %s83
    %s84 = sphi 0, %s81
    %s85 = sphi 0, %s84
    %s101 = sphi 0, %s85
  $region4: #{upblock_forward.5} parent=0 // loop_header_branch
    %11 = sbr.rel (%p9) target = $region8
  $region5: #{upblock_forward.5} parent=0 // loop_body
    %s13 = ssub.s32 %s8, 1
    %s14 = ssub.s32 %s8, 2
    %s21 = sadd.s32 1, %s16
    %p22 = scmp.ge.s32.totalorder %s21, 1
    %s23 = scalar_select %p22, 0, %s21
    %s24 = sadd.s32 1, %s15
    %s25 = scalar_select %p22, %s24, %s15
    %p26 = scmp.ge.s32.totalorder %s25, 2
    %s27 = scalar_select %p26, 0, %s25
    %s28 = ssub.s32 %s15, %s27
    %s29 = ssub.s32 %s16, %s23
    %s30 = sor.u32 %s28, %s29
    %p31 = scmp.eq.s32.totalorder %s30, 0
    %s33 = sadd.s32 %s32, 1
    %s34 = scalar_select %p31, %s32, %s33
    %p37 = pneg %p31
    %p38 = scmp.eq.s32.totalorder %s8, 1
    %p39 = por %p37, %p38
    %p40 = scmp.ne.s32.totalorder %s32, %s35
    %p41 = scmp.eq.s32.totalorder %s8, 0
    %p42 = por %p40, %p41
    %p43 = scmp.ne.s32.totalorder %s32, %s35
    %p44 = scmp.eq.s32.totalorder %s13, 1
    %p45 = por %p43, %p44
    %p46 = scmp.ne.s32.totalorder %s35, %s36
    %p47 = scmp.eq.s32.totalorder %s13, 0
    %p48 = por %p46, %p47
    %p49 = scmp.ne.s32.totalorder %s35, %s36
    %p50 = scmp.eq.s32.totalorder %s14, 1
    %p51 = por %p49, %p50
    %p53 = scmp.ne.s32.totalorder %s36, %s52
    %p54 = scmp.eq.s32.totalorder %s14, 0
    %p55 = por %p53, %p54
    %s57 = sadd.s32 %s56, 1
    %p60 = scmp.eq.s32.totalorder %s8, 1
    %p61 = scmp.ne.s32.totalorder %s56, %s58
    %p62 = scmp.eq.s32.totalorder %s8, 0
    %p63 = por %p61, %p62
    %p64 = scmp.ne.s32.totalorder %s56, %s58
    %p65 = scmp.eq.s32.totalorder %s13, 1
    %p66 = por %p64, %p65
    %p67 = scmp.ne.s32.totalorder %s58, %s59
    %p68 = scmp.eq.s32.totalorder %s13, 0
    %p69 = por %p67, %p68
    %p70 = scmp.ne.s32.totalorder %s58, %s59
    %p71 = scmp.eq.s32.totalorder %s14, 1
    %p72 = por %p70, %p71
    %p74 = scmp.ne.s32.totalorder %s59, %s73
    %p75 = scmp.eq.s32.totalorder %s14, 0
    %p76 = por %p74, %p75
    %s77 = ssub.s32 %s15, %s27
    %s78 = ssub.s32 %s16, %s23
    %s79 = sor.u32 %s77, %s78
    %p80 = scmp.eq.s32.totalorder %s79, 0
    %s82 = sadd.s32 %s81, 1
    %s83 = scalar_select %p80, %s81, %s82
    %p86 = pneg %p80
    %p87 = scmp.eq.s32.totalorder %s8, 1
    %p88 = por %p86, %p87
    %p89 = scmp.ne.s32.totalorder %s81, %s84
    %p90 = scmp.eq.s32.totalorder %s8, 0
    %p91 = por %p89, %p90
    %p92 = scmp.ne.s32.totalorder %s81, %s84
    %p93 = scmp.eq.s32.totalorder %s13, 1
    %p94 = por %p92, %p93
    %p95 = scmp.ne.s32.totalorder %s84, %s85
    %p96 = scmp.eq.s32.totalorder %s13, 0
    %p97 = por %p95, %p96
    %p98 = scmp.ne.s32.totalorder %s84, %s85
    %p99 = scmp.eq.s32.totalorder %s14, 1
    %p100 = por %p98, %p99
    %p102 = scmp.ne.s32.totalorder %s85, %s101
    %p103 = scmp.eq.s32.totalorder %s14, 0
    %p104 = por %p102, %p103
    %p105 = scmp.le.s32.totalorder 1, %s8
    %p106 = scmp.lt.s32.totalorder %s8, 3
    %p107 = pnand %p105, %p106
    %p108 = pneg %p107
    // Predicated region
    $region9: #{upblock_forward.5} parent=5 // pred_check
      _
    $region10: #{upblock_forward.5} parent=5 // pred_check_branch
      %110 = sbr.rel (%p107) target = $region12
    $region11: #{upblock_forward.5} parent=5 // pred_region
      %s111 = ssub.s32 %s8, 1
      // Predicated region
      $region13: #{upblock_forward.5} parent=11 // pred_check
        %p112 = pneg %p69
      $region14: #{upblock_forward.5} parent=11 // pred_check_branch
        %114 = sbr.rel (%p112) target = $region16
      $region15: #{upblock_forward.5} parent=11 // pred_region
        _
      $region16: #{upblock_forward.5} parent=11 // pred_fallthru
        _
    $region12: #{upblock_forward.5} parent=5 // pred_fallthru
      _
    %p115 = scmp.lt.s32.totalorder %s8, 2
    // Predicated region
    $region17: #{upblock_forward.5} parent=5 // pred_check
      %p116 = pneg %p115
    $region18: #{upblock_forward.5} parent=5 // pred_check_branch
      %118 = sbr.rel (%p116) target = $region20
    $region19: #{upblock_forward.5} parent=5 // pred_region
      // Predicated region
      $region21: #{upblock_forward.5} parent=19 // pred_check
        %p119 = pneg %p42
      $region22: #{upblock_forward.5} parent=19 // pred_check_branch
        %121 = sbr.rel (%p119) target = $region24
      $region23: #{upblock_forward.5} parent=19 // pred_region
        %s122 = smul.u32 32, %s16
        %p123 = scmp.lt.s32.totalorder %s15, 1
        %s124 = scalar_select %p123, %s15, 1
        %p125 = scmp.lt.s32.totalorder %s122, 31
        %s126 = scalar_select %p125, %s122, 31
        %s127 = smul.addr %s124, 32
        %s128 = sadd.s32 %s126, %s127
        %s129 = smul.addr %s128, 4
        %s130 = scalar_lea.vmem %s0, %s129
        %s131 = smul.u32 32, %s16
      $region24: #{upblock_forward.5} parent=19 // pred_fallthru
        _
    $region20: #{upblock_forward.5} parent=5 // pred_fallthru
      _
    %p132 = scmp.le.s32.totalorder 1, %s8
    %p133 = scmp.lt.s32.totalorder %s8, 3
    %p134 = pnand %p132, %p133
    %p135 = pneg %p134
    // Predicated region
    $region25: #{upblock_forward.5} parent=5 // pred_check
      _
    $region26: #{upblock_forward.5} parent=5 // pred_check_branch
      %137 = sbr.rel (%p134) target = $region28
    $region27: #{upblock_forward.5} parent=5 // pred_region
      %s138 = ssub.s32 %s8, 1
      %s139 = smul.u32 32, %s18
      %p140 = scmp.lt.s32.totalorder %s17, 1
      %s141 = scalar_select %p140, %s17, 1
      %p142 = scmp.lt.s32.totalorder %s139, 31
      %s143 = scalar_select %p142, %s139, 31
      %s144 = smul.addr %s141, 32
      %s145 = sadd.s32 %s143, %s144
      %s146 = smul.addr %s145, 4
      %s147 = scalar_lea.vmem %s0, %s146
      %p148 = pneg %p48
      %p149 = pneg %p45
      %p150 = pneg %p69
      %p151 = pneg %p66
      %p152 = pneg %p97
      %p153 = pneg %p94
      %s154 = smul.u32 32, %s18
      %p155 = scmp.lt.s32.totalorder %s17, 1
      %s156 = scalar_select %p155, %s17, 1
      %p157 = scmp.lt.s32.totalorder %s154, 31
      %s158 = scalar_select %p157, %s154, 31
      %s159 = smul.addr %s156, 32
      %s160 = sadd.s32 %s158, %s159
      %s161 = smul.addr %s160, 8
      %s162 = scalar_lea.vmem %s2, %s161
      %s163 = smul.u32 32, %s18
      %p164 = scmp.lt.s32.totalorder %s17, 1
      %s165 = scalar_select %p164, %s17, 1
      %p166 = scmp.lt.s32.totalorder %s163, 31
      %s167 = scalar_select %p166, %s163, 31
      %s168 = smul.addr %s165, 32
      %s169 = sadd.s32 %s167, %s168
      %s170 = smul.addr %s169, 4
      %s171 = scalar_lea.vmem %s0, %s170
      %s172 = smul.u32 32, %s18
      %s173 = smul.u32 32, %s18
      %p174 = scmp.lt.s32.totalorder %s17, 1
      %s175 = scalar_select %p174, %s17, 1
      %p176 = scmp.lt.s32.totalorder %s173, 31
      %s177 = scalar_select %p176, %s173, 31
      %s178 = smul.addr %s175, 32
      %s179 = sadd.s32 %s177, %s178
      %s180 = smul.addr %s179, 8
      %s181 = scalar_lea.vmem %s2, %s180
      %s182 = smul.u32 32, %s18
      %v183 = vld [vmem:[%s171] sm:$0xf]
      %v184 = vld [vmem:[%s171 + $0x4] sm:$0xf]
      %v185 = vld [vmem:[%s171 + $0x8] sm:$0xf]
      %v186 = vld [vmem:[%s171 + $0xc] sm:$0xf]
      %v187 = vld [vmem:[%s171 + $0x10] sm:$0xf]
      %v188 = vld [vmem:[%s171 + $0x14] sm:$0xf]
      %v189 = vld [vmem:[%s171 + $0x18] sm:$0xf]
      %v190 = vld [vmem:[%s171 + $0x1c] sm:$0xf]
      %v191 = vld [vmem:[%s171 + $0x20] sm:$0xf]
      %v192 = vld [vmem:[%s171 + $0x24] sm:$0xf]
      %v193 = vld [vmem:[%s171 + $0x28] sm:$0xf]
      %v194 = vld [vmem:[%s171 + $0x2c] sm:$0xf]
      %v195 = vld [vmem:[%s171 + $0x30] sm:$0xf]
      %v196 = vld [vmem:[%s171 + $0x34] sm:$0xf]
      %v197 = vld [vmem:[%s171 + $0x38] sm:$0xf]
      %v198 = vld [vmem:[%s171 + $0x3c] sm:$0xf]
      %v199 = vld [vmem:[%s171 + $0x40] sm:$0xf]
      %v200 = vld [vmem:[%s171 + $0x44] sm:$0xf]
      %v201 = vld [vmem:[%s171 + $0x48] sm:$0xf]
      %v202 = vld [vmem:[%s171 + $0x4c] sm:$0xf]
      %v203 = vld [vmem:[%s171 + $0x50] sm:$0xf]
      %v204 = vld [vmem:[%s171 + $0x54] sm:$0xf]
      %v205 = vld [vmem:[%s171 + $0x58] sm:$0xf]
      %v206 = vld [vmem:[%s171 + $0x5c] sm:$0xf]
      %v207 = vld [vmem:[%s171 + $0x60] sm:$0xf]
      %v208 = vld [vmem:[%s171 + $0x64] sm:$0xf]
      %v209 = vld [vmem:[%s171 + $0x68] sm:$0xf]
      %v210 = vld [vmem:[%s171 + $0x6c] sm:$0xf]
      %v211 = vld [vmem:[%s171 + $0x70] sm:$0xf]
      %v212 = vld [vmem:[%s171 + $0x74] sm:$0xf]
      %v213 = vld [vmem:[%s171 + $0x78] sm:$0xf]
      %v214 = vld [vmem:[%s171 + $0x7c] sm:$0xf]
      %v215 = vunpack.c.l.bf16 %v183
      %v216 = vunpack.c.l.bf16 %v184
      %v217 = vunpack.c.l.bf16 %v185
      %v218 = vunpack.c.l.bf16 %v186
      %v219 = vunpack.c.l.bf16 %v187
      %v220 = vunpack.c.l.bf16 %v188
      %v221 = vunpack.c.l.bf16 %v189
      %v222 = vunpack.c.l.bf16 %v190
      %v223 = vunpack.c.l.bf16 %v191
      %v224 = vunpack.c.l.bf16 %v192
      %v225 = vunpack.c.l.bf16 %v193
      %v226 = vunpack.c.l.bf16 %v194
      %v227 = vunpack.c.l.bf16 %v195
      %v228 = vunpack.c.l.bf16 %v196
      %v229 = vunpack.c.l.bf16 %v197
      %v230 = vunpack.c.l.bf16 %v198
      %v231 = vunpack.c.l.bf16 %v199
      %v232 = vunpack.c.l.bf16 %v200
      %v233 = vunpack.c.l.bf16 %v201
      %v234 = vunpack.c.l.bf16 %v202
      %v235 = vunpack.c.l.bf16 %v203
      %v236 = vunpack.c.l.bf16 %v204
      %v237 = vunpack.c.l.bf16 %v205
      %v238 = vunpack.c.l.bf16 %v206
      %v239 = vunpack.c.l.bf16 %v207
      %v240 = vunpack.c.l.bf16 %v208
      %v241 = vunpack.c.l.bf16 %v209
      %v242 = vunpack.c.l.bf16 %v210
      %v243 = vunpack.c.l.bf16 %v211
      %v244 = vunpack.c.l.bf16 %v212
      %v245 = vunpack.c.l.bf16 %v213
      %v246 = vunpack.c.l.bf16 %v214
      %v247 = vld [vmem:[%s1] sm:$0x1]
      %v248 = vlaneseq
      %v249 = vshrl.u32 %v248, 7
      %v250 = vsub.s32 0, %v249
      %v251 = vrot.slane %v247, %v250
      %v252 = vmul.f32 %v215, %v251
      %v253 = vmul.f32 %v216, %v251
      %v254 = vmul.f32 %v217, %v251
      %v255 = vmul.f32 %v218, %v251
      %v256 = vmul.f32 %v219, %v251
      %v257 = vmul.f32 %v220, %v251
      %v258 = vmul.f32 %v221, %v251
      %v259 = vmul.f32 %v222, %v251
      %v260 = vmul.f32 %v223, %v251
      %v261 = vmul.f32 %v224, %v251
      %v262 = vmul.f32 %v225, %v251
      %v263 = vmul.f32 %v226, %v251
      %v264 = vmul.f32 %v227, %v251
      %v265 = vmul.f32 %v228, %v251
      %v266 = vmul.f32 %v229, %v251
      %v267 = vmul.f32 %v230, %v251
      %v268 = vmul.f32 %v231, %v251
      %v269 = vmul.f32 %v232, %v251
      %v270 = vmul.f32 %v233, %v251
      %v271 = vmul.f32 %v234, %v251
      %v272 = vmul.f32 %v235, %v251
      %v273 = vmul.f32 %v236, %v251
      %v274 = vmul.f32 %v237, %v251
      %v275 = vmul.f32 %v238, %v251
      %v276 = vmul.f32 %v239, %v251
      %v277 = vmul.f32 %v240, %v251
      %v278 = vmul.f32 %v241, %v251
      %v279 = vmul.f32 %v242, %v251
      %v280 = vmul.f32 %v243, %v251
      %v281 = vmul.f32 %v244, %v251
      %v282 = vmul.f32 %v245, %v251
      %v283 = vmul.f32 %v246, %v251
      %v284 = vld [vmem:[%s1 + $0x1] sm:$0x1]
      %v285 = vlaneseq
      %v286 = vshrl.u32 %v285, 7
      %v287 = vsub.s32 0, %v286
      %v288 = vrot.slane %v284, %v287
      %v289 = vadd.f32 %v252, %v288
      %v290 = vadd.f32 %v253, %v288
      %v291 = vadd.f32 %v254, %v288
      %v292 = vadd.f32 %v255, %v288
      %v293 = vadd.f32 %v256, %v288
      %v294 = vadd.f32 %v257, %v288
      %v295 = vadd.f32 %v258, %v288
      %v296 = vadd.f32 %v259, %v288
      %v297 = vadd.f32 %v260, %v288
      %v298 = vadd.f32 %v261, %v288
      %v299 = vadd.f32 %v262, %v288
      %v300 = vadd.f32 %v263, %v288
      %v301 = vadd.f32 %v264, %v288
      %v302 = vadd.f32 %v265, %v288
      %v303 = vadd.f32 %v266, %v288
      %v304 = vadd.f32 %v267, %v288
      %v305 = vadd.f32 %v268, %v288
      %v306 = vadd.f32 %v269, %v288
      %v307 = vadd.f32 %v270, %v288
      %v308 = vadd.f32 %v271, %v288
      %v309 = vadd.f32 %v272, %v288
      %v310 = vadd.f32 %v273, %v288
      %v311 = vadd.f32 %v274, %v288
      %v312 = vadd.f32 %v275, %v288
      %v313 = vadd.f32 %v276, %v288
      %v314 = vadd.f32 %v277, %v288
      %v315 = vadd.f32 %v278, %v288
      %v316 = vadd.f32 %v279, %v288
      %v317 = vadd.f32 %v280, %v288
      %v318 = vadd.f32 %v281, %v288
      %v319 = vadd.f32 %v282, %v288
      %v320 = vadd.f32 %v283, %v288
      %v321 = vmax.f32 %v289, 0.0
      %v322 = vmax.f32 %v290, 0.0
      %v323 = vmax.f32 %v291, 0.0
      %v324 = vmax.f32 %v292, 0.0
      %v325 = vmax.f32 %v293, 0.0
      %v326 = vmax.f32 %v294, 0.0
      %v327 = vmax.f32 %v295, 0.0
      %v328 = vmax.f32 %v296, 0.0
      %v329 = vmax.f32 %v297, 0.0
      %v330 = vmax.f32 %v298, 0.0
      %v331 = vmax.f32 %v299, 0.0
      %v332 = vmax.f32 %v300, 0.0
      %v333 = vmax.f32 %v301, 0.0
      %v334 = vmax.f32 %v302, 0.0
      %v335 = vmax.f32 %v303, 0.0
      %v336 = vmax.f32 %v304, 0.0
      %v337 = vmax.f32 %v305, 0.0
      %v338 = vmax.f32 %v306, 0.0
      %v339 = vmax.f32 %v307, 0.0
      %v340 = vmax.f32 %v308, 0.0
      %v341 = vmax.f32 %v309, 0.0
      %v342 = vmax.f32 %v310, 0.0
      %v343 = vmax.f32 %v311, 0.0
      %v344 = vmax.f32 %v312, 0.0
      %v345 = vmax.f32 %v313, 0.0
      %v346 = vmax.f32 %v314, 0.0
      %v347 = vmax.f32 %v315, 0.0
      %v348 = vmax.f32 %v316, 0.0
      %v349 = vmax.f32 %v317, 0.0
      %v350 = vmax.f32 %v318, 0.0
      %v351 = vmax.f32 %v319, 0.0
      %v352 = vmax.f32 %v320, 0.0
      %vm353 = vcmask 31744
      %354 = vst.msk [vmem:[%s181] sm:$0xff] %vm353, %v321
      %355 = vst.msk [vmem:[%s181 + $0x8] sm:$0xff] %vm353, %v322
      %356 = vst.msk [vmem:[%s181 + $0x10] sm:$0xff] %vm353, %v323
      %357 = vst.msk [vmem:[%s181 + $0x18] sm:$0xff] %vm353, %v324
      %358 = vst.msk [vmem:[%s181 + $0x20] sm:$0xff] %vm353, %v325
      %359 = vst.msk [vmem:[%s181 + $0x28] sm:$0xff] %vm353, %v326
      %360 = vst.msk [vmem:[%s181 + $0x30] sm:$0xff] %vm353, %v327
      %361 = vst.msk [vmem:[%s181 + $0x38] sm:$0xff] %vm353, %v328
      %362 = vst.msk [vmem:[%s181 + $0x40] sm:$0xff] %vm353, %v329
      %363 = vst.msk [vmem:[%s181 + $0x48] sm:$0xff] %vm353, %v330
      %364 = vst.msk [vmem:[%s181 + $0x50] sm:$0xff] %vm353, %v331
      %365 = vst.msk [vmem:[%s181 + $0x58] sm:$0xff] %vm353, %v332
      %366 = vst.msk [vmem:[%s181 + $0x60] sm:$0xff] %vm353, %v333
      %367 = vst.msk [vmem:[%s181 + $0x68] sm:$0xff] %vm353, %v334
      %368 = vst.msk [vmem:[%s181 + $0x70] sm:$0xff] %vm353, %v335
      %369 = vst.msk [vmem:[%s181 + $0x78] sm:$0xff] %vm353, %v336
      %370 = vst.msk [vmem:[%s181 + $0x80] sm:$0xff] %vm353, %v337
      %371 = vst.msk [vmem:[%s181 + $0x88] sm:$0xff] %vm353, %v338
      %372 = vst.msk [vmem:[%s181 + $0x90] sm:$0xff] %vm353, %v339
      %373 = vst.msk [vmem:[%s181 + $0x98] sm:$0xff] %vm353, %v340
      %374 = vst.msk [vmem:[%s181 + $0xa0] sm:$0xff] %vm353, %v341
      %375 = vst.msk [vmem:[%s181 + $0xa8] sm:$0xff] %vm353, %v342
      %376 = vst.msk [vmem:[%s181 + $0xb0] sm:$0xff] %vm353, %v343
      %377 = vst.msk [vmem:[%s181 + $0xb8] sm:$0xff] %vm353, %v344
      %378 = vst.msk [vmem:[%s181 + $0xc0] sm:$0xff] %vm353, %v345
      %379 = vst.msk [vmem:[%s181 + $0xc8] sm:$0xff] %vm353, %v346
      %380 = vst.msk [vmem:[%s181 + $0xd0] sm:$0xff] %vm353, %v347
      %381 = vst.msk [vmem:[%s181 + $0xd8] sm:$0xff] %vm353, %v348
      %382 = vst.msk [vmem:[%s181 + $0xe0] sm:$0xff] %vm353, %v349
      %383 = vst.msk [vmem:[%s181 + $0xe8] sm:$0xff] %vm353, %v350
      %384 = vst.msk [vmem:[%s181 + $0xf0] sm:$0xff] %vm353, %v351
      %385 = vst.msk [vmem:[%s181 + $0xf8] sm:$0xff] %vm353, %v352
      %s386 = smul.u32 32, %s18
      %p387 = scmp.lt.s32.totalorder %s17, 1
      %s388 = scalar_select %p387, %s17, 1
      %p389 = scmp.lt.s32.totalorder %s386, 31
      %s390 = scalar_select %p389, %s386, 31
      %s391 = smul.addr %s388, 32
      %s392 = sadd.s32 %s390, %s391
      %s393 = smul.addr %s392, 8
      %s394 = scalar_lea.vmem %s2, %s393
      // Predicated region
      $region29: #{upblock_forward.5} parent=27 // pred_check
        %p395 = pneg %p94
      $region30: #{upblock_forward.5} parent=27 // pred_check_branch
        %397 = sbr.rel (%p395) target = $region32
      $region31: #{upblock_forward.5} parent=27 // pred_region
        %s398 = smul.u32 32, %s18
      $region32: #{upblock_forward.5} parent=27 // pred_fallthru
        _
    $region28: #{upblock_forward.5} parent=5 // pred_fallthru
      _
    %p399 = scmp.le.s32.totalorder 2, %s8
    // Predicated region
    $region33: #{upblock_forward.5} parent=5 // pred_check
      %p400 = pneg %p399
    $region34: #{upblock_forward.5} parent=5 // pred_check_branch
      %402 = sbr.rel (%p400) target = $region36
    $region35: #{upblock_forward.5} parent=5 // pred_region
      %s403 = ssub.s32 %s8, 2
      // Predicated region
      $region37: #{upblock_forward.5} parent=35 // pred_check
        %p404 = pneg %p100
      $region38: #{upblock_forward.5} parent=35 // pred_check_branch
        %406 = sbr.rel (%p404) target = $region40
      $region39: #{upblock_forward.5} parent=35 // pred_region
        %s407 = smul.u32 32, %s20
        %p408 = scmp.lt.s32.totalorder %s19, 1
        %s409 = scalar_select %p408, %s19, 1
        %p410 = scmp.lt.s32.totalorder %s407, 31
        %s411 = scalar_select %p410, %s407, 31
        %s412 = smul.addr %s409, 32
        %s413 = sadd.s32 %s411, %s412
        %s414 = smul.addr %s413, 8
        %s415 = scalar_lea.vmem %s2, %s414
      $region40: #{upblock_forward.5} parent=35 // pred_fallthru
        _
    $region36: #{upblock_forward.5} parent=5 // pred_fallthru
      _
  $region6: #{upblock_forward.5} parent=0 // loop_footer
    %s12 = sadd.s32 1, %s8
  $region7: #{upblock_forward.5} parent=0 // loop_footer_branch
    %7 = sbr.rel target = $region3
  $region8: #{upblock_forward.5} parent=0 // loop_exit
    _

// kernel: upblock_forward.3
$region0: #{upblock_forward.3}
  #allocation0 [shape = 'u32[]', space=smem, size = 0x4, offset = 0x4, fixed_abs, tag = 'smem constant byte address 0x4 - core index']
  #allocation1 [shape = 'u32[144,128]{1,0:T(1,128)}', space=vmem, size = 0x12000, scoped, tag = 'internal scratch']
  #allocation2 [shape = 'bf16[304,128]{1,0:T(16,128)(2,1)}', space=vmem, size = 0x13000, scoped, tag = 'scratch operand']
  %s0 = inlined_call_operand.vmem [shape: bf16[2,256,128], index: 0, kind: input, shape index: {}, may-alias: {0,1,2}]
  %s1 = inlined_call_operand.vmem [shape: bf16[2,256,128], index: 1, kind: input, shape index: {}, may-alias: {0,1,2}]
  %s2 = inlined_call_operand.vmem [shape: bf16[2,256,128], index: 2, kind: input, shape index: {}, may-alias: {0,1,2}]
  %s3 = inlined_call_operand.vmem [shape: bf16[9,128,128], index: 3, kind: input, shape index: {}]
  %s4 = inlined_call_operand.vmem [shape: f32[2,128], index: 4, kind: input, shape index: {}]
  %s5 = inlined_call_operand.vmem [shape: bf16[2,256,128], index: 5, kind: output, shape index: {0}]
  %s6 = inlined_call_operand.vmem [shape: f32[2,2,128], index: 6, kind: output, shape index: {1}]
  %7 = xla_tuple %s5, %s6
  %s8 = sld [smem:[#allocation0]]
  $region77: #{upblock_forward.3} parent=0
    _
  %s10 = ssub.s32 1, %s8
  %s11 = scalar_select 0, %s10, %s8
  loop: start=0, step=1, limit=4
  $region2: #{upblock_forward.3} parent=0 // loop_pre_header
    _
  $region3: #{upblock_forward.3} parent=0 // loop_header
    %s13 = sphi 0, %s17
    %p14 = scmp.ge.s32.totalorder %s13, 4
    %s20 = sphi 0, %s32
    %s21 = sphi 0, %s28
    %s22 = sphi 0, %s20
    %s23 = sphi 0, %s21
    %s24 = sphi 0, %s22
    %s25 = sphi 0, %s23
    %s37 = sphi 0, %s39
    %s40 = sphi 0, %s37
    %s41 = sphi 0, %s40
    %s57 = sphi 0, %s41
    %s73 = sphi 0, %s75
    %s76 = sphi 0, %s73
    %s77 = sphi 0, %s76
    %s93 = sphi 0, %s77
    %s109 = sphi 0, %s111
    %s112 = sphi 0, %s109
    %s113 = sphi 0, %s112
    %s129 = sphi 0, %s113
    %s133 = sphi 0, %s133
    %s135 = sphi 0, %s133
    %s136 = sphi 0, %s135
    %s150 = sphi 0, %s136
    %s154 = sphi 0, %s154
    %s156 = sphi 0, %s154
    %s157 = sphi 0, %s156
    %s171 = sphi 0, %s157
    %s179 = sphi 0, %s181
    %s182 = sphi 0, %s179
    %s183 = sphi 0, %s182
    %s199 = sphi 0, %s183
    %s207 = sphi 0, %s209
    %s210 = sphi 0, %s207
    %s211 = sphi 0, %s210
    %s227 = sphi 0, %s211
  $region4: #{upblock_forward.3} parent=0 // loop_header_branch
    %16 = sbr.rel (%p14) target = $region8
  $region5: #{upblock_forward.3} parent=0 // loop_body
    %s18 = ssub.s32 %s13, 1
    %s19 = ssub.s32 %s13, 2
    %s26 = sadd.s32 1, %s21
    %p27 = scmp.ge.s32.totalorder %s26, 1
    %s28 = scalar_select %p27, 0, %s26
    %s29 = sadd.s32 1, %s20
    %s30 = scalar_select %p27, %s29, %s20
    %p31 = scmp.ge.s32.totalorder %s30, 2
    %s32 = scalar_select %p31, 0, %s30
    %s33 = ssub.s32 %s20, %s32
    %s34 = ssub.s32 %s21, %s28
    %s35 = sor.u32 %s33, %s34
    %p36 = scmp.eq.s32.totalorder %s35, 0
    %s38 = sadd.s32 %s37, 1
    %s39 = scalar_select %p36, %s37, %s38
    %p42 = pneg %p36
    %p43 = scmp.eq.s32.totalorder %s13, 1
    %p44 = por %p42, %p43
    %p45 = scmp.ne.s32.totalorder %s37, %s40
    %p46 = scmp.eq.s32.totalorder %s13, 0
    %p47 = por %p45, %p46
    %p48 = scmp.ne.s32.totalorder %s37, %s40
    %p49 = scmp.eq.s32.totalorder %s18, 1
    %p50 = por %p48, %p49
    %p51 = scmp.ne.s32.totalorder %s40, %s41
    %p52 = scmp.eq.s32.totalorder %s18, 0
    %p53 = por %p51, %p52
    %p54 = scmp.ne.s32.totalorder %s40, %s41
    %p55 = scmp.eq.s32.totalorder %s19, 1
    %p56 = por %p54, %p55
    %p58 = scmp.ne.s32.totalorder %s41, %s57
    %p59 = scmp.eq.s32.totalorder %s19, 0
    %p60 = por %p58, %p59
    %s61 = smul.u32 %s21, 16
    %s62 = ssub.s32 %s61, 1
    %p63 = scmp.gt.s32.totalorder %s62, 0
    %s64 = scalar_select %p63, %s62, 0
    %s65 = smul.u32 %s28, 16
    %s66 = ssub.s32 %s65, 1
    %p67 = scmp.gt.s32.totalorder %s66, 0
    %s68 = scalar_select %p67, %s66, 0
    %s69 = ssub.s32 %s20, %s32
    %s70 = ssub.s32 %s64, %s68
    %s71 = sor.u32 %s69, %s70
    %p72 = scmp.eq.s32.totalorder %s71, 0
    %s74 = sadd.s32 %s73, 1
    %s75 = scalar_select %p72, %s73, %s74
    %p78 = pneg %p72
    %p79 = scmp.eq.s32.totalorder %s13, 1
    %p80 = por %p78, %p79
    %p81 = scmp.ne.s32.totalorder %s73, %s76
    %p82 = scmp.eq.s32.totalorder %s13, 0
    %p83 = por %p81, %p82
    %p84 = scmp.ne.s32.totalorder %s73, %s76
    %p85 = scmp.eq.s32.totalorder %s18, 1
    %p86 = por %p84, %p85
    %p87 = scmp.ne.s32.totalorder %s76, %s77
    %p88 = scmp.eq.s32.totalorder %s18, 0
    %p89 = por %p87, %p88
    %p90 = scmp.ne.s32.totalorder %s76, %s77
    %p91 = scmp.eq.s32.totalorder %s19, 1
    %p92 = por %p90, %p91
    %p94 = scmp.ne.s32.totalorder %s77, %s93
    %p95 = scmp.eq.s32.totalorder %s19, 0
    %p96 = por %p94, %p95
    %s97 = sadd.s32 %s21, 1
    %s98 = smul.u32 %s97, 16
    %p99 = scmp.lt.s32.totalorder %s98, 15
    %s100 = scalar_select %p99, %s98, 15
    %s101 = sadd.s32 %s28, 1
    %s102 = smul.u32 %s101, 16
    %p103 = scmp.lt.s32.totalorder %s102, 15
    %s104 = scalar_select %p103, %s102, 15
    %s105 = ssub.s32 %s20, %s32
    %s106 = ssub.s32 %s100, %s104
    %s107 = sor.u32 %s105, %s106
    %p108 = scmp.eq.s32.totalorder %s107, 0
    %s110 = sadd.s32 %s109, 1
    %s111 = scalar_select %p108, %s109, %s110
    %p114 = pneg %p108
    %p115 = scmp.eq.s32.totalorder %s13, 1
    %p116 = por %p114, %p115
    %p117 = scmp.ne.s32.totalorder %s109, %s112
    %p118 = scmp.eq.s32.totalorder %s13, 0
    %p119 = por %p117, %p118
    %p120 = scmp.ne.s32.totalorder %s109, %s112
    %p121 = scmp.eq.s32.totalorder %s18, 1
    %p122 = por %p120, %p121
    %p123 = scmp.ne.s32.totalorder %s112, %s113
    %p124 = scmp.eq.s32.totalorder %s18, 0
    %p125 = por %p123, %p124
    %p126 = scmp.ne.s32.totalorder %s112, %s113
    %p127 = scmp.eq.s32.totalorder %s19, 1
    %p128 = por %p126, %p127
    %p130 = scmp.ne.s32.totalorder %s113, %s129
    %p131 = scmp.eq.s32.totalorder %s19, 0
    %p132 = por %p130, %p131
    %s134 = sadd.s32 %s133, 1
    %p137 = scmp.eq.s32.totalorder %s13, 1
    %p138 = scmp.ne.s32.totalorder %s133, %s135
    %p139 = scmp.eq.s32.totalorder %s13, 0
    %p140 = por %p138, %p139
    %p141 = scmp.ne.s32.totalorder %s133, %s135
    %p142 = scmp.eq.s32.totalorder %s18, 1
    %p143 = por %p141, %p142
    %p144 = scmp.ne.s32.totalorder %s135, %s136
    %p145 = scmp.eq.s32.totalorder %s18, 0
    %p146 = por %p144, %p145
    %p147 = scmp.ne.s32.totalorder %s135, %s136
    %p148 = scmp.eq.s32.totalorder %s19, 1
    %p149 = por %p147, %p148
    %p151 = scmp.ne.s32.totalorder %s136, %s150
    %p152 = scmp.eq.s32.totalorder %s19, 0
    %p153 = por %p151, %p152
    %s155 = sadd.s32 %s154, 1
    %p158 = scmp.eq.s32.totalorder %s13, 1
    %p159 = scmp.ne.s32.totalorder %s154, %s156
    %p160 = scmp.eq.s32.totalorder %s13, 0
    %p161 = por %p159, %p160
    %p162 = scmp.ne.s32.totalorder %s154, %s156
    %p163 = scmp.eq.s32.totalorder %s18, 1
    %p164 = por %p162, %p163
    %p165 = scmp.ne.s32.totalorder %s156, %s157
    %p166 = scmp.eq.s32.totalorder %s18, 0
    %p167 = por %p165, %p166
    %p168 = scmp.ne.s32.totalorder %s156, %s157
    %p169 = scmp.eq.s32.totalorder %s19, 1
    %p170 = por %p168, %p169
    %p172 = scmp.ne.s32.totalorder %s157, %s171
    %p173 = scmp.eq.s32.totalorder %s19, 0
    %p174 = por %p172, %p173
    %s175 = ssub.s32 %s20, %s32
    %s176 = ssub.s32 %s21, %s28
    %s177 = sor.u32 %s175, %s176
    %p178 = scmp.eq.s32.totalorder %s177, 0
    %s180 = sadd.s32 %s179, 1
    %s181 = scalar_select %p178, %s179, %s180
    %p184 = pneg %p178
    %p185 = scmp.eq.s32.totalorder %s13, 1
    %p186 = por %p184, %p185
    %p187 = scmp.ne.s32.totalorder %s179, %s182
    %p188 = scmp.eq.s32.totalorder %s13, 0
    %p189 = por %p187, %p188
    %p190 = scmp.ne.s32.totalorder %s179, %s182
    %p191 = scmp.eq.s32.totalorder %s18, 1
    %p192 = por %p190, %p191
    %p193 = scmp.ne.s32.totalorder %s182, %s183
    %p194 = scmp.eq.s32.totalorder %s18, 0
    %p195 = por %p193, %p194
    %p196 = scmp.ne.s32.totalorder %s182, %s183
    %p197 = scmp.eq.s32.totalorder %s19, 1
    %p198 = por %p196, %p197
    %p200 = scmp.ne.s32.totalorder %s183, %s199
    %p201 = scmp.eq.s32.totalorder %s19, 0
    %p202 = por %p200, %p201
    %s203 = sadd.s32 %s20, %s21
    %s204 = sadd.s32 %s32, %s28
    %s205 = ssub.s32 %s203, %s204
    %p206 = scmp.eq.s32.totalorder %s205, 0
    %s208 = sadd.s32 %s207, 1
    %s209 = scalar_select %p206, %s207, %s208
    %p212 = pneg %p206
    %p213 = scmp.eq.s32.totalorder %s13, 1
    %p214 = por %p212, %p213
    %p215 = scmp.ne.s32.totalorder %s207, %s210
    %p216 = scmp.eq.s32.totalorder %s13, 0
    %p217 = por %p215, %p216
    %p218 = scmp.ne.s32.totalorder %s207, %s210
    %p219 = scmp.eq.s32.totalorder %s18, 1
    %p220 = por %p218, %p219
    %p221 = scmp.ne.s32.totalorder %s210, %s211
    %p222 = scmp.eq.s32.totalorder %s18, 0
    %p223 = por %p221, %p222
    %p224 = scmp.ne.s32.totalorder %s210, %s211
    %p225 = scmp.eq.s32.totalorder %s19, 1
    %p226 = por %p224, %p225
    %p228 = scmp.ne.s32.totalorder %s211, %s227
    %p229 = scmp.eq.s32.totalorder %s19, 0
    %p230 = por %p228, %p229
    %p231 = scmp.le.s32.totalorder 1, %s13
    %p232 = scmp.lt.s32.totalorder %s13, 3
    %p233 = pnand %p231, %p232
    %p234 = pneg %p233
    // Predicated region
    $region9: #{upblock_forward.3} parent=5 // pred_check
      _
    $region10: #{upblock_forward.3} parent=5 // pred_check_branch
      %236 = sbr.rel (%p233) target = $region12
    $region11: #{upblock_forward.3} parent=5 // pred_region
      %s237 = ssub.s32 %s13, 1
      // Predicated region
      $region13: #{upblock_forward.3} parent=11 // pred_check
        %p238 = pneg %p146
      $region14: #{upblock_forward.3} parent=11 // pred_check_branch
        %240 = sbr.rel (%p238) target = $region16
      $region15: #{upblock_forward.3} parent=11 // pred_region
        _
      $region16: #{upblock_forward.3} parent=11 // pred_fallthru
        _
      // Predicated region
      $region17: #{upblock_forward.3} parent=11 // pred_check
        %p241 = pneg %p167
      $region18: #{upblock_forward.3} parent=11 // pred_check_branch
        %243 = sbr.rel (%p241) target = $region20
      $region19: #{upblock_forward.3} parent=11 // pred_region
        _
      $region20: #{upblock_forward.3} parent=11 // pred_fallthru
        _
    $region12: #{upblock_forward.3} parent=5 // pred_fallthru
      _
    %p244 = scmp.lt.s32.totalorder %s13, 2
    // Predicated region
    $region21: #{upblock_forward.3} parent=5 // pred_check
      %p245 = pneg %p244
    $region22: #{upblock_forward.3} parent=5 // pred_check_branch
      %247 = sbr.rel (%p245) target = $region24
    $region23: #{upblock_forward.3} parent=5 // pred_region
      // Predicated region
      $region25: #{upblock_forward.3} parent=23 // pred_check
        %p248 = pneg %p47
      $region26: #{upblock_forward.3} parent=23 // pred_check_branch
        %250 = sbr.rel (%p248) target = $region28
      $region27: #{upblock_forward.3} parent=23 // pred_region
        %s251 = smul.u32 32, %s21
        %p252 = scmp.lt.s32.totalorder %s20, 1
        %s253 = scalar_select %p252, %s20, 1
        %p254 = scmp.lt.s32.totalorder %s251, 31
        %s255 = scalar_select %p254, %s251, 31
        %s256 = smul.addr %s253, 32
        %s257 = sadd.s32 %s255, %s256
        %s258 = smul.addr %s257, 4
        %s259 = scalar_lea.vmem %s0, %s258
        %s260 = smul.u32 32, %s21
      $region28: #{upblock_forward.3} parent=23 // pred_fallthru
        _
      // Predicated region
      $region29: #{upblock_forward.3} parent=23 // pred_check
        %p261 = pneg %p83
      $region30: #{upblock_forward.3} parent=23 // pred_check_branch
        %263 = sbr.rel (%p261) target = $region32
      $region31: #{upblock_forward.3} parent=23 // pred_region
        %s264 = smul.u32 %s21, 16
        %s265 = ssub.s32 %s264, 1
        %p266 = scmp.gt.s32.totalorder %s265, 0
        %s267 = scalar_select %p266, %s265, 0
        %s268 = smul.u32 2, %s267
        %p269 = scmp.lt.s32.totalorder %s20, 1
        %s270 = scalar_select %p269, %s20, 1
        %p271 = scmp.lt.s32.totalorder %s268, 31
        %s272 = scalar_select %p271, %s268, 31
        %s273 = smul.addr %s270, 32
        %s274 = sadd.s32 %s272, %s273
        %s275 = smul.addr %s274, 4
        %s276 = scalar_lea.vmem %s1, %s275
        %s277 = smul.u32 %s21, 16
        %s278 = ssub.s32 %s277, 1
        %p279 = scmp.gt.s32.totalorder %s278, 0
        %s280 = scalar_select %p279, %s278, 0
        %s281 = smul.u32 2, %s280
      $region32: #{upblock_forward.3} parent=23 // pred_fallthru
        _
      // Predicated region
      $region33: #{upblock_forward.3} parent=23 // pred_check
        %p282 = pneg %p119
      $region34: #{upblock_forward.3} parent=23 // pred_check_branch
        %284 = sbr.rel (%p282) target = $region36
      $region35: #{upblock_forward.3} parent=23 // pred_region
        %s285 = sadd.s32 %s21, 1
        %s286 = smul.u32 %s285, 16
        %p287 = scmp.lt.s32.totalorder %s286, 15
        %s288 = scalar_select %p287, %s286, 15
        %s289 = smul.u32 2, %s288
        %p290 = scmp.lt.s32.totalorder %s20, 1
        %s291 = scalar_select %p290, %s20, 1
        %p292 = scmp.lt.s32.totalorder %s289, 31
        %s293 = scalar_select %p292, %s289, 31
        %s294 = smul.addr %s291, 32
        %s295 = sadd.s32 %s293, %s294
        %s296 = smul.addr %s295, 4
        %s297 = scalar_lea.vmem %s2, %s296
        %s298 = sadd.s32 %s21, 1
        %s299 = smul.u32 %s298, 16
        %p300 = scmp.lt.s32.totalorder %s299, 15
        %s301 = scalar_select %p300, %s299, 15
        %s302 = smul.u32 2, %s301
      $region36: #{upblock_forward.3} parent=23 // pred_fallthru
        _
    $region24: #{upblock_forward.3} parent=5 // pred_fallthru
      _
    %p303 = scmp.le.s32.totalorder 1, %s13
    %p304 = scmp.lt.s32.totalorder %s13, 3
    %p305 = pnand %p303, %p304
    %p306 = pneg %p305
    // Predicated region
    $region37: #{upblock_forward.3} parent=5 // pred_check
      _
    $region38: #{upblock_forward.3} parent=5 // pred_check_branch
      %308 = sbr.rel (%p305) target = $region40
    $region39: #{upblock_forward.3} parent=5 // pred_region
      %s309 = ssub.s32 %s13, 1
      %s310 = smul.u32 32, %s23
      %p311 = scmp.lt.s32.totalorder %s22, 1
      %s312 = scalar_select %p311, %s22, 1
      %p313 = scmp.lt.s32.totalorder %s310, 31
      %s314 = scalar_select %p313, %s310, 31
      %s315 = smul.addr %s312, 32
      %s316 = sadd.s32 %s314, %s315
      %s317 = smul.addr %s316, 4
      %s318 = scalar_lea.vmem %s0, %s317
      %p319 = pneg %p53
      %p320 = pneg %p50
      %s321 = smul.u32 %s23, 16
      %s322 = ssub.s32 %s321, 1
      %p323 = scmp.gt.s32.totalorder %s322, 0
      %s324 = scalar_select %p323, %s322, 0
      %s325 = smul.u32 2, %s324
      %p326 = scmp.lt.s32.totalorder %s22, 1
      %s327 = scalar_select %p326, %s22, 1
      %p328 = scmp.lt.s32.totalorder %s325, 31
      %s329 = scalar_select %p328, %s325, 31
      %s330 = smul.addr %s327, 32
      %s331 = sadd.s32 %s329, %s330
      %s332 = smul.addr %s331, 4
      %s333 = scalar_lea.vmem %s1, %s332
      %p334 = pneg %p89
      %p335 = pneg %p86
      %s336 = sadd.s32 %s23, 1
      %s337 = smul.u32 %s336, 16
      %p338 = scmp.lt.s32.totalorder %s337, 15
      %s339 = scalar_select %p338, %s337, 15
      %s340 = smul.u32 2, %s339
      %p341 = scmp.lt.s32.totalorder %s22, 1
      %s342 = scalar_select %p341, %s22, 1
      %p343 = scmp.lt.s32.totalorder %s340, 31
      %s344 = scalar_select %p343, %s340, 31
      %s345 = smul.addr %s342, 32
      %s346 = sadd.s32 %s344, %s345
      %s347 = smul.addr %s346, 4
      %s348 = scalar_lea.vmem %s2, %s347
      %p349 = pneg %p125
      %p350 = pneg %p122
      %p351 = pneg %p146
      %p352 = pneg %p143
      %p353 = pneg %p167
      %p354 = pneg %p164
      %p355 = pneg %p195
      %p356 = pneg %p192
      %s357 = smul.u32 32, %s23
      %p358 = scmp.lt.s32.totalorder %s22, 1
      %s359 = scalar_select %p358, %s22, 1
      %p360 = scmp.lt.s32.totalorder %s357, 31
      %s361 = scalar_select %p360, %s357, 31
      %s362 = smul.addr %s359, 32
      %s363 = sadd.s32 %s361, %s362
      %s364 = smul.addr %s363, 4
      %s365 = scalar_lea.vmem %s5, %s364
      %p366 = pneg %p223
      %p367 = pneg %p220
      %s368 = sadd.s32 %s22, %s23
      %p369 = scmp.lt.s32.totalorder %s368, 1
      %s370 = scalar_select %p369, %s368, 1
      %s371 = smul.addr %s370, 2
      %s372 = scalar_lea.vmem %s6, %s371
      %s373 = smul.u32 32, %s23
      %p374 = scmp.lt.s32.totalorder %s22, 1
      %s375 = scalar_select %p374, %s22, 1
      %p376 = scmp.lt.s32.totalorder %s373, 31
      %s377 = scalar_select %p376, %s373, 31
      %s378 = smul.addr %s375, 32
      %s379 = sadd.s32 %s377, %s378
      %s380 = smul.addr %s379, 4
      %s381 = scalar_lea.vmem %s0, %s380
      %s382 = smul.u32 32, %s23
      %s383 = smul.u32 %s23, 16
      %s384 = ssub.s32 %s383, 1
      %p385 = scmp.gt.s32.totalorder %s384, 0
      %s386 = scalar_select %p385, %s384, 0
      %s387 = smul.u32 2, %s386
      %p388 = scmp.lt.s32.totalorder %s22, 1
      %s389 = scalar_select %p388, %s22, 1
      %p390 = scmp.lt.s32.totalorder %s387, 31
      %s391 = scalar_select %p390, %s387, 31
      %s392 = smul.addr %s389, 32
      %s393 = sadd.s32 %s391, %s392
      %s394 = smul.addr %s393, 4
      %s395 = scalar_lea.vmem %s1, %s394
      %s396 = smul.u32 %s23, 16
      %s397 = ssub.s32 %s396, 1
      %p398 = scmp.gt.s32.totalorder %s397, 0
      %s399 = scalar_select %p398, %s397, 0
      %s400 = smul.u32 2, %s399
      %s401 = sadd.s32 %s23, 1
      %s402 = smul.u32 %s401, 16
      %p403 = scmp.lt.s32.totalorder %s402, 15
      %s404 = scalar_select %p403, %s402, 15
      %s405 = smul.u32 2, %s404
      %p406 = scmp.lt.s32.totalorder %s22, 1
      %s407 = scalar_select %p406, %s22, 1
      %p408 = scmp.lt.s32.totalorder %s405, 31
      %s409 = scalar_select %p408, %s405, 31
      %s410 = smul.addr %s407, 32
      %s411 = sadd.s32 %s409, %s410
      %s412 = smul.addr %s411, 4
      %s413 = scalar_lea.vmem %s2, %s412
      %s414 = sadd.s32 %s23, 1
      %s415 = smul.u32 %s414, 16
      %p416 = scmp.lt.s32.totalorder %s415, 15
      %s417 = scalar_select %p416, %s415, 15
      %s418 = smul.u32 2, %s417
      %s419 = smul.u32 32, %s23
      %p420 = scmp.lt.s32.totalorder %s22, 1
      %s421 = scalar_select %p420, %s22, 1
      %p422 = scmp.lt.s32.totalorder %s419, 31
      %s423 = scalar_select %p422, %s419, 31
      %s424 = smul.addr %s421, 32
      %s425 = sadd.s32 %s423, %s424
      %s426 = smul.addr %s425, 4
      %s427 = scalar_lea.vmem %s5, %s426
      %s428 = smul.u32 32, %s23
      %s429 = sadd.s32 %s22, %s23
      %p430 = scmp.lt.s32.totalorder %s429, 1
      %s431 = scalar_select %p430, %s429, 1
      %s432 = smul.addr %s431, 2
      %s433 = scalar_lea.vmem %s6, %s432
      %s434 = sadd.s32 %s22, %s23
      %v438 = vld [vmem:[%s381] sm:$0xf]
      %v439 = vld [vmem:[%s381 + $0x4] sm:$0xf]
      %v440 = vld [vmem:[%s381 + $0x8] sm:$0xf]
      %v441 = vld [vmem:[%s381 + $0xc] sm:$0xf]
      %v442 = vld [vmem:[%s381 + $0x10] sm:$0xf]
      %v443 = vld [vmem:[%s381 + $0x14] sm:$0xf]
      %v444 = vld [vmem:[%s381 + $0x18] sm:$0xf]
      %v445 = vld [vmem:[%s381 + $0x1c] sm:$0xf]
      %v446 = vld [vmem:[%s381 + $0x20] sm:$0xf]
      %v447 = vld [vmem:[%s381 + $0x24] sm:$0xf]
      %v448 = vld [vmem:[%s381 + $0x28] sm:$0xf]
      %v449 = vld [vmem:[%s381 + $0x2c] sm:$0xf]
      %v450 = vld [vmem:[%s381 + $0x30] sm:$0xf]
      %v451 = vld [vmem:[%s381 + $0x34] sm:$0xf]
      %v452 = vld [vmem:[%s381 + $0x38] sm:$0xf]
      %v453 = vld [vmem:[%s381 + $0x3c] sm:$0xf]
      %v454 = vld [vmem:[%s381 + $0x40] sm:$0xf]
      %v455 = vld [vmem:[%s381 + $0x44] sm:$0xf]
      %v456 = vld [vmem:[%s381 + $0x48] sm:$0xf]
      %v457 = vld [vmem:[%s381 + $0x4c] sm:$0xf]
      %v458 = vld [vmem:[%s381 + $0x50] sm:$0xf]
      %v459 = vld [vmem:[%s381 + $0x54] sm:$0xf]
      %v460 = vld [vmem:[%s381 + $0x58] sm:$0xf]
      %v461 = vld [vmem:[%s381 + $0x5c] sm:$0xf]
      %v462 = vld [vmem:[%s381 + $0x60] sm:$0xf]
      %v463 = vld [vmem:[%s381 + $0x64] sm:$0xf]
      %v464 = vld [vmem:[%s381 + $0x68] sm:$0xf]
      %v465 = vld [vmem:[%s381 + $0x6c] sm:$0xf]
      %v466 = vld [vmem:[%s381 + $0x70] sm:$0xf]
      %v467 = vld [vmem:[%s381 + $0x74] sm:$0xf]
      %v468 = vld [vmem:[%s381 + $0x78] sm:$0xf]
      %v469 = vld [vmem:[%s381 + $0x7c] sm:$0xf]
      %v502 = vunpack.c.l.b16 %v438
      %v503 = vunpack.c.l.b16 %v439
      %v504 = vunpack.c.l.b16 %v440
      %v505 = vunpack.c.l.b16 %v441
      %v506 = vunpack.c.l.b16 %v442
      %v507 = vunpack.c.l.b16 %v443
      %v508 = vunpack.c.l.b16 %v444
      %v509 = vunpack.c.l.b16 %v445
      %v510 = vunpack.c.l.b16 %v446
      %v511 = vunpack.c.l.b16 %v447
      %v512 = vunpack.c.l.b16 %v448
      %v513 = vunpack.c.l.b16 %v449
      %v514 = vunpack.c.l.b16 %v450
      %v515 = vunpack.c.l.b16 %v451
      %v516 = vunpack.c.l.b16 %v452
      %v517 = vunpack.c.l.b16 %v453
      %v518 = vunpack.c.l.b16 %v454
      %v519 = vunpack.c.l.b16 %v455
      %v520 = vunpack.c.l.b16 %v456
      %v521 = vunpack.c.l.b16 %v457
      %v522 = vunpack.c.l.b16 %v458
      %v523 = vunpack.c.l.b16 %v459
      %v524 = vunpack.c.l.b16 %v460
      %v525 = vunpack.c.l.b16 %v461
      %v526 = vunpack.c.l.b16 %v462
      %v527 = vunpack.c.l.b16 %v463
      %v528 = vunpack.c.l.b16 %v464
      %v529 = vunpack.c.l.b16 %v465
      %v530 = vunpack.c.l.b16 %v466
      %v531 = vunpack.c.l.b16 %v467
      %v532 = vunpack.c.l.b16 %v468
      %v533 = vunpack.c.l.b16 %v469
      %v534 = vpack.c.b16 %v502, %v502
      %v535 = vpack.c.b16 %v504, %v503
      %v536 = vpack.c.b16 %v506, %v505
      %v537 = vpack.c.b16 %v508, %v507
      %v538 = vpack.c.b16 %v510, %v509
      %v539 = vpack.c.b16 %v512, %v511
      %v540 = vpack.c.b16 %v514, %v513
      %v541 = vpack.c.b16 %v516, %v515
      %v542 = vpack.c.b16 %v518, %v517
      %v543 = vpack.c.b16 %v520, %v519
      %v544 = vpack.c.b16 %v522, %v521
      %v545 = vpack.c.b16 %v524, %v523
      %v546 = vpack.c.b16 %v526, %v525
      %v547 = vpack.c.b16 %v528, %v527
      %v548 = vpack.c.b16 %v530, %v529
      %v549 = vpack.c.b16 %v532, %v531
      %v550 = vpack.c.b16 %v533, %v533
      %568 = vst [vmem:[#allocation2 + $0x8] sm:$0xf0] %v534
      %569 = vst [vmem:[#allocation2 + $0x10] sm:$0xff] %v535
      %570 = vst [vmem:[#allocation2 + $0x18] sm:$0xff] %v536
      %571 = vst [vmem:[#allocation2 + $0x20] sm:$0xff] %v537
      %572 = vst [vmem:[#allocation2 + $0x28] sm:$0xff] %v538
      %573 = vst [vmem:[#allocation2 + $0x30] sm:$0xff] %v539
      %574 = vst [vmem:[#allocation2 + $0x38] sm:$0xff] %v540
      %575 = vst [vmem:[#allocation2 + $0x40] sm:$0xff] %v541
      %576 = vst [vmem:[#allocation2 + $0x48] sm:$0xff] %v542
      %577 = vst [vmem:[#allocation2 + $0x50] sm:$0xff] %v543
      %578 = vst [vmem:[#allocation2 + $0x58] sm:$0xff] %v544
      %579 = vst [vmem:[#allocation2 + $0x60] sm:$0xff] %v545
      %580 = vst [vmem:[#allocation2 + $0x68] sm:$0xff] %v546
      %581 = vst [vmem:[#allocation2 + $0x70] sm:$0xff] %v547
      %582 = vst [vmem:[#allocation2 + $0x78] sm:$0xff] %v548
      %583 = vst [vmem:[#allocation2 + $0x80] sm:$0xff] %v549
      %584 = vst [vmem:[#allocation2 + $0x88] sm:$0xf] %v550
      %p585 = scmp.eq.s32.totalorder %s23, 0
      // Predicated region
      $region41: #{upblock_forward.3} parent=39 // pred_check
        %p586 = pneg %p585
      $region42: #{upblock_forward.3} parent=39 // pred_check_branch
        %588 = sbr.rel (%p586) target = $region44
      $region43: #{upblock_forward.3} parent=39 // pred_region
        %589 = vst [vmem:[#allocation2] sm:$0xf0] 0
        %590 = vst [vmem:[#allocation2 + $0x8] sm:$0xf] 0
      $region44: #{upblock_forward.3} parent=39 // pred_fallthru
        _
      %p591 = scmp.gt.s32.totalorder %s23, 0
      // Predicated region
      $region45: #{upblock_forward.3} parent=39 // pred_check
        %p592 = pneg %p591
      $region46: #{upblock_forward.3} parent=39 // pred_check_branch
        %594 = sbr.rel (%p592) target = $region48
      $region47: #{upblock_forward.3} parent=39 // pred_region
        %v595 = vld [vmem:[%s395] sm:$0xf]
        %v596 = vld [vmem:[%s395 + $0x4] sm:$0xf]
        %v599 = vunpack.c.l.b16 %v595
        %v600 = vunpack.c.l.b16 %v596
        %v601 = vpack.c.b16 %v599, %v599
        %v602 = vpack.c.b16 %v600, %v600
        %605 = vst [vmem:[#allocation2] sm:$0xf0] %v601
        %606 = vst [vmem:[#allocation2 + $0x8] sm:$0xf] %v602
      $region48: #{upblock_forward.3} parent=39 // pred_fallthru
        _
      // Predicated region
      $region49: #{upblock_forward.3} parent=39 // pred_check
        %p607 = pneg %p585
      $region50: #{upblock_forward.3} parent=39 // pred_check_branch
        %609 = sbr.rel (%p607) target = $region52
      $region51: #{upblock_forward.3} parent=39 // pred_region
        %610 = vst [vmem:[#allocation2 + $0x88] sm:$0xf0] 0
        %611 = vst [vmem:[#allocation2 + $0x90] sm:$0xf] 0
      $region52: #{upblock_forward.3} parent=39 // pred_fallthru
        _
      %p612 = scmp.lt.s32.totalorder %s23, 0
      // Predicated region
      $region53: #{upblock_forward.3} parent=39 // pred_check
        %p613 = pneg %p612
      $region54: #{upblock_forward.3} parent=39 // pred_check_branch
        %615 = sbr.rel (%p613) target = $region56
      $region55: #{upblock_forward.3} parent=39 // pred_region
        %v616 = vld [vmem:[%s413] sm:$0xf]
        %v617 = vld [vmem:[%s413 + $0x4] sm:$0xf]
        %v620 = vunpack.c.l.b16 %v616
        %v621 = vunpack.c.l.b16 %v617
        %v622 = vpack.c.b16 %v620, %v620
        %v623 = vpack.c.b16 %v621, %v621
        %626 = vst [vmem:[#allocation2 + $0x88] sm:$0xf0] %v622
        %627 = vst [vmem:[#allocation2 + $0x90] sm:$0xf] %v623
      $region56: #{upblock_forward.3} parent=39 // pred_fallthru
        _
      %v628 = vlaneseq
      %v629 = vshrl.u32 %v628, 7
      %v630 = vadd.s32 %v629, 8
      %v631 = vadd.s32 %v629, 16
      %v632 = vadd.s32 %v629, 24
      %v633 = vadd.s32 %v629, 32
      %v634 = vadd.s32 %v629, 40
      %v635 = vadd.s32 %v629, 48
      %v636 = vadd.s32 %v629, 56
      %v637 = vadd.s32 %v629, 64
      %v638 = vadd.s32 %v629, 72
      %v639 = vadd.s32 %v629, 80
      %v640 = vadd.s32 %v629, 88
      %v641 = vadd.s32 %v629, 96
      %v642 = vadd.s32 %v629, 104
      %v643 = vadd.s32 %v629, 112
      %v644 = vadd.s32 %v629, 120
      %v645 = vadd.s32 %v629, 128
      %v646 = vadd.s32 %v629, 136
      %v647 = vadd.s32 %v629, 144
      %v648 = vadd.s32 %v629, 152
      %v649 = vadd.s32 %v629, 160
      %v650 = vadd.s32 %v629, 168
      %v651 = vadd.s32 %v629, 176
      %v652 = vadd.s32 %v629, 184
      %v653 = vadd.s32 %v629, 192
      %v654 = vadd.s32 %v629, 200
      %v655 = vadd.s32 %v629, 208
      %v656 = vadd.s32 %v629, 216
      %v657 = vadd.s32 %v629, 224
      %v658 = vadd.s32 %v629, 232
      %v659 = vadd.s32 %v629, 240
      %v660 = vadd.s32 %v629, 248
      %vm661 = vcmp.lt.s32.totalorder %v629, 0
      %v662 = vsub.s32 0, %v629
      %v663 = vsel %vm661, %v662, %v629
      %v664 = vshrl.u32 %v663, 4
      %v665 = vand.u32 %v663, 15
      %v666 = vsub.s32 0, %v665
      %v667 = vsel %vm661, %v666, %v665
      %vm668 = vcmp.lt.s32.totalorder %v630, 0
      %v669 = vsub.s32 0, %v630
      %v670 = vsel %vm668, %v669, %v630
      %v671 = vshrl.u32 %v670, 4
      %v672 = vand.u32 %v670, 15
      %v673 = vsub.s32 0, %v672
      %v674 = vsel %vm668, %v673, %v672
      %vm675 = vcmp.lt.s32.totalorder %v631, 0
      %v676 = vsub.s32 0, %v631
      %v677 = vsel %vm675, %v676, %v631
      %v678 = vshrl.u32 %v677, 4
      %v679 = vand.u32 %v677, 15
      %v680 = vsub.s32 0, %v679
      %v681 = vsel %vm675, %v680, %v679
      %vm682 = vcmp.lt.s32.totalorder %v632, 0
      %v683 = vsub.s32 0, %v632
      %v684 = vsel %vm682, %v683, %v632
      %v685 = vshrl.u32 %v684, 4
      %v686 = vand.u32 %v684, 15
      %v687 = vsub.s32 0, %v686
      %v688 = vsel %vm682, %v687, %v686
      %vm689 = vcmp.lt.s32.totalorder %v633, 0
      %v690 = vsub.s32 0, %v633
      %v691 = vsel %vm689, %v690, %v633
      %v692 = vshrl.u32 %v691, 4
      %v693 = vand.u32 %v691, 15
      %v694 = vsub.s32 0, %v693
      %v695 = vsel %vm689, %v694, %v693
      %vm696 = vcmp.lt.s32.totalorder %v634, 0
      %v697 = vsub.s32 0, %v634
      %v698 = vsel %vm696, %v697, %v634
      %v699 = vshrl.u32 %v698, 4
      %v700 = vand.u32 %v698, 15
      %v701 = vsub.s32 0, %v700
      %v702 = vsel %vm696, %v701, %v700
      %vm703 = vcmp.lt.s32.totalorder %v635, 0
      %v704 = vsub.s32 0, %v635
      %v705 = vsel %vm703, %v704, %v635
      %v706 = vshrl.u32 %v705, 4
      %v707 = vand.u32 %v705, 15
      %v708 = vsub.s32 0, %v707
      %v709 = vsel %vm703, %v708, %v707
      %vm710 = vcmp.lt.s32.totalorder %v636, 0
      %v711 = vsub.s32 0, %v636
      %v712 = vsel %vm710, %v711, %v636
      %v713 = vshrl.u32 %v712, 4
      %v714 = vand.u32 %v712, 15
      %v715 = vsub.s32 0, %v714
      %v716 = vsel %vm710, %v715, %v714
      %vm717 = vcmp.lt.s32.totalorder %v637, 0
      %v718 = vsub.s32 0, %v637
      %v719 = vsel %vm717, %v718, %v637
      %v720 = vshrl.u32 %v719, 4
      %v721 = vand.u32 %v719, 15
      %v722 = vsub.s32 0, %v721
      %v723 = vsel %vm717, %v722, %v721
      %vm724 = vcmp.lt.s32.totalorder %v638, 0
      %v725 = vsub.s32 0, %v638
      %v726 = vsel %vm724, %v725, %v638
      %v727 = vshrl.u32 %v726, 4
      %v728 = vand.u32 %v726, 15
      %v729 = vsub.s32 0, %v728
      %v730 = vsel %vm724, %v729, %v728
      %vm731 = vcmp.lt.s32.totalorder %v639, 0
      %v732 = vsub.s32 0, %v639
      %v733 = vsel %vm731, %v732, %v639
      %v734 = vshrl.u32 %v733, 4
      %v735 = vand.u32 %v733, 15
      %v736 = vsub.s32 0, %v735
      %v737 = vsel %vm731, %v736, %v735
      %vm738 = vcmp.lt.s32.totalorder %v640, 0
      %v739 = vsub.s32 0, %v640
      %v740 = vsel %vm738, %v739, %v640
      %v741 = vshrl.u32 %v740, 4
      %v742 = vand.u32 %v740, 15
      %v743 = vsub.s32 0, %v742
      %v744 = vsel %vm738, %v743, %v742
      %vm745 = vcmp.lt.s32.totalorder %v641, 0
      %v746 = vsub.s32 0, %v641
      %v747 = vsel %vm745, %v746, %v641
      %v748 = vshrl.u32 %v747, 4
      %v749 = vand.u32 %v747, 15
      %v750 = vsub.s32 0, %v749
      %v751 = vsel %vm745, %v750, %v749
      %vm752 = vcmp.lt.s32.totalorder %v642, 0
      %v753 = vsub.s32 0, %v642
      %v754 = vsel %vm752, %v753, %v642
      %v755 = vshrl.u32 %v754, 4
      %v756 = vand.u32 %v754, 15
      %v757 = vsub.s32 0, %v756
      %v758 = vsel %vm752, %v757, %v756
      %vm759 = vcmp.lt.s32.totalorder %v643, 0
      %v760 = vsub.s32 0, %v643
      %v761 = vsel %vm759, %v760, %v643
      %v762 = vshrl.u32 %v761, 4
      %v763 = vand.u32 %v761, 15
      %v764 = vsub.s32 0, %v763
      %v765 = vsel %vm759, %v764, %v763
      %vm766 = vcmp.lt.s32.totalorder %v644, 0
      %v767 = vsub.s32 0, %v644
      %v768 = vsel %vm766, %v767, %v644
      %v769 = vshrl.u32 %v768, 4
      %v770 = vand.u32 %v768, 15
      %v771 = vsub.s32 0, %v770
      %v772 = vsel %vm766, %v771, %v770
      %vm773 = vcmp.lt.s32.totalorder %v645, 0
      %v774 = vsub.s32 0, %v645
      %v775 = vsel %vm773, %v774, %v645
      %v776 = vshrl.u32 %v775, 4
      %v777 = vand.u32 %v775, 15
      %v778 = vsub.s32 0, %v777
      %v779 = vsel %vm773, %v778, %v777
      %vm780 = vcmp.lt.s32.totalorder %v646, 0
      %v781 = vsub.s32 0, %v646
      %v782 = vsel %vm780, %v781, %v646
      %v783 = vshrl.u32 %v782, 4
      %v784 = vand.u32 %v782, 15
      %v785 = vsub.s32 0, %v784
      %v786 = vsel %vm780, %v785, %v784
      %vm787 = vcmp.lt.s32.totalorder %v647, 0
      %v788 = vsub.s32 0, %v647
      %v789 = vsel %vm787, %v788, %v647
      %v790 = vshrl.u32 %v789, 4
      %v791 = vand.u32 %v789, 15
      %v792 = vsub.s32 0, %v791
      %v793 = vsel %vm787, %v792, %v791
      %vm794 = vcmp.lt.s32.totalorder %v648, 0
      %v795 = vsub.s32 0, %v648
      %v796 = vsel %vm794, %v795, %v648
      %v797 = vshrl.u32 %v796, 4
      %v798 = vand.u32 %v796, 15
      %v799 = vsub.s32 0, %v798
      %v800 = vsel %vm794, %v799, %v798
      %vm801 = vcmp.lt.s32.totalorder %v649, 0
      %v802 = vsub.s32 0, %v649
      %v803 = vsel %vm801, %v802, %v649
      %v804 = vshrl.u32 %v803, 4
      %v805 = vand.u32 %v803, 15
      %v806 = vsub.s32 0, %v805
      %v807 = vsel %vm801, %v806, %v805
      %vm808 = vcmp.lt.s32.totalorder %v650, 0
      %v809 = vsub.s32 0, %v650
      %v810 = vsel %vm808, %v809, %v650
      %v811 = vshrl.u32 %v810, 4
      %v812 = vand.u32 %v810, 15
      %v813 = vsub.s32 0, %v812
      %v814 = vsel %vm808, %v813, %v812
      %vm815 = vcmp.lt.s32.totalorder %v651, 0
      %v816 = vsub.s32 0, %v651
      %v817 = vsel %vm815, %v816, %v651
      %v818 = vshrl.u32 %v817, 4
      %v819 = vand.u32 %v817, 15
      %v820 = vsub.s32 0, %v819
      %v821 = vsel %vm815, %v820, %v819
      %vm822 = vcmp.lt.s32.totalorder %v652, 0
      %v823 = vsub.s32 0, %v652
      %v824 = vsel %vm822, %v823, %v652
      %v825 = vshrl.u32 %v824, 4
      %v826 = vand.u32 %v824, 15
      %v827 = vsub.s32 0, %v826
      %v828 = vsel %vm822, %v827, %v826
      %vm829 = vcmp.lt.s32.totalorder %v653, 0
      %v830 = vsub.s32 0, %v653
      %v831 = vsel %vm829, %v830, %v653
      %v832 = vshrl.u32 %v831, 4
      %v833 = vand.u32 %v831, 15
      %v834 = vsub.s32 0, %v833
      %v835 = vsel %vm829, %v834, %v833
      %vm836 = vcmp.lt.s32.totalorder %v654, 0
      %v837 = vsub.s32 0, %v654
      %v838 = vsel %vm836, %v837, %v654
      %v839 = vshrl.u32 %v838, 4
      %v840 = vand.u32 %v838, 15
      %v841 = vsub.s32 0, %v840
      %v842 = vsel %vm836, %v841, %v840
      %vm843 = vcmp.lt.s32.totalorder %v655, 0
      %v844 = vsub.s32 0, %v655
      %v845 = vsel %vm843, %v844, %v655
      %v846 = vshrl.u32 %v845, 4
      %v847 = vand.u32 %v845, 15
      %v848 = vsub.s32 0, %v847
      %v849 = vsel %vm843, %v848, %v847
      %vm850 = vcmp.lt.s32.totalorder %v656, 0
      %v851 = vsub.s32 0, %v656
      %v852 = vsel %vm850, %v851, %v656
      %v853 = vshrl.u32 %v852, 4
      %v854 = vand.u32 %v852, 15
      %v855 = vsub.s32 0, %v854
      %v856 = vsel %vm850, %v855, %v854
      %vm857 = vcmp.lt.s32.totalorder %v657, 0
      %v858 = vsub.s32 0, %v657
      %v859 = vsel %vm857, %v858, %v657
      %v860 = vshrl.u32 %v859, 4
      %v861 = vand.u32 %v859, 15
      %v862 = vsub.s32 0, %v861
      %v863 = vsel %vm857, %v862, %v861
      %vm864 = vcmp.lt.s32.totalorder %v658, 0
      %v865 = vsub.s32 0, %v658
      %v866 = vsel %vm864, %v865, %v658
      %v867 = vshrl.u32 %v866, 4
      %v868 = vand.u32 %v866, 15
      %v869 = vsub.s32 0, %v868
      %v870 = vsel %vm864, %v869, %v868
      %vm871 = vcmp.lt.s32.totalorder %v659, 0
      %v872 = vsub.s32 0, %v659
      %v873 = vsel %vm871, %v872, %v659
      %v874 = vshrl.u32 %v873, 4
      %v875 = vand.u32 %v873, 15
      %v876 = vsub.s32 0, %v875
      %v877 = vsel %vm871, %v876, %v875
      %vm878 = vcmp.lt.s32.totalorder %v660, 0
      %v879 = vsub.s32 0, %v660
      %v880 = vsel %vm878, %v879, %v660
      %v881 = vshrl.u32 %v880, 4
      %v882 = vand.u32 %v880, 15
      %v883 = vsub.s32 0, %v882
      %v884 = vsel %vm878, %v883, %v882
      %vm885 = vcmp.ne.s32.totalorder %v667, 0
      %vm886 = vcmp.ne.s32.totalorder %v674, 0
      %vm887 = vcmp.ne.s32.totalorder %v681, 0
      %vm888 = vcmp.ne.s32.totalorder %v688, 0
      %vm889 = vcmp.ne.s32.totalorder %v695, 0
      %vm890 = vcmp.ne.s32.totalorder %v702, 0
      %vm891 = vcmp.ne.s32.totalorder %v709, 0
      %vm892 = vcmp.ne.s32.totalorder %v716, 0
      %vm893 = vcmp.ne.s32.totalorder %v723, 0
      %vm894 = vcmp.ne.s32.totalorder %v730, 0
      %vm895 = vcmp.ne.s32.totalorder %v737, 0
      %vm896 = vcmp.ne.s32.totalorder %v744, 0
      %vm897 = vcmp.ne.s32.totalorder %v751, 0
      %vm898 = vcmp.ne.s32.totalorder %v758, 0
      %vm899 = vcmp.ne.s32.totalorder %v765, 0
      %vm900 = vcmp.ne.s32.totalorder %v772, 0
      %vm901 = vcmp.ne.s32.totalorder %v779, 0
      %vm902 = vcmp.ne.s32.totalorder %v786, 0
      %vm903 = vcmp.ne.s32.totalorder %v793, 0
      %vm904 = vcmp.ne.s32.totalorder %v800, 0
      %vm905 = vcmp.ne.s32.totalorder %v807, 0
      %vm906 = vcmp.ne.s32.totalorder %v814, 0
      %vm907 = vcmp.ne.s32.totalorder %v821, 0
      %vm908 = vcmp.ne.s32.totalorder %v828, 0
      %vm909 = vcmp.ne.s32.totalorder %v835, 0
      %vm910 = vcmp.ne.s32.totalorder %v842, 0
      %vm911 = vcmp.ne.s32.totalorder %v849, 0
      %vm912 = vcmp.ne.s32.totalorder %v856, 0
      %vm913 = vcmp.ne.s32.totalorder %v863, 0
      %vm914 = vcmp.ne.s32.totalorder %v870, 0
      %vm915 = vcmp.ne.s32.totalorder %v877, 0
      %vm916 = vcmp.ne.s32.totalorder %v884, 0
      %vm917 = vcmp.lt.s32.totalorder %v667, 0
      %vm918 = vcmp.lt.s32.totalorder %v674, 0
      %vm919 = vcmp.lt.s32.totalorder %v681, 0
      %vm920 = vcmp.lt.s32.totalorder %v688, 0
      %vm921 = vcmp.lt.s32.totalorder %v695, 0
      %vm922 = vcmp.lt.s32.totalorder %v702, 0
      %vm923 = vcmp.lt.s32.totalorder %v709, 0
      %vm924 = vcmp.lt.s32.totalorder %v716, 0
      %vm925 = vcmp.lt.s32.totalorder %v723, 0
      %vm926 = vcmp.lt.s32.totalorder %v730, 0
      %vm927 = vcmp.lt.s32.totalorder %v737, 0
      %vm928 = vcmp.lt.s32.totalorder %v744, 0
      %vm929 = vcmp.lt.s32.totalorder %v751, 0
      %vm930 = vcmp.lt.s32.totalorder %v758, 0
      %vm931 = vcmp.lt.s32.totalorder %v765, 0
      %vm932 = vcmp.lt.s32.totalorder %v772, 0
      %vm933 = vcmp.lt.s32.totalorder %v779, 0
      %vm934 = vcmp.lt.s32.totalorder %v786, 0
      %vm935 = vcmp.lt.s32.totalorder %v793, 0
      %vm936 = vcmp.lt.s32.totalorder %v800, 0
      %vm937 = vcmp.lt.s32.totalorder %v807, 0
      %vm938 = vcmp.lt.s32.totalorder %v814, 0
      %vm939 = vcmp.lt.s32.totalorder %v821, 0
      %vm940 = vcmp.lt.s32.totalorder %v828, 0
      %vm941 = vcmp.lt.s32.totalorder %v835, 0
      %vm942 = vcmp.lt.s32.totalorder %v842, 0
      %vm943 = vcmp.lt.s32.totalorder %v849, 0
      %vm944 = vcmp.lt.s32.totalorder %v856, 0
      %vm945 = vcmp.lt.s32.totalorder %v863, 0
      %vm946 = vcmp.lt.s32.totalorder %v870, 0
      %vm947 = vcmp.lt.s32.totalorder %v877, 0
      %vm948 = vcmp.lt.s32.totalorder %v884, 0
      %vm949 = vmand %vm917, %vm885
      %vm950 = vmand %vm918, %vm886
      %vm951 = vmand %vm919, %vm887
      %vm952 = vmand %vm920, %vm888
      %vm953 = vmand %vm921, %vm889
      %vm954 = vmand %vm922, %vm890
      %vm955 = vmand %vm923, %vm891
      %vm956 = vmand %vm924, %vm892
      %vm957 = vmand %vm925, %vm893
      %vm958 = vmand %vm926, %vm894
      %vm959 = vmand %vm927, %vm895
      %vm960 = vmand %vm928, %vm896
      %vm961 = vmand %vm929, %vm897
      %vm962 = vmand %vm930, %vm898
      %vm963 = vmand %vm931, %vm899
      %vm964 = vmand %vm932, %vm900
      %vm965 = vmand %vm933, %vm901
      %vm966 = vmand %vm934, %vm902
      %vm967 = vmand %vm935, %vm903
      %vm968 = vmand %vm936, %vm904
      %vm969 = vmand %vm937, %vm905
      %vm970 = vmand %vm938, %vm906
      %vm971 = vmand %vm939, %vm907
      %vm972 = vmand %vm940, %vm908
      %vm973 = vmand %vm941, %vm909
      %vm974 = vmand %vm942, %vm910
      %vm975 = vmand %vm943, %vm911
      %vm976 = vmand %vm944, %vm912
      %vm977 = vmand %vm945, %vm913
      %vm978 = vmand %vm946, %vm914
      %vm979 = vmand %vm947, %vm915
      %vm980 = vmand %vm948, %vm916
      %v981 = vadd.s32 %v667, 16
      %v982 = vadd.s32 %v674, 16
      %v983 = vadd.s32 %v681, 16
      %v984 = vadd.s32 %v688, 16
      %v985 = vadd.s32 %v695, 16
      %v986 = vadd.s32 %v702, 16
      %v987 = vadd.s32 %v709, 16
      %v988 = vadd.s32 %v716, 16
      %v989 = vadd.s32 %v723, 16
      %v990 = vadd.s32 %v730, 16
      %v991 = vadd.s32 %v737, 16
      %v992 = vadd.s32 %v744, 16
      %v993 = vadd.s32 %v751, 16
      %v994 = vadd.s32 %v758, 16
      %v995 = vadd.s32 %v765, 16
      %v996 = vadd.s32 %v772, 16
      %v997 = vadd.s32 %v779, 16
      %v998 = vadd.s32 %v786, 16
      %v999 = vadd.s32 %v793, 16
      %v1000 = vadd.s32 %v800, 16
      %v1001 = vadd.s32 %v807, 16
      %v1002 = vadd.s32 %v814, 16
      %v1003 = vadd.s32 %v821, 16
      %v1004 = vadd.s32 %v828, 16
      %v1005 = vadd.s32 %v835, 16
      %v1006 = vadd.s32 %v842, 16
      %v1007 = vadd.s32 %v849, 16
      %v1008 = vadd.s32 %v856, 16
      %v1009 = vadd.s32 %v863, 16
      %v1010 = vadd.s32 %v870, 16
      %v1011 = vadd.s32 %v877, 16
      %v1012 = vadd.s32 %v884, 16
      %v1013 = vsel %vm949, %v981, %v667
      %v1014 = vsel %vm950, %v982, %v674
      %v1015 = vsel %vm951, %v983, %v681
      %v1016 = vsel %vm952, %v984, %v688
      %v1017 = vsel %vm953, %v985, %v695
      %v1018 = vsel %vm954, %v986, %v702
      %v1019 = vsel %vm955, %v987, %v709
      %v1020 = vsel %vm956, %v988, %v716
      %v1021 = vsel %vm957, %v989, %v723
      %v1022 = vsel %vm958, %v990, %v730
      %v1023 = vsel %vm959, %v991, %v737
      %v1024 = vsel %vm960, %v992, %v744
      %v1025 = vsel %vm961, %v993, %v751
      %v1026 = vsel %vm962, %v994, %v758
      %v1027 = vsel %vm963, %v995, %v765
      %v1028 = vsel %vm964, %v996, %v772
      %v1029 = vsel %vm965, %v997, %v779
      %v1030 = vsel %vm966, %v998, %v786
      %v1031 = vsel %vm967, %v999, %v793
      %v1032 = vsel %vm968, %v1000, %v800
      %v1033 = vsel %vm969, %v1001, %v807
      %v1034 = vsel %vm970, %v1002, %v814
      %v1035 = vsel %vm971, %v1003, %v821
      %v1036 = vsel %vm972, %v1004, %v828
      %v1037 = vsel %vm973, %v1005, %v835
      %v1038 = vsel %vm974, %v1006, %v842
      %v1039 = vsel %vm975, %v1007, %v849
      %v1040 = vsel %vm976, %v1008, %v856
      %v1041 = vsel %vm977, %v1009, %v863
      %v1042 = vsel %vm978, %v1010, %v870
      %v1043 = vsel %vm979, %v1011, %v877
      %v1044 = vsel %vm980, %v1012, %v884
      %vm1045 = vcmp.ne.s32.totalorder %v1013, 0
      %vm1046 = vcmp.ne.s32.totalorder %v1014, 0
      %vm1047 = vcmp.ne.s32.totalorder %v1015, 0
      %vm1048 = vcmp.ne.s32.totalorder %v1016, 0
      %vm1049 = vcmp.ne.s32.totalorder %v1017, 0
      %vm1050 = vcmp.ne.s32.totalorder %v1018, 0
      %vm1051 = vcmp.ne.s32.totalorder %v1019, 0
      %vm1052 = vcmp.ne.s32.totalorder %v1020, 0
      %vm1053 = vcmp.ne.s32.totalorder %v1021, 0
      %vm1054 = vcmp.ne.s32.totalorder %v1022, 0
      %vm1055 = vcmp.ne.s32.totalorder %v1023, 0
      %vm1056 = vcmp.ne.s32.totalorder %v1024, 0
      %vm1057 = vcmp.ne.s32.totalorder %v1025, 0
      %vm1058 = vcmp.ne.s32.totalorder %v1026, 0
      %vm1059 = vcmp.ne.s32.totalorder %v1027, 0
      %vm1060 = vcmp.ne.s32.totalorder %v1028, 0
      %vm1061 = vcmp.ne.s32.totalorder %v1029, 0
      %vm1062 = vcmp.ne.s32.totalorder %v1030, 0
      %vm1063 = vcmp.ne.s32.totalorder %v1031, 0
      %vm1064 = vcmp.ne.s32.totalorder %v1032, 0
      %vm1065 = vcmp.ne.s32.totalorder %v1033, 0
      %vm1066 = vcmp.ne.s32.totalorder %v1034, 0
      %vm1067 = vcmp.ne.s32.totalorder %v1035, 0
      %vm1068 = vcmp.ne.s32.totalorder %v1036, 0
      %vm1069 = vcmp.ne.s32.totalorder %v1037, 0
      %vm1070 = vcmp.ne.s32.totalorder %v1038, 0
      %vm1071 = vcmp.ne.s32.totalorder %v1039, 0
      %vm1072 = vcmp.ne.s32.totalorder %v1040, 0
      %vm1073 = vcmp.ne.s32.totalorder %v1041, 0
      %vm1074 = vcmp.ne.s32.totalorder %v1042, 0
      %vm1075 = vcmp.ne.s32.totalorder %v1043, 0
      %vm1076 = vcmp.ne.s32.totalorder %v1044, 0
      %vm1077 = vcmp.ne.s32.totalorder %v1013, 15
      %vm1078 = vcmp.ne.s32.totalorder %v1014, 15
      %vm1079 = vcmp.ne.s32.totalorder %v1015, 15
      %vm1080 = vcmp.ne.s32.totalorder %v1016, 15
      %vm1081 = vcmp.ne.s32.totalorder %v1017, 15
      %vm1082 = vcmp.ne.s32.totalorder %v1018, 15
      %vm1083 = vcmp.ne.s32.totalorder %v1019, 15
      %vm1084 = vcmp.ne.s32.totalorder %v1020, 15
      %vm1085 = vcmp.ne.s32.totalorder %v1021, 15
      %vm1086 = vcmp.ne.s32.totalorder %v1022, 15
      %vm1087 = vcmp.ne.s32.totalorder %v1023, 15
      %vm1088 = vcmp.ne.s32.totalorder %v1024, 15
      %vm1089 = vcmp.ne.s32.totalorder %v1025, 15
      %vm1090 = vcmp.ne.s32.totalorder %v1026, 15
      %vm1091 = vcmp.ne.s32.totalorder %v1027, 15
      %vm1092 = vcmp.ne.s32.totalorder %v1028, 15
      %vm1093 = vcmp.ne.s32.totalorder %v1029, 15
      %vm1094 = vcmp.ne.s32.totalorder %v1030, 15
      %vm1095 = vcmp.ne.s32.totalorder %v1031, 15
      %vm1096 = vcmp.ne.s32.totalorder %v1032, 15
      %vm1097 = vcmp.ne.s32.totalorder %v1033, 15
      %vm1098 = vcmp.ne.s32.totalorder %v1034, 15
      %vm1099 = vcmp.ne.s32.totalorder %v1035, 15
      %vm1100 = vcmp.ne.s32.totalorder %v1036, 15
      %vm1101 = vcmp.ne.s32.totalorder %v1037, 15
      %vm1102 = vcmp.ne.s32.totalorder %v1038, 15
      %vm1103 = vcmp.ne.s32.totalorder %v1039, 15
      %vm1104 = vcmp.ne.s32.totalorder %v1040, 15
      %vm1105 = vcmp.ne.s32.totalorder %v1041, 15
      %vm1106 = vcmp.ne.s32.totalorder %v1042, 15
      %vm1107 = vcmp.ne.s32.totalorder %v1043, 15
      %vm1108 = vcmp.ne.s32.totalorder %v1044, 15
      %v1109 = vld [vmem:[#allocation2] sm:$0xf8]
      %v1110 = vld [vmem:[#allocation2 + $0x8] sm:$0xff]
      %v1111 = vld [vmem:[#allocation2 + $0x10] sm:$0xff]
      %v1112 = vld [vmem:[#allocation2 + $0x18] sm:$0xff]
      %v1113 = vld [vmem:[#allocation2 + $0x20] sm:$0xff]
      %v1114 = vld [vmem:[#allocation2 + $0x28] sm:$0xff]
      %v1115 = vld [vmem:[#allocation2 + $0x30] sm:$0xff]
      %v1116 = vld [vmem:[#allocation2 + $0x38] sm:$0xff]
      %v1117 = vld [vmem:[#allocation2 + $0x40] sm:$0xff]
      %v1118 = vld [vmem:[#allocation2 + $0x48] sm:$0xff]
      %v1119 = vld [vmem:[#allocation2 + $0x50] sm:$0xff]
      %v1120 = vld [vmem:[#allocation2 + $0x58] sm:$0xff]
      %v1121 = vld [vmem:[#allocation2 + $0x60] sm:$0xff]
      %v1122 = vld [vmem:[#allocation2 + $0x68] sm:$0xff]
      %v1123 = vld [vmem:[#allocation2 + $0x70] sm:$0xff]
      %v1124 = vld [vmem:[#allocation2 + $0x78] sm:$0xff]
      %v1125 = vld [vmem:[#allocation2 + $0x80] sm:$0xf]
      %v1126 = vsel %vm1045, 1, 0
      %v1127 = vsel %vm1046, 1, 0
      %v1128 = vsel %vm1047, 1, 0
      %v1129 = vsel %vm1048, 1, 0
      %v1130 = vsel %vm1049, 1, 0
      %v1131 = vsel %vm1050, 1, 0
      %v1132 = vsel %vm1051, 1, 0
      %v1133 = vsel %vm1052, 1, 0
      %v1134 = vsel %vm1053, 1, 0
      %v1135 = vsel %vm1054, 1, 0
      %v1136 = vsel %vm1055, 1, 0
      %v1137 = vsel %vm1056, 1, 0
      %v1138 = vsel %vm1057, 1, 0
      %v1139 = vsel %vm1058, 1, 0
      %v1140 = vsel %vm1059, 1, 0
      %v1141 = vsel %vm1060, 1, 0
      %v1142 = vsel %vm1061, 1, 0
      %v1143 = vsel %vm1062, 1, 0
      %v1144 = vsel %vm1063, 1, 0
      %v1145 = vsel %vm1064, 1, 0
      %v1146 = vsel %vm1065, 1, 0
      %v1147 = vsel %vm1066, 1, 0
      %v1148 = vsel %vm1067, 1, 0
      %v1149 = vsel %vm1068, 1, 0
      %v1150 = vsel %vm1069, 1, 0
      %v1151 = vsel %vm1070, 1, 0
      %v1152 = vsel %vm1071, 1, 0
      %v1153 = vsel %vm1072, 1, 0
      %v1154 = vsel %vm1073, 1, 0
      %v1155 = vsel %vm1074, 1, 0
      %v1156 = vsel %vm1075, 1, 0
      %v1157 = vsel %vm1076, 1, 0
      %vm1158 = vcmp.eq.s32.totalorder %v1126, 1
      %vm1159 = vcmp.eq.s32.totalorder %v1127, 1
      %vm1160 = vcmp.eq.s32.totalorder %v1128, 1
      %vm1161 = vcmp.eq.s32.totalorder %v1129, 1
      %vm1162 = vcmp.eq.s32.totalorder %v1130, 1
      %vm1163 = vcmp.eq.s32.totalorder %v1131, 1
      %vm1164 = vcmp.eq.s32.totalorder %v1132, 1
      %vm1165 = vcmp.eq.s32.totalorder %v1133, 1
      %vm1166 = vcmp.eq.s32.totalorder %v1134, 1
      %vm1167 = vcmp.eq.s32.totalorder %v1135, 1
      %vm1168 = vcmp.eq.s32.totalorder %v1136, 1
      %vm1169 = vcmp.eq.s32.totalorder %v1137, 1
      %vm1170 = vcmp.eq.s32.totalorder %v1138, 1
      %vm1171 = vcmp.eq.s32.totalorder %v1139, 1
      %vm1172 = vcmp.eq.s32.totalorder %v1140, 1
      %vm1173 = vcmp.eq.s32.totalorder %v1141, 1
      %vm1174 = vcmp.eq.s32.totalorder %v1142, 1
      %vm1175 = vcmp.eq.s32.totalorder %v1143, 1
      %vm1176 = vcmp.eq.s32.totalorder %v1144, 1
      %vm1177 = vcmp.eq.s32.totalorder %v1145, 1
      %vm1178 = vcmp.eq.s32.totalorder %v1146, 1
      %vm1179 = vcmp.eq.s32.totalorder %v1147, 1
      %vm1180 = vcmp.eq.s32.totalorder %v1148, 1
      %vm1181 = vcmp.eq.s32.totalorder %v1149, 1
      %vm1182 = vcmp.eq.s32.totalorder %v1150, 1
      %vm1183 = vcmp.eq.s32.totalorder %v1151, 1
      %vm1184 = vcmp.eq.s32.totalorder %v1152, 1
      %vm1185 = vcmp.eq.s32.totalorder %v1153, 1
      %vm1186 = vcmp.eq.s32.totalorder %v1154, 1
      %vm1187 = vcmp.eq.s32.totalorder %v1155, 1
      %vm1188 = vcmp.eq.s32.totalorder %v1156, 1
      %vm1189 = vcmp.eq.s32.totalorder %v1157, 1
      %vm1190 = vmpackc.low %vm1158, %vm1158
      %vm1191 = vmpackc.low %vm1159, %vm1159
      %vm1192 = vmpackc.low %vm1160, %vm1160
      %vm1193 = vmpackc.low %vm1161, %vm1161
      %vm1194 = vmpackc.low %vm1162, %vm1162
      %vm1195 = vmpackc.low %vm1163, %vm1163
      %vm1196 = vmpackc.low %vm1164, %vm1164
      %vm1197 = vmpackc.low %vm1165, %vm1165
      %vm1198 = vmpackc.low %vm1166, %vm1166
      %vm1199 = vmpackc.low %vm1167, %vm1167
      %vm1200 = vmpackc.low %vm1168, %vm1168
      %vm1201 = vmpackc.low %vm1169, %vm1169
      %vm1202 = vmpackc.low %vm1170, %vm1170
      %vm1203 = vmpackc.low %vm1171, %vm1171
      %vm1204 = vmpackc.low %vm1172, %vm1172
      %vm1205 = vmpackc.low %vm1173, %vm1173
      %vm1206 = vmpackc.low %vm1174, %vm1174
      %vm1207 = vmpackc.low %vm1175, %vm1175
      %vm1208 = vmpackc.low %vm1176, %vm1176
      %vm1209 = vmpackc.low %vm1177, %vm1177
      %vm1210 = vmpackc.low %vm1178, %vm1178
      %vm1211 = vmpackc.low %vm1179, %vm1179
      %vm1212 = vmpackc.low %vm1180, %vm1180
      %vm1213 = vmpackc.low %vm1181, %vm1181
      %vm1214 = vmpackc.low %vm1182, %vm1182
      %vm1215 = vmpackc.low %vm1183, %vm1183
      %vm1216 = vmpackc.low %vm1184, %vm1184
      %vm1217 = vmpackc.low %vm1185, %vm1185
      %vm1218 = vmpackc.low %vm1186, %vm1186
      %vm1219 = vmpackc.low %vm1187, %vm1187
      %vm1220 = vmpackc.low %vm1188, %vm1188
      %vm1221 = vmpackc.low %vm1189, %vm1189
      %v1222 = vsel %vm1190, 65537, 0
      %v1223 = vsel %vm1191, 65537, 0
      %v1224 = vsel %vm1192, 65537, 0
      %v1225 = vsel %vm1193, 65537, 0
      %v1226 = vsel %vm1194, 65537, 0
      %v1227 = vsel %vm1195, 65537, 0
      %v1228 = vsel %vm1196, 65537, 0
      %v1229 = vsel %vm1197, 65537, 0
      %v1230 = vsel %vm1198, 65537, 0
      %v1231 = vsel %vm1199, 65537, 0
      %v1232 = vsel %vm1200, 65537, 0
      %v1233 = vsel %vm1201, 65537, 0
      %v1234 = vsel %vm1202, 65537, 0
      %v1235 = vsel %vm1203, 65537, 0
      %v1236 = vsel %vm1204, 65537, 0
      %v1237 = vsel %vm1205, 65537, 0
      %v1238 = vsel %vm1206, 65537, 0
      %v1239 = vsel %vm1207, 65537, 0
      %v1240 = vsel %vm1208, 65537, 0
      %v1241 = vsel %vm1209, 65537, 0
      %v1242 = vsel %vm1210, 65537, 0
      %v1243 = vsel %vm1211, 65537, 0
      %v1244 = vsel %vm1212, 65537, 0
      %v1245 = vsel %vm1213, 65537, 0
      %v1246 = vsel %vm1214, 65537, 0
      %v1247 = vsel %vm1215, 65537, 0
      %v1248 = vsel %vm1216, 65537, 0
      %v1249 = vsel %vm1217, 65537, 0
      %v1250 = vsel %vm1218, 65537, 0
      %v1251 = vsel %vm1219, 65537, 0
      %v1252 = vsel %vm1220, 65537, 0
      %v1253 = vsel %vm1221, 65537, 0
      %v1254 = vunpack.c.l.b16 %v1222
      %v1255 = vunpack.c.l.b16 %v1223
      %v1256 = vunpack.c.l.b16 %v1224
      %v1257 = vunpack.c.l.b16 %v1225
      %v1258 = vunpack.c.l.b16 %v1226
      %v1259 = vunpack.c.l.b16 %v1227
      %v1260 = vunpack.c.l.b16 %v1228
      %v1261 = vunpack.c.l.b16 %v1229
      %v1262 = vunpack.c.l.b16 %v1230
      %v1263 = vunpack.c.l.b16 %v1231
      %v1264 = vunpack.c.l.b16 %v1232
      %v1265 = vunpack.c.l.b16 %v1233
      %v1266 = vunpack.c.l.b16 %v1234
      %v1267 = vunpack.c.l.b16 %v1235
      %v1268 = vunpack.c.l.b16 %v1236
      %v1269 = vunpack.c.l.b16 %v1237
      %v1270 = vunpack.c.l.b16 %v1238
      %v1271 = vunpack.c.l.b16 %v1239
      %v1272 = vunpack.c.l.b16 %v1240
      %v1273 = vunpack.c.l.b16 %v1241
      %v1274 = vunpack.c.l.b16 %v1242
      %v1275 = vunpack.c.l.b16 %v1243
      %v1276 = vunpack.c.l.b16 %v1244
      %v1277 = vunpack.c.l.b16 %v1245
      %v1278 = vunpack.c.l.b16 %v1246
      %v1279 = vunpack.c.l.b16 %v1247
      %v1280 = vunpack.c.l.b16 %v1248
      %v1281 = vunpack.c.l.b16 %v1249
      %v1282 = vunpack.c.l.b16 %v1250
      %v1283 = vunpack.c.l.b16 %v1251
      %v1284 = vunpack.c.l.b16 %v1252
      %v1285 = vunpack.c.l.b16 %v1253
      %v1286 = vpack.c.b16 %v1255, %v1254
      %v1287 = vpack.c.b16 %v1257, %v1256
      %v1288 = vpack.c.b16 %v1259, %v1258
      %v1289 = vpack.c.b16 %v1261, %v1260
      %v1290 = vpack.c.b16 %v1263, %v1262
      %v1291 = vpack.c.b16 %v1265, %v1264
      %v1292 = vpack.c.b16 %v1267, %v1266
      %v1293 = vpack.c.b16 %v1269, %v1268
      %v1294 = vpack.c.b16 %v1271, %v1270
      %v1295 = vpack.c.b16 %v1273, %v1272
      %v1296 = vpack.c.b16 %v1275, %v1274
      %v1297 = vpack.c.b16 %v1277, %v1276
      %v1298 = vpack.c.b16 %v1279, %v1278
      %v1299 = vpack.c.b16 %v1281, %v1280
      %v1300 = vpack.c.b16 %v1283, %v1282
      %v1301 = vpack.c.b16 %v1285, %v1284
      %vm1302 = vsmask.f32 3328
      %v1304 = vshrl.u32 %v1286, 16
      %v1306 = vrot.slane %v1304, 4
      %v1307 = vshll.u32 %v1286, 16
      %v1309 = vrot.slane %v1307, 5
      %v1310 = vor.u32 %v1306, %v1309
      %v1312 = vshrl.u32 %v1287, 16
      %v1314 = vrot.slane %v1312, 4
      %v1315 = vshll.u32 %v1287, 16
      %v1317 = vrot.slane %v1315, 5
      %v1318 = vor.u32 %v1314, %v1317
      %v1319 = vsel %vm1302, %v1310, %v1318
      %v1321 = vshrl.u32 %v1288, 16
      %v1323 = vrot.slane %v1321, 4
      %v1324 = vshll.u32 %v1288, 16
      %v1326 = vrot.slane %v1324, 5
      %v1327 = vor.u32 %v1323, %v1326
      %v1328 = vsel %vm1302, %v1318, %v1327
      %v1330 = vshrl.u32 %v1289, 16
      %v1332 = vrot.slane %v1330, 4
      %v1333 = vshll.u32 %v1289, 16
      %v1335 = vrot.slane %v1333, 5
      %v1336 = vor.u32 %v1332, %v1335
      %v1337 = vsel %vm1302, %v1327, %v1336
      %v1339 = vshrl.u32 %v1290, 16
      %v1341 = vrot.slane %v1339, 4
      %v1342 = vshll.u32 %v1290, 16
      %v1344 = vrot.slane %v1342, 5
      %v1345 = vor.u32 %v1341, %v1344
      %v1346 = vsel %vm1302, %v1336, %v1345
      %v1348 = vshrl.u32 %v1291, 16
      %v1350 = vrot.slane %v1348, 4
      %v1351 = vshll.u32 %v1291, 16
      %v1353 = vrot.slane %v1351, 5
      %v1354 = vor.u32 %v1350, %v1353
      %v1355 = vsel %vm1302, %v1345, %v1354
      %v1357 = vshrl.u32 %v1292, 16
      %v1359 = vrot.slane %v1357, 4
      %v1360 = vshll.u32 %v1292, 16
      %v1362 = vrot.slane %v1360, 5
      %v1363 = vor.u32 %v1359, %v1362
      %v1364 = vsel %vm1302, %v1354, %v1363
      %v1366 = vshrl.u32 %v1293, 16
      %v1368 = vrot.slane %v1366, 4
      %v1369 = vshll.u32 %v1293, 16
      %v1371 = vrot.slane %v1369, 5
      %v1372 = vor.u32 %v1368, %v1371
      %v1373 = vsel %vm1302, %v1363, %v1372
      %v1375 = vshrl.u32 %v1294, 16
      %v1377 = vrot.slane %v1375, 4
      %v1378 = vshll.u32 %v1294, 16
      %v1380 = vrot.slane %v1378, 5
      %v1381 = vor.u32 %v1377, %v1380
      %v1382 = vsel %vm1302, %v1372, %v1381
      %v1384 = vshrl.u32 %v1295, 16
      %v1386 = vrot.slane %v1384, 4
      %v1387 = vshll.u32 %v1295, 16
      %v1389 = vrot.slane %v1387, 5
      %v1390 = vor.u32 %v1386, %v1389
      %v1391 = vsel %vm1302, %v1381, %v1390
      %v1393 = vshrl.u32 %v1296, 16
      %v1395 = vrot.slane %v1393, 4
      %v1396 = vshll.u32 %v1296, 16
      %v1398 = vrot.slane %v1396, 5
      %v1399 = vor.u32 %v1395, %v1398
      %v1400 = vsel %vm1302, %v1390, %v1399
      %v1402 = vshrl.u32 %v1297, 16
      %v1404 = vrot.slane %v1402, 4
      %v1405 = vshll.u32 %v1297, 16
      %v1407 = vrot.slane %v1405, 5
      %v1408 = vor.u32 %v1404, %v1407
      %v1409 = vsel %vm1302, %v1399, %v1408
      %v1411 = vshrl.u32 %v1298, 16
      %v1413 = vrot.slane %v1411, 4
      %v1414 = vshll.u32 %v1298, 16
      %v1416 = vrot.slane %v1414, 5
      %v1417 = vor.u32 %v1413, %v1416
      %v1418 = vsel %vm1302, %v1408, %v1417
      %v1420 = vshrl.u32 %v1299, 16
      %v1422 = vrot.slane %v1420, 4
      %v1423 = vshll.u32 %v1299, 16
      %v1425 = vrot.slane %v1423, 5
      %v1426 = vor.u32 %v1422, %v1425
      %v1427 = vsel %vm1302, %v1417, %v1426
      %v1429 = vshrl.u32 %v1300, 16
      %v1431 = vrot.slane %v1429, 4
      %v1432 = vshll.u32 %v1300, 16
      %v1434 = vrot.slane %v1432, 5
      %v1435 = vor.u32 %v1431, %v1434
      %v1436 = vsel %vm1302, %v1426, %v1435
      %v1438 = vshrl.u32 %v1301, 16
      %v1440 = vrot.slane %v1438, 4
      %v1441 = vshll.u32 %v1301, 16
      %v1443 = vrot.slane %v1441, 5
      %v1444 = vor.u32 %v1440, %v1443
      %v1445 = vsel %vm1302, %v1435, %v1444
      %vm1446 = vcmp.ne.s16.totalorder %v1310, 0
      %vm1447 = vcmp.ne.s16.totalorder %v1319, 0
      %vm1448 = vcmp.ne.s16.totalorder %v1328, 0
      %vm1449 = vcmp.ne.s16.totalorder %v1337, 0
      %vm1450 = vcmp.ne.s16.totalorder %v1346, 0
      %vm1451 = vcmp.ne.s16.totalorder %v1355, 0
      %vm1452 = vcmp.ne.s16.totalorder %v1364, 0
      %vm1453 = vcmp.ne.s16.totalorder %v1373, 0
      %vm1454 = vcmp.ne.s16.totalorder %v1382, 0
      %vm1455 = vcmp.ne.s16.totalorder %v1391, 0
      %vm1456 = vcmp.ne.s16.totalorder %v1400, 0
      %vm1457 = vcmp.ne.s16.totalorder %v1409, 0
      %vm1458 = vcmp.ne.s16.totalorder %v1418, 0
      %vm1459 = vcmp.ne.s16.totalorder %v1427, 0
      %vm1460 = vcmp.ne.s16.totalorder %v1436, 0
      %vm1461 = vcmp.ne.s16.totalorder %v1445, 0
      %vm1462 = vcmp.ne.s16.totalorder %v1444, 0
      %v1463 = vsel %vm1446, %v1109, 0
      %v1464 = vsel %vm1447, %v1110, 0
      %v1465 = vsel %vm1448, %v1111, 0
      %v1466 = vsel %vm1449, %v1112, 0
      %v1467 = vsel %vm1450, %v1113, 0
      %v1468 = vsel %vm1451, %v1114, 0
      %v1469 = vsel %vm1452, %v1115, 0
      %v1470 = vsel %vm1453, %v1116, 0
      %v1471 = vsel %vm1454, %v1117, 0
      %v1472 = vsel %vm1455, %v1118, 0
      %v1473 = vsel %vm1456, %v1119, 0
      %v1474 = vsel %vm1457, %v1120, 0
      %v1475 = vsel %vm1458, %v1121, 0
      %v1476 = vsel %vm1459, %v1122, 0
      %v1477 = vsel %vm1460, %v1123, 0
      %v1478 = vsel %vm1461, %v1124, 0
      %v1479 = vsel %vm1462, %v1125, 0
      %v1480 = vld [vmem:[%s3] sm:$0xf]
      %v1481 = vld [vmem:[%s3 + $0x4] sm:$0xf]
      %v1482 = vld [vmem:[%s3 + $0x8] sm:$0xf]
      %v1483 = vld [vmem:[%s3 + $0xc] sm:$0xf]
      %v1484 = vld [vmem:[%s3 + $0x10] sm:$0xf]
      %v1485 = vld [vmem:[%s3 + $0x14] sm:$0xf]
      %v1486 = vld [vmem:[%s3 + $0x18] sm:$0xf]
      %v1487 = vld [vmem:[%s3 + $0x1c] sm:$0xf]
      %v1488 = vld [vmem:[%s3 + $0x20] sm:$0xf]
      %v1489 = vld [vmem:[%s3 + $0x24] sm:$0xf]
      %v1490 = vld [vmem:[%s3 + $0x28] sm:$0xf]
      %v1491 = vld [vmem:[%s3 + $0x2c] sm:$0xf]
      %v1492 = vld [vmem:[%s3 + $0x30] sm:$0xf]
      %v1493 = vld [vmem:[%s3 + $0x34] sm:$0xf]
      %v1494 = vld [vmem:[%s3 + $0x38] sm:$0xf]
      %v1495 = vld [vmem:[%s3 + $0x3c] sm:$0xf]
      %v1496 = vld [vmem:[#allocation2] sm:$0xf0]
      %s1497 = scalar_lea.vmem %s3, 64
      %v1498 = vld [vmem:[%s1497] sm:$0xf]
      %v1499 = vld [vmem:[%s1497 + $0x4] sm:$0xf]
      %v1500 = vld [vmem:[%s1497 + $0x8] sm:$0xf]
      %v1501 = vld [vmem:[%s1497 + $0xc] sm:$0xf]
      %v1502 = vld [vmem:[%s1497 + $0x10] sm:$0xf]
      %v1503 = vld [vmem:[%s1497 + $0x14] sm:$0xf]
      %v1504 = vld [vmem:[%s1497 + $0x18] sm:$0xf]
      %v1505 = vld [vmem:[%s1497 + $0x1c] sm:$0xf]
      %v1506 = vld [vmem:[%s1497 + $0x20] sm:$0xf]
      %v1507 = vld [vmem:[%s1497 + $0x24] sm:$0xf]
      %v1508 = vld [vmem:[%s1497 + $0x28] sm:$0xf]
      %v1509 = vld [vmem:[%s1497 + $0x2c] sm:$0xf]
      %v1510 = vld [vmem:[%s1497 + $0x30] sm:$0xf]
      %v1511 = vld [vmem:[%s1497 + $0x34] sm:$0xf]
      %v1512 = vld [vmem:[%s1497 + $0x38] sm:$0xf]
      %v1513 = vld [vmem:[%s1497 + $0x3c] sm:$0xf]
      %vm1531 = vcmask 1043456
      %v1532 = vrot.slane %v1496, 4
      %v1533 = vrot.slane %v1110, 4
      %v1534 = vsel %vm1531, %v1532, %v1533
      %v1535 = vrot.slane %v1111, 4
      %v1536 = vsel %vm1531, %v1533, %v1535
      %v1537 = vrot.slane %v1112, 4
      %v1538 = vsel %vm1531, %v1535, %v1537
      %v1539 = vrot.slane %v1113, 4
      %v1540 = vsel %vm1531, %v1537, %v1539
      %v1541 = vrot.slane %v1114, 4
      %v1542 = vsel %vm1531, %v1539, %v1541
      %v1543 = vrot.slane %v1115, 4
      %v1544 = vsel %vm1531, %v1541, %v1543
      %v1545 = vrot.slane %v1116, 4
      %v1546 = vsel %vm1531, %v1543, %v1545
      %v1547 = vrot.slane %v1117, 4
      %v1548 = vsel %vm1531, %v1545, %v1547
      %v1549 = vrot.slane %v1118, 4
      %v1550 = vsel %vm1531, %v1547, %v1549
      %v1551 = vrot.slane %v1119, 4
      %v1552 = vsel %vm1531, %v1549, %v1551
      %v1553 = vrot.slane %v1120, 4
      %v1554 = vsel %vm1531, %v1551, %v1553
      %v1555 = vrot.slane %v1121, 4
      %v1556 = vsel %vm1531, %v1553, %v1555
      %v1557 = vrot.slane %v1122, 4
      %v1558 = vsel %vm1531, %v1555, %v1557
      %v1559 = vrot.slane %v1123, 4
      %v1560 = vsel %vm1531, %v1557, %v1559
      %v1561 = vrot.slane %v1124, 4
      %v1562 = vsel %vm1531, %v1559, %v1561
      %v1563 = vrot.slane %v1125, 4
      %v1564 = vsel %vm1531, %v1561, %v1563
      %v1597 = vunpack.c.l.b16 %v1498
      %v1598 = vunpack.c.l.b16 %v1499
      %v1599 = vunpack.c.l.b16 %v1500
      %v1600 = vunpack.c.l.b16 %v1501
      %v1601 = vunpack.c.l.b16 %v1502
      %v1602 = vunpack.c.l.b16 %v1503
      %v1603 = vunpack.c.l.b16 %v1504
      %v1604 = vunpack.c.l.b16 %v1505
      %v1605 = vunpack.c.l.b16 %v1506
      %v1606 = vunpack.c.l.b16 %v1507
      %v1607 = vunpack.c.l.b16 %v1508
      %v1608 = vunpack.c.l.b16 %v1509
      %v1609 = vunpack.c.l.b16 %v1510
      %v1610 = vunpack.c.l.b16 %v1511
      %v1611 = vunpack.c.l.b16 %v1512
      %v1612 = vunpack.c.l.b16 %v1513
      %v1613 = vpack.c.b16 %v1598, %v1597
      %v1614 = vpack.c.b16 %v1600, %v1599
      %v1615 = vpack.c.b16 %v1602, %v1601
      %v1616 = vpack.c.b16 %v1604, %v1603
      %v1617 = vpack.c.b16 %v1606, %v1605
      %v1618 = vpack.c.b16 %v1608, %v1607
      %v1619 = vpack.c.b16 %v1610, %v1609
      %v1620 = vpack.c.b16 %v1612, %v1611
      %1629 = vmatprep.subr.bf16.mxu0 0
      %1630 = vmatpush1.bf16.msra.mxu0 %v1613
      %1631 = vmatprep.subr.bf16.mxu0 0
      %1632 = vmatpush1.bf16.msra.mxu0 %v1614
      %1633 = vmatprep.subr.bf16.mxu0 0
      %1634 = vmatpush1.bf16.msra.mxu0 %v1615
      %1635 = vmatprep.subr.bf16.mxu0 0
      %1636 = vmatpush1.bf16.msra.mxu0 %v1616
      %1637 = vmatprep.subr.bf16.mxu0 0
      %1638 = vmatpush1.bf16.msra.mxu0 %v1617
      %1639 = vmatprep.subr.bf16.mxu0 0
      %1640 = vmatpush1.bf16.msra.mxu0 %v1618
      %1641 = vmatprep.subr.bf16.mxu0 0
      %1642 = vmatpush1.bf16.msra.mxu0 %v1619
      %1643 = vmatprep.subr.bf16.mxu0 0
      %1644 = vmatpush1.bf16.msra.mxu0 %v1620
      %1645 = vmatprep.subr.bf16.mxu0 0
      %1646 = vmatpush1.bf16.msra.mxu0 0
      %1647 = vmatprep.subr.bf16.mxu0 0
      %1648 = vmatpush1.bf16.msra.mxu0 0
      %1649 = vmatprep.subr.bf16.mxu0 0
      %1650 = vmatpush1.bf16.msra.mxu0 0
      %1651 = vmatprep.subr.bf16.mxu0 0
      %1652 = vmatpush1.bf16.msra.mxu0 0
      %1653 = vmatprep.subr.bf16.mxu0 0
      %1654 = vmatpush1.bf16.msra.mxu0 0
      %1655 = vmatprep.subr.bf16.mxu0 0
      %1656 = vmatpush1.bf16.msra.mxu0 0
      %1657 = vmatprep.subr.bf16.mxu0 0
      %1658 = vmatpush1.bf16.msra.mxu0 0
      %1659 = vmatprep.subr.bf16.mxu0 0
      %1660 = vmatpush1.bf16.msra.mxu0 0
      %1661 = vmatprep.mubr.bf16.mxu0 0
      %1662 = vmatmul.mubr.bf16.gmra.mrb[0].mxu0 %v1534
      %v1663 = vpop.f32.mrb[0].mxu0
      %v1664 = vadd.f32 0.0, %v1663
      %v1665 = vpop.f32.mrb[0].mxu0
      %v1666 = vpop.f32.mrb[0].mxu0
      %v1667 = vadd.f32 0.0, %v1666
      %v1668 = vpop.f32.mrb[0].mxu0
      %1669 = vmatprep.mubr.bf16.mxu0 0
      %1670 = vmatmul.mubr.bf16.gmra.mrb[0].mxu0 %v1536
      %v1671 = vpop.f32.mrb[0].mxu0
      %v1672 = vadd.f32 0.0, %v1671
      %v1673 = vpop.f32.mrb[0].mxu0
      %v1674 = vpop.f32.mrb[0].mxu0
      %v1675 = vadd.f32 0.0, %v1674
      %v1676 = vpop.f32.mrb[0].mxu0
      %1677 = vmatprep.mubr.bf16.mxu0 0
      %1678 = vmatmul.mubr.bf16.gmra.mrb[0].mxu0 %v1538
      %v1679 = vpop.f32.mrb[0].mxu0
      %v1680 = vadd.f32 0.0, %v1679
      %v1681 = vpop.f32.mrb[0].mxu0
      %v1682 = vpop.f32.mrb[0].mxu0
      %v1683 = vadd.f32 0.0, %v1682
      %v1684 = vpop.f32.mrb[0].mxu0
      %1685 = vmatprep.mubr.bf16.mxu0 0
      %1686 = vmatmul.mubr.bf16.gmra.mrb[0].mxu0 %v1540
      %v1687 = vpop.f32.mrb[0].mxu0
      %v1688 = vadd.f32 0.0, %v1687
      %v1689 = vpop.f32.mrb[0].mxu0
      %v1690 = vpop.f32.mrb[0].mxu0
      %v1691 = vadd.f32 0.0, %v1690
      %v1692 = vpop.f32.mrb[0].mxu0
      %1693 = vmatprep.mubr.bf16.mxu0 0
      %1694 = vmatmul.mubr.bf16.gmra.mrb[0].mxu0 %v1542
      %v1695 = vpop.f32.mrb[0].mxu0
      %v1696 = vadd.f32 0.0, %v1695
      %v1697 = vpop.f32.mrb[0].mxu0
      %v1698 = vpop.f32.mrb[0].mxu0
      %v1699 = vadd.f32 0.0, %v1698
      %v1700 = vpop.f32.mrb[0].mxu0
      %1701 = vmatprep.mubr.bf16.mxu0 0
      %1702 = vmatmul.mubr.bf16.gmra.mrb[0].mxu0 %v1544
      %v1703 = vpop.f32.mrb[0].mxu0
      %v1704 = vadd.f32 0.0, %v1703
      %v1705 = vpop.f32.mrb[0].mxu0
      %v1706 = vpop.f32.mrb[0].mxu0
      %v1707 = vadd.f32 0.0, %v1706
      %v1708 = vpop.f32.mrb[0].mxu0
      %1709 = vmatprep.mubr.bf16.mxu0 0
      %1710 = vmatmul.mubr.bf16.gmra.mrb[0].mxu0 %v1546
      %v1711 = vpop.f32.mrb[0].mxu0
      %v1712 = vadd.f32 0.0, %v1711
      %v1713 = vpop.f32.mrb[0].mxu0
      %v1714 = vpop.f32.mrb[0].mxu0
      %v1715 = vadd.f32 0.0, %v1714
      %v1716 = vpop.f32.mrb[0].mxu0
      %1717 = vmatprep.mubr.bf16.mxu0 0
      %1718 = vmatmul.mubr.bf16.gmra.mrb[0].mxu0 %v1548
      %v1719 = vpop.f32.mrb[0].mxu0
      %v1720 = vadd.f32 0.0, %v1719
      %v1721 = vpop.f32.mrb[0].mxu0
      %v1722 = vpop.f32.mrb[0].mxu0
      %v1723 = vadd.f32 0.0, %v1722
      %v1724 = vpop.f32.mrb[0].mxu0
      %1725 = vmatprep.mubr.bf16.mxu0 0
      %1726 = vmatmul.mubr.bf16.gmra.mrb[0].mxu0 %v1550
      %v1727 = vpop.f32.mrb[0].mxu0
      %v1728 = vadd.f32 0.0, %v1727
      %v1729 = vpop.f32.mrb[0].mxu0
      %v1730 = vpop.f32.mrb[0].mxu0
      %v1731 = vadd.f32 0.0, %v1730
      %v1732 = vpop.f32.mrb[0].mxu0
      %1733 = vmatprep.mubr.bf16.mxu0 0
      %1734 = vmatmul.mubr.bf16.gmra.mrb[0].mxu0 %v1552
      %v1735 = vpop.f32.mrb[0].mxu0
      %v1736 = vadd.f32 0.0, %v1735
      %v1737 = vpop.f32.mrb[0].mxu0
      %v1738 = vpop.f32.mrb[0].mxu0
      %v1739 = vadd.f32 0.0, %v1738
      %v1740 = vpop.f32.mrb[0].mxu0
      %1741 = vmatprep.mubr.bf16.mxu0 0
      %1742 = vmatmul.mubr.bf16.gmra.mrb[0].mxu0 %v1554
      %v1743 = vpop.f32.mrb[0].mxu0
      %v1744 = vadd.f32 0.0, %v1743
      %v1745 = vpop.f32.mrb[0].mxu0
      %v1746 = vpop.f32.mrb[0].mxu0
      %v1747 = vadd.f32 0.0, %v1746
      %v1748 = vpop.f32.mrb[0].mxu0
      %1749 = vmatprep.mubr.bf16.mxu0 0
      %1750 = vmatmul.mubr.bf16.gmra.mrb[0].mxu0 %v1556
      %v1751 = vpop.f32.mrb[0].mxu0
      %v1752 = vadd.f32 0.0, %v1751
      %v1753 = vpop.f32.mrb[0].mxu0
      %v1754 = vpop.f32.mrb[0].mxu0
      %v1755 = vadd.f32 0.0, %v1754
      %v1756 = vpop.f32.mrb[0].mxu0
      %1757 = vmatprep.mubr.bf16.mxu0 0
      %1758 = vmatmul.mubr.bf16.gmra.mrb[0].mxu0 %v1558
      %v1759 = vpop.f32.mrb[0].mxu0
      %v1760 = vadd.f32 0.0, %v1759
      %v1761 = vpop.f32.mrb[0].mxu0
      %v1762 = vpop.f32.mrb[0].mxu0
      %v1763 = vadd.f32 0.0, %v1762
      %v1764 = vpop.f32.mrb[0].mxu0
      %1765 = vmatprep.mubr.bf16.mxu0 0
      %1766 = vmatmul.mubr.bf16.gmra.mrb[0].mxu0 %v1560
      %v1767 = vpop.f32.mrb[0].mxu0
      %v1768 = vadd.f32 0.0, %v1767
      %v1769 = vpop.f32.mrb[0].mxu0
      %v1770 = vpop.f32.mrb[0].mxu0
      %v1771 = vadd.f32 0.0, %v1770
      %v1772 = vpop.f32.mrb[0].mxu0
      %1773 = vmatprep.mubr.bf16.mxu0 0
      %1774 = vmatmul.mubr.bf16.gmra.mrb[0].mxu0 %v1562
      %v1775 = vpop.f32.mrb[0].mxu0
      %v1776 = vadd.f32 0.0, %v1775
      %v1777 = vpop.f32.mrb[0].mxu0
      %v1778 = vpop.f32.mrb[0].mxu0
      %v1779 = vadd.f32 0.0, %v1778
      %v1780 = vpop.f32.mrb[0].mxu0
      %1781 = vmatprep.mubr.bf16.mxu0 0
      %1782 = vmatmul.mubr.bf16.gmra.mrb[0].mxu0 %v1564
      %v1783 = vpop.f32.mrb[0].mxu0
      %v1784 = vadd.f32 0.0, %v1783
      %v1785 = vpop.f32.mrb[0].mxu0
      %v1786 = vpop.f32.mrb[0].mxu0
      %v1787 = vadd.f32 0.0, %v1786
      %v1788 = vpop.f32.mrb[0].mxu0
      %1789 = vdwg.mxu0
      %vm1790 = vsmask.f32 4352
      %v1792 = vshrl.u32 %v1463, 16
      %v1794 = vrot.slane %v1792, 3
      %v1795 = vshll.u32 %v1463, 16
      %v1797 = vrot.slane %v1795, 4
      %v1798 = vor.u32 %v1794, %v1797
      %v1800 = vshrl.u32 %v1464, 16
      %v1802 = vrot.slane %v1800, 3
      %v1803 = vshll.u32 %v1464, 16
      %v1805 = vrot.slane %v1803, 4
      %v1806 = vor.u32 %v1802, %v1805
      %v1807 = vsel %vm1790, %v1798, %v1806
      %v1809 = vshrl.u32 %v1465, 16
      %v1811 = vrot.slane %v1809, 3
      %v1812 = vshll.u32 %v1465, 16
      %v1814 = vrot.slane %v1812, 4
      %v1815 = vor.u32 %v1811, %v1814
      %v1816 = vsel %vm1790, %v1806, %v1815
      %v1818 = vshrl.u32 %v1466, 16
      %v1820 = vrot.slane %v1818, 3
      %v1821 = vshll.u32 %v1466, 16
      %v1823 = vrot.slane %v1821, 4
      %v1824 = vor.u32 %v1820, %v1823
      %v1825 = vsel %vm1790, %v1815, %v1824
      %v1827 = vshrl.u32 %v1467, 16
      %v1829 = vrot.slane %v1827, 3
      %v1830 = vshll.u32 %v1467, 16
      %v1832 = vrot.slane %v1830, 4
      %v1833 = vor.u32 %v1829, %v1832
      %v1834 = vsel %vm1790, %v1824, %v1833
      %v1836 = vshrl.u32 %v1468, 16
      %v1838 = vrot.slane %v1836, 3
      %v1839 = vshll.u32 %v1468, 16
      %v1841 = vrot.slane %v1839, 4
      %v1842 = vor.u32 %v1838, %v1841
      %v1843 = vsel %vm1790, %v1833, %v1842
      %v1845 = vshrl.u32 %v1469, 16
      %v1847 = vrot.slane %v1845, 3
      %v1848 = vshll.u32 %v1469, 16
      %v1850 = vrot.slane %v1848, 4
      %v1851 = vor.u32 %v1847, %v1850
      %v1852 = vsel %vm1790, %v1842, %v1851
      %v1854 = vshrl.u32 %v1470, 16
      %v1856 = vrot.slane %v1854, 3
      %v1857 = vshll.u32 %v1470, 16
      %v1859 = vrot.slane %v1857, 4
      %v1860 = vor.u32 %v1856, %v1859
      %v1861 = vsel %vm1790, %v1851, %v1860
      %v1863 = vshrl.u32 %v1471, 16
      %v1865 = vrot.slane %v1863, 3
      %v1866 = vshll.u32 %v1471, 16
      %v1868 = vrot.slane %v1866, 4
      %v1869 = vor.u32 %v1865, %v1868
      %v1870 = vsel %vm1790, %v1860, %v1869
      %v1872 = vshrl.u32 %v1472, 16
      %v1874 = vrot.slane %v1872, 3
      %v1875 = vshll.u32 %v1472, 16
      %v1877 = vrot.slane %v1875, 4
      %v1878 = vor.u32 %v1874, %v1877
      %v1879 = vsel %vm1790, %v1869, %v1878
      %v1881 = vshrl.u32 %v1473, 16
      %v1883 = vrot.slane %v1881, 3
      %v1884 = vshll.u32 %v1473, 16
      %v1886 = vrot.slane %v1884, 4
      %v1887 = vor.u32 %v1883, %v1886
      %v1888 = vsel %vm1790, %v1878, %v1887
      %v1890 = vshrl.u32 %v1474, 16
      %v1892 = vrot.slane %v1890, 3
      %v1893 = vshll.u32 %v1474, 16
      %v1895 = vrot.slane %v1893, 4
      %v1896 = vor.u32 %v1892, %v1895
      %v1897 = vsel %vm1790, %v1887, %v1896
      %v1899 = vshrl.u32 %v1475, 16
      %v1901 = vrot.slane %v1899, 3
      %v1902 = vshll.u32 %v1475, 16
      %v1904 = vrot.slane %v1902, 4
      %v1905 = vor.u32 %v1901, %v1904
      %v1906 = vsel %vm1790, %v1896, %v1905
      %v1908 = vshrl.u32 %v1476, 16
      %v1910 = vrot.slane %v1908, 3
      %v1911 = vshll.u32 %v1476, 16
      %v1913 = vrot.slane %v1911, 4
      %v1914 = vor.u32 %v1910, %v1913
      %v1915 = vsel %vm1790, %v1905, %v1914
      %v1917 = vshrl.u32 %v1477, 16
      %v1919 = vrot.slane %v1917, 3
      %v1920 = vshll.u32 %v1477, 16
      %v1922 = vrot.slane %v1920, 4
      %v1923 = vor.u32 %v1919, %v1922
      %v1924 = vsel %vm1790, %v1914, %v1923
      %v1926 = vshrl.u32 %v1478, 16
      %v1928 = vrot.slane %v1926, 3
      %v1929 = vshll.u32 %v1478, 16
      %v1931 = vrot.slane %v1929, 4
      %v1932 = vor.u32 %v1928, %v1931
      %v1933 = vsel %vm1790, %v1923, %v1932
      %v1935 = vshrl.u32 %v1479, 16
      %v1937 = vrot.slane %v1935, 3
      %v1938 = vshll.u32 %v1479, 16
      %v1940 = vrot.slane %v1938, 4
      %v1941 = vor.u32 %v1937, %v1940
      %v1942 = vsel %vm1790, %v1932, %v1941
      %v1975 = vunpack.c.l.b16 %v1480
      %v1976 = vunpack.c.l.b16 %v1481
      %v1977 = vunpack.c.l.b16 %v1482
      %v1978 = vunpack.c.l.b16 %v1483
      %v1979 = vunpack.c.l.b16 %v1484
      %v1980 = vunpack.c.l.b16 %v1485
      %v1981 = vunpack.c.l.b16 %v1486
      %v1982 = vunpack.c.l.b16 %v1487
      %v1983 = vunpack.c.l.b16 %v1488
      %v1984 = vunpack.c.l.b16 %v1489
      %v1985 = vunpack.c.l.b16 %v1490
      %v1986 = vunpack.c.l.b16 %v1491
      %v1987 = vunpack.c.l.b16 %v1492
      %v1988 = vunpack.c.l.b16 %v1493
      %v1989 = vunpack.c.l.b16 %v1494
      %v1990 = vunpack.c.l.b16 %v1495
      %v1991 = vpack.c.b16 %v1976, %v1975
      %v1992 = vpack.c.b16 %v1978, %v1977
      %v1993 = vpack.c.b16 %v1980, %v1979
      %v1994 = vpack.c.b16 %v1982, %v1981
      %v1995 = vpack.c.b16 %v1984, %v1983
      %v1996 = vpack.c.b16 %v1986, %v1985
      %v1997 = vpack.c.b16 %v1988, %v1987
      %v1998 = vpack.c.b16 %v1990, %v1989
      %2007 = vmatprep.subr.bf16.mxu0 0
      %2008 = vmatpush1.bf16.msra.mxu0 %v1991
      %2009 = vmatprep.subr.bf16.mxu0 0
      %2010 = vmatpush1.bf16.msra.mxu0 %v1992
      %2011 = vmatprep.subr.bf16.mxu0 0
      %2012 = vmatpush1.bf16.msra.mxu0 %v1993
      %2013 = vmatprep.subr.bf16.mxu0 0
      %2014 = vmatpush1.bf16.msra.mxu0 %v1994
      %2015 = vmatprep.subr.bf16.mxu0 0
      %2016 = vmatpush1.bf16.msra.mxu0 %v1995
      %2017 = vmatprep.subr.bf16.mxu0 0
      %2018 = vmatpush1.bf16.msra.mxu0 %v1996
      %2019 = vmatprep.subr.bf16.mxu0 0
      %2020 = vmatpush1.bf16.msra.mxu0 %v1997
      %2021 = vmatprep.subr.bf16.mxu0 0
      %2022 = vmatpush1.bf16.msra.mxu0 %v1998
      %2023 = vmatprep.subr.bf16.mxu0 0
      %2024 = vmatpush1.bf16.msra.mxu0 0
      %2025 = vmatprep.subr.bf16.mxu0 0
      %2026 = vmatpush1.bf16.msra.mxu0 0
      %2027 = vmatprep.subr.bf16.mxu0 0
      %2028 = vmatpush1.bf16.msra.mxu0 0
      %2029 = vmatprep.subr.bf16.mxu0 0
      %2030 = vmatpush1.bf16.msra.mxu0 0
      %2031 = vmatprep.subr.bf16.mxu0 0
      %2032 = vmatpush1.bf16.msra.mxu0 0
      %2033 = vmatprep.subr.bf16.mxu0 0
      %2034 = vmatpush1.bf16.msra.mxu0 0
      %2035 = vmatprep.subr.bf16.mxu0 0
      %2036 = vmatpush1.bf16.msra.mxu0 0
      %2037 = vmatprep.subr.bf16.mxu0 0
      %2038 = vmatpush1.bf16.msra.mxu0 0
      %2039 = vmatprep.mubr.bf16.mxu0 0
      %2040 = vmatmul.mubr.bf16.gmra.mrb[0].mxu0 %v1807
      %v2041 = vpop.f32.mrb[0].mxu0
      %v2042 = vadd.f32 %v1664, %v2041
      %v2043 = vpop.f32.mrb[0].mxu0
      %v2044 = vpop.f32.mrb[0].mxu0
      %v2045 = vadd.f32 %v1667, %v2044
      %v2046 = vpop.f32.mrb[0].mxu0
      %2047 = vmatprep.mubr.bf16.mxu0 0
      %2048 = vmatmul.mubr.bf16.gmra.mrb[0].mxu0 %v1816
      %v2049 = vpop.f32.mrb[0].mxu0
      %v2050 = vadd.f32 %v1672, %v2049
      %v2051 = vpop.f32.mrb[0].mxu0
      %v2052 = vpop.f32.mrb[0].mxu0
      %v2053 = vadd.f32 %v1675, %v2052
      %v2054 = vpop.f32.mrb[0].mxu0
      %2055 = vmatprep.mubr.bf16.mxu0 0
      %2056 = vmatmul.mubr.bf16.gmra.mrb[0].mxu0 %v1825
      %v2057 = vpop.f32.mrb[0].mxu0
      %v2058 = vadd.f32 %v1680, %v2057
      %v2059 = vpop.f32.mrb[0].mxu0
      %v2060 = vpop.f32.mrb[0].mxu0
      %v2061 = vadd.f32 %v1683, %v2060
      %v2062 = vpop.f32.mrb[0].mxu0
      %2063 = vmatprep.mubr.bf16.mxu0 0
      %2064 = vmatmul.mubr.bf16.gmra.mrb[0].mxu0 %v1834
      %v2065 = vpop.f32.mrb[0].mxu0
      %v2066 = vadd.f32 %v1688, %v2065
      %v2067 = vpop.f32.mrb[0].mxu0
      %v2068 = vpop.f32.mrb[0].mxu0
      %v2069 = vadd.f32 %v1691, %v2068
      %v2070 = vpop.f32.mrb[0].mxu0
      %2071 = vmatprep.mubr.bf16.mxu0 0
      %2072 = vmatmul.mubr.bf16.gmra.mrb[0].mxu0 %v1843
      %v2073 = vpop.f32.mrb[0].mxu0
      %v2074 = vadd.f32 %v1696, %v2073
      %v2075 = vpop.f32.mrb[0].mxu0
      %v2076 = vpop.f32.mrb[0].mxu0
      %v2077 = vadd.f32 %v1699, %v2076
      %v2078 = vpop.f32.mrb[0].mxu0
      %2079 = vmatprep.mubr.bf16.mxu0 0
      %2080 = vmatmul.mubr.bf16.gmra.mrb[0].mxu0 %v1852
      %v2081 = vpop.f32.mrb[0].mxu0
      %v2082 = vadd.f32 %v1704, %v2081
      %v2083 = vpop.f32.mrb[0].mxu0
      %v2084 = vpop.f32.mrb[0].mxu0
      %v2085 = vadd.f32 %v1707, %v2084
      %v2086 = vpop.f32.mrb[0].mxu0
      %2087 = vmatprep.mubr.bf16.mxu0 0
      %2088 = vmatmul.mubr.bf16.gmra.mrb[0].mxu0 %v1861
      %v2089 = vpop.f32.mrb[0].mxu0
      %v2090 = vadd.f32 %v1712, %v2089
      %v2091 = vpop.f32.mrb[0].mxu0
      %v2092 = vpop.f32.mrb[0].mxu0
      %v2093 = vadd.f32 %v1715, %v2092
      %v2094 = vpop.f32.mrb[0].mxu0
      %2095 = vmatprep.mubr.bf16.mxu0 0
      %2096 = vmatmul.mubr.bf16.gmra.mrb[0].mxu0 %v1870
      %v2097 = vpop.f32.mrb[0].mxu0
      %v2098 = vadd.f32 %v1720, %v2097
      %v2099 = vpop.f32.mrb[0].mxu0
      %v2100 = vpop.f32.mrb[0].mxu0
      %v2101 = vadd.f32 %v1723, %v2100
      %v2102 = vpop.f32.mrb[0].mxu0
      %2103 = vmatprep.mubr.bf16.mxu0 0
      %2104 = vmatmul.mubr.bf16.gmra.mrb[0].mxu0 %v1879
      %v2105 = vpop.f32.mrb[0].mxu0
      %v2106 = vadd.f32 %v1728, %v2105
      %v2107 = vpop.f32.mrb[0].mxu0
      %v2108 = vpop.f32.mrb[0].mxu0
      %v2109 = vadd.f32 %v1731, %v2108
      %v2110 = vpop.f32.mrb[0].mxu0
      %2111 = vmatprep.mubr.bf16.mxu0 0
      %2112 = vmatmul.mubr.bf16.gmra.mrb[0].mxu0 %v1888
      %v2113 = vpop.f32.mrb[0].mxu0
      %v2114 = vadd.f32 %v1736, %v2113
      %v2115 = vpop.f32.mrb[0].mxu0
      %v2116 = vpop.f32.mrb[0].mxu0
      %v2117 = vadd.f32 %v1739, %v2116
      %v2118 = vpop.f32.mrb[0].mxu0
      %2119 = vmatprep.mubr.bf16.mxu0 0
      %2120 = vmatmul.mubr.bf16.gmra.mrb[0].mxu0 %v1897
      %v2121 = vpop.f32.mrb[0].mxu0
      %v2122 = vadd.f32 %v1744, %v2121
      %v2123 = vpop.f32.mrb[0].mxu0
      %v2124 = vpop.f32.mrb[0].mxu0
      %v2125 = vadd.f32 %v1747, %v2124
      %v2126 = vpop.f32.mrb[0].mxu0
      %2127 = vmatprep.mubr.bf16.mxu0 0
      %2128 = vmatmul.mubr.bf16.gmra.mrb[0].mxu0 %v1906
      %v2129 = vpop.f32.mrb[0].mxu0
      %v2130 = vadd.f32 %v1752, %v2129
      %v2131 = vpop.f32.mrb[0].mxu0
      %v2132 = vpop.f32.mrb[0].mxu0
      %v2133 = vadd.f32 %v1755, %v2132
      %v2134 = vpop.f32.mrb[0].mxu0
      %2135 = vmatprep.mubr.bf16.mxu0 0
      %2136 = vmatmul.mubr.bf16.gmra.mrb[0].mxu0 %v1915
      %v2137 = vpop.f32.mrb[0].mxu0
      %v2138 = vadd.f32 %v1760, %v2137
      %v2139 = vpop.f32.mrb[0].mxu0
      %v2140 = vpop.f32.mrb[0].mxu0
      %v2141 = vadd.f32 %v1763, %v2140
      %v2142 = vpop.f32.mrb[0].mxu0
      %2143 = vmatprep.mubr.bf16.mxu0 0
      %2144 = vmatmul.mubr.bf16.gmra.mrb[0].mxu0 %v1924
      %v2145 = vpop.f32.mrb[0].mxu0
      %v2146 = vadd.f32 %v1768, %v2145
      %v2147 = vpop.f32.mrb[0].mxu0
      %v2148 = vpop.f32.mrb[0].mxu0
      %v2149 = vadd.f32 %v1771, %v2148
      %v2150 = vpop.f32.mrb[0].mxu0
      %2151 = vmatprep.mubr.bf16.mxu0 0
      %2152 = vmatmul.mubr.bf16.gmra.mrb[0].mxu0 %v1933
      %v2153 = vpop.f32.mrb[0].mxu0
      %v2154 = vadd.f32 %v1776, %v2153
      %v2155 = vpop.f32.mrb[0].mxu0
      %v2156 = vpop.f32.mrb[0].mxu0
      %v2157 = vadd.f32 %v1779, %v2156
      %v2158 = vpop.f32.mrb[0].mxu0
      %2159 = vmatprep.mubr.bf16.mxu0 0
      %2160 = vmatmul.mubr.bf16.gmra.mrb[0].mxu0 %v1942
      %v2161 = vpop.f32.mrb[0].mxu0
      %v2162 = vadd.f32 %v1784, %v2161
      %v2163 = vpop.f32.mrb[0].mxu0
      %v2164 = vpop.f32.mrb[0].mxu0
      %v2165 = vadd.f32 %v1787, %v2164
      %v2166 = vpop.f32.mrb[0].mxu0
      %2167 = vdwg.mxu0
      %v2168 = vld [vmem:[#allocation2 + $0x80] sm:$0x1f]
      %v2169 = vsel %vm1077, 1, 0
      %v2170 = vsel %vm1078, 1, 0
      %v2171 = vsel %vm1079, 1, 0
      %v2172 = vsel %vm1080, 1, 0
      %v2173 = vsel %vm1081, 1, 0
      %v2174 = vsel %vm1082, 1, 0
      %v2175 = vsel %vm1083, 1, 0
      %v2176 = vsel %vm1084, 1, 0
      %v2177 = vsel %vm1085, 1, 0
      %v2178 = vsel %vm1086, 1, 0
      %v2179 = vsel %vm1087, 1, 0
      %v2180 = vsel %vm1088, 1, 0
      %v2181 = vsel %vm1089, 1, 0
      %v2182 = vsel %vm1090, 1, 0
      %v2183 = vsel %vm1091, 1, 0
      %v2184 = vsel %vm1092, 1, 0
      %v2185 = vsel %vm1093, 1, 0
      %v2186 = vsel %vm1094, 1, 0
      %v2187 = vsel %vm1095, 1, 0
      %v2188 = vsel %vm1096, 1, 0
      %v2189 = vsel %vm1097, 1, 0
      %v2190 = vsel %vm1098, 1, 0
      %v2191 = vsel %vm1099, 1, 0
      %v2192 = vsel %vm1100, 1, 0
      %v2193 = vsel %vm1101, 1, 0
      %v2194 = vsel %vm1102, 1, 0
      %v2195 = vsel %vm1103, 1, 0
      %v2196 = vsel %vm1104, 1, 0
      %v2197 = vsel %vm1105, 1, 0
      %v2198 = vsel %vm1106, 1, 0
      %v2199 = vsel %vm1107, 1, 0
      %v2200 = vsel %vm1108, 1, 0
      %vm2201 = vcmp.eq.s32.totalorder %v2169, 1
      %vm2202 = vcmp.eq.s32.totalorder %v2170, 1
      %vm2203 = vcmp.eq.s32.totalorder %v2171, 1
      %vm2204 = vcmp.eq.s32.totalorder %v2172, 1
      %vm2205 = vcmp.eq.s32.totalorder %v2173, 1
      %vm2206 = vcmp.eq.s32.totalorder %v2174, 1
      %vm2207 = vcmp.eq.s32.totalorder %v2175, 1
      %vm2208 = vcmp.eq.s32.totalorder %v2176, 1
      %vm2209 = vcmp.eq.s32.totalorder %v2177, 1
      %vm2210 = vcmp.eq.s32.totalorder %v2178, 1
      %vm2211 = vcmp.eq.s32.totalorder %v2179, 1
      %vm2212 = vcmp.eq.s32.totalorder %v2180, 1
      %vm2213 = vcmp.eq.s32.totalorder %v2181, 1
      %vm2214 = vcmp.eq.s32.totalorder %v2182, 1
      %vm2215 = vcmp.eq.s32.totalorder %v2183, 1
      %vm2216 = vcmp.eq.s32.totalorder %v2184, 1
      %vm2217 = vcmp.eq.s32.totalorder %v2185, 1
      %vm2218 = vcmp.eq.s32.totalorder %v2186, 1
      %vm2219 = vcmp.eq.s32.totalorder %v2187, 1
      %vm2220 = vcmp.eq.s32.totalorder %v2188, 1
      %vm2221 = vcmp.eq.s32.totalorder %v2189, 1
      %vm2222 = vcmp.eq.s32.totalorder %v2190, 1
      %vm2223 = vcmp.eq.s32.totalorder %v2191, 1
      %vm2224 = vcmp.eq.s32.totalorder %v2192, 1
      %vm2225 = vcmp.eq.s32.totalorder %v2193, 1
      %vm2226 = vcmp.eq.s32.totalorder %v2194, 1
      %vm2227 = vcmp.eq.s32.totalorder %v2195, 1
      %vm2228 = vcmp.eq.s32.totalorder %v2196, 1
      %vm2229 = vcmp.eq.s32.totalorder %v2197, 1
      %vm2230 = vcmp.eq.s32.totalorder %v2198, 1
      %vm2231 = vcmp.eq.s32.totalorder %v2199, 1
      %vm2232 = vcmp.eq.s32.totalorder %v2200, 1
      %vm2233 = vmpackc.low %vm2201, %vm2201
      %vm2234 = vmpackc.low %vm2202, %vm2202
      %vm2235 = vmpackc.low %vm2203, %vm2203
      %vm2236 = vmpackc.low %vm2204, %vm2204
      %vm2237 = vmpackc.low %vm2205, %vm2205
      %vm2238 = vmpackc.low %vm2206, %vm2206
      %vm2239 = vmpackc.low %vm2207, %vm2207
      %vm2240 = vmpackc.low %vm2208, %vm2208
      %vm2241 = vmpackc.low %vm2209, %vm2209
      %vm2242 = vmpackc.low %vm2210, %vm2210
      %vm2243 = vmpackc.low %vm2211, %vm2211
      %vm2244 = vmpackc.low %vm2212, %vm2212
      %vm2245 = vmpackc.low %vm2213, %vm2213
      %vm2246 = vmpackc.low %vm2214, %vm2214
      %vm2247 = vmpackc.low %vm2215, %vm2215
      %vm2248 = vmpackc.low %vm2216, %vm2216
      %vm2249 = vmpackc.low %vm2217, %vm2217
      %vm2250 = vmpackc.low %vm2218, %vm2218
      %vm2251 = vmpackc.low %vm2219, %vm2219
      %vm2252 = vmpackc.low %vm2220, %vm2220
      %vm2253 = vmpackc.low %vm2221, %vm2221
      %vm2254 = vmpackc.low %vm2222, %vm2222
      %vm2255 = vmpackc.low %vm2223, %vm2223
      %vm2256 = vmpackc.low %vm2224, %vm2224
      %vm2257 = vmpackc.low %vm2225, %vm2225
      %vm2258 = vmpackc.low %vm2226, %vm2226
      %vm2259 = vmpackc.low %vm2227, %vm2227
      %vm2260 = vmpackc.low %vm2228, %vm2228
      %vm2261 = vmpackc.low %vm2229, %vm2229
      %vm2262 = vmpackc.low %vm2230, %vm2230
      %vm2263 = vmpackc.low %vm2231, %vm2231
      %vm2264 = vmpackc.low %vm2232, %vm2232
      %v2265 = vsel %vm2233, 65537, 0
      %v2266 = vsel %vm2234, 65537, 0
      %v2267 = vsel %vm2235, 65537, 0
      %v2268 = vsel %vm2236, 65537, 0
      %v2269 = vsel %vm2237, 65537, 0
      %v2270 = vsel %vm2238, 65537, 0
      %v2271 = vsel %vm2239, 65537, 0
      %v2272 = vsel %vm2240, 65537, 0
      %v2273 = vsel %vm2241, 65537, 0
      %v2274 = vsel %vm2242, 65537, 0
      %v2275 = vsel %vm2243, 65537, 0
      %v2276 = vsel %vm2244, 65537, 0
      %v2277 = vsel %vm2245, 65537, 0
      %v2278 = vsel %vm2246, 65537, 0
      %v2279 = vsel %vm2247, 65537, 0
      %v2280 = vsel %vm2248, 65537, 0
      %v2281 = vsel %vm2249, 65537, 0
      %v2282 = vsel %vm2250, 65537, 0
      %v2283 = vsel %vm2251, 65537, 0
      %v2284 = vsel %vm2252, 65537, 0
      %v2285 = vsel %vm2253, 65537, 0
      %v2286 = vsel %vm2254, 65537, 0
      %v2287 = vsel %vm2255, 65537, 0
      %v2288 = vsel %vm2256, 65537, 0
      %v2289 = vsel %vm2257, 65537, 0
      %v2290 = vsel %vm2258, 65537, 0
      %v2291 = vsel %vm2259, 65537, 0
      %v2292 = vsel %vm2260, 65537, 0
      %v2293 = vsel %vm2261, 65537, 0
      %v2294 = vsel %vm2262, 65537, 0
      %v2295 = vsel %vm2263, 65537, 0
      %v2296 = vsel %vm2264, 65537, 0
      %v2297 = vunpack.c.l.b16 %v2265
      %v2298 = vunpack.c.l.b16 %v2266
      %v2299 = vunpack.c.l.b16 %v2267
      %v2300 = vunpack.c.l.b16 %v2268
      %v2301 = vunpack.c.l.b16 %v2269
      %v2302 = vunpack.c.l.b16 %v2270
      %v2303 = vunpack.c.l.b16 %v2271
      %v2304 = vunpack.c.l.b16 %v2272
      %v2305 = vunpack.c.l.b16 %v2273
      %v2306 = vunpack.c.l.b16 %v2274
      %v2307 = vunpack.c.l.b16 %v2275
      %v2308 = vunpack.c.l.b16 %v2276
      %v2309 = vunpack.c.l.b16 %v2277
      %v2310 = vunpack.c.l.b16 %v2278
      %v2311 = vunpack.c.l.b16 %v2279
      %v2312 = vunpack.c.l.b16 %v2280
      %v2313 = vunpack.c.l.b16 %v2281
      %v2314 = vunpack.c.l.b16 %v2282
      %v2315 = vunpack.c.l.b16 %v2283
      %v2316 = vunpack.c.l.b16 %v2284
      %v2317 = vunpack.c.l.b16 %v2285
      %v2318 = vunpack.c.l.b16 %v2286
      %v2319 = vunpack.c.l.b16 %v2287
      %v2320 = vunpack.c.l.b16 %v2288
      %v2321 = vunpack.c.l.b16 %v2289
      %v2322 = vunpack.c.l.b16 %v2290
      %v2323 = vunpack.c.l.b16 %v2291
      %v2324 = vunpack.c.l.b16 %v2292
      %v2325 = vunpack.c.l.b16 %v2293
      %v2326 = vunpack.c.l.b16 %v2294
      %v2327 = vunpack.c.l.b16 %v2295
      %v2328 = vunpack.c.l.b16 %v2296
      %v2329 = vpack.c.b16 %v2298, %v2297
      %v2330 = vpack.c.b16 %v2300, %v2299
      %v2331 = vpack.c.b16 %v2302, %v2301
      %v2332 = vpack.c.b16 %v2304, %v2303
      %v2333 = vpack.c.b16 %v2306, %v2305
      %v2334 = vpack.c.b16 %v2308, %v2307
      %v2335 = vpack.c.b16 %v2310, %v2309
      %v2336 = vpack.c.b16 %v2312, %v2311
      %v2337 = vpack.c.b16 %v2314, %v2313
      %v2338 = vpack.c.b16 %v2316, %v2315
      %v2339 = vpack.c.b16 %v2318, %v2317
      %v2340 = vpack.c.b16 %v2320, %v2319
      %v2341 = vpack.c.b16 %v2322, %v2321
      %v2342 = vpack.c.b16 %v2324, %v2323
      %v2343 = vpack.c.b16 %v2326, %v2325
      %v2344 = vpack.c.b16 %v2328, %v2327
      %v2346 = vshrl.u32 %v2329, 16
      %v2348 = vrot.slane %v2346, 3
      %v2349 = vshll.u32 %v2329, 16
      %v2351 = vrot.slane %v2349, 4
      %v2352 = vor.u32 %v2348, %v2351
      %v2354 = vshrl.u32 %v2330, 16
      %v2356 = vrot.slane %v2354, 3
      %v2357 = vshll.u32 %v2330, 16
      %v2359 = vrot.slane %v2357, 4
      %v2360 = vor.u32 %v2356, %v2359
      %v2361 = vsel %vm1790, %v2352, %v2360
      %v2363 = vshrl.u32 %v2331, 16
      %v2365 = vrot.slane %v2363, 3
      %v2366 = vshll.u32 %v2331, 16
      %v2368 = vrot.slane %v2366, 4
      %v2369 = vor.u32 %v2365, %v2368
      %v2370 = vsel %vm1790, %v2360, %v2369
      %v2372 = vshrl.u32 %v2332, 16
      %v2374 = vrot.slane %v2372, 3
      %v2375 = vshll.u32 %v2332, 16
      %v2377 = vrot.slane %v2375, 4
      %v2378 = vor.u32 %v2374, %v2377
      %v2379 = vsel %vm1790, %v2369, %v2378
      %v2381 = vshrl.u32 %v2333, 16
      %v2383 = vrot.slane %v2381, 3
      %v2384 = vshll.u32 %v2333, 16
      %v2386 = vrot.slane %v2384, 4
      %v2387 = vor.u32 %v2383, %v2386
      %v2388 = vsel %vm1790, %v2378, %v2387
      %v2390 = vshrl.u32 %v2334, 16
      %v2392 = vrot.slane %v2390, 3
      %v2393 = vshll.u32 %v2334, 16
      %v2395 = vrot.slane %v2393, 4
      %v2396 = vor.u32 %v2392, %v2395
      %v2397 = vsel %vm1790, %v2387, %v2396
      %v2399 = vshrl.u32 %v2335, 16
      %v2401 = vrot.slane %v2399, 3
      %v2402 = vshll.u32 %v2335, 16
      %v2404 = vrot.slane %v2402, 4
      %v2405 = vor.u32 %v2401, %v2404
      %v2406 = vsel %vm1790, %v2396, %v2405
      %v2408 = vshrl.u32 %v2336, 16
      %v2410 = vrot.slane %v2408, 3
      %v2411 = vshll.u32 %v2336, 16
      %v2413 = vrot.slane %v2411, 4
      %v2414 = vor.u32 %v2410, %v2413
      %v2415 = vsel %vm1790, %v2405, %v2414
      %v2417 = vshrl.u32 %v2337, 16
      %v2419 = vrot.slane %v2417, 3
      %v2420 = vshll.u32 %v2337, 16
      %v2422 = vrot.slane %v2420, 4
      %v2423 = vor.u32 %v2419, %v2422
      %v2424 = vsel %vm1790, %v2414, %v2423
      %v2426 = vshrl.u32 %v2338, 16
      %v2428 = vrot.slane %v2426, 3
      %v2429 = vshll.u32 %v2338, 16
      %v2431 = vrot.slane %v2429, 4
      %v2432 = vor.u32 %v2428, %v2431
      %v2433 = vsel %vm1790, %v2423, %v2432
      %v2435 = vshrl.u32 %v2339, 16
      %v2437 = vrot.slane %v2435, 3
      %v2438 = vshll.u32 %v2339, 16
      %v2440 = vrot.slane %v2438, 4
      %v2441 = vor.u32 %v2437, %v2440
      %v2442 = vsel %vm1790, %v2432, %v2441
      %v2444 = vshrl.u32 %v2340, 16
      %v2446 = vrot.slane %v2444, 3
      %v2447 = vshll.u32 %v2340, 16
      %v2449 = vrot.slane %v2447, 4
      %v2450 = vor.u32 %v2446, %v2449
      %v2451 = vsel %vm1790, %v2441, %v2450
      %v2453 = vshrl.u32 %v2341, 16
      %v2455 = vrot.slane %v2453, 3
      %v2456 = vshll.u32 %v2341, 16
      %v2458 = vrot.slane %v2456, 4
      %v2459 = vor.u32 %v2455, %v2458
      %v2460 = vsel %vm1790, %v2450, %v2459
      %v2462 = vshrl.u32 %v2342, 16
      %v2464 = vrot.slane %v2462, 3
      %v2465 = vshll.u32 %v2342, 16
      %v2467 = vrot.slane %v2465, 4
      %v2468 = vor.u32 %v2464, %v2467
      %v2469 = vsel %vm1790, %v2459, %v2468
      %v2471 = vshrl.u32 %v2343, 16
      %v2473 = vrot.slane %v2471, 3
      %v2474 = vshll.u32 %v2343, 16
      %v2476 = vrot.slane %v2474, 4
      %v2477 = vor.u32 %v2473, %v2476
      %v2478 = vsel %vm1790, %v2468, %v2477
      %v2480 = vshrl.u32 %v2344, 16
      %v2482 = vrot.slane %v2480, 3
      %v2483 = vshll.u32 %v2344, 16
      %v2485 = vrot.slane %v2483, 4
      %v2486 = vor.u32 %v2482, %v2485
      %v2487 = vsel %vm1790, %v2477, %v2486
      %vm2488 = vcmp.ne.s16.totalorder %v2352, 0
      %vm2489 = vcmp.ne.s16.totalorder %v2361, 0
      %vm2490 = vcmp.ne.s16.totalorder %v2370, 0
      %vm2491 = vcmp.ne.s16.totalorder %v2379, 0
      %vm2492 = vcmp.ne.s16.totalorder %v2388, 0
      %vm2493 = vcmp.ne.s16.totalorder %v2397, 0
      %vm2494 = vcmp.ne.s16.totalorder %v2406, 0
      %vm2495 = vcmp.ne.s16.totalorder %v2415, 0
      %vm2496 = vcmp.ne.s16.totalorder %v2424, 0
      %vm2497 = vcmp.ne.s16.totalorder %v2433, 0
      %vm2498 = vcmp.ne.s16.totalorder %v2442, 0
      %vm2499 = vcmp.ne.s16.totalorder %v2451, 0
      %vm2500 = vcmp.ne.s16.totalorder %v2460, 0
      %vm2501 = vcmp.ne.s16.totalorder %v2469, 0
      %vm2502 = vcmp.ne.s16.totalorder %v2478, 0
      %vm2503 = vcmp.ne.s16.totalorder %v2487, 0
      %vm2504 = vcmp.ne.s16.totalorder %v2486, 0
      %v2505 = vsel %vm2488, %v1496, 0
      %v2506 = vsel %vm2489, %v1110, 0
      %v2507 = vsel %vm2490, %v1111, 0
      %v2508 = vsel %vm2491, %v1112, 0
      %v2509 = vsel %vm2492, %v1113, 0
      %v2510 = vsel %vm2493, %v1114, 0
      %v2511 = vsel %vm2494, %v1115, 0
      %v2512 = vsel %vm2495, %v1116, 0
      %v2513 = vsel %vm2496, %v1117, 0
      %v2514 = vsel %vm2497, %v1118, 0
      %v2515 = vsel %vm2498, %v1119, 0
      %v2516 = vsel %vm2499, %v1120, 0
      %v2517 = vsel %vm2500, %v1121, 0
      %v2518 = vsel %vm2501, %v1122, 0
      %v2519 = vsel %vm2502, %v1123, 0
      %v2520 = vsel %vm2503, %v1124, 0
      %v2521 = vsel %vm2504, %v2168, 0
      %s2522 = scalar_lea.vmem %s3, 128
      %v2523 = vld [vmem:[%s2522] sm:$0xf]
      %v2524 = vld [vmem:[%s2522 + $0x4] sm:$0xf]
      %v2525 = vld [vmem:[%s2522 + $0x8] sm:$0xf]
      %v2526 = vld [vmem:[%s2522 + $0xc] sm:$0xf]
      %v2527 = vld [vmem:[%s2522 + $0x10] sm:$0xf]
      %v2528 = vld [vmem:[%s2522 + $0x14] sm:$0xf]
      %v2529 = vld [vmem:[%s2522 + $0x18] sm:$0xf]
      %v2530 = vld [vmem:[%s2522 + $0x1c] sm:$0xf]
      %v2531 = vld [vmem:[%s2522 + $0x20] sm:$0xf]
      %v2532 = vld [vmem:[%s2522 + $0x24] sm:$0xf]
      %v2533 = vld [vmem:[%s2522 + $0x28] sm:$0xf]
      %v2534 = vld [vmem:[%s2522 + $0x2c] sm:$0xf]
      %v2535 = vld [vmem:[%s2522 + $0x30] sm:$0xf]
      %v2536 = vld [vmem:[%s2522 + $0x34] sm:$0xf]
      %v2537 = vld [vmem:[%s2522 + $0x38] sm:$0xf]
      %v2538 = vld [vmem:[%s2522 + $0x3c] sm:$0xf]
      %v2540 = vshrl.u32 %v2505, 16
      %v2542 = vrot.slane %v2540, 4
      %v2543 = vshll.u32 %v2505, 16
      %v2545 = vrot.slane %v2543, 5
      %v2546 = vor.u32 %v2542, %v2545
      %v2548 = vshrl.u32 %v2506, 16
      %v2550 = vrot.slane %v2548, 4
      %v2551 = vshll.u32 %v2506, 16
      %v2553 = vrot.slane %v2551, 5
      %v2554 = vor.u32 %v2550, %v2553
      %v2555 = vsel %vm1302, %v2546, %v2554
      %v2557 = vshrl.u32 %v2507, 16
      %v2559 = vrot.slane %v2557, 4
      %v2560 = vshll.u32 %v2507, 16
      %v2562 = vrot.slane %v2560, 5
      %v2563 = vor.u32 %v2559, %v2562
      %v2564 = vsel %vm1302, %v2554, %v2563
      %v2566 = vshrl.u32 %v2508, 16
      %v2568 = vrot.slane %v2566, 4
      %v2569 = vshll.u32 %v2508, 16
      %v2571 = vrot.slane %v2569, 5
      %v2572 = vor.u32 %v2568, %v2571
      %v2573 = vsel %vm1302, %v2563, %v2572
      %v2575 = vshrl.u32 %v2509, 16
      %v2577 = vrot.slane %v2575, 4
      %v2578 = vshll.u32 %v2509, 16
      %v2580 = vrot.slane %v2578, 5
      %v2581 = vor.u32 %v2577, %v2580
      %v2582 = vsel %vm1302, %v2572, %v2581
      %v2584 = vshrl.u32 %v2510, 16
      %v2586 = vrot.slane %v2584, 4
      %v2587 = vshll.u32 %v2510, 16
      %v2589 = vrot.slane %v2587, 5
      %v2590 = vor.u32 %v2586, %v2589
      %v2591 = vsel %vm1302, %v2581, %v2590
      %v2593 = vshrl.u32 %v2511, 16
      %v2595 = vrot.slane %v2593, 4
      %v2596 = vshll.u32 %v2511, 16
      %v2598 = vrot.slane %v2596, 5
      %v2599 = vor.u32 %v2595, %v2598
      %v2600 = vsel %vm1302, %v2590, %v2599
      %v2602 = vshrl.u32 %v2512, 16
      %v2604 = vrot.slane %v2602, 4
      %v2605 = vshll.u32 %v2512, 16
      %v2607 = vrot.slane %v2605, 5
      %v2608 = vor.u32 %v2604, %v2607
      %v2609 = vsel %vm1302, %v2599, %v2608
      %v2611 = vshrl.u32 %v2513, 16
      %v2613 = vrot.slane %v2611, 4
      %v2614 = vshll.u32 %v2513, 16
      %v2616 = vrot.slane %v2614, 5
      %v2617 = vor.u32 %v2613, %v2616
      %v2618 = vsel %vm1302, %v2608, %v2617
      %v2620 = vshrl.u32 %v2514, 16
      %v2622 = vrot.slane %v2620, 4
      %v2623 = vshll.u32 %v2514, 16
      %v2625 = vrot.slane %v2623, 5
      %v2626 = vor.u32 %v2622, %v2625
      %v2627 = vsel %vm1302, %v2617, %v2626
      %v2629 = vshrl.u32 %v2515, 16
      %v2631 = vrot.slane %v2629, 4
      %v2632 = vshll.u32 %v2515, 16
      %v2634 = vrot.slane %v2632, 5
      %v2635 = vor.u32 %v2631, %v2634
      %v2636 = vsel %vm1302, %v2626, %v2635
      %v2638 = vshrl.u32 %v2516, 16
      %v2640 = vrot.slane %v2638, 4
      %v2641 = vshll.u32 %v2516, 16
      %v2643 = vrot.slane %v2641, 5
      %v2644 = vor.u32 %v2640, %v2643
      %v2645 = vsel %vm1302, %v2635, %v2644
      %v2647 = vshrl.u32 %v2517, 16
      %v2649 = vrot.slane %v2647, 4
      %v2650 = vshll.u32 %v2517, 16
      %v2652 = vrot.slane %v2650, 5
      %v2653 = vor.u32 %v2649, %v2652
      %v2654 = vsel %vm1302, %v2644, %v2653
      %v2656 = vshrl.u32 %v2518, 16
      %v2658 = vrot.slane %v2656, 4
      %v2659 = vshll.u32 %v2518, 16
      %v2661 = vrot.slane %v2659, 5
      %v2662 = vor.u32 %v2658, %v2661
      %v2663 = vsel %vm1302, %v2653, %v2662
      %v2665 = vshrl.u32 %v2519, 16
      %v2667 = vrot.slane %v2665, 4
      %v2668 = vshll.u32 %v2519, 16
      %v2670 = vrot.slane %v2668, 5
      %v2671 = vor.u32 %v2667, %v2670
      %v2672 = vsel %vm1302, %v2662, %v2671
      %v2674 = vshrl.u32 %v2520, 16
      %v2676 = vrot.slane %v2674, 4
      %v2677 = vshll.u32 %v2520, 16
      %v2679 = vrot.slane %v2677, 5
      %v2680 = vor.u32 %v2676, %v2679
      %v2681 = vsel %vm1302, %v2671, %v2680
      %v2683 = vshrl.u32 %v2521, 16
      %v2685 = vrot.slane %v2683, 4
      %v2686 = vshll.u32 %v2521, 16
      %v2688 = vrot.slane %v2686, 5
      %v2689 = vor.u32 %v2685, %v2688
      %v2690 = vsel %vm1302, %v2680, %v2689
      %v2723 = vunpack.c.l.b16 %v2523
      %v2724 = vunpack.c.l.b16 %v2524
      %v2725 = vunpack.c.l.b16 %v2525
      %v2726 = vunpack.c.l.b16 %v2526
      %v2727 = vunpack.c.l.b16 %v2527
      %v2728 = vunpack.c.l.b16 %v2528
      %v2729 = vunpack.c.l.b16 %v2529
      %v2730 = vunpack.c.l.b16 %v2530
      %v2731 = vunpack.c.l.b16 %v2531
      %v2732 = vunpack.c.l.b16 %v2532
      %v2733 = vunpack.c.l.b16 %v2533
      %v2734 = vunpack.c.l.b16 %v2534
      %v2735 = vunpack.c.l.b16 %v2535
      %v2736 = vunpack.c.l.b16 %v2536
      %v2737 = vunpack.c.l.b16 %v2537
      %v2738 = vunpack.c.l.b16 %v2538
      %v2739 = vpack.c.b16 %v2724, %v2723
      %v2740 = vpack.c.b16 %v2726, %v2725
      %v2741 = vpack.c.b16 %v2728, %v2727
      %v2742 = vpack.c.b16 %v2730, %v2729
      %v2743 = vpack.c.b16 %v2732, %v2731
      %v2744 = vpack.c.b16 %v2734, %v2733
      %v2745 = vpack.c.b16 %v2736, %v2735
      %v2746 = vpack.c.b16 %v2738, %v2737
      %2755 = vmatprep.subr.bf16.mxu0 0
      %2756 = vmatpush1.bf16.msra.mxu0 %v2739
      %2757 = vmatprep.subr.bf16.mxu0 0
      %2758 = vmatpush1.bf16.msra.mxu0 %v2740
      %2759 = vmatprep.subr.bf16.mxu0 0
      %2760 = vmatpush1.bf16.msra.mxu0 %v2741
      %2761 = vmatprep.subr.bf16.mxu0 0
      %2762 = vmatpush1.bf16.msra.mxu0 %v2742
      %2763 = vmatprep.subr.bf16.mxu0 0
      %2764 = vmatpush1.bf16.msra.mxu0 %v2743
      %2765 = vmatprep.subr.bf16.mxu0 0
      %2766 = vmatpush1.bf16.msra.mxu0 %v2744
      %2767 = vmatprep.subr.bf16.mxu0 0
      %2768 = vmatpush1.bf16.msra.mxu0 %v2745
      %2769 = vmatprep.subr.bf16.mxu0 0
      %2770 = vmatpush1.bf16.msra.mxu0 %v2746
      %2771 = vmatprep.subr.bf16.mxu0 0
      %2772 = vmatpush1.bf16.msra.mxu0 0
      %2773 = vmatprep.subr.bf16.mxu0 0
      %2774 = vmatpush1.bf16.msra.mxu0 0
      %2775 = vmatprep.subr.bf16.mxu0 0
      %2776 = vmatpush1.bf16.msra.mxu0 0
      %2777 = vmatprep.subr.bf16.mxu0 0
      %2778 = vmatpush1.bf16.msra.mxu0 0
      %2779 = vmatprep.subr.bf16.mxu0 0
      %2780 = vmatpush1.bf16.msra.mxu0 0
      %2781 = vmatprep.subr.bf16.mxu0 0
      %2782 = vmatpush1.bf16.msra.mxu0 0
      %2783 = vmatprep.subr.bf16.mxu0 0
      %2784 = vmatpush1.bf16.msra.mxu0 0
      %2785 = vmatprep.subr.bf16.mxu0 0
      %2786 = vmatpush1.bf16.msra.mxu0 0
      %2787 = vmatprep.mubr.bf16.mxu0 0
      %2788 = vmatmul.mubr.bf16.gmra.mrb[0].mxu0 %v2555
      %v2789 = vpop.f32.mrb[0].mxu0
      %v2790 = vadd.f32 0.0, %v2789
      %v2791 = vpop.f32.mrb[0].mxu0
      %v2792 = vpop.f32.mrb[0].mxu0
      %v2793 = vadd.f32 0.0, %v2792
      %v2794 = vpop.f32.mrb[0].mxu0
      %2795 = vmatprep.mubr.bf16.mxu0 0
      %2796 = vmatmul.mubr.bf16.gmra.mrb[0].mxu0 %v2564
      %v2797 = vpop.f32.mrb[0].mxu0
      %v2798 = vadd.f32 0.0, %v2797
      %v2799 = vpop.f32.mrb[0].mxu0
      %v2800 = vpop.f32.mrb[0].mxu0
      %v2801 = vadd.f32 0.0, %v2800
      %v2802 = vpop.f32.mrb[0].mxu0
      %2803 = vmatprep.mubr.bf16.mxu0 0
      %2804 = vmatmul.mubr.bf16.gmra.mrb[0].mxu0 %v2573
      %v2805 = vpop.f32.mrb[0].mxu0
      %v2806 = vadd.f32 0.0, %v2805
      %v2807 = vpop.f32.mrb[0].mxu0
      %v2808 = vpop.f32.mrb[0].mxu0
      %v2809 = vadd.f32 0.0, %v2808
      %v2810 = vpop.f32.mrb[0].mxu0
      %2811 = vmatprep.mubr.bf16.mxu0 0
      %2812 = vmatmul.mubr.bf16.gmra.mrb[0].mxu0 %v2582
      %v2813 = vpop.f32.mrb[0].mxu0
      %v2814 = vadd.f32 0.0, %v2813
      %v2815 = vpop.f32.mrb[0].mxu0
      %v2816 = vpop.f32.mrb[0].mxu0
      %v2817 = vadd.f32 0.0, %v2816
      %v2818 = vpop.f32.mrb[0].mxu0
      %2819 = vmatprep.mubr.bf16.mxu0 0
      %2820 = vmatmul.mubr.bf16.gmra.mrb[0].mxu0 %v2591
      %v2821 = vpop.f32.mrb[0].mxu0
      %v2822 = vadd.f32 0.0, %v2821
      %v2823 = vpop.f32.mrb[0].mxu0
      %v2824 = vpop.f32.mrb[0].mxu0
      %v2825 = vadd.f32 0.0, %v2824
      %v2826 = vpop.f32.mrb[0].mxu0
      %2827 = vmatprep.mubr.bf16.mxu0 0
      %2828 = vmatmul.mubr.bf16.gmra.mrb[0].mxu0 %v2600
      %v2829 = vpop.f32.mrb[0].mxu0
      %v2830 = vadd.f32 0.0, %v2829
      %v2831 = vpop.f32.mrb[0].mxu0
      %v2832 = vpop.f32.mrb[0].mxu0
      %v2833 = vadd.f32 0.0, %v2832
      %v2834 = vpop.f32.mrb[0].mxu0
      %2835 = vmatprep.mubr.bf16.mxu0 0
      %2836 = vmatmul.mubr.bf16.gmra.mrb[0].mxu0 %v2609
      %v2837 = vpop.f32.mrb[0].mxu0
      %v2838 = vadd.f32 0.0, %v2837
      %v2839 = vpop.f32.mrb[0].mxu0
      %v2840 = vpop.f32.mrb[0].mxu0
      %v2841 = vadd.f32 0.0, %v2840
      %v2842 = vpop.f32.mrb[0].mxu0
      %2843 = vmatprep.mubr.bf16.mxu0 0
      %2844 = vmatmul.mubr.bf16.gmra.mrb[0].mxu0 %v2618
      %v2845 = vpop.f32.mrb[0].mxu0
      %v2846 = vadd.f32 0.0, %v2845
      %v2847 = vpop.f32.mrb[0].mxu0
      %v2848 = vpop.f32.mrb[0].mxu0
      %v2849 = vadd.f32 0.0, %v2848
      %v2850 = vpop.f32.mrb[0].mxu0
      %2851 = vmatprep.mubr.bf16.mxu0 0
      %2852 = vmatmul.mubr.bf16.gmra.mrb[0].mxu0 %v2627
      %v2853 = vpop.f32.mrb[0].mxu0
      %v2854 = vadd.f32 0.0, %v2853
      %v2855 = vpop.f32.mrb[0].mxu0
      %v2856 = vpop.f32.mrb[0].mxu0
      %v2857 = vadd.f32 0.0, %v2856
      %v2858 = vpop.f32.mrb[0].mxu0
      %2859 = vmatprep.mubr.bf16.mxu0 0
      %2860 = vmatmul.mubr.bf16.gmra.mrb[0].mxu0 %v2636
      %v2861 = vpop.f32.mrb[0].mxu0
      %v2862 = vadd.f32 0.0, %v2861
      %v2863 = vpop.f32.mrb[0].mxu0
      %v2864 = vpop.f32.mrb[0].mxu0
      %v2865 = vadd.f32 0.0, %v2864
      %v2866 = vpop.f32.mrb[0].mxu0
      %2867 = vmatprep.mubr.bf16.mxu0 0
      %2868 = vmatmul.mubr.bf16.gmra.mrb[0].mxu0 %v2645
      %v2869 = vpop.f32.mrb[0].mxu0
      %v2870 = vadd.f32 0.0, %v2869
      %v2871 = vpop.f32.mrb[0].mxu0
      %v2872 = vpop.f32.mrb[0].mxu0
      %v2873 = vadd.f32 0.0, %v2872
      %v2874 = vpop.f32.mrb[0].mxu0
      %2875 = vmatprep.mubr.bf16.mxu0 0
      %2876 = vmatmul.mubr.bf16.gmra.mrb[0].mxu0 %v2654
      %v2877 = vpop.f32.mrb[0].mxu0
      %v2878 = vadd.f32 0.0, %v2877
      %v2879 = vpop.f32.mrb[0].mxu0
      %v2880 = vpop.f32.mrb[0].mxu0
      %v2881 = vadd.f32 0.0, %v2880
      %v2882 = vpop.f32.mrb[0].mxu0
      %2883 = vmatprep.mubr.bf16.mxu0 0
      %2884 = vmatmul.mubr.bf16.gmra.mrb[0].mxu0 %v2663
      %v2885 = vpop.f32.mrb[0].mxu0
      %v2886 = vadd.f32 0.0, %v2885
      %v2887 = vpop.f32.mrb[0].mxu0
      %v2888 = vpop.f32.mrb[0].mxu0
      %v2889 = vadd.f32 0.0, %v2888
      %v2890 = vpop.f32.mrb[0].mxu0
      %2891 = vmatprep.mubr.bf16.mxu0 0
      %2892 = vmatmul.mubr.bf16.gmra.mrb[0].mxu0 %v2672
      %v2893 = vpop.f32.mrb[0].mxu0
      %v2894 = vadd.f32 0.0, %v2893
      %v2895 = vpop.f32.mrb[0].mxu0
      %v2896 = vpop.f32.mrb[0].mxu0
      %v2897 = vadd.f32 0.0, %v2896
      %v2898 = vpop.f32.mrb[0].mxu0
      %2899 = vmatprep.mubr.bf16.mxu0 0
      %2900 = vmatmul.mubr.bf16.gmra.mrb[0].mxu0 %v2681
      %v2901 = vpop.f32.mrb[0].mxu0
      %v2902 = vadd.f32 0.0, %v2901
      %v2903 = vpop.f32.mrb[0].mxu0
      %v2904 = vpop.f32.mrb[0].mxu0
      %v2905 = vadd.f32 0.0, %v2904
      %v2906 = vpop.f32.mrb[0].mxu0
      %2907 = vmatprep.mubr.bf16.mxu0 0
      %2908 = vmatmul.mubr.bf16.gmra.mrb[0].mxu0 %v2690
      %v2909 = vpop.f32.mrb[0].mxu0
      %v2910 = vadd.f32 0.0, %v2909
      %v2911 = vpop.f32.mrb[0].mxu0
      %v2912 = vpop.f32.mrb[0].mxu0
      %v2913 = vadd.f32 0.0, %v2912
      %v2914 = vpop.f32.mrb[0].mxu0
      %2915 = vdwg.mxu0
      %v2916 = vadd.f32 %v2042, %v2790
      %v2917 = vadd.f32 %v2045, %v2793
      %v2918 = vadd.f32 %v2050, %v2798
      %v2919 = vadd.f32 %v2053, %v2801
      %v2920 = vadd.f32 %v2058, %v2806
      %v2921 = vadd.f32 %v2061, %v2809
      %v2922 = vadd.f32 %v2066, %v2814
      %v2923 = vadd.f32 %v2069, %v2817
      %v2924 = vadd.f32 %v2074, %v2822
      %v2925 = vadd.f32 %v2077, %v2825
      %v2926 = vadd.f32 %v2082, %v2830
      %v2927 = vadd.f32 %v2085, %v2833
      %v2928 = vadd.f32 %v2090, %v2838
      %v2929 = vadd.f32 %v2093, %v2841
      %v2930 = vadd.f32 %v2098, %v2846
      %v2931 = vadd.f32 %v2101, %v2849
      %v2932 = vadd.f32 %v2106, %v2854
      %v2933 = vadd.f32 %v2109, %v2857
      %v2934 = vadd.f32 %v2114, %v2862
      %v2935 = vadd.f32 %v2117, %v2865
      %v2936 = vadd.f32 %v2122, %v2870
      %v2937 = vadd.f32 %v2125, %v2873
      %v2938 = vadd.f32 %v2130, %v2878
      %v2939 = vadd.f32 %v2133, %v2881
      %v2940 = vadd.f32 %v2138, %v2886
      %v2941 = vadd.f32 %v2141, %v2889
      %v2942 = vadd.f32 %v2146, %v2894
      %v2943 = vadd.f32 %v2149, %v2897
      %v2944 = vadd.f32 %v2154, %v2902
      %v2945 = vadd.f32 %v2157, %v2905
      %v2946 = vadd.f32 %v2162, %v2910
      %v2947 = vadd.f32 %v2165, %v2913
      %v2948 = vld [vmem:[#allocation2 + $0x8] sm:$0xf8]
      %v2949 = vld [vmem:[#allocation2 + $0x10] sm:$0xff]
      %v2950 = vld [vmem:[#allocation2 + $0x18] sm:$0xff]
      %v2951 = vld [vmem:[#allocation2 + $0x20] sm:$0xff]
      %v2952 = vld [vmem:[#allocation2 + $0x28] sm:$0xff]
      %v2953 = vld [vmem:[#allocation2 + $0x30] sm:$0xff]
      %v2954 = vld [vmem:[#allocation2 + $0x38] sm:$0xff]
      %v2955 = vld [vmem:[#allocation2 + $0x40] sm:$0xff]
      %v2956 = vld [vmem:[#allocation2 + $0x48] sm:$0xff]
      %v2957 = vld [vmem:[#allocation2 + $0x50] sm:$0xff]
      %v2958 = vld [vmem:[#allocation2 + $0x58] sm:$0xff]
      %v2959 = vld [vmem:[#allocation2 + $0x60] sm:$0xff]
      %v2960 = vld [vmem:[#allocation2 + $0x68] sm:$0xff]
      %v2961 = vld [vmem:[#allocation2 + $0x70] sm:$0xff]
      %v2962 = vld [vmem:[#allocation2 + $0x78] sm:$0xff]
      %v2963 = vld [vmem:[#allocation2 + $0x80] sm:$0xff]
      %v2964 = vld [vmem:[#allocation2 + $0x88] sm:$0xf]
      %v2965 = vsel %vm1446, %v2948, 0
      %v2966 = vsel %vm1447, %v2949, 0
      %v2967 = vsel %vm1448, %v2950, 0
      %v2968 = vsel %vm1449, %v2951, 0
      %v2969 = vsel %vm1450, %v2952, 0
      %v2970 = vsel %vm1451, %v2953, 0
      %v2971 = vsel %vm1452, %v2954, 0
      %v2972 = vsel %vm1453, %v2955, 0
      %v2973 = vsel %vm1454, %v2956, 0
      %v2974 = vsel %vm1455, %v2957, 0
      %v2975 = vsel %vm1456, %v2958, 0
      %v2976 = vsel %vm1457, %v2959, 0
      %v2977 = vsel %vm1458, %v2960, 0
      %v2978 = vsel %vm1459, %v2961, 0
      %v2979 = vsel %vm1460, %v2962, 0
      %v2980 = vsel %vm1461, %v2963, 0
      %v2981 = vsel %vm1462, %v2964, 0
      %s2982 = scalar_lea.vmem %s3, 192
      %v2983 = vld [vmem:[%s2982] sm:$0xf]
      %v2984 = vld [vmem:[%s2982 + $0x4] sm:$0xf]
      %v2985 = vld [vmem:[%s2982 + $0x8] sm:$0xf]
      %v2986 = vld [vmem:[%s2982 + $0xc] sm:$0xf]
      %v2987 = vld [vmem:[%s2982 + $0x10] sm:$0xf]
      %v2988 = vld [vmem:[%s2982 + $0x14] sm:$0xf]
      %v2989 = vld [vmem:[%s2982 + $0x18] sm:$0xf]
      %v2990 = vld [vmem:[%s2982 + $0x1c] sm:$0xf]
      %v2991 = vld [vmem:[%s2982 + $0x20] sm:$0xf]
      %v2992 = vld [vmem:[%s2982 + $0x24] sm:$0xf]
      %v2993 = vld [vmem:[%s2982 + $0x28] sm:$0xf]
      %v2994 = vld [vmem:[%s2982 + $0x2c] sm:$0xf]
      %v2995 = vld [vmem:[%s2982 + $0x30] sm:$0xf]
      %v2996 = vld [vmem:[%s2982 + $0x34] sm:$0xf]
      %v2997 = vld [vmem:[%s2982 + $0x38] sm:$0xf]
      %v2998 = vld [vmem:[%s2982 + $0x3c] sm:$0xf]
      %v3000 = vshrl.u32 %v2965, 16
      %v3002 = vrot.slane %v3000, 3
      %v3003 = vshll.u32 %v2965, 16
      %v3005 = vrot.slane %v3003, 4
      %v3006 = vor.u32 %v3002, %v3005
      %v3008 = vshrl.u32 %v2966, 16
      %v3010 = vrot.slane %v3008, 3
      %v3011 = vshll.u32 %v2966, 16
      %v3013 = vrot.slane %v3011, 4
      %v3014 = vor.u32 %v3010, %v3013
      %v3015 = vsel %vm1790, %v3006, %v3014
      %v3017 = vshrl.u32 %v2967, 16
      %v3019 = vrot.slane %v3017, 3
      %v3020 = vshll.u32 %v2967, 16
      %v3022 = vrot.slane %v3020, 4
      %v3023 = vor.u32 %v3019, %v3022
      %v3024 = vsel %vm1790, %v3014, %v3023
      %v3026 = vshrl.u32 %v2968, 16
      %v3028 = vrot.slane %v3026, 3
      %v3029 = vshll.u32 %v2968, 16
      %v3031 = vrot.slane %v3029, 4
      %v3032 = vor.u32 %v3028, %v3031
      %v3033 = vsel %vm1790, %v3023, %v3032
      %v3035 = vshrl.u32 %v2969, 16
      %v3037 = vrot.slane %v3035, 3
      %v3038 = vshll.u32 %v2969, 16
      %v3040 = vrot.slane %v3038, 4
      %v3041 = vor.u32 %v3037, %v3040
      %v3042 = vsel %vm1790, %v3032, %v3041
      %v3044 = vshrl.u32 %v2970, 16
      %v3046 = vrot.slane %v3044, 3
      %v3047 = vshll.u32 %v2970, 16
      %v3049 = vrot.slane %v3047, 4
      %v3050 = vor.u32 %v3046, %v3049
      %v3051 = vsel %vm1790, %v3041, %v3050
      %v3053 = vshrl.u32 %v2971, 16
      %v3055 = vrot.slane %v3053, 3
      %v3056 = vshll.u32 %v2971, 16
      %v3058 = vrot.slane %v3056, 4
      %v3059 = vor.u32 %v3055, %v3058
      %v3060 = vsel %vm1790, %v3050, %v3059
      %v3062 = vshrl.u32 %v2972, 16
      %v3064 = vrot.slane %v3062, 3
      %v3065 = vshll.u32 %v2972, 16
      %v3067 = vrot.slane %v3065, 4
      %v3068 = vor.u32 %v3064, %v3067
      %v3069 = vsel %vm1790, %v3059, %v3068
      %v3071 = vshrl.u32 %v2973, 16
      %v3073 = vrot.slane %v3071, 3
      %v3074 = vshll.u32 %v2973, 16
      %v3076 = vrot.slane %v3074, 4
      %v3077 = vor.u32 %v3073, %v3076
      %v3078 = vsel %vm1790, %v3068, %v3077
      %v3080 = vshrl.u32 %v2974, 16
      %v3082 = vrot.slane %v3080, 3
      %v3083 = vshll.u32 %v2974, 16
      %v3085 = vrot.slane %v3083, 4
      %v3086 = vor.u32 %v3082, %v3085
      %v3087 = vsel %vm1790, %v3077, %v3086
      %v3089 = vshrl.u32 %v2975, 16
      %v3091 = vrot.slane %v3089, 3
      %v3092 = vshll.u32 %v2975, 16
      %v3094 = vrot.slane %v3092, 4
      %v3095 = vor.u32 %v3091, %v3094
      %v3096 = vsel %vm1790, %v3086, %v3095
      %v3098 = vshrl.u32 %v2976, 16
      %v3100 = vrot.slane %v3098, 3
      %v3101 = vshll.u32 %v2976, 16
      %v3103 = vrot.slane %v3101, 4
      %v3104 = vor.u32 %v3100, %v3103
      %v3105 = vsel %vm1790, %v3095, %v3104
      %v3107 = vshrl.u32 %v2977, 16
      %v3109 = vrot.slane %v3107, 3
      %v3110 = vshll.u32 %v2977, 16
      %v3112 = vrot.slane %v3110, 4
      %v3113 = vor.u32 %v3109, %v3112
      %v3114 = vsel %vm1790, %v3104, %v3113
      %v3116 = vshrl.u32 %v2978, 16
      %v3118 = vrot.slane %v3116, 3
      %v3119 = vshll.u32 %v2978, 16
      %v3121 = vrot.slane %v3119, 4
      %v3122 = vor.u32 %v3118, %v3121
      %v3123 = vsel %vm1790, %v3113, %v3122
      %v3125 = vshrl.u32 %v2979, 16
      %v3127 = vrot.slane %v3125, 3
      %v3128 = vshll.u32 %v2979, 16
      %v3130 = vrot.slane %v3128, 4
      %v3131 = vor.u32 %v3127, %v3130
      %v3132 = vsel %vm1790, %v3122, %v3131
      %v3134 = vshrl.u32 %v2980, 16
      %v3136 = vrot.slane %v3134, 3
      %v3137 = vshll.u32 %v2980, 16
      %v3139 = vrot.slane %v3137, 4
      %v3140 = vor.u32 %v3136, %v3139
      %v3141 = vsel %vm1790, %v3131, %v3140
      %v3143 = vshrl.u32 %v2981, 16
      %v3145 = vrot.slane %v3143, 3
      %v3146 = vshll.u32 %v2981, 16
      %v3148 = vrot.slane %v3146, 4
      %v3149 = vor.u32 %v3145, %v3148
      %v3150 = vsel %vm1790, %v3140, %v3149
      %v3183 = vunpack.c.l.b16 %v2983
      %v3184 = vunpack.c.l.b16 %v2984
      %v3185 = vunpack.c.l.b16 %v2985
      %v3186 = vunpack.c.l.b16 %v2986
      %v3187 = vunpack.c.l.b16 %v2987
      %v3188 = vunpack.c.l.b16 %v2988
      %v3189 = vunpack.c.l.b16 %v2989
      %v3190 = vunpack.c.l.b16 %v2990
      %v3191 = vunpack.c.l.b16 %v2991
      %v3192 = vunpack.c.l.b16 %v2992
      %v3193 = vunpack.c.l.b16 %v2993
      %v3194 = vunpack.c.l.b16 %v2994
      %v3195 = vunpack.c.l.b16 %v2995
      %v3196 = vunpack.c.l.b16 %v2996
      %v3197 = vunpack.c.l.b16 %v2997
      %v3198 = vunpack.c.l.b16 %v2998
      %v3199 = vpack.c.b16 %v3184, %v3183
      %v3200 = vpack.c.b16 %v3186, %v3185
      %v3201 = vpack.c.b16 %v3188, %v3187
      %v3202 = vpack.c.b16 %v3190, %v3189
      %v3203 = vpack.c.b16 %v3192, %v3191
      %v3204 = vpack.c.b16 %v3194, %v3193
      %v3205 = vpack.c.b16 %v3196, %v3195
      %v3206 = vpack.c.b16 %v3198, %v3197
      %3215 = vmatprep.subr.bf16.mxu0 0
      %3216 = vmatpush1.bf16.msra.mxu0 %v3199
      %3217 = vmatprep.subr.bf16.mxu0 0
      %3218 = vmatpush1.bf16.msra.mxu0 %v3200
      %3219 = vmatprep.subr.bf16.mxu0 0
      %3220 = vmatpush1.bf16.msra.mxu0 %v3201
      %3221 = vmatprep.subr.bf16.mxu0 0
      %3222 = vmatpush1.bf16.msra.mxu0 %v3202
      %3223 = vmatprep.subr.bf16.mxu0 0
      %3224 = vmatpush1.bf16.msra.mxu0 %v3203
      %3225 = vmatprep.subr.bf16.mxu0 0
      %3226 = vmatpush1.bf16.msra.mxu0 %v3204
      %3227 = vmatprep.subr.bf16.mxu0 0
      %3228 = vmatpush1.bf16.msra.mxu0 %v3205
      %3229 = vmatprep.subr.bf16.mxu0 0
      %3230 = vmatpush1.bf16.msra.mxu0 %v3206
      %3231 = vmatprep.subr.bf16.mxu0 0
      %3232 = vmatpush1.bf16.msra.mxu0 0
      %3233 = vmatprep.subr.bf16.mxu0 0
      %3234 = vmatpush1.bf16.msra.mxu0 0
      %3235 = vmatprep.subr.bf16.mxu0 0
      %3236 = vmatpush1.bf16.msra.mxu0 0
      %3237 = vmatprep.subr.bf16.mxu0 0
      %3238 = vmatpush1.bf16.msra.mxu0 0
      %3239 = vmatprep.subr.bf16.mxu0 0
      %3240 = vmatpush1.bf16.msra.mxu0 0
      %3241 = vmatprep.subr.bf16.mxu0 0
      %3242 = vmatpush1.bf16.msra.mxu0 0
      %3243 = vmatprep.subr.bf16.mxu0 0
      %3244 = vmatpush1.bf16.msra.mxu0 0
      %3245 = vmatprep.subr.bf16.mxu0 0
      %3246 = vmatpush1.bf16.msra.mxu0 0
      %3247 = vmatprep.mubr.bf16.mxu0 0
      %3248 = vmatmul.mubr.bf16.gmra.mrb[0].mxu0 %v3015
      %v3249 = vpop.f32.mrb[0].mxu0
      %v3250 = vadd.f32 0.0, %v3249
      %v3251 = vpop.f32.mrb[0].mxu0
      %v3252 = vpop.f32.mrb[0].mxu0
      %v3253 = vadd.f32 0.0, %v3252
      %v3254 = vpop.f32.mrb[0].mxu0
      %3255 = vmatprep.mubr.bf16.mxu0 0
      %3256 = vmatmul.mubr.bf16.gmra.mrb[0].mxu0 %v3024
      %v3257 = vpop.f32.mrb[0].mxu0
      %v3258 = vadd.f32 0.0, %v3257
      %v3259 = vpop.f32.mrb[0].mxu0
      %v3260 = vpop.f32.mrb[0].mxu0
      %v3261 = vadd.f32 0.0, %v3260
      %v3262 = vpop.f32.mrb[0].mxu0
      %3263 = vmatprep.mubr.bf16.mxu0 0
      %3264 = vmatmul.mubr.bf16.gmra.mrb[0].mxu0 %v3033
      %v3265 = vpop.f32.mrb[0].mxu0
      %v3266 = vadd.f32 0.0, %v3265
      %v3267 = vpop.f32.mrb[0].mxu0
      %v3268 = vpop.f32.mrb[0].mxu0
      %v3269 = vadd.f32 0.0, %v3268
      %v3270 = vpop.f32.mrb[0].mxu0
      %3271 = vmatprep.mubr.bf16.mxu0 0
      %3272 = vmatmul.mubr.bf16.gmra.mrb[0].mxu0 %v3042
      %v3273 = vpop.f32.mrb[0].mxu0
      %v3274 = vadd.f32 0.0, %v3273
      %v3275 = vpop.f32.mrb[0].mxu0
      %v3276 = vpop.f32.mrb[0].mxu0
      %v3277 = vadd.f32 0.0, %v3276
      %v3278 = vpop.f32.mrb[0].mxu0
      %3279 = vmatprep.mubr.bf16.mxu0 0
      %3280 = vmatmul.mubr.bf16.gmra.mrb[0].mxu0 %v3051
      %v3281 = vpop.f32.mrb[0].mxu0
      %v3282 = vadd.f32 0.0, %v3281
      %v3283 = vpop.f32.mrb[0].mxu0
      %v3284 = vpop.f32.mrb[0].mxu0
      %v3285 = vadd.f32 0.0, %v3284
      %v3286 = vpop.f32.mrb[0].mxu0
      %3287 = vmatprep.mubr.bf16.mxu0 0
      %3288 = vmatmul.mubr.bf16.gmra.mrb[0].mxu0 %v3060
      %v3289 = vpop.f32.mrb[0].mxu0
      %v3290 = vadd.f32 0.0, %v3289
      %v3291 = vpop.f32.mrb[0].mxu0
      %v3292 = vpop.f32.mrb[0].mxu0
      %v3293 = vadd.f32 0.0, %v3292
      %v3294 = vpop.f32.mrb[0].mxu0
      %3295 = vmatprep.mubr.bf16.mxu0 0
      %3296 = vmatmul.mubr.bf16.gmra.mrb[0].mxu0 %v3069
      %v3297 = vpop.f32.mrb[0].mxu0
      %v3298 = vadd.f32 0.0, %v3297
      %v3299 = vpop.f32.mrb[0].mxu0
      %v3300 = vpop.f32.mrb[0].mxu0
      %v3301 = vadd.f32 0.0, %v3300
      %v3302 = vpop.f32.mrb[0].mxu0
      %3303 = vmatprep.mubr.bf16.mxu0 0
      %3304 = vmatmul.mubr.bf16.gmra.mrb[0].mxu0 %v3078
      %v3305 = vpop.f32.mrb[0].mxu0
      %v3306 = vadd.f32 0.0, %v3305
      %v3307 = vpop.f32.mrb[0].mxu0
      %v3308 = vpop.f32.mrb[0].mxu0
      %v3309 = vadd.f32 0.0, %v3308
      %v3310 = vpop.f32.mrb[0].mxu0
      %3311 = vmatprep.mubr.bf16.mxu0 0
      %3312 = vmatmul.mubr.bf16.gmra.mrb[0].mxu0 %v3087
      %v3313 = vpop.f32.mrb[0].mxu0
      %v3314 = vadd.f32 0.0, %v3313
      %v3315 = vpop.f32.mrb[0].mxu0
      %v3316 = vpop.f32.mrb[0].mxu0
      %v3317 = vadd.f32 0.0, %v3316
      %v3318 = vpop.f32.mrb[0].mxu0
      %3319 = vmatprep.mubr.bf16.mxu0 0
      %3320 = vmatmul.mubr.bf16.gmra.mrb[0].mxu0 %v3096
      %v3321 = vpop.f32.mrb[0].mxu0
      %v3322 = vadd.f32 0.0, %v3321
      %v3323 = vpop.f32.mrb[0].mxu0
      %v3324 = vpop.f32.mrb[0].mxu0
      %v3325 = vadd.f32 0.0, %v3324
      %v3326 = vpop.f32.mrb[0].mxu0
      %3327 = vmatprep.mubr.bf16.mxu0 0
      %3328 = vmatmul.mubr.bf16.gmra.mrb[0].mxu0 %v3105
      %v3329 = vpop.f32.mrb[0].mxu0
      %v3330 = vadd.f32 0.0, %v3329
      %v3331 = vpop.f32.mrb[0].mxu0
      %v3332 = vpop.f32.mrb[0].mxu0
      %v3333 = vadd.f32 0.0, %v3332
      %v3334 = vpop.f32.mrb[0].mxu0
      %3335 = vmatprep.mubr.bf16.mxu0 0
      %3336 = vmatmul.mubr.bf16.gmra.mrb[0].mxu0 %v3114
      %v3337 = vpop.f32.mrb[0].mxu0
      %v3338 = vadd.f32 0.0, %v3337
      %v3339 = vpop.f32.mrb[0].mxu0
      %v3340 = vpop.f32.mrb[0].mxu0
      %v3341 = vadd.f32 0.0, %v3340
      %v3342 = vpop.f32.mrb[0].mxu0
      %3343 = vmatprep.mubr.bf16.mxu0 0
      %3344 = vmatmul.mubr.bf16.gmra.mrb[0].mxu0 %v3123
      %v3345 = vpop.f32.mrb[0].mxu0
      %v3346 = vadd.f32 0.0, %v3345
      %v3347 = vpop.f32.mrb[0].mxu0
      %v3348 = vpop.f32.mrb[0].mxu0
      %v3349 = vadd.f32 0.0, %v3348
      %v3350 = vpop.f32.mrb[0].mxu0
      %3351 = vmatprep.mubr.bf16.mxu0 0
      %3352 = vmatmul.mubr.bf16.gmra.mrb[0].mxu0 %v3132
      %v3353 = vpop.f32.mrb[0].mxu0
      %v3354 = vadd.f32 0.0, %v3353
      %v3355 = vpop.f32.mrb[0].mxu0
      %v3356 = vpop.f32.mrb[0].mxu0
      %v3357 = vadd.f32 0.0, %v3356
      %v3358 = vpop.f32.mrb[0].mxu0
      %3359 = vmatprep.mubr.bf16.mxu0 0
      %3360 = vmatmul.mubr.bf16.gmra.mrb[0].mxu0 %v3141
      %v3361 = vpop.f32.mrb[0].mxu0
      %v3362 = vadd.f32 0.0, %v3361
      %v3363 = vpop.f32.mrb[0].mxu0
      %v3364 = vpop.f32.mrb[0].mxu0
      %v3365 = vadd.f32 0.0, %v3364
      %v3366 = vpop.f32.mrb[0].mxu0
      %3367 = vmatprep.mubr.bf16.mxu0 0
      %3368 = vmatmul.mubr.bf16.gmra.mrb[0].mxu0 %v3150
      %v3369 = vpop.f32.mrb[0].mxu0
      %v3370 = vadd.f32 0.0, %v3369
      %v3371 = vpop.f32.mrb[0].mxu0
      %v3372 = vpop.f32.mrb[0].mxu0
      %v3373 = vadd.f32 0.0, %v3372
      %v3374 = vpop.f32.mrb[0].mxu0
      %3375 = vdwg.mxu0
      %v3376 = vadd.f32 %v2916, %v3250
      %v3377 = vadd.f32 %v2917, %v3253
      %v3378 = vadd.f32 %v2918, %v3258
      %v3379 = vadd.f32 %v2919, %v3261
      %v3380 = vadd.f32 %v2920, %v3266
      %v3381 = vadd.f32 %v2921, %v3269
      %v3382 = vadd.f32 %v2922, %v3274
      %v3383 = vadd.f32 %v2923, %v3277
      %v3384 = vadd.f32 %v2924, %v3282
      %v3385 = vadd.f32 %v2925, %v3285
      %v3386 = vadd.f32 %v2926, %v3290
      %v3387 = vadd.f32 %v2927, %v3293
      %v3388 = vadd.f32 %v2928, %v3298
      %v3389 = vadd.f32 %v2929, %v3301
      %v3390 = vadd.f32 %v2930, %v3306
      %v3391 = vadd.f32 %v2931, %v3309
      %v3392 = vadd.f32 %v2932, %v3314
      %v3393 = vadd.f32 %v2933, %v3317
      %v3394 = vadd.f32 %v2934, %v3322
      %v3395 = vadd.f32 %v2935, %v3325
      %v3396 = vadd.f32 %v2936, %v3330
      %v3397 = vadd.f32 %v2937, %v3333
      %v3398 = vadd.f32 %v2938, %v3338
      %v3399 = vadd.f32 %v2939, %v3341
      %v3400 = vadd.f32 %v2940, %v3346
      %v3401 = vadd.f32 %v2941, %v3349
      %v3402 = vadd.f32 %v2942, %v3354
      %v3403 = vadd.f32 %v2943, %v3357
      %v3404 = vadd.f32 %v2944, %v3362
      %v3405 = vadd.f32 %v2945, %v3365
      %v3406 = vadd.f32 %v2946, %v3370
      %v3407 = vadd.f32 %v2947, %v3373
      %v3408 = vld [vmem:[#allocation2 + $0x8] sm:$0xf0]
      %s3409 = scalar_lea.vmem %s3, 256
      %v3410 = vld [vmem:[%s3409] sm:$0xf]
      %v3411 = vld [vmem:[%s3409 + $0x4] sm:$0xf]
      %v3412 = vld [vmem:[%s3409 + $0x8] sm:$0xf]
      %v3413 = vld [vmem:[%s3409 + $0xc] sm:$0xf]
      %v3414 = vld [vmem:[%s3409 + $0x10] sm:$0xf]
      %v3415 = vld [vmem:[%s3409 + $0x14] sm:$0xf]
      %v3416 = vld [vmem:[%s3409 + $0x18] sm:$0xf]
      %v3417 = vld [vmem:[%s3409 + $0x1c] sm:$0xf]
      %v3418 = vld [vmem:[%s3409 + $0x20] sm:$0xf]
      %v3419 = vld [vmem:[%s3409 + $0x24] sm:$0xf]
      %v3420 = vld [vmem:[%s3409 + $0x28] sm:$0xf]
      %v3421 = vld [vmem:[%s3409 + $0x2c] sm:$0xf]
      %v3422 = vld [vmem:[%s3409 + $0x30] sm:$0xf]
      %v3423 = vld [vmem:[%s3409 + $0x34] sm:$0xf]
      %v3424 = vld [vmem:[%s3409 + $0x38] sm:$0xf]
      %v3425 = vld [vmem:[%s3409 + $0x3c] sm:$0xf]
      %v3443 = vrot.slane %v3408, 4
      %v3444 = vrot.slane %v2949, 4
      %v3445 = vsel %vm1531, %v3443, %v3444
      %v3446 = vrot.slane %v2950, 4
      %v3447 = vsel %vm1531, %v3444, %v3446
      %v3448 = vrot.slane %v2951, 4
      %v3449 = vsel %vm1531, %v3446, %v3448
      %v3450 = vrot.slane %v2952, 4
      %v3451 = vsel %vm1531, %v3448, %v3450
      %v3452 = vrot.slane %v2953, 4
      %v3453 = vsel %vm1531, %v3450, %v3452
      %v3454 = vrot.slane %v2954, 4
      %v3455 = vsel %vm1531, %v3452, %v3454
      %v3456 = vrot.slane %v2955, 4
      %v3457 = vsel %vm1531, %v3454, %v3456
      %v3458 = vrot.slane %v2956, 4
      %v3459 = vsel %vm1531, %v3456, %v3458
      %v3460 = vrot.slane %v2957, 4
      %v3461 = vsel %vm1531, %v3458, %v3460
      %v3462 = vrot.slane %v2958, 4
      %v3463 = vsel %vm1531, %v3460, %v3462
      %v3464 = vrot.slane %v2959, 4
      %v3465 = vsel %vm1531, %v3462, %v3464
      %v3466 = vrot.slane %v2960, 4
      %v3467 = vsel %vm1531, %v3464, %v3466
      %v3468 = vrot.slane %v2961, 4
      %v3469 = vsel %vm1531, %v3466, %v3468
      %v3470 = vrot.slane %v2962, 4
      %v3471 = vsel %vm1531, %v3468, %v3470
      %v3472 = vrot.slane %v2963, 4
      %v3473 = vsel %vm1531, %v3470, %v3472
      %v3474 = vrot.slane %v2964, 4
      %v3475 = vsel %vm1531, %v3472, %v3474
      %v3508 = vunpack.c.l.b16 %v3410
      %v3509 = vunpack.c.l.b16 %v3411
      %v3510 = vunpack.c.l.b16 %v3412
      %v3511 = vunpack.c.l.b16 %v3413
      %v3512 = vunpack.c.l.b16 %v3414
      %v3513 = vunpack.c.l.b16 %v3415
      %v3514 = vunpack.c.l.b16 %v3416
      %v3515 = vunpack.c.l.b16 %v3417
      %v3516 = vunpack.c.l.b16 %v3418
      %v3517 = vunpack.c.l.b16 %v3419
      %v3518 = vunpack.c.l.b16 %v3420
      %v3519 = vunpack.c.l.b16 %v3421
      %v3520 = vunpack.c.l.b16 %v3422
      %v3521 = vunpack.c.l.b16 %v3423
      %v3522 = vunpack.c.l.b16 %v3424
      %v3523 = vunpack.c.l.b16 %v3425
      %v3524 = vpack.c.b16 %v3509, %v3508
      %v3525 = vpack.c.b16 %v3511, %v3510
      %v3526 = vpack.c.b16 %v3513, %v3512
      %v3527 = vpack.c.b16 %v3515, %v3514
      %v3528 = vpack.c.b16 %v3517, %v3516
      %v3529 = vpack.c.b16 %v3519, %v3518
      %v3530 = vpack.c.b16 %v3521, %v3520
      %v3531 = vpack.c.b16 %v3523, %v3522
      %3540 = vmatprep.subr.bf16.mxu0 0
      %3541 = vmatpush1.bf16.msra.mxu0 %v3524
      %3542 = vmatprep.subr.bf16.mxu0 0
      %3543 = vmatpush1.bf16.msra.mxu0 %v3525
      %3544 = vmatprep.subr.bf16.mxu0 0
      %3545 = vmatpush1.bf16.msra.mxu0 %v3526
      %3546 = vmatprep.subr.bf16.mxu0 0
      %3547 = vmatpush1.bf16.msra.mxu0 %v3527
      %3548 = vmatprep.subr.bf16.mxu0 0
      %3549 = vmatpush1.bf16.msra.mxu0 %v3528
      %3550 = vmatprep.subr.bf16.mxu0 0
      %3551 = vmatpush1.bf16.msra.mxu0 %v3529
      %3552 = vmatprep.subr.bf16.mxu0 0
      %3553 = vmatpush1.bf16.msra.mxu0 %v3530
      %3554 = vmatprep.subr.bf16.mxu0 0
      %3555 = vmatpush1.bf16.msra.mxu0 %v3531
      %3556 = vmatprep.subr.bf16.mxu0 0
      %3557 = vmatpush1.bf16.msra.mxu0 0
      %3558 = vmatprep.subr.bf16.mxu0 0
      %3559 = vmatpush1.bf16.msra.mxu0 0
      %3560 = vmatprep.subr.bf16.mxu0 0
      %3561 = vmatpush1.bf16.msra.mxu0 0
      %3562 = vmatprep.subr.bf16.mxu0 0
      %3563 = vmatpush1.bf16.msra.mxu0 0
      %3564 = vmatprep.subr.bf16.mxu0 0
      %3565 = vmatpush1.bf16.msra.mxu0 0
      %3566 = vmatprep.subr.bf16.mxu0 0
      %3567 = vmatpush1.bf16.msra.mxu0 0
      %3568 = vmatprep.subr.bf16.mxu0 0
      %3569 = vmatpush1.bf16.msra.mxu0 0
      %3570 = vmatprep.subr.bf16.mxu0 0
      %3571 = vmatpush1.bf16.msra.mxu0 0
      %3572 = vmatprep.mubr.bf16.mxu0 0
      %3573 = vmatmul.mubr.bf16.gmra.mrb[0].mxu0 %v3445
      %v3574 = vpop.f32.mrb[0].mxu0
      %v3575 = vadd.f32 0.0, %v3574
      %v3576 = vpop.f32.mrb[0].mxu0
      %v3577 = vpop.f32.mrb[0].mxu0
      %v3578 = vadd.f32 0.0, %v3577
      %v3579 = vpop.f32.mrb[0].mxu0
      %3580 = vmatprep.mubr.bf16.mxu0 0
      %3581 = vmatmul.mubr.bf16.gmra.mrb[0].mxu0 %v3447
      %v3582 = vpop.f32.mrb[0].mxu0
      %v3583 = vadd.f32 0.0, %v3582
      %v3584 = vpop.f32.mrb[0].mxu0
      %v3585 = vpop.f32.mrb[0].mxu0
      %v3586 = vadd.f32 0.0, %v3585
      %v3587 = vpop.f32.mrb[0].mxu0
      %3588 = vmatprep.mubr.bf16.mxu0 0
      %3589 = vmatmul.mubr.bf16.gmra.mrb[0].mxu0 %v3449
      %v3590 = vpop.f32.mrb[0].mxu0
      %v3591 = vadd.f32 0.0, %v3590
      %v3592 = vpop.f32.mrb[0].mxu0
      %v3593 = vpop.f32.mrb[0].mxu0
      %v3594 = vadd.f32 0.0, %v3593
      %v3595 = vpop.f32.mrb[0].mxu0
      %3596 = vmatprep.mubr.bf16.mxu0 0
      %3597 = vmatmul.mubr.bf16.gmra.mrb[0].mxu0 %v3451
      %v3598 = vpop.f32.mrb[0].mxu0
      %v3599 = vadd.f32 0.0, %v3598
      %v3600 = vpop.f32.mrb[0].mxu0
      %v3601 = vpop.f32.mrb[0].mxu0
      %v3602 = vadd.f32 0.0, %v3601
      %v3603 = vpop.f32.mrb[0].mxu0
      %3604 = vmatprep.mubr.bf16.mxu0 0
      %3605 = vmatmul.mubr.bf16.gmra.mrb[0].mxu0 %v3453
      %v3606 = vpop.f32.mrb[0].mxu0
      %v3607 = vadd.f32 0.0, %v3606
      %v3608 = vpop.f32.mrb[0].mxu0
      %v3609 = vpop.f32.mrb[0].mxu0
      %v3610 = vadd.f32 0.0, %v3609
      %v3611 = vpop.f32.mrb[0].mxu0
      %3612 = vmatprep.mubr.bf16.mxu0 0
      %3613 = vmatmul.mubr.bf16.gmra.mrb[0].mxu0 %v3455
      %v3614 = vpop.f32.mrb[0].mxu0
      %v3615 = vadd.f32 0.0, %v3614
      %v3616 = vpop.f32.mrb[0].mxu0
      %v3617 = vpop.f32.mrb[0].mxu0
      %v3618 = vadd.f32 0.0, %v3617
      %v3619 = vpop.f32.mrb[0].mxu0
      %3620 = vmatprep.mubr.bf16.mxu0 0
      %3621 = vmatmul.mubr.bf16.gmra.mrb[0].mxu0 %v3457
      %v3622 = vpop.f32.mrb[0].mxu0
      %v3623 = vadd.f32 0.0, %v3622
      %v3624 = vpop.f32.mrb[0].mxu0
      %v3625 = vpop.f32.mrb[0].mxu0
      %v3626 = vadd.f32 0.0, %v3625
      %v3627 = vpop.f32.mrb[0].mxu0
      %3628 = vmatprep.mubr.bf16.mxu0 0
      %3629 = vmatmul.mubr.bf16.gmra.mrb[0].mxu0 %v3459
      %v3630 = vpop.f32.mrb[0].mxu0
      %v3631 = vadd.f32 0.0, %v3630
      %v3632 = vpop.f32.mrb[0].mxu0
      %v3633 = vpop.f32.mrb[0].mxu0
      %v3634 = vadd.f32 0.0, %v3633
      %v3635 = vpop.f32.mrb[0].mxu0
      %3636 = vmatprep.mubr.bf16.mxu0 0
      %3637 = vmatmul.mubr.bf16.gmra.mrb[0].mxu0 %v3461
      %v3638 = vpop.f32.mrb[0].mxu0
      %v3639 = vadd.f32 0.0, %v3638
      %v3640 = vpop.f32.mrb[0].mxu0
      %v3641 = vpop.f32.mrb[0].mxu0
      %v3642 = vadd.f32 0.0, %v3641
      %v3643 = vpop.f32.mrb[0].mxu0
      %3644 = vmatprep.mubr.bf16.mxu0 0
      %3645 = vmatmul.mubr.bf16.gmra.mrb[0].mxu0 %v3463
      %v3646 = vpop.f32.mrb[0].mxu0
      %v3647 = vadd.f32 0.0, %v3646
      %v3648 = vpop.f32.mrb[0].mxu0
      %v3649 = vpop.f32.mrb[0].mxu0
      %v3650 = vadd.f32 0.0, %v3649
      %v3651 = vpop.f32.mrb[0].mxu0
      %3652 = vmatprep.mubr.bf16.mxu0 0
      %3653 = vmatmul.mubr.bf16.gmra.mrb[0].mxu0 %v3465
      %v3654 = vpop.f32.mrb[0].mxu0
      %v3655 = vadd.f32 0.0, %v3654
      %v3656 = vpop.f32.mrb[0].mxu0
      %v3657 = vpop.f32.mrb[0].mxu0
      %v3658 = vadd.f32 0.0, %v3657
      %v3659 = vpop.f32.mrb[0].mxu0
      %3660 = vmatprep.mubr.bf16.mxu0 0
      %3661 = vmatmul.mubr.bf16.gmra.mrb[0].mxu0 %v3467
      %v3662 = vpop.f32.mrb[0].mxu0
      %v3663 = vadd.f32 0.0, %v3662
      %v3664 = vpop.f32.mrb[0].mxu0
      %v3665 = vpop.f32.mrb[0].mxu0
      %v3666 = vadd.f32 0.0, %v3665
      %v3667 = vpop.f32.mrb[0].mxu0
      %3668 = vmatprep.mubr.bf16.mxu0 0
      %3669 = vmatmul.mubr.bf16.gmra.mrb[0].mxu0 %v3469
      %v3670 = vpop.f32.mrb[0].mxu0
      %v3671 = vadd.f32 0.0, %v3670
      %v3672 = vpop.f32.mrb[0].mxu0
      %v3673 = vpop.f32.mrb[0].mxu0
      %v3674 = vadd.f32 0.0, %v3673
      %v3675 = vpop.f32.mrb[0].mxu0
      %3676 = vmatprep.mubr.bf16.mxu0 0
      %3677 = vmatmul.mubr.bf16.gmra.mrb[0].mxu0 %v3471
      %v3678 = vpop.f32.mrb[0].mxu0
      %v3679 = vadd.f32 0.0, %v3678
      %v3680 = vpop.f32.mrb[0].mxu0
      %v3681 = vpop.f32.mrb[0].mxu0
      %v3682 = vadd.f32 0.0, %v3681
      %v3683 = vpop.f32.mrb[0].mxu0
      %3684 = vmatprep.mubr.bf16.mxu0 0
      %3685 = vmatmul.mubr.bf16.gmra.mrb[0].mxu0 %v3473
      %v3686 = vpop.f32.mrb[0].mxu0
      %v3687 = vadd.f32 0.0, %v3686
      %v3688 = vpop.f32.mrb[0].mxu0
      %v3689 = vpop.f32.mrb[0].mxu0
      %v3690 = vadd.f32 0.0, %v3689
      %v3691 = vpop.f32.mrb[0].mxu0
      %3692 = vmatprep.mubr.bf16.mxu0 0
      %3693 = vmatmul.mubr.bf16.gmra.mrb[0].mxu0 %v3475
      %v3694 = vpop.f32.mrb[0].mxu0
      %v3695 = vadd.f32 0.0, %v3694
      %v3696 = vpop.f32.mrb[0].mxu0
      %v3697 = vpop.f32.mrb[0].mxu0
      %v3698 = vadd.f32 0.0, %v3697
      %v3699 = vpop.f32.mrb[0].mxu0
      %3700 = vdwg.mxu0
      %v3701 = vadd.f32 %v3376, %v3575
      %v3702 = vadd.f32 %v3377, %v3578
      %v3703 = vadd.f32 %v3378, %v3583
      %v3704 = vadd.f32 %v3379, %v3586
      %v3705 = vadd.f32 %v3380, %v3591
      %v3706 = vadd.f32 %v3381, %v3594
      %v3707 = vadd.f32 %v3382, %v3599
      %v3708 = vadd.f32 %v3383, %v3602
      %v3709 = vadd.f32 %v3384, %v3607
      %v3710 = vadd.f32 %v3385, %v3610
      %v3711 = vadd.f32 %v3386, %v3615
      %v3712 = vadd.f32 %v3387, %v3618
      %v3713 = vadd.f32 %v3388, %v3623
      %v3714 = vadd.f32 %v3389, %v3626
      %v3715 = vadd.f32 %v3390, %v3631
      %v3716 = vadd.f32 %v3391, %v3634
      %v3717 = vadd.f32 %v3392, %v3639
      %v3718 = vadd.f32 %v3393, %v3642
      %v3719 = vadd.f32 %v3394, %v3647
      %v3720 = vadd.f32 %v3395, %v3650
      %v3721 = vadd.f32 %v3396, %v3655
      %v3722 = vadd.f32 %v3397, %v3658
      %v3723 = vadd.f32 %v3398, %v3663
      %v3724 = vadd.f32 %v3399, %v3666
      %v3725 = vadd.f32 %v3400, %v3671
      %v3726 = vadd.f32 %v3401, %v3674
      %v3727 = vadd.f32 %v3402, %v3679
      %v3728 = vadd.f32 %v3403, %v3682
      %v3729 = vadd.f32 %v3404, %v3687
      %v3730 = vadd.f32 %v3405, %v3690
      %v3731 = vadd.f32 %v3406, %v3695
      %v3732 = vadd.f32 %v3407, %v3698
      %v3733 = vld [vmem:[#allocation2 + $0x88] sm:$0x1f]
      %v3734 = vsel %vm2488, %v3408, 0
      %v3735 = vsel %vm2489, %v2949, 0
      %v3736 = vsel %vm2490, %v2950, 0
      %v3737 = vsel %vm2491, %v2951, 0
      %v3738 = vsel %vm2492, %v2952, 0
      %v3739 = vsel %vm2493, %v2953, 0
      %v3740 = vsel %vm2494, %v2954, 0
      %v3741 = vsel %vm2495, %v2955, 0
      %v3742 = vsel %vm2496, %v2956, 0
      %v3743 = vsel %vm2497, %v2957, 0
      %v3744 = vsel %vm2498, %v2958, 0
      %v3745 = vsel %vm2499, %v2959, 0
      %v3746 = vsel %vm2500, %v2960, 0
      %v3747 = vsel %vm2501, %v2961, 0
      %v3748 = vsel %vm2502, %v2962, 0
      %v3749 = vsel %vm2503, %v2963, 0
      %v3750 = vsel %vm2504, %v3733, 0
      %s3751 = scalar_lea.vmem %s3, 320
      %v3752 = vld [vmem:[%s3751] sm:$0xf]
      %v3753 = vld [vmem:[%s3751 + $0x4] sm:$0xf]
      %v3754 = vld [vmem:[%s3751 + $0x8] sm:$0xf]
      %v3755 = vld [vmem:[%s3751 + $0xc] sm:$0xf]
      %v3756 = vld [vmem:[%s3751 + $0x10] sm:$0xf]
      %v3757 = vld [vmem:[%s3751 + $0x14] sm:$0xf]
      %v3758 = vld [vmem:[%s3751 + $0x18] sm:$0xf]
      %v3759 = vld [vmem:[%s3751 + $0x1c] sm:$0xf]
      %v3760 = vld [vmem:[%s3751 + $0x20] sm:$0xf]
      %v3761 = vld [vmem:[%s3751 + $0x24] sm:$0xf]
      %v3762 = vld [vmem:[%s3751 + $0x28] sm:$0xf]
      %v3763 = vld [vmem:[%s3751 + $0x2c] sm:$0xf]
      %v3764 = vld [vmem:[%s3751 + $0x30] sm:$0xf]
      %v3765 = vld [vmem:[%s3751 + $0x34] sm:$0xf]
      %v3766 = vld [vmem:[%s3751 + $0x38] sm:$0xf]
      %v3767 = vld [vmem:[%s3751 + $0x3c] sm:$0xf]
      %v3769 = vshrl.u32 %v3734, 16
      %v3771 = vrot.slane %v3769, 4
      %v3772 = vshll.u32 %v3734, 16
      %v3774 = vrot.slane %v3772, 5
      %v3775 = vor.u32 %v3771, %v3774
      %v3777 = vshrl.u32 %v3735, 16
      %v3779 = vrot.slane %v3777, 4
      %v3780 = vshll.u32 %v3735, 16
      %v3782 = vrot.slane %v3780, 5
      %v3783 = vor.u32 %v3779, %v3782
      %v3784 = vsel %vm1302, %v3775, %v3783
      %v3786 = vshrl.u32 %v3736, 16
      %v3788 = vrot.slane %v3786, 4
      %v3789 = vshll.u32 %v3736, 16
      %v3791 = vrot.slane %v3789, 5
      %v3792 = vor.u32 %v3788, %v3791
      %v3793 = vsel %vm1302, %v3783, %v3792
      %v3795 = vshrl.u32 %v3737, 16
      %v3797 = vrot.slane %v3795, 4
      %v3798 = vshll.u32 %v3737, 16
      %v3800 = vrot.slane %v3798, 5
      %v3801 = vor.u32 %v3797, %v3800
      %v3802 = vsel %vm1302, %v3792, %v3801
      %v3804 = vshrl.u32 %v3738, 16
      %v3806 = vrot.slane %v3804, 4
      %v3807 = vshll.u32 %v3738, 16
      %v3809 = vrot.slane %v3807, 5
      %v3810 = vor.u32 %v3806, %v3809
      %v3811 = vsel %vm1302, %v3801, %v3810
      %v3813 = vshrl.u32 %v3739, 16
      %v3815 = vrot.slane %v3813, 4
      %v3816 = vshll.u32 %v3739, 16
      %v3818 = vrot.slane %v3816, 5
      %v3819 = vor.u32 %v3815, %v3818
      %v3820 = vsel %vm1302, %v3810, %v3819
      %v3822 = vshrl.u32 %v3740, 16
      %v3824 = vrot.slane %v3822, 4
      %v3825 = vshll.u32 %v3740, 16
      %v3827 = vrot.slane %v3825, 5
      %v3828 = vor.u32 %v3824, %v3827
      %v3829 = vsel %vm1302, %v3819, %v3828
      %v3831 = vshrl.u32 %v3741, 16
      %v3833 = vrot.slane %v3831, 4
      %v3834 = vshll.u32 %v3741, 16
      %v3836 = vrot.slane %v3834, 5
      %v3837 = vor.u32 %v3833, %v3836
      %v3838 = vsel %vm1302, %v3828, %v3837
      %v3840 = vshrl.u32 %v3742, 16
      %v3842 = vrot.slane %v3840, 4
      %v3843 = vshll.u32 %v3742, 16
      %v3845 = vrot.slane %v3843, 5
      %v3846 = vor.u32 %v3842, %v3845
      %v3847 = vsel %vm1302, %v3837, %v3846
      %v3849 = vshrl.u32 %v3743, 16
      %v3851 = vrot.slane %v3849, 4
      %v3852 = vshll.u32 %v3743, 16
      %v3854 = vrot.slane %v3852, 5
      %v3855 = vor.u32 %v3851, %v3854
      %v3856 = vsel %vm1302, %v3846, %v3855
      %v3858 = vshrl.u32 %v3744, 16
      %v3860 = vrot.slane %v3858, 4
      %v3861 = vshll.u32 %v3744, 16
      %v3863 = vrot.slane %v3861, 5
      %v3864 = vor.u32 %v3860, %v3863
      %v3865 = vsel %vm1302, %v3855, %v3864
      %v3867 = vshrl.u32 %v3745, 16
      %v3869 = vrot.slane %v3867, 4
      %v3870 = vshll.u32 %v3745, 16
      %v3872 = vrot.slane %v3870, 5
      %v3873 = vor.u32 %v3869, %v3872
      %v3874 = vsel %vm1302, %v3864, %v3873
      %v3876 = vshrl.u32 %v3746, 16
      %v3878 = vrot.slane %v3876, 4
      %v3879 = vshll.u32 %v3746, 16
      %v3881 = vrot.slane %v3879, 5
      %v3882 = vor.u32 %v3878, %v3881
      %v3883 = vsel %vm1302, %v3873, %v3882
      %v3885 = vshrl.u32 %v3747, 16
      %v3887 = vrot.slane %v3885, 4
      %v3888 = vshll.u32 %v3747, 16
      %v3890 = vrot.slane %v3888, 5
      %v3891 = vor.u32 %v3887, %v3890
      %v3892 = vsel %vm1302, %v3882, %v3891
      %v3894 = vshrl.u32 %v3748, 16
      %v3896 = vrot.slane %v3894, 4
      %v3897 = vshll.u32 %v3748, 16
      %v3899 = vrot.slane %v3897, 5
      %v3900 = vor.u32 %v3896, %v3899
      %v3901 = vsel %vm1302, %v3891, %v3900
      %v3903 = vshrl.u32 %v3749, 16
      %v3905 = vrot.slane %v3903, 4
      %v3906 = vshll.u32 %v3749, 16
      %v3908 = vrot.slane %v3906, 5
      %v3909 = vor.u32 %v3905, %v3908
      %v3910 = vsel %vm1302, %v3900, %v3909
      %v3912 = vshrl.u32 %v3750, 16
      %v3914 = vrot.slane %v3912, 4
      %v3915 = vshll.u32 %v3750, 16
      %v3917 = vrot.slane %v3915, 5
      %v3918 = vor.u32 %v3914, %v3917
      %v3919 = vsel %vm1302, %v3909, %v3918
      %v3952 = vunpack.c.l.b16 %v3752
      %v3953 = vunpack.c.l.b16 %v3753
      %v3954 = vunpack.c.l.b16 %v3754
      %v3955 = vunpack.c.l.b16 %v3755
      %v3956 = vunpack.c.l.b16 %v3756
      %v3957 = vunpack.c.l.b16 %v3757
      %v3958 = vunpack.c.l.b16 %v3758
      %v3959 = vunpack.c.l.b16 %v3759
      %v3960 = vunpack.c.l.b16 %v3760
      %v3961 = vunpack.c.l.b16 %v3761
      %v3962 = vunpack.c.l.b16 %v3762
      %v3963 = vunpack.c.l.b16 %v3763
      %v3964 = vunpack.c.l.b16 %v3764
      %v3965 = vunpack.c.l.b16 %v3765
      %v3966 = vunpack.c.l.b16 %v3766
      %v3967 = vunpack.c.l.b16 %v3767
      %v3968 = vpack.c.b16 %v3953, %v3952
      %v3969 = vpack.c.b16 %v3955, %v3954
      %v3970 = vpack.c.b16 %v3957, %v3956
      %v3971 = vpack.c.b16 %v3959, %v3958
      %v3972 = vpack.c.b16 %v3961, %v3960
      %v3973 = vpack.c.b16 %v3963, %v3962
      %v3974 = vpack.c.b16 %v3965, %v3964
      %v3975 = vpack.c.b16 %v3967, %v3966
      %3984 = vmatprep.subr.bf16.mxu0 0
      %3985 = vmatpush1.bf16.msra.mxu0 %v3968
      %3986 = vmatprep.subr.bf16.mxu0 0
      %3987 = vmatpush1.bf16.msra.mxu0 %v3969
      %3988 = vmatprep.subr.bf16.mxu0 0
      %3989 = vmatpush1.bf16.msra.mxu0 %v3970
      %3990 = vmatprep.subr.bf16.mxu0 0
      %3991 = vmatpush1.bf16.msra.mxu0 %v3971
      %3992 = vmatprep.subr.bf16.mxu0 0
      %3993 = vmatpush1.bf16.msra.mxu0 %v3972
      %3994 = vmatprep.subr.bf16.mxu0 0
      %3995 = vmatpush1.bf16.msra.mxu0 %v3973
      %3996 = vmatprep.subr.bf16.mxu0 0
      %3997 = vmatpush1.bf16.msra.mxu0 %v3974
      %3998 = vmatprep.subr.bf16.mxu0 0
      %3999 = vmatpush1.bf16.msra.mxu0 %v3975
      %4000 = vmatprep.subr.bf16.mxu0 0
      %4001 = vmatpush1.bf16.msra.mxu0 0
      %4002 = vmatprep.subr.bf16.mxu0 0
      %4003 = vmatpush1.bf16.msra.mxu0 0
      %4004 = vmatprep.subr.bf16.mxu0 0
      %4005 = vmatpush1.bf16.msra.mxu0 0
      %4006 = vmatprep.subr.bf16.mxu0 0
      %4007 = vmatpush1.bf16.msra.mxu0 0
      %4008 = vmatprep.subr.bf16.mxu0 0
      %4009 = vmatpush1.bf16.msra.mxu0 0
      %4010 = vmatprep.subr.bf16.mxu0 0
      %4011 = vmatpush1.bf16.msra.mxu0 0
      %4012 = vmatprep.subr.bf16.mxu0 0
      %4013 = vmatpush1.bf16.msra.mxu0 0
      %4014 = vmatprep.subr.bf16.mxu0 0
      %4015 = vmatpush1.bf16.msra.mxu0 0
      %4016 = vmatprep.mubr.bf16.mxu0 0
      %4017 = vmatmul.mubr.bf16.gmra.mrb[0].mxu0 %v3784
      %v4018 = vpop.f32.mrb[0].mxu0
      %v4019 = vadd.f32 0.0, %v4018
      %v4020 = vpop.f32.mrb[0].mxu0
      %v4021 = vpop.f32.mrb[0].mxu0
      %v4022 = vadd.f32 0.0, %v4021
      %v4023 = vpop.f32.mrb[0].mxu0
      %4024 = vmatprep.mubr.bf16.mxu0 0
      %4025 = vmatmul.mubr.bf16.gmra.mrb[0].mxu0 %v3793
      %v4026 = vpop.f32.mrb[0].mxu0
      %v4027 = vadd.f32 0.0, %v4026
      %v4028 = vpop.f32.mrb[0].mxu0
      %v4029 = vpop.f32.mrb[0].mxu0
      %v4030 = vadd.f32 0.0, %v4029
      %v4031 = vpop.f32.mrb[0].mxu0
      %4032 = vmatprep.mubr.bf16.mxu0 0
      %4033 = vmatmul.mubr.bf16.gmra.mrb[0].mxu0 %v3802
      %v4034 = vpop.f32.mrb[0].mxu0
      %v4035 = vadd.f32 0.0, %v4034
      %v4036 = vpop.f32.mrb[0].mxu0
      %v4037 = vpop.f32.mrb[0].mxu0
      %v4038 = vadd.f32 0.0, %v4037
      %v4039 = vpop.f32.mrb[0].mxu0
      %4040 = vmatprep.mubr.bf16.mxu0 0
      %4041 = vmatmul.mubr.bf16.gmra.mrb[0].mxu0 %v3811
      %v4042 = vpop.f32.mrb[0].mxu0
      %v4043 = vadd.f32 0.0, %v4042
      %v4044 = vpop.f32.mrb[0].mxu0
      %v4045 = vpop.f32.mrb[0].mxu0
      %v4046 = vadd.f32 0.0, %v4045
      %v4047 = vpop.f32.mrb[0].mxu0
      %4048 = vmatprep.mubr.bf16.mxu0 0
      %4049 = vmatmul.mubr.bf16.gmra.mrb[0].mxu0 %v3820
      %v4050 = vpop.f32.mrb[0].mxu0
      %v4051 = vadd.f32 0.0, %v4050
      %v4052 = vpop.f32.mrb[0].mxu0
      %v4053 = vpop.f32.mrb[0].mxu0
      %v4054 = vadd.f32 0.0, %v4053
      %v4055 = vpop.f32.mrb[0].mxu0
      %4056 = vmatprep.mubr.bf16.mxu0 0
      %4057 = vmatmul.mubr.bf16.gmra.mrb[0].mxu0 %v3829
      %v4058 = vpop.f32.mrb[0].mxu0
      %v4059 = vadd.f32 0.0, %v4058
      %v4060 = vpop.f32.mrb[0].mxu0
      %v4061 = vpop.f32.mrb[0].mxu0
      %v4062 = vadd.f32 0.0, %v4061
      %v4063 = vpop.f32.mrb[0].mxu0
      %4064 = vmatprep.mubr.bf16.mxu0 0
      %4065 = vmatmul.mubr.bf16.gmra.mrb[0].mxu0 %v3838
      %v4066 = vpop.f32.mrb[0].mxu0
      %v4067 = vadd.f32 0.0, %v4066
      %v4068 = vpop.f32.mrb[0].mxu0
      %v4069 = vpop.f32.mrb[0].mxu0
      %v4070 = vadd.f32 0.0, %v4069
      %v4071 = vpop.f32.mrb[0].mxu0
      %4072 = vmatprep.mubr.bf16.mxu0 0
      %4073 = vmatmul.mubr.bf16.gmra.mrb[0].mxu0 %v3847
      %v4074 = vpop.f32.mrb[0].mxu0
      %v4075 = vadd.f32 0.0, %v4074
      %v4076 = vpop.f32.mrb[0].mxu0
      %v4077 = vpop.f32.mrb[0].mxu0
      %v4078 = vadd.f32 0.0, %v4077
      %v4079 = vpop.f32.mrb[0].mxu0
      %4080 = vmatprep.mubr.bf16.mxu0 0
      %4081 = vmatmul.mubr.bf16.gmra.mrb[0].mxu0 %v3856
      %v4082 = vpop.f32.mrb[0].mxu0
      %v4083 = vadd.f32 0.0, %v4082
      %v4084 = vpop.f32.mrb[0].mxu0
      %v4085 = vpop.f32.mrb[0].mxu0
      %v4086 = vadd.f32 0.0, %v4085
      %v4087 = vpop.f32.mrb[0].mxu0
      %4088 = vmatprep.mubr.bf16.mxu0 0
      %4089 = vmatmul.mubr.bf16.gmra.mrb[0].mxu0 %v3865
      %v4090 = vpop.f32.mrb[0].mxu0
      %v4091 = vadd.f32 0.0, %v4090
      %v4092 = vpop.f32.mrb[0].mxu0
      %v4093 = vpop.f32.mrb[0].mxu0
      %v4094 = vadd.f32 0.0, %v4093
      %v4095 = vpop.f32.mrb[0].mxu0
      %4096 = vmatprep.mubr.bf16.mxu0 0
      %4097 = vmatmul.mubr.bf16.gmra.mrb[0].mxu0 %v3874
      %v4098 = vpop.f32.mrb[0].mxu0
      %v4099 = vadd.f32 0.0, %v4098
      %v4100 = vpop.f32.mrb[0].mxu0
      %v4101 = vpop.f32.mrb[0].mxu0
      %v4102 = vadd.f32 0.0, %v4101
      %v4103 = vpop.f32.mrb[0].mxu0
      %4104 = vmatprep.mubr.bf16.mxu0 0
      %4105 = vmatmul.mubr.bf16.gmra.mrb[0].mxu0 %v3883
      %v4106 = vpop.f32.mrb[0].mxu0
      %v4107 = vadd.f32 0.0, %v4106
      %v4108 = vpop.f32.mrb[0].mxu0
      %v4109 = vpop.f32.mrb[0].mxu0
      %v4110 = vadd.f32 0.0, %v4109
      %v4111 = vpop.f32.mrb[0].mxu0
      %4112 = vmatprep.mubr.bf16.mxu0 0
      %4113 = vmatmul.mubr.bf16.gmra.mrb[0].mxu0 %v3892
      %v4114 = vpop.f32.mrb[0].mxu0
      %v4115 = vadd.f32 0.0, %v4114
      %v4116 = vpop.f32.mrb[0].mxu0
      %v4117 = vpop.f32.mrb[0].mxu0
      %v4118 = vadd.f32 0.0, %v4117
      %v4119 = vpop.f32.mrb[0].mxu0
      %4120 = vmatprep.mubr.bf16.mxu0 0
      %4121 = vmatmul.mubr.bf16.gmra.mrb[0].mxu0 %v3901
      %v4122 = vpop.f32.mrb[0].mxu0
      %v4123 = vadd.f32 0.0, %v4122
      %v4124 = vpop.f32.mrb[0].mxu0
      %v4125 = vpop.f32.mrb[0].mxu0
      %v4126 = vadd.f32 0.0, %v4125
      %v4127 = vpop.f32.mrb[0].mxu0
      %4128 = vmatprep.mubr.bf16.mxu0 0
      %4129 = vmatmul.mubr.bf16.gmra.mrb[0].mxu0 %v3910
      %v4130 = vpop.f32.mrb[0].mxu0
      %v4131 = vadd.f32 0.0, %v4130
      %v4132 = vpop.f32.mrb[0].mxu0
      %v4133 = vpop.f32.mrb[0].mxu0
      %v4134 = vadd.f32 0.0, %v4133
      %v4135 = vpop.f32.mrb[0].mxu0
      %4136 = vmatprep.mubr.bf16.mxu0 0
      %4137 = vmatmul.mubr.bf16.gmra.mrb[0].mxu0 %v3919
      %v4138 = vpop.f32.mrb[0].mxu0
      %v4139 = vadd.f32 0.0, %v4138
      %v4140 = vpop.f32.mrb[0].mxu0
      %v4141 = vpop.f32.mrb[0].mxu0
      %v4142 = vadd.f32 0.0, %v4141
      %v4143 = vpop.f32.mrb[0].mxu0
      %4144 = vdwg.mxu0
      %v4145 = vadd.f32 %v3701, %v4019
      %v4146 = vadd.f32 %v3702, %v4022
      %v4147 = vadd.f32 %v3703, %v4027
      %v4148 = vadd.f32 %v3704, %v4030
      %v4149 = vadd.f32 %v3705, %v4035
      %v4150 = vadd.f32 %v3706, %v4038
      %v4151 = vadd.f32 %v3707, %v4043
      %v4152 = vadd.f32 %v3708, %v4046
      %v4153 = vadd.f32 %v3709, %v4051
      %v4154 = vadd.f32 %v3710, %v4054
      %v4155 = vadd.f32 %v3711, %v4059
      %v4156 = vadd.f32 %v3712, %v4062
      %v4157 = vadd.f32 %v3713, %v4067
      %v4158 = vadd.f32 %v3714, %v4070
      %v4159 = vadd.f32 %v3715, %v4075
      %v4160 = vadd.f32 %v3716, %v4078
      %v4161 = vadd.f32 %v3717, %v4083
      %v4162 = vadd.f32 %v3718, %v4086
      %v4163 = vadd.f32 %v3719, %v4091
      %v4164 = vadd.f32 %v3720, %v4094
      %v4165 = vadd.f32 %v3721, %v4099
      %v4166 = vadd.f32 %v3722, %v4102
      %v4167 = vadd.f32 %v3723, %v4107
      %v4168 = vadd.f32 %v3724, %v4110
      %v4169 = vadd.f32 %v3725, %v4115
      %v4170 = vadd.f32 %v3726, %v4118
      %v4171 = vadd.f32 %v3727, %v4123
      %v4172 = vadd.f32 %v3728, %v4126
      %v4173 = vadd.f32 %v3729, %v4131
      %v4174 = vadd.f32 %v3730, %v4134
      %v4175 = vadd.f32 %v3731, %v4139
      %v4176 = vadd.f32 %v3732, %v4142
      %v4177 = vld [vmem:[#allocation2 + $0x10] sm:$0xf8]
      %v4178 = vld [vmem:[#allocation2 + $0x18] sm:$0xff]
      %v4179 = vld [vmem:[#allocation2 + $0x20] sm:$0xff]
      %v4180 = vld [vmem:[#allocation2 + $0x28] sm:$0xff]
      %v4181 = vld [vmem:[#allocation2 + $0x30] sm:$0xff]
      %v4182 = vld [vmem:[#allocation2 + $0x38] sm:$0xff]
      %v4183 = vld [vmem:[#allocation2 + $0x40] sm:$0xff]
      %v4184 = vld [vmem:[#allocation2 + $0x48] sm:$0xff]
      %v4185 = vld [vmem:[#allocation2 + $0x50] sm:$0xff]
      %v4186 = vld [vmem:[#allocation2 + $0x58] sm:$0xff]
      %v4187 = vld [vmem:[#allocation2 + $0x60] sm:$0xff]
      %v4188 = vld [vmem:[#allocation2 + $0x68] sm:$0xff]
      %v4189 = vld [vmem:[#allocation2 + $0x70] sm:$0xff]
      %v4190 = vld [vmem:[#allocation2 + $0x78] sm:$0xff]
      %v4191 = vld [vmem:[#allocation2 + $0x80] sm:$0xff]
      %v4192 = vld [vmem:[#allocation2 + $0x88] sm:$0xff]
      %v4193 = vld [vmem:[#allocation2 + $0x90] sm:$0xf]
      %v4194 = vsel %vm1446, %v4177, 0
      %v4195 = vsel %vm1447, %v4178, 0
      %v4196 = vsel %vm1448, %v4179, 0
      %v4197 = vsel %vm1449, %v4180, 0
      %v4198 = vsel %vm1450, %v4181, 0
      %v4199 = vsel %vm1451, %v4182, 0
      %v4200 = vsel %vm1452, %v4183, 0
      %v4201 = vsel %vm1453, %v4184, 0
      %v4202 = vsel %vm1454, %v4185, 0
      %v4203 = vsel %vm1455, %v4186, 0
      %v4204 = vsel %vm1456, %v4187, 0
      %v4205 = vsel %vm1457, %v4188, 0
      %v4206 = vsel %vm1458, %v4189, 0
      %v4207 = vsel %vm1459, %v4190, 0
      %v4208 = vsel %vm1460, %v4191, 0
      %v4209 = vsel %vm1461, %v4192, 0
      %v4210 = vsel %vm1462, %v4193, 0
      %s4211 = scalar_lea.vmem %s3, 384
      %v4212 = vld [vmem:[%s4211] sm:$0xf]
      %v4213 = vld [vmem:[%s4211 + $0x4] sm:$0xf]
      %v4214 = vld [vmem:[%s4211 + $0x8] sm:$0xf]
      %v4215 = vld [vmem:[%s4211 + $0xc] sm:$0xf]
      %v4216 = vld [vmem:[%s4211 + $0x10] sm:$0xf]
      %v4217 = vld [vmem:[%s4211 + $0x14] sm:$0xf]
      %v4218 = vld [vmem:[%s4211 + $0x18] sm:$0xf]
      %v4219 = vld [vmem:[%s4211 + $0x1c] sm:$0xf]
      %v4220 = vld [vmem:[%s4211 + $0x20] sm:$0xf]
      %v4221 = vld [vmem:[%s4211 + $0x24] sm:$0xf]
      %v4222 = vld [vmem:[%s4211 + $0x28] sm:$0xf]
      %v4223 = vld [vmem:[%s4211 + $0x2c] sm:$0xf]
      %v4224 = vld [vmem:[%s4211 + $0x30] sm:$0xf]
      %v4225 = vld [vmem:[%s4211 + $0x34] sm:$0xf]
      %v4226 = vld [vmem:[%s4211 + $0x38] sm:$0xf]
      %v4227 = vld [vmem:[%s4211 + $0x3c] sm:$0xf]
      %v4229 = vshrl.u32 %v4194, 16
      %v4231 = vrot.slane %v4229, 3
      %v4232 = vshll.u32 %v4194, 16
      %v4234 = vrot.slane %v4232, 4
      %v4235 = vor.u32 %v4231, %v4234
      %v4237 = vshrl.u32 %v4195, 16
      %v4239 = vrot.slane %v4237, 3
      %v4240 = vshll.u32 %v4195, 16
      %v4242 = vrot.slane %v4240, 4
      %v4243 = vor.u32 %v4239, %v4242
      %v4244 = vsel %vm1790, %v4235, %v4243
      %v4246 = vshrl.u32 %v4196, 16
      %v4248 = vrot.slane %v4246, 3
      %v4249 = vshll.u32 %v4196, 16
      %v4251 = vrot.slane %v4249, 4
      %v4252 = vor.u32 %v4248, %v4251
      %v4253 = vsel %vm1790, %v4243, %v4252
      %v4255 = vshrl.u32 %v4197, 16
      %v4257 = vrot.slane %v4255, 3
      %v4258 = vshll.u32 %v4197, 16
      %v4260 = vrot.slane %v4258, 4
      %v4261 = vor.u32 %v4257, %v4260
      %v4262 = vsel %vm1790, %v4252, %v4261
      %v4264 = vshrl.u32 %v4198, 16
      %v4266 = vrot.slane %v4264, 3
      %v4267 = vshll.u32 %v4198, 16
      %v4269 = vrot.slane %v4267, 4
      %v4270 = vor.u32 %v4266, %v4269
      %v4271 = vsel %vm1790, %v4261, %v4270
      %v4273 = vshrl.u32 %v4199, 16
      %v4275 = vrot.slane %v4273, 3
      %v4276 = vshll.u32 %v4199, 16
      %v4278 = vrot.slane %v4276, 4
      %v4279 = vor.u32 %v4275, %v4278
      %v4280 = vsel %vm1790, %v4270, %v4279
      %v4282 = vshrl.u32 %v4200, 16
      %v4284 = vrot.slane %v4282, 3
      %v4285 = vshll.u32 %v4200, 16
      %v4287 = vrot.slane %v4285, 4
      %v4288 = vor.u32 %v4284, %v4287
      %v4289 = vsel %vm1790, %v4279, %v4288
      %v4291 = vshrl.u32 %v4201, 16
      %v4293 = vrot.slane %v4291, 3
      %v4294 = vshll.u32 %v4201, 16
      %v4296 = vrot.slane %v4294, 4
      %v4297 = vor.u32 %v4293, %v4296
      %v4298 = vsel %vm1790, %v4288, %v4297
      %v4300 = vshrl.u32 %v4202, 16
      %v4302 = vrot.slane %v4300, 3
      %v4303 = vshll.u32 %v4202, 16
      %v4305 = vrot.slane %v4303, 4
      %v4306 = vor.u32 %v4302, %v4305
      %v4307 = vsel %vm1790, %v4297, %v4306
      %v4309 = vshrl.u32 %v4203, 16
      %v4311 = vrot.slane %v4309, 3
      %v4312 = vshll.u32 %v4203, 16
      %v4314 = vrot.slane %v4312, 4
      %v4315 = vor.u32 %v4311, %v4314
      %v4316 = vsel %vm1790, %v4306, %v4315
      %v4318 = vshrl.u32 %v4204, 16
      %v4320 = vrot.slane %v4318, 3
      %v4321 = vshll.u32 %v4204, 16
      %v4323 = vrot.slane %v4321, 4
      %v4324 = vor.u32 %v4320, %v4323
      %v4325 = vsel %vm1790, %v4315, %v4324
      %v4327 = vshrl.u32 %v4205, 16
      %v4329 = vrot.slane %v4327, 3
      %v4330 = vshll.u32 %v4205, 16
      %v4332 = vrot.slane %v4330, 4
      %v4333 = vor.u32 %v4329, %v4332
      %v4334 = vsel %vm1790, %v4324, %v4333
      %v4336 = vshrl.u32 %v4206, 16
      %v4338 = vrot.slane %v4336, 3
      %v4339 = vshll.u32 %v4206, 16
      %v4341 = vrot.slane %v4339, 4
      %v4342 = vor.u32 %v4338, %v4341
      %v4343 = vsel %vm1790, %v4333, %v4342
      %v4345 = vshrl.u32 %v4207, 16
      %v4347 = vrot.slane %v4345, 3
      %v4348 = vshll.u32 %v4207, 16
      %v4350 = vrot.slane %v4348, 4
      %v4351 = vor.u32 %v4347, %v4350
      %v4352 = vsel %vm1790, %v4342, %v4351
      %v4354 = vshrl.u32 %v4208, 16
      %v4356 = vrot.slane %v4354, 3
      %v4357 = vshll.u32 %v4208, 16
      %v4359 = vrot.slane %v4357, 4
      %v4360 = vor.u32 %v4356, %v4359
      %v4361 = vsel %vm1790, %v4351, %v4360
      %v4363 = vshrl.u32 %v4209, 16
      %v4365 = vrot.slane %v4363, 3
      %v4366 = vshll.u32 %v4209, 16
      %v4368 = vrot.slane %v4366, 4
      %v4369 = vor.u32 %v4365, %v4368
      %v4370 = vsel %vm1790, %v4360, %v4369
      %v4372 = vshrl.u32 %v4210, 16
      %v4374 = vrot.slane %v4372, 3
      %v4375 = vshll.u32 %v4210, 16
      %v4377 = vrot.slane %v4375, 4
      %v4378 = vor.u32 %v4374, %v4377
      %v4379 = vsel %vm1790, %v4369, %v4378
      %v4412 = vunpack.c.l.b16 %v4212
      %v4413 = vunpack.c.l.b16 %v4213
      %v4414 = vunpack.c.l.b16 %v4214
      %v4415 = vunpack.c.l.b16 %v4215
      %v4416 = vunpack.c.l.b16 %v4216
      %v4417 = vunpack.c.l.b16 %v4217
      %v4418 = vunpack.c.l.b16 %v4218
      %v4419 = vunpack.c.l.b16 %v4219
      %v4420 = vunpack.c.l.b16 %v4220
      %v4421 = vunpack.c.l.b16 %v4221
      %v4422 = vunpack.c.l.b16 %v4222
      %v4423 = vunpack.c.l.b16 %v4223
      %v4424 = vunpack.c.l.b16 %v4224
      %v4425 = vunpack.c.l.b16 %v4225
      %v4426 = vunpack.c.l.b16 %v4226
      %v4427 = vunpack.c.l.b16 %v4227
      %v4428 = vpack.c.b16 %v4413, %v4412
      %v4429 = vpack.c.b16 %v4415, %v4414
      %v4430 = vpack.c.b16 %v4417, %v4416
      %v4431 = vpack.c.b16 %v4419, %v4418
      %v4432 = vpack.c.b16 %v4421, %v4420
      %v4433 = vpack.c.b16 %v4423, %v4422
      %v4434 = vpack.c.b16 %v4425, %v4424
      %v4435 = vpack.c.b16 %v4427, %v4426
      %4444 = vmatprep.subr.bf16.mxu0 0
      %4445 = vmatpush1.bf16.msra.mxu0 %v4428
      %4446 = vmatprep.subr.bf16.mxu0 0
      %4447 = vmatpush1.bf16.msra.mxu0 %v4429
      %4448 = vmatprep.subr.bf16.mxu0 0
      %4449 = vmatpush1.bf16.msra.mxu0 %v4430
      %4450 = vmatprep.subr.bf16.mxu0 0
      %4451 = vmatpush1.bf16.msra.mxu0 %v4431
      %4452 = vmatprep.subr.bf16.mxu0 0
      %4453 = vmatpush1.bf16.msra.mxu0 %v4432
      %4454 = vmatprep.subr.bf16.mxu0 0
      %4455 = vmatpush1.bf16.msra.mxu0 %v4433
      %4456 = vmatprep.subr.bf16.mxu0 0
      %4457 = vmatpush1.bf16.msra.mxu0 %v4434
      %4458 = vmatprep.subr.bf16.mxu0 0
      %4459 = vmatpush1.bf16.msra.mxu0 %v4435
      %4460 = vmatprep.subr.bf16.mxu0 0
      %4461 = vmatpush1.bf16.msra.mxu0 0
      %4462 = vmatprep.subr.bf16.mxu0 0
      %4463 = vmatpush1.bf16.msra.mxu0 0
      %4464 = vmatprep.subr.bf16.mxu0 0
      %4465 = vmatpush1.bf16.msra.mxu0 0
      %4466 = vmatprep.subr.bf16.mxu0 0
      %4467 = vmatpush1.bf16.msra.mxu0 0
      %4468 = vmatprep.subr.bf16.mxu0 0
      %4469 = vmatpush1.bf16.msra.mxu0 0
      %4470 = vmatprep.subr.bf16.mxu0 0
      %4471 = vmatpush1.bf16.msra.mxu0 0
      %4472 = vmatprep.subr.bf16.mxu0 0
      %4473 = vmatpush1.bf16.msra.mxu0 0
      %4474 = vmatprep.subr.bf16.mxu0 0
      %4475 = vmatpush1.bf16.msra.mxu0 0
      %4476 = vmatprep.mubr.bf16.mxu0 0
      %4477 = vmatmul.mubr.bf16.gmra.mrb[0].mxu0 %v4244
      %v4478 = vpop.f32.mrb[0].mxu0
      %v4479 = vadd.f32 0.0, %v4478
      %v4480 = vpop.f32.mrb[0].mxu0
      %v4481 = vpop.f32.mrb[0].mxu0
      %v4482 = vadd.f32 0.0, %v4481
      %v4483 = vpop.f32.mrb[0].mxu0
      %4484 = vmatprep.mubr.bf16.mxu0 0
      %4485 = vmatmul.mubr.bf16.gmra.mrb[0].mxu0 %v4253
      %v4486 = vpop.f32.mrb[0].mxu0
      %v4487 = vadd.f32 0.0, %v4486
      %v4488 = vpop.f32.mrb[0].mxu0
      %v4489 = vpop.f32.mrb[0].mxu0
      %v4490 = vadd.f32 0.0, %v4489
      %v4491 = vpop.f32.mrb[0].mxu0
      %4492 = vmatprep.mubr.bf16.mxu0 0
      %4493 = vmatmul.mubr.bf16.gmra.mrb[0].mxu0 %v4262
      %v4494 = vpop.f32.mrb[0].mxu0
      %v4495 = vadd.f32 0.0, %v4494
      %v4496 = vpop.f32.mrb[0].mxu0
      %v4497 = vpop.f32.mrb[0].mxu0
      %v4498 = vadd.f32 0.0, %v4497
      %v4499 = vpop.f32.mrb[0].mxu0
      %4500 = vmatprep.mubr.bf16.mxu0 0
      %4501 = vmatmul.mubr.bf16.gmra.mrb[0].mxu0 %v4271
      %v4502 = vpop.f32.mrb[0].mxu0
      %v4503 = vadd.f32 0.0, %v4502
      %v4504 = vpop.f32.mrb[0].mxu0
      %v4505 = vpop.f32.mrb[0].mxu0
      %v4506 = vadd.f32 0.0, %v4505
      %v4507 = vpop.f32.mrb[0].mxu0
      %4508 = vmatprep.mubr.bf16.mxu0 0
      %4509 = vmatmul.mubr.bf16.gmra.mrb[0].mxu0 %v4280
      %v4510 = vpop.f32.mrb[0].mxu0
      %v4511 = vadd.f32 0.0, %v4510
      %v4512 = vpop.f32.mrb[0].mxu0
      %v4513 = vpop.f32.mrb[0].mxu0
      %v4514 = vadd.f32 0.0, %v4513
      %v4515 = vpop.f32.mrb[0].mxu0
      %4516 = vmatprep.mubr.bf16.mxu0 0
      %4517 = vmatmul.mubr.bf16.gmra.mrb[0].mxu0 %v4289
      %v4518 = vpop.f32.mrb[0].mxu0
      %v4519 = vadd.f32 0.0, %v4518
      %v4520 = vpop.f32.mrb[0].mxu0
      %v4521 = vpop.f32.mrb[0].mxu0
      %v4522 = vadd.f32 0.0, %v4521
      %v4523 = vpop.f32.mrb[0].mxu0
      %4524 = vmatprep.mubr.bf16.mxu0 0
      %4525 = vmatmul.mubr.bf16.gmra.mrb[0].mxu0 %v4298
      %v4526 = vpop.f32.mrb[0].mxu0
      %v4527 = vadd.f32 0.0, %v4526
      %v4528 = vpop.f32.mrb[0].mxu0
      %v4529 = vpop.f32.mrb[0].mxu0
      %v4530 = vadd.f32 0.0, %v4529
      %v4531 = vpop.f32.mrb[0].mxu0
      %4532 = vmatprep.mubr.bf16.mxu0 0
      %4533 = vmatmul.mubr.bf16.gmra.mrb[0].mxu0 %v4307
      %v4534 = vpop.f32.mrb[0].mxu0
      %v4535 = vadd.f32 0.0, %v4534
      %v4536 = vpop.f32.mrb[0].mxu0
      %v4537 = vpop.f32.mrb[0].mxu0
      %v4538 = vadd.f32 0.0, %v4537
      %v4539 = vpop.f32.mrb[0].mxu0
      %4540 = vmatprep.mubr.bf16.mxu0 0
      %4541 = vmatmul.mubr.bf16.gmra.mrb[0].mxu0 %v4316
      %v4542 = vpop.f32.mrb[0].mxu0
      %v4543 = vadd.f32 0.0, %v4542
      %v4544 = vpop.f32.mrb[0].mxu0
      %v4545 = vpop.f32.mrb[0].mxu0
      %v4546 = vadd.f32 0.0, %v4545
      %v4547 = vpop.f32.mrb[0].mxu0
      %4548 = vmatprep.mubr.bf16.mxu0 0
      %4549 = vmatmul.mubr.bf16.gmra.mrb[0].mxu0 %v4325
      %v4550 = vpop.f32.mrb[0].mxu0
      %v4551 = vadd.f32 0.0, %v4550
      %v4552 = vpop.f32.mrb[0].mxu0
      %v4553 = vpop.f32.mrb[0].mxu0
      %v4554 = vadd.f32 0.0, %v4553
      %v4555 = vpop.f32.mrb[0].mxu0
      %4556 = vmatprep.mubr.bf16.mxu0 0
      %4557 = vmatmul.mubr.bf16.gmra.mrb[0].mxu0 %v4334
      %v4558 = vpop.f32.mrb[0].mxu0
      %v4559 = vadd.f32 0.0, %v4558
      %v4560 = vpop.f32.mrb[0].mxu0
      %v4561 = vpop.f32.mrb[0].mxu0
      %v4562 = vadd.f32 0.0, %v4561
      %v4563 = vpop.f32.mrb[0].mxu0
      %4564 = vmatprep.mubr.bf16.mxu0 0
      %4565 = vmatmul.mubr.bf16.gmra.mrb[0].mxu0 %v4343
      %v4566 = vpop.f32.mrb[0].mxu0
      %v4567 = vadd.f32 0.0, %v4566
      %v4568 = vpop.f32.mrb[0].mxu0
      %v4569 = vpop.f32.mrb[0].mxu0
      %v4570 = vadd.f32 0.0, %v4569
      %v4571 = vpop.f32.mrb[0].mxu0
      %4572 = vmatprep.mubr.bf16.mxu0 0
      %4573 = vmatmul.mubr.bf16.gmra.mrb[0].mxu0 %v4352
      %v4574 = vpop.f32.mrb[0].mxu0
      %v4575 = vadd.f32 0.0, %v4574
      %v4576 = vpop.f32.mrb[0].mxu0
      %v4577 = vpop.f32.mrb[0].mxu0
      %v4578 = vadd.f32 0.0, %v4577
      %v4579 = vpop.f32.mrb[0].mxu0
      %4580 = vmatprep.mubr.bf16.mxu0 0
      %4581 = vmatmul.mubr.bf16.gmra.mrb[0].mxu0 %v4361
      %v4582 = vpop.f32.mrb[0].mxu0
      %v4583 = vadd.f32 0.0, %v4582
      %v4584 = vpop.f32.mrb[0].mxu0
      %v4585 = vpop.f32.mrb[0].mxu0
      %v4586 = vadd.f32 0.0, %v4585
      %v4587 = vpop.f32.mrb[0].mxu0
      %4588 = vmatprep.mubr.bf16.mxu0 0
      %4589 = vmatmul.mubr.bf16.gmra.mrb[0].mxu0 %v4370
      %v4590 = vpop.f32.mrb[0].mxu0
      %v4591 = vadd.f32 0.0, %v4590
      %v4592 = vpop.f32.mrb[0].mxu0
      %v4593 = vpop.f32.mrb[0].mxu0
      %v4594 = vadd.f32 0.0, %v4593
      %v4595 = vpop.f32.mrb[0].mxu0
      %4596 = vmatprep.mubr.bf16.mxu0 0
      %4597 = vmatmul.mubr.bf16.gmra.mrb[0].mxu0 %v4379
      %v4598 = vpop.f32.mrb[0].mxu0
      %v4599 = vadd.f32 0.0, %v4598
      %v4600 = vpop.f32.mrb[0].mxu0
      %v4601 = vpop.f32.mrb[0].mxu0
      %v4602 = vadd.f32 0.0, %v4601
      %v4603 = vpop.f32.mrb[0].mxu0
      %4604 = vdwg.mxu0
      %v4605 = vadd.f32 %v4145, %v4479
      %v4606 = vadd.f32 %v4146, %v4482
      %v4607 = vadd.f32 %v4147, %v4487
      %v4608 = vadd.f32 %v4148, %v4490
      %v4609 = vadd.f32 %v4149, %v4495
      %v4610 = vadd.f32 %v4150, %v4498
      %v4611 = vadd.f32 %v4151, %v4503
      %v4612 = vadd.f32 %v4152, %v4506
      %v4613 = vadd.f32 %v4153, %v4511
      %v4614 = vadd.f32 %v4154, %v4514
      %v4615 = vadd.f32 %v4155, %v4519
      %v4616 = vadd.f32 %v4156, %v4522
      %v4617 = vadd.f32 %v4157, %v4527
      %v4618 = vadd.f32 %v4158, %v4530
      %v4619 = vadd.f32 %v4159, %v4535
      %v4620 = vadd.f32 %v4160, %v4538
      %v4621 = vadd.f32 %v4161, %v4543
      %v4622 = vadd.f32 %v4162, %v4546
      %v4623 = vadd.f32 %v4163, %v4551
      %v4624 = vadd.f32 %v4164, %v4554
      %v4625 = vadd.f32 %v4165, %v4559
      %v4626 = vadd.f32 %v4166, %v4562
      %v4627 = vadd.f32 %v4167, %v4567
      %v4628 = vadd.f32 %v4168, %v4570
      %v4629 = vadd.f32 %v4169, %v4575
      %v4630 = vadd.f32 %v4170, %v4578
      %v4631 = vadd.f32 %v4171, %v4583
      %v4632 = vadd.f32 %v4172, %v4586
      %v4633 = vadd.f32 %v4173, %v4591
      %v4634 = vadd.f32 %v4174, %v4594
      %v4635 = vadd.f32 %v4175, %v4599
      %v4636 = vadd.f32 %v4176, %v4602
      %v4637 = vld [vmem:[#allocation2 + $0x10] sm:$0xf0]
      %s4638 = scalar_lea.vmem %s3, 448
      %v4639 = vld [vmem:[%s4638] sm:$0xf]
      %v4640 = vld [vmem:[%s4638 + $0x4] sm:$0xf]
      %v4641 = vld [vmem:[%s4638 + $0x8] sm:$0xf]
      %v4642 = vld [vmem:[%s4638 + $0xc] sm:$0xf]
      %v4643 = vld [vmem:[%s4638 + $0x10] sm:$0xf]
      %v4644 = vld [vmem:[%s4638 + $0x14] sm:$0xf]
      %v4645 = vld [vmem:[%s4638 + $0x18] sm:$0xf]
      %v4646 = vld [vmem:[%s4638 + $0x1c] sm:$0xf]
      %v4647 = vld [vmem:[%s4638 + $0x20] sm:$0xf]
      %v4648 = vld [vmem:[%s4638 + $0x24] sm:$0xf]
      %v4649 = vld [vmem:[%s4638 + $0x28] sm:$0xf]
      %v4650 = vld [vmem:[%s4638 + $0x2c] sm:$0xf]
      %v4651 = vld [vmem:[%s4638 + $0x30] sm:$0xf]
      %v4652 = vld [vmem:[%s4638 + $0x34] sm:$0xf]
      %v4653 = vld [vmem:[%s4638 + $0x38] sm:$0xf]
      %v4654 = vld [vmem:[%s4638 + $0x3c] sm:$0xf]
      %v4672 = vrot.slane %v4637, 4
      %v4673 = vrot.slane %v4178, 4
      %v4674 = vsel %vm1531, %v4672, %v4673
      %v4675 = vrot.slane %v4179, 4
      %v4676 = vsel %vm1531, %v4673, %v4675
      %v4677 = vrot.slane %v4180, 4
      %v4678 = vsel %vm1531, %v4675, %v4677
      %v4679 = vrot.slane %v4181, 4
      %v4680 = vsel %vm1531, %v4677, %v4679
      %v4681 = vrot.slane %v4182, 4
      %v4682 = vsel %vm1531, %v4679, %v4681
      %v4683 = vrot.slane %v4183, 4
      %v4684 = vsel %vm1531, %v4681, %v4683
      %v4685 = vrot.slane %v4184, 4
      %v4686 = vsel %vm1531, %v4683, %v4685
      %v4687 = vrot.slane %v4185, 4
      %v4688 = vsel %vm1531, %v4685, %v4687
      %v4689 = vrot.slane %v4186, 4
      %v4690 = vsel %vm1531, %v4687, %v4689
      %v4691 = vrot.slane %v4187, 4
      %v4692 = vsel %vm1531, %v4689, %v4691
      %v4693 = vrot.slane %v4188, 4
      %v4694 = vsel %vm1531, %v4691, %v4693
      %v4695 = vrot.slane %v4189, 4
      %v4696 = vsel %vm1531, %v4693, %v4695
      %v4697 = vrot.slane %v4190, 4
      %v4698 = vsel %vm1531, %v4695, %v4697
      %v4699 = vrot.slane %v4191, 4
      %v4700 = vsel %vm1531, %v4697, %v4699
      %v4701 = vrot.slane %v4192, 4
      %v4702 = vsel %vm1531, %v4699, %v4701
      %v4703 = vrot.slane %v4193, 4
      %v4704 = vsel %vm1531, %v4701, %v4703
      %v4737 = vunpack.c.l.b16 %v4639
      %v4738 = vunpack.c.l.b16 %v4640
      %v4739 = vunpack.c.l.b16 %v4641
      %v4740 = vunpack.c.l.b16 %v4642
      %v4741 = vunpack.c.l.b16 %v4643
      %v4742 = vunpack.c.l.b16 %v4644
      %v4743 = vunpack.c.l.b16 %v4645
      %v4744 = vunpack.c.l.b16 %v4646
      %v4745 = vunpack.c.l.b16 %v4647
      %v4746 = vunpack.c.l.b16 %v4648
      %v4747 = vunpack.c.l.b16 %v4649
      %v4748 = vunpack.c.l.b16 %v4650
      %v4749 = vunpack.c.l.b16 %v4651
      %v4750 = vunpack.c.l.b16 %v4652
      %v4751 = vunpack.c.l.b16 %v4653
      %v4752 = vunpack.c.l.b16 %v4654
      %v4753 = vpack.c.b16 %v4738, %v4737
      %v4754 = vpack.c.b16 %v4740, %v4739
      %v4755 = vpack.c.b16 %v4742, %v4741
      %v4756 = vpack.c.b16 %v4744, %v4743
      %v4757 = vpack.c.b16 %v4746, %v4745
      %v4758 = vpack.c.b16 %v4748, %v4747
      %v4759 = vpack.c.b16 %v4750, %v4749
      %v4760 = vpack.c.b16 %v4752, %v4751
      %4769 = vmatprep.subr.bf16.mxu0 0
      %4770 = vmatpush1.bf16.msra.mxu0 %v4753
      %4771 = vmatprep.subr.bf16.mxu0 0
      %4772 = vmatpush1.bf16.msra.mxu0 %v4754
      %4773 = vmatprep.subr.bf16.mxu0 0
      %4774 = vmatpush1.bf16.msra.mxu0 %v4755
      %4775 = vmatprep.subr.bf16.mxu0 0
      %4776 = vmatpush1.bf16.msra.mxu0 %v4756
      %4777 = vmatprep.subr.bf16.mxu0 0
      %4778 = vmatpush1.bf16.msra.mxu0 %v4757
      %4779 = vmatprep.subr.bf16.mxu0 0
      %4780 = vmatpush1.bf16.msra.mxu0 %v4758
      %4781 = vmatprep.subr.bf16.mxu0 0
      %4782 = vmatpush1.bf16.msra.mxu0 %v4759
      %4783 = vmatprep.subr.bf16.mxu0 0
      %4784 = vmatpush1.bf16.msra.mxu0 %v4760
      %4785 = vmatprep.subr.bf16.mxu0 0
      %4786 = vmatpush1.bf16.msra.mxu0 0
      %4787 = vmatprep.subr.bf16.mxu0 0
      %4788 = vmatpush1.bf16.msra.mxu0 0
      %4789 = vmatprep.subr.bf16.mxu0 0
      %4790 = vmatpush1.bf16.msra.mxu0 0
      %4791 = vmatprep.subr.bf16.mxu0 0
      %4792 = vmatpush1.bf16.msra.mxu0 0
      %4793 = vmatprep.subr.bf16.mxu0 0
      %4794 = vmatpush1.bf16.msra.mxu0 0
      %4795 = vmatprep.subr.bf16.mxu0 0
      %4796 = vmatpush1.bf16.msra.mxu0 0
      %4797 = vmatprep.subr.bf16.mxu0 0
      %4798 = vmatpush1.bf16.msra.mxu0 0
      %4799 = vmatprep.subr.bf16.mxu0 0
      %4800 = vmatpush1.bf16.msra.mxu0 0
      %4801 = vmatprep.mubr.bf16.mxu0 0
      %4802 = vmatmul.mubr.bf16.gmra.mrb[0].mxu0 %v4674
      %v4803 = vpop.f32.mrb[0].mxu0
      %v4804 = vadd.f32 0.0, %v4803
      %v4805 = vpop.f32.mrb[0].mxu0
      %v4806 = vpop.f32.mrb[0].mxu0
      %v4807 = vadd.f32 0.0, %v4806
      %v4808 = vpop.f32.mrb[0].mxu0
      %4809 = vmatprep.mubr.bf16.mxu0 0
      %4810 = vmatmul.mubr.bf16.gmra.mrb[0].mxu0 %v4676
      %v4811 = vpop.f32.mrb[0].mxu0
      %v4812 = vadd.f32 0.0, %v4811
      %v4813 = vpop.f32.mrb[0].mxu0
      %v4814 = vpop.f32.mrb[0].mxu0
      %v4815 = vadd.f32 0.0, %v4814
      %v4816 = vpop.f32.mrb[0].mxu0
      %4817 = vmatprep.mubr.bf16.mxu0 0
      %4818 = vmatmul.mubr.bf16.gmra.mrb[0].mxu0 %v4678
      %v4819 = vpop.f32.mrb[0].mxu0
      %v4820 = vadd.f32 0.0, %v4819
      %v4821 = vpop.f32.mrb[0].mxu0
      %v4822 = vpop.f32.mrb[0].mxu0
      %v4823 = vadd.f32 0.0, %v4822
      %v4824 = vpop.f32.mrb[0].mxu0
      %4825 = vmatprep.mubr.bf16.mxu0 0
      %4826 = vmatmul.mubr.bf16.gmra.mrb[0].mxu0 %v4680
      %v4827 = vpop.f32.mrb[0].mxu0
      %v4828 = vadd.f32 0.0, %v4827
      %v4829 = vpop.f32.mrb[0].mxu0
      %v4830 = vpop.f32.mrb[0].mxu0
      %v4831 = vadd.f32 0.0, %v4830
      %v4832 = vpop.f32.mrb[0].mxu0
      %4833 = vmatprep.mubr.bf16.mxu0 0
      %4834 = vmatmul.mubr.bf16.gmra.mrb[0].mxu0 %v4682
      %v4835 = vpop.f32.mrb[0].mxu0
      %v4836 = vadd.f32 0.0, %v4835
      %v4837 = vpop.f32.mrb[0].mxu0
      %v4838 = vpop.f32.mrb[0].mxu0
      %v4839 = vadd.f32 0.0, %v4838
      %v4840 = vpop.f32.mrb[0].mxu0
      %4841 = vmatprep.mubr.bf16.mxu0 0
      %4842 = vmatmul.mubr.bf16.gmra.mrb[0].mxu0 %v4684
      %v4843 = vpop.f32.mrb[0].mxu0
      %v4844 = vadd.f32 0.0, %v4843
      %v4845 = vpop.f32.mrb[0].mxu0
      %v4846 = vpop.f32.mrb[0].mxu0
      %v4847 = vadd.f32 0.0, %v4846
      %v4848 = vpop.f32.mrb[0].mxu0
      %4849 = vmatprep.mubr.bf16.mxu0 0
      %4850 = vmatmul.mubr.bf16.gmra.mrb[0].mxu0 %v4686
      %v4851 = vpop.f32.mrb[0].mxu0
      %v4852 = vadd.f32 0.0, %v4851
      %v4853 = vpop.f32.mrb[0].mxu0
      %v4854 = vpop.f32.mrb[0].mxu0
      %v4855 = vadd.f32 0.0, %v4854
      %v4856 = vpop.f32.mrb[0].mxu0
      %4857 = vmatprep.mubr.bf16.mxu0 0
      %4858 = vmatmul.mubr.bf16.gmra.mrb[0].mxu0 %v4688
      %v4859 = vpop.f32.mrb[0].mxu0
      %v4860 = vadd.f32 0.0, %v4859
      %v4861 = vpop.f32.mrb[0].mxu0
      %v4862 = vpop.f32.mrb[0].mxu0
      %v4863 = vadd.f32 0.0, %v4862
      %v4864 = vpop.f32.mrb[0].mxu0
      %4865 = vmatprep.mubr.bf16.mxu0 0
      %4866 = vmatmul.mubr.bf16.gmra.mrb[0].mxu0 %v4690
      %v4867 = vpop.f32.mrb[0].mxu0
      %v4868 = vadd.f32 0.0, %v4867
      %v4869 = vpop.f32.mrb[0].mxu0
      %v4870 = vpop.f32.mrb[0].mxu0
      %v4871 = vadd.f32 0.0, %v4870
      %v4872 = vpop.f32.mrb[0].mxu0
      %4873 = vmatprep.mubr.bf16.mxu0 0
      %4874 = vmatmul.mubr.bf16.gmra.mrb[0].mxu0 %v4692
      %v4875 = vpop.f32.mrb[0].mxu0
      %v4876 = vadd.f32 0.0, %v4875
      %v4877 = vpop.f32.mrb[0].mxu0
      %v4878 = vpop.f32.mrb[0].mxu0
      %v4879 = vadd.f32 0.0, %v4878
      %v4880 = vpop.f32.mrb[0].mxu0
      %4881 = vmatprep.mubr.bf16.mxu0 0
      %4882 = vmatmul.mubr.bf16.gmra.mrb[0].mxu0 %v4694
      %v4883 = vpop.f32.mrb[0].mxu0
      %v4884 = vadd.f32 0.0, %v4883
      %v4885 = vpop.f32.mrb[0].mxu0
      %v4886 = vpop.f32.mrb[0].mxu0
      %v4887 = vadd.f32 0.0, %v4886
      %v4888 = vpop.f32.mrb[0].mxu0
      %4889 = vmatprep.mubr.bf16.mxu0 0
      %4890 = vmatmul.mubr.bf16.gmra.mrb[0].mxu0 %v4696
      %v4891 = vpop.f32.mrb[0].mxu0
      %v4892 = vadd.f32 0.0, %v4891
      %v4893 = vpop.f32.mrb[0].mxu0
      %v4894 = vpop.f32.mrb[0].mxu0
      %v4895 = vadd.f32 0.0, %v4894
      %v4896 = vpop.f32.mrb[0].mxu0
      %4897 = vmatprep.mubr.bf16.mxu0 0
      %4898 = vmatmul.mubr.bf16.gmra.mrb[0].mxu0 %v4698
      %v4899 = vpop.f32.mrb[0].mxu0
      %v4900 = vadd.f32 0.0, %v4899
      %v4901 = vpop.f32.mrb[0].mxu0
      %v4902 = vpop.f32.mrb[0].mxu0
      %v4903 = vadd.f32 0.0, %v4902
      %v4904 = vpop.f32.mrb[0].mxu0
      %4905 = vmatprep.mubr.bf16.mxu0 0
      %4906 = vmatmul.mubr.bf16.gmra.mrb[0].mxu0 %v4700
      %v4907 = vpop.f32.mrb[0].mxu0
      %v4908 = vadd.f32 0.0, %v4907
      %v4909 = vpop.f32.mrb[0].mxu0
      %v4910 = vpop.f32.mrb[0].mxu0
      %v4911 = vadd.f32 0.0, %v4910
      %v4912 = vpop.f32.mrb[0].mxu0
      %4913 = vmatprep.mubr.bf16.mxu0 0
      %4914 = vmatmul.mubr.bf16.gmra.mrb[0].mxu0 %v4702
      %v4915 = vpop.f32.mrb[0].mxu0
      %v4916 = vadd.f32 0.0, %v4915
      %v4917 = vpop.f32.mrb[0].mxu0
      %v4918 = vpop.f32.mrb[0].mxu0
      %v4919 = vadd.f32 0.0, %v4918
      %v4920 = vpop.f32.mrb[0].mxu0
      %4921 = vmatprep.mubr.bf16.mxu0 0
      %4922 = vmatmul.mubr.bf16.gmra.mrb[0].mxu0 %v4704
      %v4923 = vpop.f32.mrb[0].mxu0
      %v4924 = vadd.f32 0.0, %v4923
      %v4925 = vpop.f32.mrb[0].mxu0
      %v4926 = vpop.f32.mrb[0].mxu0
      %v4927 = vadd.f32 0.0, %v4926
      %v4928 = vpop.f32.mrb[0].mxu0
      %4929 = vdwg.mxu0
      %v4930 = vadd.f32 %v4605, %v4804
      %v4931 = vadd.f32 %v4606, %v4807
      %v4932 = vadd.f32 %v4607, %v4812
      %v4933 = vadd.f32 %v4608, %v4815
      %v4934 = vadd.f32 %v4609, %v4820
      %v4935 = vadd.f32 %v4610, %v4823
      %v4936 = vadd.f32 %v4611, %v4828
      %v4937 = vadd.f32 %v4612, %v4831
      %v4938 = vadd.f32 %v4613, %v4836
      %v4939 = vadd.f32 %v4614, %v4839
      %v4940 = vadd.f32 %v4615, %v4844
      %v4941 = vadd.f32 %v4616, %v4847
      %v4942 = vadd.f32 %v4617, %v4852
      %v4943 = vadd.f32 %v4618, %v4855
      %v4944 = vadd.f32 %v4619, %v4860
      %v4945 = vadd.f32 %v4620, %v4863
      %v4946 = vadd.f32 %v4621, %v4868
      %v4947 = vadd.f32 %v4622, %v4871
      %v4948 = vadd.f32 %v4623, %v4876
      %v4949 = vadd.f32 %v4624, %v4879
      %v4950 = vadd.f32 %v4625, %v4884
      %v4951 = vadd.f32 %v4626, %v4887
      %v4952 = vadd.f32 %v4627, %v4892
      %v4953 = vadd.f32 %v4628, %v4895
      %v4954 = vadd.f32 %v4629, %v4900
      %v4955 = vadd.f32 %v4630, %v4903
      %v4956 = vadd.f32 %v4631, %v4908
      %v4957 = vadd.f32 %v4632, %v4911
      %v4958 = vadd.f32 %v4633, %v4916
      %v4959 = vadd.f32 %v4634, %v4919
      %v4960 = vadd.f32 %v4635, %v4924
      %v4961 = vadd.f32 %v4636, %v4927
      %v4962 = vld [vmem:[#allocation2 + $0x90] sm:$0x1f]
      %v4963 = vsel %vm2488, %v4637, 0
      %v4964 = vsel %vm2489, %v4178, 0
      %v4965 = vsel %vm2490, %v4179, 0
      %v4966 = vsel %vm2491, %v4180, 0
      %v4967 = vsel %vm2492, %v4181, 0
      %v4968 = vsel %vm2493, %v4182, 0
      %v4969 = vsel %vm2494, %v4183, 0
      %v4970 = vsel %vm2495, %v4184, 0
      %v4971 = vsel %vm2496, %v4185, 0
      %v4972 = vsel %vm2497, %v4186, 0
      %v4973 = vsel %vm2498, %v4187, 0
      %v4974 = vsel %vm2499, %v4188, 0
      %v4975 = vsel %vm2500, %v4189, 0
      %v4976 = vsel %vm2501, %v4190, 0
      %v4977 = vsel %vm2502, %v4191, 0
      %v4978 = vsel %vm2503, %v4192, 0
      %v4979 = vsel %vm2504, %v4962, 0
      %s4980 = scalar_lea.vmem %s3, 512
      %v4981 = vld [vmem:[%s4980] sm:$0xf]
      %v4982 = vld [vmem:[%s4980 + $0x4] sm:$0xf]
      %v4983 = vld [vmem:[%s4980 + $0x8] sm:$0xf]
      %v4984 = vld [vmem:[%s4980 + $0xc] sm:$0xf]
      %v4985 = vld [vmem:[%s4980 + $0x10] sm:$0xf]
      %v4986 = vld [vmem:[%s4980 + $0x14] sm:$0xf]
      %v4987 = vld [vmem:[%s4980 + $0x18] sm:$0xf]
      %v4988 = vld [vmem:[%s4980 + $0x1c] sm:$0xf]
      %v4989 = vld [vmem:[%s4980 + $0x20] sm:$0xf]
      %v4990 = vld [vmem:[%s4980 + $0x24] sm:$0xf]
      %v4991 = vld [vmem:[%s4980 + $0x28] sm:$0xf]
      %v4992 = vld [vmem:[%s4980 + $0x2c] sm:$0xf]
      %v4993 = vld [vmem:[%s4980 + $0x30] sm:$0xf]
      %v4994 = vld [vmem:[%s4980 + $0x34] sm:$0xf]
      %v4995 = vld [vmem:[%s4980 + $0x38] sm:$0xf]
      %v4996 = vld [vmem:[%s4980 + $0x3c] sm:$0xf]
      %v4998 = vshrl.u32 %v4963, 16
      %v5000 = vrot.slane %v4998, 4
      %v5001 = vshll.u32 %v4963, 16
      %v5003 = vrot.slane %v5001, 5
      %v5004 = vor.u32 %v5000, %v5003
      %v5006 = vshrl.u32 %v4964, 16
      %v5008 = vrot.slane %v5006, 4
      %v5009 = vshll.u32 %v4964, 16
      %v5011 = vrot.slane %v5009, 5
      %v5012 = vor.u32 %v5008, %v5011
      %v5013 = vsel %vm1302, %v5004, %v5012
      %v5015 = vshrl.u32 %v4965, 16
      %v5017 = vrot.slane %v5015, 4
      %v5018 = vshll.u32 %v4965, 16
      %v5020 = vrot.slane %v5018, 5
      %v5021 = vor.u32 %v5017, %v5020
      %v5022 = vsel %vm1302, %v5012, %v5021
      %v5024 = vshrl.u32 %v4966, 16
      %v5026 = vrot.slane %v5024, 4
      %v5027 = vshll.u32 %v4966, 16
      %v5029 = vrot.slane %v5027, 5
      %v5030 = vor.u32 %v5026, %v5029
      %v5031 = vsel %vm1302, %v5021, %v5030
      %v5033 = vshrl.u32 %v4967, 16
      %v5035 = vrot.slane %v5033, 4
      %v5036 = vshll.u32 %v4967, 16
      %v5038 = vrot.slane %v5036, 5
      %v5039 = vor.u32 %v5035, %v5038
      %v5040 = vsel %vm1302, %v5030, %v5039
      %v5042 = vshrl.u32 %v4968, 16
      %v5044 = vrot.slane %v5042, 4
      %v5045 = vshll.u32 %v4968, 16
      %v5047 = vrot.slane %v5045, 5
      %v5048 = vor.u32 %v5044, %v5047
      %v5049 = vsel %vm1302, %v5039, %v5048
      %v5051 = vshrl.u32 %v4969, 16
      %v5053 = vrot.slane %v5051, 4
      %v5054 = vshll.u32 %v4969, 16
      %v5056 = vrot.slane %v5054, 5
      %v5057 = vor.u32 %v5053, %v5056
      %v5058 = vsel %vm1302, %v5048, %v5057
      %v5060 = vshrl.u32 %v4970, 16
      %v5062 = vrot.slane %v5060, 4
      %v5063 = vshll.u32 %v4970, 16
      %v5065 = vrot.slane %v5063, 5
      %v5066 = vor.u32 %v5062, %v5065
      %v5067 = vsel %vm1302, %v5057, %v5066
      %v5069 = vshrl.u32 %v4971, 16
      %v5071 = vrot.slane %v5069, 4
      %v5072 = vshll.u32 %v4971, 16
      %v5074 = vrot.slane %v5072, 5
      %v5075 = vor.u32 %v5071, %v5074
      %v5076 = vsel %vm1302, %v5066, %v5075
      %v5078 = vshrl.u32 %v4972, 16
      %v5080 = vrot.slane %v5078, 4
      %v5081 = vshll.u32 %v4972, 16
      %v5083 = vrot.slane %v5081, 5
      %v5084 = vor.u32 %v5080, %v5083
      %v5085 = vsel %vm1302, %v5075, %v5084
      %v5087 = vshrl.u32 %v4973, 16
      %v5089 = vrot.slane %v5087, 4
      %v5090 = vshll.u32 %v4973, 16
      %v5092 = vrot.slane %v5090, 5
      %v5093 = vor.u32 %v5089, %v5092
      %v5094 = vsel %vm1302, %v5084, %v5093
      %v5096 = vshrl.u32 %v4974, 16
      %v5098 = vrot.slane %v5096, 4
      %v5099 = vshll.u32 %v4974, 16
      %v5101 = vrot.slane %v5099, 5
      %v5102 = vor.u32 %v5098, %v5101
      %v5103 = vsel %vm1302, %v5093, %v5102
      %v5105 = vshrl.u32 %v4975, 16
      %v5107 = vrot.slane %v5105, 4
      %v5108 = vshll.u32 %v4975, 16
      %v5110 = vrot.slane %v5108, 5
      %v5111 = vor.u32 %v5107, %v5110
      %v5112 = vsel %vm1302, %v5102, %v5111
      %v5114 = vshrl.u32 %v4976, 16
      %v5116 = vrot.slane %v5114, 4
      %v5117 = vshll.u32 %v4976, 16
      %v5119 = vrot.slane %v5117, 5
      %v5120 = vor.u32 %v5116, %v5119
      %v5121 = vsel %vm1302, %v5111, %v5120
      %v5123 = vshrl.u32 %v4977, 16
      %v5125 = vrot.slane %v5123, 4
      %v5126 = vshll.u32 %v4977, 16
      %v5128 = vrot.slane %v5126, 5
      %v5129 = vor.u32 %v5125, %v5128
      %v5130 = vsel %vm1302, %v5120, %v5129
      %v5132 = vshrl.u32 %v4978, 16
      %v5134 = vrot.slane %v5132, 4
      %v5135 = vshll.u32 %v4978, 16
      %v5137 = vrot.slane %v5135, 5
      %v5138 = vor.u32 %v5134, %v5137
      %v5139 = vsel %vm1302, %v5129, %v5138
      %v5141 = vshrl.u32 %v4979, 16
      %v5143 = vrot.slane %v5141, 4
      %v5144 = vshll.u32 %v4979, 16
      %v5146 = vrot.slane %v5144, 5
      %v5147 = vor.u32 %v5143, %v5146
      %v5148 = vsel %vm1302, %v5138, %v5147
      %v5181 = vunpack.c.l.b16 %v4981
      %v5182 = vunpack.c.l.b16 %v4982
      %v5183 = vunpack.c.l.b16 %v4983
      %v5184 = vunpack.c.l.b16 %v4984
      %v5185 = vunpack.c.l.b16 %v4985
      %v5186 = vunpack.c.l.b16 %v4986
      %v5187 = vunpack.c.l.b16 %v4987
      %v5188 = vunpack.c.l.b16 %v4988
      %v5189 = vunpack.c.l.b16 %v4989
      %v5190 = vunpack.c.l.b16 %v4990
      %v5191 = vunpack.c.l.b16 %v4991
      %v5192 = vunpack.c.l.b16 %v4992
      %v5193 = vunpack.c.l.b16 %v4993
      %v5194 = vunpack.c.l.b16 %v4994
      %v5195 = vunpack.c.l.b16 %v4995
      %v5196 = vunpack.c.l.b16 %v4996
      %v5197 = vpack.c.b16 %v5182, %v5181
      %v5198 = vpack.c.b16 %v5184, %v5183
      %v5199 = vpack.c.b16 %v5186, %v5185
      %v5200 = vpack.c.b16 %v5188, %v5187
      %v5201 = vpack.c.b16 %v5190, %v5189
      %v5202 = vpack.c.b16 %v5192, %v5191
      %v5203 = vpack.c.b16 %v5194, %v5193
      %v5204 = vpack.c.b16 %v5196, %v5195
      %5213 = vmatprep.subr.bf16.mxu0 0
      %5214 = vmatpush1.bf16.msra.mxu0 %v5197
      %5215 = vmatprep.subr.bf16.mxu0 0
      %5216 = vmatpush1.bf16.msra.mxu0 %v5198
      %5217 = vmatprep.subr.bf16.mxu0 0
      %5218 = vmatpush1.bf16.msra.mxu0 %v5199
      %5219 = vmatprep.subr.bf16.mxu0 0
      %5220 = vmatpush1.bf16.msra.mxu0 %v5200
      %5221 = vmatprep.subr.bf16.mxu0 0
      %5222 = vmatpush1.bf16.msra.mxu0 %v5201
      %5223 = vmatprep.subr.bf16.mxu0 0
      %5224 = vmatpush1.bf16.msra.mxu0 %v5202
      %5225 = vmatprep.subr.bf16.mxu0 0
      %5226 = vmatpush1.bf16.msra.mxu0 %v5203
      %5227 = vmatprep.subr.bf16.mxu0 0
      %5228 = vmatpush1.bf16.msra.mxu0 %v5204
      %5229 = vmatprep.subr.bf16.mxu0 0
      %5230 = vmatpush1.bf16.msra.mxu0 0
      %5231 = vmatprep.subr.bf16.mxu0 0
      %5232 = vmatpush1.bf16.msra.mxu0 0
      %5233 = vmatprep.subr.bf16.mxu0 0
      %5234 = vmatpush1.bf16.msra.mxu0 0
      %5235 = vmatprep.subr.bf16.mxu0 0
      %5236 = vmatpush1.bf16.msra.mxu0 0
      %5237 = vmatprep.subr.bf16.mxu0 0
      %5238 = vmatpush1.bf16.msra.mxu0 0
      %5239 = vmatprep.subr.bf16.mxu0 0
      %5240 = vmatpush1.bf16.msra.mxu0 0
      %5241 = vmatprep.subr.bf16.mxu0 0
      %5242 = vmatpush1.bf16.msra.mxu0 0
      %5243 = vmatprep.subr.bf16.mxu0 0
      %5244 = vmatpush1.bf16.msra.mxu0 0
      %5245 = vmatprep.mubr.bf16.mxu0 0
      %5246 = vmatmul.mubr.bf16.gmra.mrb[0].mxu0 %v5013
      %v5247 = vpop.f32.mrb[0].mxu0
      %v5248 = vadd.f32 0.0, %v5247
      %v5249 = vpop.f32.mrb[0].mxu0
      %v5250 = vpop.f32.mrb[0].mxu0
      %v5251 = vadd.f32 0.0, %v5250
      %v5252 = vpop.f32.mrb[0].mxu0
      %5253 = vmatprep.mubr.bf16.mxu0 0
      %5254 = vmatmul.mubr.bf16.gmra.mrb[0].mxu0 %v5022
      %v5255 = vpop.f32.mrb[0].mxu0
      %v5256 = vadd.f32 0.0, %v5255
      %v5257 = vpop.f32.mrb[0].mxu0
      %v5258 = vpop.f32.mrb[0].mxu0
      %v5259 = vadd.f32 0.0, %v5258
      %v5260 = vpop.f32.mrb[0].mxu0
      %5261 = vmatprep.mubr.bf16.mxu0 0
      %5262 = vmatmul.mubr.bf16.gmra.mrb[0].mxu0 %v5031
      %v5263 = vpop.f32.mrb[0].mxu0
      %v5264 = vadd.f32 0.0, %v5263
      %v5265 = vpop.f32.mrb[0].mxu0
      %v5266 = vpop.f32.mrb[0].mxu0
      %v5267 = vadd.f32 0.0, %v5266
      %v5268 = vpop.f32.mrb[0].mxu0
      %5269 = vmatprep.mubr.bf16.mxu0 0
      %5270 = vmatmul.mubr.bf16.gmra.mrb[0].mxu0 %v5040
      %v5271 = vpop.f32.mrb[0].mxu0
      %v5272 = vadd.f32 0.0, %v5271
      %v5273 = vpop.f32.mrb[0].mxu0
      %v5274 = vpop.f32.mrb[0].mxu0
      %v5275 = vadd.f32 0.0, %v5274
      %v5276 = vpop.f32.mrb[0].mxu0
      %5277 = vmatprep.mubr.bf16.mxu0 0
      %5278 = vmatmul.mubr.bf16.gmra.mrb[0].mxu0 %v5049
      %v5279 = vpop.f32.mrb[0].mxu0
      %v5280 = vadd.f32 0.0, %v5279
      %v5281 = vpop.f32.mrb[0].mxu0
      %v5282 = vpop.f32.mrb[0].mxu0
      %v5283 = vadd.f32 0.0, %v5282
      %v5284 = vpop.f32.mrb[0].mxu0
      %5285 = vmatprep.mubr.bf16.mxu0 0
      %5286 = vmatmul.mubr.bf16.gmra.mrb[0].mxu0 %v5058
      %v5287 = vpop.f32.mrb[0].mxu0
      %v5288 = vadd.f32 0.0, %v5287
      %v5289 = vpop.f32.mrb[0].mxu0
      %v5290 = vpop.f32.mrb[0].mxu0
      %v5291 = vadd.f32 0.0, %v5290
      %v5292 = vpop.f32.mrb[0].mxu0
      %5293 = vmatprep.mubr.bf16.mxu0 0
      %5294 = vmatmul.mubr.bf16.gmra.mrb[0].mxu0 %v5067
      %v5295 = vpop.f32.mrb[0].mxu0
      %v5296 = vadd.f32 0.0, %v5295
      %v5297 = vpop.f32.mrb[0].mxu0
      %v5298 = vpop.f32.mrb[0].mxu0
      %v5299 = vadd.f32 0.0, %v5298
      %v5300 = vpop.f32.mrb[0].mxu0
      %5301 = vmatprep.mubr.bf16.mxu0 0
      %5302 = vmatmul.mubr.bf16.gmra.mrb[0].mxu0 %v5076
      %v5303 = vpop.f32.mrb[0].mxu0
      %v5304 = vadd.f32 0.0, %v5303
      %v5305 = vpop.f32.mrb[0].mxu0
      %v5306 = vpop.f32.mrb[0].mxu0
      %v5307 = vadd.f32 0.0, %v5306
      %v5308 = vpop.f32.mrb[0].mxu0
      %5309 = vmatprep.mubr.bf16.mxu0 0
      %5310 = vmatmul.mubr.bf16.gmra.mrb[0].mxu0 %v5085
      %v5311 = vpop.f32.mrb[0].mxu0
      %v5312 = vadd.f32 0.0, %v5311
      %v5313 = vpop.f32.mrb[0].mxu0
      %v5314 = vpop.f32.mrb[0].mxu0
      %v5315 = vadd.f32 0.0, %v5314
      %v5316 = vpop.f32.mrb[0].mxu0
      %5317 = vmatprep.mubr.bf16.mxu0 0
      %5318 = vmatmul.mubr.bf16.gmra.mrb[0].mxu0 %v5094
      %v5319 = vpop.f32.mrb[0].mxu0
      %v5320 = vadd.f32 0.0, %v5319
      %v5321 = vpop.f32.mrb[0].mxu0
      %v5322 = vpop.f32.mrb[0].mxu0
      %v5323 = vadd.f32 0.0, %v5322
      %v5324 = vpop.f32.mrb[0].mxu0
      %5325 = vmatprep.mubr.bf16.mxu0 0
      %5326 = vmatmul.mubr.bf16.gmra.mrb[0].mxu0 %v5103
      %v5327 = vpop.f32.mrb[0].mxu0
      %v5328 = vadd.f32 0.0, %v5327
      %v5329 = vpop.f32.mrb[0].mxu0
      %v5330 = vpop.f32.mrb[0].mxu0
      %v5331 = vadd.f32 0.0, %v5330
      %v5332 = vpop.f32.mrb[0].mxu0
      %5333 = vmatprep.mubr.bf16.mxu0 0
      %5334 = vmatmul.mubr.bf16.gmra.mrb[0].mxu0 %v5112
      %v5335 = vpop.f32.mrb[0].mxu0
      %v5336 = vadd.f32 0.0, %v5335
      %v5337 = vpop.f32.mrb[0].mxu0
      %v5338 = vpop.f32.mrb[0].mxu0
      %v5339 = vadd.f32 0.0, %v5338
      %v5340 = vpop.f32.mrb[0].mxu0
      %5341 = vmatprep.mubr.bf16.mxu0 0
      %5342 = vmatmul.mubr.bf16.gmra.mrb[0].mxu0 %v5121
      %v5343 = vpop.f32.mrb[0].mxu0
      %v5344 = vadd.f32 0.0, %v5343
      %v5345 = vpop.f32.mrb[0].mxu0
      %v5346 = vpop.f32.mrb[0].mxu0
      %v5347 = vadd.f32 0.0, %v5346
      %v5348 = vpop.f32.mrb[0].mxu0
      %5349 = vmatprep.mubr.bf16.mxu0 0
      %5350 = vmatmul.mubr.bf16.gmra.mrb[0].mxu0 %v5130
      %v5351 = vpop.f32.mrb[0].mxu0
      %v5352 = vadd.f32 0.0, %v5351
      %v5353 = vpop.f32.mrb[0].mxu0
      %v5354 = vpop.f32.mrb[0].mxu0
      %v5355 = vadd.f32 0.0, %v5354
      %v5356 = vpop.f32.mrb[0].mxu0
      %5357 = vmatprep.mubr.bf16.mxu0 0
      %5358 = vmatmul.mubr.bf16.gmra.mrb[0].mxu0 %v5139
      %v5359 = vpop.f32.mrb[0].mxu0
      %v5360 = vadd.f32 0.0, %v5359
      %v5361 = vpop.f32.mrb[0].mxu0
      %v5362 = vpop.f32.mrb[0].mxu0
      %v5363 = vadd.f32 0.0, %v5362
      %v5364 = vpop.f32.mrb[0].mxu0
      %5365 = vmatprep.mubr.bf16.mxu0 0
      %5366 = vmatmul.mubr.bf16.gmra.mrb[0].mxu0 %v5148
      %v5367 = vpop.f32.mrb[0].mxu0
      %v5368 = vadd.f32 0.0, %v5367
      %v5369 = vpop.f32.mrb[0].mxu0
      %v5370 = vpop.f32.mrb[0].mxu0
      %v5371 = vadd.f32 0.0, %v5370
      %v5372 = vpop.f32.mrb[0].mxu0
      %5373 = vdwg.mxu0
      %v5374 = vadd.f32 %v4930, %v5248
      %v5375 = vadd.f32 %v4931, %v5251
      %v5376 = vadd.f32 %v4932, %v5256
      %v5377 = vadd.f32 %v4933, %v5259
      %v5378 = vadd.f32 %v4934, %v5264
      %v5379 = vadd.f32 %v4935, %v5267
      %v5380 = vadd.f32 %v4936, %v5272
      %v5381 = vadd.f32 %v4937, %v5275
      %v5382 = vadd.f32 %v4938, %v5280
      %v5383 = vadd.f32 %v4939, %v5283
      %v5384 = vadd.f32 %v4940, %v5288
      %v5385 = vadd.f32 %v4941, %v5291
      %v5386 = vadd.f32 %v4942, %v5296
      %v5387 = vadd.f32 %v4943, %v5299
      %v5388 = vadd.f32 %v4944, %v5304
      %v5389 = vadd.f32 %v4945, %v5307
      %v5390 = vadd.f32 %v4946, %v5312
      %v5391 = vadd.f32 %v4947, %v5315
      %v5392 = vadd.f32 %v4948, %v5320
      %v5393 = vadd.f32 %v4949, %v5323
      %v5394 = vadd.f32 %v4950, %v5328
      %v5395 = vadd.f32 %v4951, %v5331
      %v5396 = vadd.f32 %v4952, %v5336
      %v5397 = vadd.f32 %v4953, %v5339
      %v5398 = vadd.f32 %v4954, %v5344
      %v5399 = vadd.f32 %v4955, %v5347
      %v5400 = vadd.f32 %v4956, %v5352
      %v5401 = vadd.f32 %v4957, %v5355
      %v5402 = vadd.f32 %v4958, %v5360
      %v5403 = vadd.f32 %v4959, %v5363
      %v5404 = vadd.f32 %v4960, %v5368
      %v5405 = vadd.f32 %v4961, %v5371
      %v5406 = vpack.c.bf16 %v5375, %v5374
      %v5407 = vpack.c.bf16 %v5377, %v5376
      %v5408 = vpack.c.bf16 %v5379, %v5378
      %v5409 = vpack.c.bf16 %v5381, %v5380
      %v5410 = vpack.c.bf16 %v5383, %v5382
      %v5411 = vpack.c.bf16 %v5385, %v5384
      %v5412 = vpack.c.bf16 %v5387, %v5386
      %v5413 = vpack.c.bf16 %v5389, %v5388
      %v5414 = vpack.c.bf16 %v5391, %v5390
      %v5415 = vpack.c.bf16 %v5393, %v5392
      %v5416 = vpack.c.bf16 %v5395, %v5394
      %v5417 = vpack.c.bf16 %v5397, %v5396
      %v5418 = vpack.c.bf16 %v5399, %v5398
      %v5419 = vpack.c.bf16 %v5401, %v5400
      %v5420 = vpack.c.bf16 %v5403, %v5402
      %v5421 = vpack.c.bf16 %v5405, %v5404
      %v5438 = vunpack.c.l.b16 %v5406
      %v5439 = vunpack.c.h.b16 %v5406
      %v5440 = vunpack.c.l.b16 %v5407
      %v5441 = vunpack.c.h.b16 %v5407
      %v5442 = vunpack.c.l.b16 %v5408
      %v5443 = vunpack.c.h.b16 %v5408
      %v5444 = vunpack.c.l.b16 %v5409
      %v5445 = vunpack.c.h.b16 %v5409
      %v5446 = vunpack.c.l.b16 %v5410
      %v5447 = vunpack.c.h.b16 %v5410
      %v5448 = vunpack.c.l.b16 %v5411
      %v5449 = vunpack.c.h.b16 %v5411
      %v5450 = vunpack.c.l.b16 %v5412
      %v5451 = vunpack.c.h.b16 %v5412
      %v5452 = vunpack.c.l.b16 %v5413
      %v5453 = vunpack.c.h.b16 %v5413
      %v5454 = vunpack.c.l.b16 %v5414
      %v5455 = vunpack.c.h.b16 %v5414
      %v5456 = vunpack.c.l.b16 %v5415
      %v5457 = vunpack.c.h.b16 %v5415
      %v5458 = vunpack.c.l.b16 %v5416
      %v5459 = vunpack.c.h.b16 %v5416
      %v5460 = vunpack.c.l.b16 %v5417
      %v5461 = vunpack.c.h.b16 %v5417
      %v5462 = vunpack.c.l.b16 %v5418
      %v5463 = vunpack.c.h.b16 %v5418
      %v5464 = vunpack.c.l.b16 %v5419
      %v5465 = vunpack.c.h.b16 %v5419
      %v5466 = vunpack.c.l.b16 %v5420
      %v5467 = vunpack.c.h.b16 %v5420
      %v5468 = vunpack.c.l.b16 %v5421
      %v5469 = vunpack.c.h.b16 %v5421
      %v5470 = vpack.c.b16 %v5438, %v5438
      %v5471 = vpack.c.b16 %v5439, %v5439
      %v5472 = vpack.c.b16 %v5440, %v5440
      %v5473 = vpack.c.b16 %v5441, %v5441
      %v5474 = vpack.c.b16 %v5442, %v5442
      %v5475 = vpack.c.b16 %v5443, %v5443
      %v5476 = vpack.c.b16 %v5444, %v5444
      %v5477 = vpack.c.b16 %v5445, %v5445
      %v5478 = vpack.c.b16 %v5446, %v5446
      %v5479 = vpack.c.b16 %v5447, %v5447
      %v5480 = vpack.c.b16 %v5448, %v5448
      %v5481 = vpack.c.b16 %v5449, %v5449
      %v5482 = vpack.c.b16 %v5450, %v5450
      %v5483 = vpack.c.b16 %v5451, %v5451
      %v5484 = vpack.c.b16 %v5452, %v5452
      %v5485 = vpack.c.b16 %v5453, %v5453
      %v5486 = vpack.c.b16 %v5454, %v5454
      %v5487 = vpack.c.b16 %v5455, %v5455
      %v5488 = vpack.c.b16 %v5456, %v5456
      %v5489 = vpack.c.b16 %v5457, %v5457
      %v5490 = vpack.c.b16 %v5458, %v5458
      %v5491 = vpack.c.b16 %v5459, %v5459
      %v5492 = vpack.c.b16 %v5460, %v5460
      %v5493 = vpack.c.b16 %v5461, %v5461
      %v5494 = vpack.c.b16 %v5462, %v5462
      %v5495 = vpack.c.b16 %v5463, %v5463
      %v5496 = vpack.c.b16 %v5464, %v5464
      %v5497 = vpack.c.b16 %v5465, %v5465
      %v5498 = vpack.c.b16 %v5466, %v5466
      %v5499 = vpack.c.b16 %v5467, %v5467
      %v5500 = vpack.c.b16 %v5468, %v5468
      %v5501 = vpack.c.b16 %v5469, %v5469
      %5534 = vst [vmem:[%s427] sm:$0xf] %v5470
      %5535 = vst [vmem:[%s427 + $0x4] sm:$0xf] %v5471
      %5536 = vst [vmem:[%s427 + $0x8] sm:$0xf] %v5472
      %5537 = vst [vmem:[%s427 + $0xc] sm:$0xf] %v5473
      %5538 = vst [vmem:[%s427 + $0x10] sm:$0xf] %v5474
      %5539 = vst [vmem:[%s427 + $0x14] sm:$0xf] %v5475
      %5540 = vst [vmem:[%s427 + $0x18] sm:$0xf] %v5476
      %5541 = vst [vmem:[%s427 + $0x1c] sm:$0xf] %v5477
      %5542 = vst [vmem:[%s427 + $0x20] sm:$0xf] %v5478
      %5543 = vst [vmem:[%s427 + $0x24] sm:$0xf] %v5479
      %5544 = vst [vmem:[%s427 + $0x28] sm:$0xf] %v5480
      %5545 = vst [vmem:[%s427 + $0x2c] sm:$0xf] %v5481
      %5546 = vst [vmem:[%s427 + $0x30] sm:$0xf] %v5482
      %5547 = vst [vmem:[%s427 + $0x34] sm:$0xf] %v5483
      %5548 = vst [vmem:[%s427 + $0x38] sm:$0xf] %v5484
      %5549 = vst [vmem:[%s427 + $0x3c] sm:$0xf] %v5485
      %5550 = vst [vmem:[%s427 + $0x40] sm:$0xf] %v5486
      %5551 = vst [vmem:[%s427 + $0x44] sm:$0xf] %v5487
      %5552 = vst [vmem:[%s427 + $0x48] sm:$0xf] %v5488
      %5553 = vst [vmem:[%s427 + $0x4c] sm:$0xf] %v5489
      %5554 = vst [vmem:[%s427 + $0x50] sm:$0xf] %v5490
      %5555 = vst [vmem:[%s427 + $0x54] sm:$0xf] %v5491
      %5556 = vst [vmem:[%s427 + $0x58] sm:$0xf] %v5492
      %5557 = vst [vmem:[%s427 + $0x5c] sm:$0xf] %v5493
      %5558 = vst [vmem:[%s427 + $0x60] sm:$0xf] %v5494
      %5559 = vst [vmem:[%s427 + $0x64] sm:$0xf] %v5495
      %5560 = vst [vmem:[%s427 + $0x68] sm:$0xf] %v5496
      %5561 = vst [vmem:[%s427 + $0x6c] sm:$0xf] %v5497
      %5562 = vst [vmem:[%s427 + $0x70] sm:$0xf] %v5498
      %5563 = vst [vmem:[%s427 + $0x74] sm:$0xf] %v5499
      %5564 = vst [vmem:[%s427 + $0x78] sm:$0xf] %v5500
      %5565 = vst [vmem:[%s427 + $0x7c] sm:$0xf] %v5501
      %v5566 = vadd.f32 %v5374, %v5375
      %v5567 = vadd.f32 %v5566, %v5376
      %v5568 = vadd.f32 %v5567, %v5377
      %v5569 = vadd.f32 %v5568, %v5378
      %v5570 = vadd.f32 %v5569, %v5379
      %v5571 = vadd.f32 %v5570, %v5380
      %v5572 = vadd.f32 %v5571, %v5381
      %v5573 = vadd.f32 %v5572, %v5382
      %v5574 = vadd.f32 %v5573, %v5383
      %v5575 = vadd.f32 %v5574, %v5384
      %v5576 = vadd.f32 %v5575, %v5385
      %v5577 = vadd.f32 %v5576, %v5386
      %v5578 = vadd.f32 %v5577, %v5387
      %v5579 = vadd.f32 %v5578, %v5388
      %v5580 = vadd.f32 %v5579, %v5389
      %v5581 = vadd.f32 %v5580, %v5390
      %v5582 = vadd.f32 %v5581, %v5391
      %v5583 = vadd.f32 %v5582, %v5392
      %v5584 = vadd.f32 %v5583, %v5393
      %v5585 = vadd.f32 %v5584, %v5394
      %v5586 = vadd.f32 %v5585, %v5395
      %v5587 = vadd.f32 %v5586, %v5396
      %v5588 = vadd.f32 %v5587, %v5397
      %v5589 = vadd.f32 %v5588, %v5398
      %v5590 = vadd.f32 %v5589, %v5399
      %v5591 = vadd.f32 %v5590, %v5400
      %v5592 = vadd.f32 %v5591, %v5401
      %v5593 = vadd.f32 %v5592, %v5402
      %v5594 = vadd.f32 %v5593, %v5403
      %v5595 = vadd.f32 %v5594, %v5404
      %v5596 = vadd.f32 %v5595, %v5405
      %v5597 = vrot.slane %v5596, 4
      %v5598 = vadd.f32 %v5596, %v5597
      %v5599 = vrot.slane %v5598, 2
      %v5600 = vadd.f32 %v5598, %v5599
      %v5601 = vrot.slane %v5600, 1
      %v5602 = vadd.f32 %v5600, %v5601
      %v5603 = vadd.f32 %v5602, 0.0
      %v5604 = vmul.f32 %v5374, %v5374
      %v5605 = vmul.f32 %v5375, %v5375
      %v5606 = vmul.f32 %v5376, %v5376
      %v5607 = vmul.f32 %v5377, %v5377
      %v5608 = vmul.f32 %v5378, %v5378
      %v5609 = vmul.f32 %v5379, %v5379
      %v5610 = vmul.f32 %v5380, %v5380
      %v5611 = vmul.f32 %v5381, %v5381
      %v5612 = vmul.f32 %v5382, %v5382
      %v5613 = vmul.f32 %v5383, %v5383
      %v5614 = vmul.f32 %v5384, %v5384
      %v5615 = vmul.f32 %v5385, %v5385
      %v5616 = vmul.f32 %v5386, %v5386
      %v5617 = vmul.f32 %v5387, %v5387
      %v5618 = vmul.f32 %v5388, %v5388
      %v5619 = vmul.f32 %v5389, %v5389
      %v5620 = vmul.f32 %v5390, %v5390
      %v5621 = vmul.f32 %v5391, %v5391
      %v5622 = vmul.f32 %v5392, %v5392
      %v5623 = vmul.f32 %v5393, %v5393
      %v5624 = vmul.f32 %v5394, %v5394
      %v5625 = vmul.f32 %v5395, %v5395
      %v5626 = vmul.f32 %v5396, %v5396
      %v5627 = vmul.f32 %v5397, %v5397
      %v5628 = vmul.f32 %v5398, %v5398
      %v5629 = vmul.f32 %v5399, %v5399
      %v5630 = vmul.f32 %v5400, %v5400
      %v5631 = vmul.f32 %v5401, %v5401
      %v5632 = vmul.f32 %v5402, %v5402
      %v5633 = vmul.f32 %v5403, %v5403
      %v5634 = vmul.f32 %v5404, %v5404
      %v5635 = vmul.f32 %v5405, %v5405
      %v5636 = vadd.f32 %v5604, %v5605
      %v5637 = vadd.f32 %v5636, %v5606
      %v5638 = vadd.f32 %v5637, %v5607
      %v5639 = vadd.f32 %v5638, %v5608
      %v5640 = vadd.f32 %v5639, %v5609
      %v5641 = vadd.f32 %v5640, %v5610
      %v5642 = vadd.f32 %v5641, %v5611
      %v5643 = vadd.f32 %v5642, %v5612
      %v5644 = vadd.f32 %v5643, %v5613
      %v5645 = vadd.f32 %v5644, %v5614
      %v5646 = vadd.f32 %v5645, %v5615
      %v5647 = vadd.f32 %v5646, %v5616
      %v5648 = vadd.f32 %v5647, %v5617
      %v5649 = vadd.f32 %v5648, %v5618
      %v5650 = vadd.f32 %v5649, %v5619
      %v5651 = vadd.f32 %v5650, %v5620
      %v5652 = vadd.f32 %v5651, %v5621
      %v5653 = vadd.f32 %v5652, %v5622
      %v5654 = vadd.f32 %v5653, %v5623
      %v5655 = vadd.f32 %v5654, %v5624
      %v5656 = vadd.f32 %v5655, %v5625
      %v5657 = vadd.f32 %v5656, %v5626
      %v5658 = vadd.f32 %v5657, %v5627
      %v5659 = vadd.f32 %v5658, %v5628
      %v5660 = vadd.f32 %v5659, %v5629
      %v5661 = vadd.f32 %v5660, %v5630
      %v5662 = vadd.f32 %v5661, %v5631
      %v5663 = vadd.f32 %v5662, %v5632
      %v5664 = vadd.f32 %v5663, %v5633
      %v5665 = vadd.f32 %v5664, %v5634
      %v5666 = vadd.f32 %v5665, %v5635
      %v5667 = vrot.slane %v5666, 4
      %v5668 = vadd.f32 %v5666, %v5667
      %v5669 = vrot.slane %v5668, 2
      %v5670 = vadd.f32 %v5668, %v5669
      %v5671 = vrot.slane %v5670, 1
      %v5672 = vadd.f32 %v5670, %v5671
      %v5673 = vadd.f32 %v5672, 0.0
      %vm5674 = vcmask 1040384
      %v5675 = vsel %vm5674, %v5603, %v5673
      %5676 = vst [vmem:[%s433] sm:$0x3] %v5675
      %s5677 = smul.u32 32, %s23
      %p5678 = scmp.lt.s32.totalorder %s22, 1
      %s5679 = scalar_select %p5678, %s22, 1
      %p5680 = scmp.lt.s32.totalorder %s5677, 31
      %s5681 = scalar_select %p5680, %s5677, 31
      %s5682 = smul.addr %s5679, 32
      %s5683 = sadd.s32 %s5681, %s5682
      %s5684 = smul.addr %s5683, 4
      %s5685 = scalar_lea.vmem %s5, %s5684
      %s5686 = sadd.s32 %s22, %s23
      %p5687 = scmp.lt.s32.totalorder %s5686, 1
      %s5688 = scalar_select %p5687, %s5686, 1
      %s5689 = smul.addr %s5688, 2
      %s5690 = scalar_lea.vmem %s6, %s5689
      // Predicated region
      $region57: #{upblock_forward.3} parent=39 // pred_check
        %p5691 = pneg %p192
      $region58: #{upblock_forward.3} parent=39 // pred_check_branch
        %5693 = sbr.rel (%p5691) target = $region60
      $region59: #{upblock_forward.3} parent=39 // pred_region
        %s5694 = smul.u32 32, %s23
      $region60: #{upblock_forward.3} parent=39 // pred_fallthru
        _
      // Predicated region
      $region61: #{upblock_forward.3} parent=39 // pred_check
        %p5695 = pneg %p220
      $region62: #{upblock_forward.3} parent=39 // pred_check_branch
        %5697 = sbr.rel (%p5695) target = $region64
      $region63: #{upblock_forward.3} parent=39 // pred_region
        %s5698 = sadd.s32 %s22, %s23
      $region64: #{upblock_forward.3} parent=39 // pred_fallthru
        _
    $region40: #{upblock_forward.3} parent=5 // pred_fallthru
      _
    %p5699 = scmp.le.s32.totalorder 2, %s13
    // Predicated region
    $region65: #{upblock_forward.3} parent=5 // pred_check
      %p5700 = pneg %p5699
    $region66: #{upblock_forward.3} parent=5 // pred_check_branch
      %5702 = sbr.rel (%p5700) target = $region68
    $region67: #{upblock_forward.3} parent=5 // pred_region
      %s5703 = ssub.s32 %s13, 2
      // Predicated region
      $region69: #{upblock_forward.3} parent=67 // pred_check
        %p5704 = pneg %p198
      $region70: #{upblock_forward.3} parent=67 // pred_check_branch
        %5706 = sbr.rel (%p5704) target = $region72
      $region71: #{upblock_forward.3} parent=67 // pred_region
        %s5707 = smul.u32 32, %s25
        %p5708 = scmp.lt.s32.totalorder %s24, 1
        %s5709 = scalar_select %p5708, %s24, 1
        %p5710 = scmp.lt.s32.totalorder %s5707, 31
        %s5711 = scalar_select %p5710, %s5707, 31
        %s5712 = smul.addr %s5709, 32
        %s5713 = sadd.s32 %s5711, %s5712
        %s5714 = smul.addr %s5713, 4
        %s5715 = scalar_lea.vmem %s5, %s5714
      $region72: #{upblock_forward.3} parent=67 // pred_fallthru
        _
      // Predicated region
      $region73: #{upblock_forward.3} parent=67 // pred_check
        %p5716 = pneg %p226
      $region74: #{upblock_forward.3} parent=67 // pred_check_branch
        %5718 = sbr.rel (%p5716) target = $region76
      $region75: #{upblock_forward.3} parent=67 // pred_region
        %s5719 = sadd.s32 %s24, %s25
        %p5720 = scmp.lt.s32.totalorder %s5719, 1
        %s5721 = scalar_select %p5720, %s5719, 1
        %s5722 = smul.addr %s5721, 2
        %s5723 = scalar_lea.vmem %s6, %s5722
      $region76: #{upblock_forward.3} parent=67 // pred_fallthru
        _
    $region68: #{upblock_forward.3} parent=5 // pred_fallthru
      _
  $region6: #{upblock_forward.3} parent=0 // loop_footer
    %s17 = sadd.s32 1, %s13
  $region7: #{upblock_forward.3} parent=0 // loop_footer_branch
    %12 = sbr.rel target = $region3
  $region8: #{upblock_forward.3} parent=0 // loop_exit
    _

// kernel: upblock_forward.4
$region0: #{upblock_forward.4}
  #allocation0 [shape = 'u32[]', space=smem, size = 0x4, offset = 0x4, fixed_abs, tag = 'smem constant byte address 0x4 - core index']
  #allocation1 [shape = 'u32[144,128]{1,0:T(1,128)}', space=vmem, size = 0x12000, scoped, tag = 'internal scratch']
  #allocation2 [shape = 'bf16[304,128]{1,0:T(16,128)(2,1)}', space=vmem, size = 0x13000, scoped, tag = 'scratch operand']
  %s0 = inlined_call_operand.vmem [shape: bf16[2,256,128], index: 0, kind: input, shape index: {}, may-alias: {0,1,2}]
  %s1 = inlined_call_operand.vmem [shape: bf16[2,256,128], index: 1, kind: input, shape index: {}, may-alias: {0,1,2}]
  %s2 = inlined_call_operand.vmem [shape: bf16[2,256,128], index: 2, kind: input, shape index: {}, may-alias: {0,1,2}]
  %s3 = inlined_call_operand.vmem [shape: bf16[9,128,128], index: 3, kind: input, shape index: {}]
  %s4 = inlined_call_operand.vmem [shape: f32[2,128], index: 4, kind: input, shape index: {}]
  %s5 = inlined_call_operand.vmem [shape: bf16[2,256,128], index: 5, kind: output, shape index: {0}]
  %s6 = inlined_call_operand.vmem [shape: f32[2,2,128], index: 6, kind: output, shape index: {1}]
  %7 = xla_tuple %s5, %s6
  %s8 = sld [smem:[#allocation0]]
  $region77: #{upblock_forward.4} parent=0
    _
  %s10 = ssub.s32 1, %s8
  %s11 = scalar_select 0, %s10, %s8
  loop: start=0, step=1, limit=4
  $region2: #{upblock_forward.4} parent=0 // loop_pre_header
    _
  $region3: #{upblock_forward.4} parent=0 // loop_header
    %s13 = sphi 0, %s17
    %p14 = scmp.ge.s32.totalorder %s13, 4
    %s20 = sphi 0, %s32
    %s21 = sphi 0, %s28
    %s22 = sphi 0, %s20
    %s23 = sphi 0, %s21
    %s24 = sphi 0, %s22
    %s25 = sphi 0, %s23
    %s37 = sphi 0, %s39
    %s40 = sphi 0, %s37
    %s41 = sphi 0, %s40
    %s57 = sphi 0, %s41
    %s73 = sphi 0, %s75
    %s76 = sphi 0, %s73
    %s77 = sphi 0, %s76
    %s93 = sphi 0, %s77
    %s109 = sphi 0, %s111
    %s112 = sphi 0, %s109
    %s113 = sphi 0, %s112
    %s129 = sphi 0, %s113
    %s133 = sphi 0, %s133
    %s135 = sphi 0, %s133
    %s136 = sphi 0, %s135
    %s150 = sphi 0, %s136
    %s154 = sphi 0, %s154
    %s156 = sphi 0, %s154
    %s157 = sphi 0, %s156
    %s171 = sphi 0, %s157
    %s179 = sphi 0, %s181
    %s182 = sphi 0, %s179
    %s183 = sphi 0, %s182
    %s199 = sphi 0, %s183
    %s207 = sphi 0, %s209
    %s210 = sphi 0, %s207
    %s211 = sphi 0, %s210
    %s227 = sphi 0, %s211
  $region4: #{upblock_forward.4} parent=0 // loop_header_branch
    %16 = sbr.rel (%p14) target = $region8
  $region5: #{upblock_forward.4} parent=0 // loop_body
    %s18 = ssub.s32 %s13, 1
    %s19 = ssub.s32 %s13, 2
    %s26 = sadd.s32 1, %s21
    %p27 = scmp.ge.s32.totalorder %s26, 1
    %s28 = scalar_select %p27, 0, %s26
    %s29 = sadd.s32 1, %s20
    %s30 = scalar_select %p27, %s29, %s20
    %p31 = scmp.ge.s32.totalorder %s30, 2
    %s32 = scalar_select %p31, 0, %s30
    %s33 = ssub.s32 %s20, %s32
    %s34 = ssub.s32 %s21, %s28
    %s35 = sor.u32 %s33, %s34
    %p36 = scmp.eq.s32.totalorder %s35, 0
    %s38 = sadd.s32 %s37, 1
    %s39 = scalar_select %p36, %s37, %s38
    %p42 = pneg %p36
    %p43 = scmp.eq.s32.totalorder %s13, 1
    %p44 = por %p42, %p43
    %p45 = scmp.ne.s32.totalorder %s37, %s40
    %p46 = scmp.eq.s32.totalorder %s13, 0
    %p47 = por %p45, %p46
    %p48 = scmp.ne.s32.totalorder %s37, %s40
    %p49 = scmp.eq.s32.totalorder %s18, 1
    %p50 = por %p48, %p49
    %p51 = scmp.ne.s32.totalorder %s40, %s41
    %p52 = scmp.eq.s32.totalorder %s18, 0
    %p53 = por %p51, %p52
    %p54 = scmp.ne.s32.totalorder %s40, %s41
    %p55 = scmp.eq.s32.totalorder %s19, 1
    %p56 = por %p54, %p55
    %p58 = scmp.ne.s32.totalorder %s41, %s57
    %p59 = scmp.eq.s32.totalorder %s19, 0
    %p60 = por %p58, %p59
    %s61 = smul.u32 %s21, 16
    %s62 = ssub.s32 %s61, 1
    %p63 = scmp.gt.s32.totalorder %s62, 0
    %s64 = scalar_select %p63, %s62, 0
    %s65 = smul.u32 %s28, 16
    %s66 = ssub.s32 %s65, 1
    %p67 = scmp.gt.s32.totalorder %s66, 0
    %s68 = scalar_select %p67, %s66, 0
    %s69 = ssub.s32 %s20, %s32
    %s70 = ssub.s32 %s64, %s68
    %s71 = sor.u32 %s69, %s70
    %p72 = scmp.eq.s32.totalorder %s71, 0
    %s74 = sadd.s32 %s73, 1
    %s75 = scalar_select %p72, %s73, %s74
    %p78 = pneg %p72
    %p79 = scmp.eq.s32.totalorder %s13, 1
    %p80 = por %p78, %p79
    %p81 = scmp.ne.s32.totalorder %s73, %s76
    %p82 = scmp.eq.s32.totalorder %s13, 0
    %p83 = por %p81, %p82
    %p84 = scmp.ne.s32.totalorder %s73, %s76
    %p85 = scmp.eq.s32.totalorder %s18, 1
    %p86 = por %p84, %p85
    %p87 = scmp.ne.s32.totalorder %s76, %s77
    %p88 = scmp.eq.s32.totalorder %s18, 0
    %p89 = por %p87, %p88
    %p90 = scmp.ne.s32.totalorder %s76, %s77
    %p91 = scmp.eq.s32.totalorder %s19, 1
    %p92 = por %p90, %p91
    %p94 = scmp.ne.s32.totalorder %s77, %s93
    %p95 = scmp.eq.s32.totalorder %s19, 0
    %p96 = por %p94, %p95
    %s97 = sadd.s32 %s21, 1
    %s98 = smul.u32 %s97, 16
    %p99 = scmp.lt.s32.totalorder %s98, 15
    %s100 = scalar_select %p99, %s98, 15
    %s101 = sadd.s32 %s28, 1
    %s102 = smul.u32 %s101, 16
    %p103 = scmp.lt.s32.totalorder %s102, 15
    %s104 = scalar_select %p103, %s102, 15
    %s105 = ssub.s32 %s20, %s32
    %s106 = ssub.s32 %s100, %s104
    %s107 = sor.u32 %s105, %s106
    %p108 = scmp.eq.s32.totalorder %s107, 0
    %s110 = sadd.s32 %s109, 1
    %s111 = scalar_select %p108, %s109, %s110
    %p114 = pneg %p108
    %p115 = scmp.eq.s32.totalorder %s13, 1
    %p116 = por %p114, %p115
    %p117 = scmp.ne.s32.totalorder %s109, %s112
    %p118 = scmp.eq.s32.totalorder %s13, 0
    %p119 = por %p117, %p118
    %p120 = scmp.ne.s32.totalorder %s109, %s112
    %p121 = scmp.eq.s32.totalorder %s18, 1
    %p122 = por %p120, %p121
    %p123 = scmp.ne.s32.totalorder %s112, %s113
    %p124 = scmp.eq.s32.totalorder %s18, 0
    %p125 = por %p123, %p124
    %p126 = scmp.ne.s32.totalorder %s112, %s113
    %p127 = scmp.eq.s32.totalorder %s19, 1
    %p128 = por %p126, %p127
    %p130 = scmp.ne.s32.totalorder %s113, %s129
    %p131 = scmp.eq.s32.totalorder %s19, 0
    %p132 = por %p130, %p131
    %s134 = sadd.s32 %s133, 1
    %p137 = scmp.eq.s32.totalorder %s13, 1
    %p138 = scmp.ne.s32.totalorder %s133, %s135
    %p139 = scmp.eq.s32.totalorder %s13, 0
    %p140 = por %p138, %p139
    %p141 = scmp.ne.s32.totalorder %s133, %s135
    %p142 = scmp.eq.s32.totalorder %s18, 1
    %p143 = por %p141, %p142
    %p144 = scmp.ne.s32.totalorder %s135, %s136
    %p145 = scmp.eq.s32.totalorder %s18, 0
    %p146 = por %p144, %p145
    %p147 = scmp.ne.s32.totalorder %s135, %s136
    %p148 = scmp.eq.s32.totalorder %s19, 1
    %p149 = por %p147, %p148
    %p151 = scmp.ne.s32.totalorder %s136, %s150
    %p152 = scmp.eq.s32.totalorder %s19, 0
    %p153 = por %p151, %p152
    %s155 = sadd.s32 %s154, 1
    %p158 = scmp.eq.s32.totalorder %s13, 1
    %p159 = scmp.ne.s32.totalorder %s154, %s156
    %p160 = scmp.eq.s32.totalorder %s13, 0
    %p161 = por %p159, %p160
    %p162 = scmp.ne.s32.totalorder %s154, %s156
    %p163 = scmp.eq.s32.totalorder %s18, 1
    %p164 = por %p162, %p163
    %p165 = scmp.ne.s32.totalorder %s156, %s157
    %p166 = scmp.eq.s32.totalorder %s18, 0
    %p167 = por %p165, %p166
    %p168 = scmp.ne.s32.totalorder %s156, %s157
    %p169 = scmp.eq.s32.totalorder %s19, 1
    %p170 = por %p168, %p169
    %p172 = scmp.ne.s32.totalorder %s157, %s171
    %p173 = scmp.eq.s32.totalorder %s19, 0
    %p174 = por %p172, %p173
    %s175 = ssub.s32 %s20, %s32
    %s176 = ssub.s32 %s21, %s28
    %s177 = sor.u32 %s175, %s176
    %p178 = scmp.eq.s32.totalorder %s177, 0
    %s180 = sadd.s32 %s179, 1
    %s181 = scalar_select %p178, %s179, %s180
    %p184 = pneg %p178
    %p185 = scmp.eq.s32.totalorder %s13, 1
    %p186 = por %p184, %p185
    %p187 = scmp.ne.s32.totalorder %s179, %s182
    %p188 = scmp.eq.s32.totalorder %s13, 0
    %p189 = por %p187, %p188
    %p190 = scmp.ne.s32.totalorder %s179, %s182
    %p191 = scmp.eq.s32.totalorder %s18, 1
    %p192 = por %p190, %p191
    %p193 = scmp.ne.s32.totalorder %s182, %s183
    %p194 = scmp.eq.s32.totalorder %s18, 0
    %p195 = por %p193, %p194
    %p196 = scmp.ne.s32.totalorder %s182, %s183
    %p197 = scmp.eq.s32.totalorder %s19, 1
    %p198 = por %p196, %p197
    %p200 = scmp.ne.s32.totalorder %s183, %s199
    %p201 = scmp.eq.s32.totalorder %s19, 0
    %p202 = por %p200, %p201
    %s203 = sadd.s32 %s20, %s21
    %s204 = sadd.s32 %s32, %s28
    %s205 = ssub.s32 %s203, %s204
    %p206 = scmp.eq.s32.totalorder %s205, 0
    %s208 = sadd.s32 %s207, 1
    %s209 = scalar_select %p206, %s207, %s208
    %p212 = pneg %p206
    %p213 = scmp.eq.s32.totalorder %s13, 1
    %p214 = por %p212, %p213
    %p215 = scmp.ne.s32.totalorder %s207, %s210
    %p216 = scmp.eq.s32.totalorder %s13, 0
    %p217 = por %p215, %p216
    %p218 = scmp.ne.s32.totalorder %s207, %s210
    %p219 = scmp.eq.s32.totalorder %s18, 1
    %p220 = por %p218, %p219
    %p221 = scmp.ne.s32.totalorder %s210, %s211
    %p222 = scmp.eq.s32.totalorder %s18, 0
    %p223 = por %p221, %p222
    %p224 = scmp.ne.s32.totalorder %s210, %s211
    %p225 = scmp.eq.s32.totalorder %s19, 1
    %p226 = por %p224, %p225
    %p228 = scmp.ne.s32.totalorder %s211, %s227
    %p229 = scmp.eq.s32.totalorder %s19, 0
    %p230 = por %p228, %p229
    %p231 = scmp.le.s32.totalorder 1, %s13
    %p232 = scmp.lt.s32.totalorder %s13, 3
    %p233 = pnand %p231, %p232
    %p234 = pneg %p233
    // Predicated region
    $region9: #{upblock_forward.4} parent=5 // pred_check
      _
    $region10: #{upblock_forward.4} parent=5 // pred_check_branch
      %236 = sbr.rel (%p233) target = $region12
    $region11: #{upblock_forward.4} parent=5 // pred_region
      %s237 = ssub.s32 %s13, 1
      // Predicated region
      $region13: #{upblock_forward.4} parent=11 // pred_check
        %p238 = pneg %p146
      $region14: #{upblock_forward.4} parent=11 // pred_check_branch
        %240 = sbr.rel (%p238) target = $region16
      $region15: #{upblock_forward.4} parent=11 // pred_region
        _
      $region16: #{upblock_forward.4} parent=11 // pred_fallthru
        _
      // Predicated region
      $region17: #{upblock_forward.4} parent=11 // pred_check
        %p241 = pneg %p167
      $region18: #{upblock_forward.4} parent=11 // pred_check_branch
        %243 = sbr.rel (%p241) target = $region20
      $region19: #{upblock_forward.4} parent=11 // pred_region
        _
      $region20: #{upblock_forward.4} parent=11 // pred_fallthru
        _
    $region12: #{upblock_forward.4} parent=5 // pred_fallthru
      _
    %p244 = scmp.lt.s32.totalorder %s13, 2
    // Predicated region
    $region21: #{upblock_forward.4} parent=5 // pred_check
      %p245 = pneg %p244
    $region22: #{upblock_forward.4} parent=5 // pred_check_branch
      %247 = sbr.rel (%p245) target = $region24
    $region23: #{upblock_forward.4} parent=5 // pred_region
      // Predicated region
      $region25: #{upblock_forward.4} parent=23 // pred_check
        %p248 = pneg %p47
      $region26: #{upblock_forward.4} parent=23 // pred_check_branch
        %250 = sbr.rel (%p248) target = $region28
      $region27: #{upblock_forward.4} parent=23 // pred_region
        %s251 = smul.u32 32, %s21
        %p252 = scmp.lt.s32.totalorder %s20, 1
        %s253 = scalar_select %p252, %s20, 1
        %p254 = scmp.lt.s32.totalorder %s251, 31
        %s255 = scalar_select %p254, %s251, 31
        %s256 = smul.addr %s253, 32
        %s257 = sadd.s32 %s255, %s256
        %s258 = smul.addr %s257, 4
        %s259 = scalar_lea.vmem %s0, %s258
        %s260 = smul.u32 32, %s21
      $region28: #{upblock_forward.4} parent=23 // pred_fallthru
        _
      // Predicated region
      $region29: #{upblock_forward.4} parent=23 // pred_check
        %p261 = pneg %p83
      $region30: #{upblock_forward.4} parent=23 // pred_check_branch
        %263 = sbr.rel (%p261) target = $region32
      $region31: #{upblock_forward.4} parent=23 // pred_region
        %s264 = smul.u32 %s21, 16
        %s265 = ssub.s32 %s264, 1
        %p266 = scmp.gt.s32.totalorder %s265, 0
        %s267 = scalar_select %p266, %s265, 0
        %s268 = smul.u32 2, %s267
        %p269 = scmp.lt.s32.totalorder %s20, 1
        %s270 = scalar_select %p269, %s20, 1
        %p271 = scmp.lt.s32.totalorder %s268, 31
        %s272 = scalar_select %p271, %s268, 31
        %s273 = smul.addr %s270, 32
        %s274 = sadd.s32 %s272, %s273
        %s275 = smul.addr %s274, 4
        %s276 = scalar_lea.vmem %s1, %s275
        %s277 = smul.u32 %s21, 16
        %s278 = ssub.s32 %s277, 1
        %p279 = scmp.gt.s32.totalorder %s278, 0
        %s280 = scalar_select %p279, %s278, 0
        %s281 = smul.u32 2, %s280
      $region32: #{upblock_forward.4} parent=23 // pred_fallthru
        _
      // Predicated region
      $region33: #{upblock_forward.4} parent=23 // pred_check
        %p282 = pneg %p119
      $region34: #{upblock_forward.4} parent=23 // pred_check_branch
        %284 = sbr.rel (%p282) target = $region36
      $region35: #{upblock_forward.4} parent=23 // pred_region
        %s285 = sadd.s32 %s21, 1
        %s286 = smul.u32 %s285, 16
        %p287 = scmp.lt.s32.totalorder %s286, 15
        %s288 = scalar_select %p287, %s286, 15
        %s289 = smul.u32 2, %s288
        %p290 = scmp.lt.s32.totalorder %s20, 1
        %s291 = scalar_select %p290, %s20, 1
        %p292 = scmp.lt.s32.totalorder %s289, 31
        %s293 = scalar_select %p292, %s289, 31
        %s294 = smul.addr %s291, 32
        %s295 = sadd.s32 %s293, %s294
        %s296 = smul.addr %s295, 4
        %s297 = scalar_lea.vmem %s2, %s296
        %s298 = sadd.s32 %s21, 1
        %s299 = smul.u32 %s298, 16
        %p300 = scmp.lt.s32.totalorder %s299, 15
        %s301 = scalar_select %p300, %s299, 15
        %s302 = smul.u32 2, %s301
      $region36: #{upblock_forward.4} parent=23 // pred_fallthru
        _
    $region24: #{upblock_forward.4} parent=5 // pred_fallthru
      _
    %p303 = scmp.le.s32.totalorder 1, %s13
    %p304 = scmp.lt.s32.totalorder %s13, 3
    %p305 = pnand %p303, %p304
    %p306 = pneg %p305
    // Predicated region
    $region37: #{upblock_forward.4} parent=5 // pred_check
      _
    $region38: #{upblock_forward.4} parent=5 // pred_check_branch
      %308 = sbr.rel (%p305) target = $region40
    $region39: #{upblock_forward.4} parent=5 // pred_region
      %s309 = ssub.s32 %s13, 1
      %s310 = smul.u32 32, %s23
      %p311 = scmp.lt.s32.totalorder %s22, 1
      %s312 = scalar_select %p311, %s22, 1
      %p313 = scmp.lt.s32.totalorder %s310, 31
      %s314 = scalar_select %p313, %s310, 31
      %s315 = smul.addr %s312, 32
      %s316 = sadd.s32 %s314, %s315
      %s317 = smul.addr %s316, 4
      %s318 = scalar_lea.vmem %s0, %s317
      %p319 = pneg %p53
      %p320 = pneg %p50
      %s321 = smul.u32 %s23, 16
      %s322 = ssub.s32 %s321, 1
      %p323 = scmp.gt.s32.totalorder %s322, 0
      %s324 = scalar_select %p323, %s322, 0
      %s325 = smul.u32 2, %s324
      %p326 = scmp.lt.s32.totalorder %s22, 1
      %s327 = scalar_select %p326, %s22, 1
      %p328 = scmp.lt.s32.totalorder %s325, 31
      %s329 = scalar_select %p328, %s325, 31
      %s330 = smul.addr %s327, 32
      %s331 = sadd.s32 %s329, %s330
      %s332 = smul.addr %s331, 4
      %s333 = scalar_lea.vmem %s1, %s332
      %p334 = pneg %p89
      %p335 = pneg %p86
      %s336 = sadd.s32 %s23, 1
      %s337 = smul.u32 %s336, 16
      %p338 = scmp.lt.s32.totalorder %s337, 15
      %s339 = scalar_select %p338, %s337, 15
      %s340 = smul.u32 2, %s339
      %p341 = scmp.lt.s32.totalorder %s22, 1
      %s342 = scalar_select %p341, %s22, 1
      %p343 = scmp.lt.s32.totalorder %s340, 31
      %s344 = scalar_select %p343, %s340, 31
      %s345 = smul.addr %s342, 32
      %s346 = sadd.s32 %s344, %s345
      %s347 = smul.addr %s346, 4
      %s348 = scalar_lea.vmem %s2, %s347
      %p349 = pneg %p125
      %p350 = pneg %p122
      %p351 = pneg %p146
      %p352 = pneg %p143
      %p353 = pneg %p167
      %p354 = pneg %p164
      %p355 = pneg %p195
      %p356 = pneg %p192
      %s357 = smul.u32 32, %s23
      %p358 = scmp.lt.s32.totalorder %s22, 1
      %s359 = scalar_select %p358, %s22, 1
      %p360 = scmp.lt.s32.totalorder %s357, 31
      %s361 = scalar_select %p360, %s357, 31
      %s362 = smul.addr %s359, 32
      %s363 = sadd.s32 %s361, %s362
      %s364 = smul.addr %s363, 4
      %s365 = scalar_lea.vmem %s5, %s364
      %p366 = pneg %p223
      %p367 = pneg %p220
      %s368 = sadd.s32 %s22, %s23
      %p369 = scmp.lt.s32.totalorder %s368, 1
      %s370 = scalar_select %p369, %s368, 1
      %s371 = smul.addr %s370, 2
      %s372 = scalar_lea.vmem %s6, %s371
      %s373 = smul.u32 32, %s23
      %p374 = scmp.lt.s32.totalorder %s22, 1
      %s375 = scalar_select %p374, %s22, 1
      %p376 = scmp.lt.s32.totalorder %s373, 31
      %s377 = scalar_select %p376, %s373, 31
      %s378 = smul.addr %s375, 32
      %s379 = sadd.s32 %s377, %s378
      %s380 = smul.addr %s379, 4
      %s381 = scalar_lea.vmem %s0, %s380
      %s382 = smul.u32 32, %s23
      %s383 = smul.u32 %s23, 16
      %s384 = ssub.s32 %s383, 1
      %p385 = scmp.gt.s32.totalorder %s384, 0
      %s386 = scalar_select %p385, %s384, 0
      %s387 = smul.u32 2, %s386
      %p388 = scmp.lt.s32.totalorder %s22, 1
      %s389 = scalar_select %p388, %s22, 1
      %p390 = scmp.lt.s32.totalorder %s387, 31
      %s391 = scalar_select %p390, %s387, 31
      %s392 = smul.addr %s389, 32
      %s393 = sadd.s32 %s391, %s392
      %s394 = smul.addr %s393, 4
      %s395 = scalar_lea.vmem %s1, %s394
      %s396 = smul.u32 %s23, 16
      %s397 = ssub.s32 %s396, 1
      %p398 = scmp.gt.s32.totalorder %s397, 0
      %s399 = scalar_select %p398, %s397, 0
      %s400 = smul.u32 2, %s399
      %s401 = sadd.s32 %s23, 1
      %s402 = smul.u32 %s401, 16
      %p403 = scmp.lt.s32.totalorder %s402, 15
      %s404 = scalar_select %p403, %s402, 15
      %s405 = smul.u32 2, %s404
      %p406 = scmp.lt.s32.totalorder %s22, 1
      %s407 = scalar_select %p406, %s22, 1
      %p408 = scmp.lt.s32.totalorder %s405, 31
      %s409 = scalar_select %p408, %s405, 31
      %s410 = smul.addr %s407, 32
      %s411 = sadd.s32 %s409, %s410
      %s412 = smul.addr %s411, 4
      %s413 = scalar_lea.vmem %s2, %s412
      %s414 = sadd.s32 %s23, 1
      %s415 = smul.u32 %s414, 16
      %p416 = scmp.lt.s32.totalorder %s415, 15
      %s417 = scalar_select %p416, %s415, 15
      %s418 = smul.u32 2, %s417
      %s419 = smul.u32 32, %s23
      %p420 = scmp.lt.s32.totalorder %s22, 1
      %s421 = scalar_select %p420, %s22, 1
      %p422 = scmp.lt.s32.totalorder %s419, 31
      %s423 = scalar_select %p422, %s419, 31
      %s424 = smul.addr %s421, 32
      %s425 = sadd.s32 %s423, %s424
      %s426 = smul.addr %s425, 4
      %s427 = scalar_lea.vmem %s5, %s426
      %s428 = smul.u32 32, %s23
      %s429 = sadd.s32 %s22, %s23
      %p430 = scmp.lt.s32.totalorder %s429, 1
      %s431 = scalar_select %p430, %s429, 1
      %s432 = smul.addr %s431, 2
      %s433 = scalar_lea.vmem %s6, %s432
      %s434 = sadd.s32 %s22, %s23
      %v438 = vld [vmem:[%s381] sm:$0xf]
      %v439 = vld [vmem:[%s381 + $0x4] sm:$0xf]
      %v440 = vld [vmem:[%s381 + $0x8] sm:$0xf]
      %v441 = vld [vmem:[%s381 + $0xc] sm:$0xf]
      %v442 = vld [vmem:[%s381 + $0x10] sm:$0xf]
      %v443 = vld [vmem:[%s381 + $0x14] sm:$0xf]
      %v444 = vld [vmem:[%s381 + $0x18] sm:$0xf]
      %v445 = vld [vmem:[%s381 + $0x1c] sm:$0xf]
      %v446 = vld [vmem:[%s381 + $0x20] sm:$0xf]
      %v447 = vld [vmem:[%s381 + $0x24] sm:$0xf]
      %v448 = vld [vmem:[%s381 + $0x28] sm:$0xf]
      %v449 = vld [vmem:[%s381 + $0x2c] sm:$0xf]
      %v450 = vld [vmem:[%s381 + $0x30] sm:$0xf]
      %v451 = vld [vmem:[%s381 + $0x34] sm:$0xf]
      %v452 = vld [vmem:[%s381 + $0x38] sm:$0xf]
      %v453 = vld [vmem:[%s381 + $0x3c] sm:$0xf]
      %v454 = vld [vmem:[%s381 + $0x40] sm:$0xf]
      %v455 = vld [vmem:[%s381 + $0x44] sm:$0xf]
      %v456 = vld [vmem:[%s381 + $0x48] sm:$0xf]
      %v457 = vld [vmem:[%s381 + $0x4c] sm:$0xf]
      %v458 = vld [vmem:[%s381 + $0x50] sm:$0xf]
      %v459 = vld [vmem:[%s381 + $0x54] sm:$0xf]
      %v460 = vld [vmem:[%s381 + $0x58] sm:$0xf]
      %v461 = vld [vmem:[%s381 + $0x5c] sm:$0xf]
      %v462 = vld [vmem:[%s381 + $0x60] sm:$0xf]
      %v463 = vld [vmem:[%s381 + $0x64] sm:$0xf]
      %v464 = vld [vmem:[%s381 + $0x68] sm:$0xf]
      %v465 = vld [vmem:[%s381 + $0x6c] sm:$0xf]
      %v466 = vld [vmem:[%s381 + $0x70] sm:$0xf]
      %v467 = vld [vmem:[%s381 + $0x74] sm:$0xf]
      %v468 = vld [vmem:[%s381 + $0x78] sm:$0xf]
      %v469 = vld [vmem:[%s381 + $0x7c] sm:$0xf]
      %v470 = vunpack.c.l.bf16 %v438
      %v471 = vunpack.c.l.bf16 %v439
      %v472 = vunpack.c.l.bf16 %v440
      %v473 = vunpack.c.l.bf16 %v441
      %v474 = vunpack.c.l.bf16 %v442
      %v475 = vunpack.c.l.bf16 %v443
      %v476 = vunpack.c.l.bf16 %v444
      %v477 = vunpack.c.l.bf16 %v445
      %v478 = vunpack.c.l.bf16 %v446
      %v479 = vunpack.c.l.bf16 %v447
      %v480 = vunpack.c.l.bf16 %v448
      %v481 = vunpack.c.l.bf16 %v449
      %v482 = vunpack.c.l.bf16 %v450
      %v483 = vunpack.c.l.bf16 %v451
      %v484 = vunpack.c.l.bf16 %v452
      %v485 = vunpack.c.l.bf16 %v453
      %v486 = vunpack.c.l.bf16 %v454
      %v487 = vunpack.c.l.bf16 %v455
      %v488 = vunpack.c.l.bf16 %v456
      %v489 = vunpack.c.l.bf16 %v457
      %v490 = vunpack.c.l.bf16 %v458
      %v491 = vunpack.c.l.bf16 %v459
      %v492 = vunpack.c.l.bf16 %v460
      %v493 = vunpack.c.l.bf16 %v461
      %v494 = vunpack.c.l.bf16 %v462
      %v495 = vunpack.c.l.bf16 %v463
      %v496 = vunpack.c.l.bf16 %v464
      %v497 = vunpack.c.l.bf16 %v465
      %v498 = vunpack.c.l.bf16 %v466
      %v499 = vunpack.c.l.bf16 %v467
      %v500 = vunpack.c.l.bf16 %v468
      %v501 = vunpack.c.l.bf16 %v469
      %v502 = vld [vmem:[%s4] sm:$0x1]
      %v503 = vlaneseq
      %v504 = vshrl.u32 %v503, 7
      %v505 = vsub.s32 0, %v504
      %v506 = vrot.slane %v502, %v505
      %v507 = vmul.f32 %v470, %v506
      %v508 = vmul.f32 %v471, %v506
      %v509 = vmul.f32 %v472, %v506
      %v510 = vmul.f32 %v473, %v506
      %v511 = vmul.f32 %v474, %v506
      %v512 = vmul.f32 %v475, %v506
      %v513 = vmul.f32 %v476, %v506
      %v514 = vmul.f32 %v477, %v506
      %v515 = vmul.f32 %v478, %v506
      %v516 = vmul.f32 %v479, %v506
      %v517 = vmul.f32 %v480, %v506
      %v518 = vmul.f32 %v481, %v506
      %v519 = vmul.f32 %v482, %v506
      %v520 = vmul.f32 %v483, %v506
      %v521 = vmul.f32 %v484, %v506
      %v522 = vmul.f32 %v485, %v506
      %v523 = vmul.f32 %v486, %v506
      %v524 = vmul.f32 %v487, %v506
      %v525 = vmul.f32 %v488, %v506
      %v526 = vmul.f32 %v489, %v506
      %v527 = vmul.f32 %v490, %v506
      %v528 = vmul.f32 %v491, %v506
      %v529 = vmul.f32 %v492, %v506
      %v530 = vmul.f32 %v493, %v506
      %v531 = vmul.f32 %v494, %v506
      %v532 = vmul.f32 %v495, %v506
      %v533 = vmul.f32 %v496, %v506
      %v534 = vmul.f32 %v497, %v506
      %v535 = vmul.f32 %v498, %v506
      %v536 = vmul.f32 %v499, %v506
      %v537 = vmul.f32 %v500, %v506
      %v538 = vmul.f32 %v501, %v506
      %v539 = vld [vmem:[%s4 + $0x1] sm:$0x1]
      %v540 = vlaneseq
      %v541 = vshrl.u32 %v540, 7
      %v542 = vsub.s32 0, %v541
      %v543 = vrot.slane %v539, %v542
      %v544 = vadd.f32 %v507, %v543
      %v545 = vadd.f32 %v508, %v543
      %v546 = vadd.f32 %v509, %v543
      %v547 = vadd.f32 %v510, %v543
      %v548 = vadd.f32 %v511, %v543
      %v549 = vadd.f32 %v512, %v543
      %v550 = vadd.f32 %v513, %v543
      %v551 = vadd.f32 %v514, %v543
      %v552 = vadd.f32 %v515, %v543
      %v553 = vadd.f32 %v516, %v543
      %v554 = vadd.f32 %v517, %v543
      %v555 = vadd.f32 %v518, %v543
      %v556 = vadd.f32 %v519, %v543
      %v557 = vadd.f32 %v520, %v543
      %v558 = vadd.f32 %v521, %v543
      %v559 = vadd.f32 %v522, %v543
      %v560 = vadd.f32 %v523, %v543
      %v561 = vadd.f32 %v524, %v543
      %v562 = vadd.f32 %v525, %v543
      %v563 = vadd.f32 %v526, %v543
      %v564 = vadd.f32 %v527, %v543
      %v565 = vadd.f32 %v528, %v543
      %v566 = vadd.f32 %v529, %v543
      %v567 = vadd.f32 %v530, %v543
      %v568 = vadd.f32 %v531, %v543
      %v569 = vadd.f32 %v532, %v543
      %v570 = vadd.f32 %v533, %v543
      %v571 = vadd.f32 %v534, %v543
      %v572 = vadd.f32 %v535, %v543
      %v573 = vadd.f32 %v536, %v543
      %v574 = vadd.f32 %v537, %v543
      %v575 = vadd.f32 %v538, %v543
      %v576 = vmax.f32 %v544, 0.0
      %v577 = vmax.f32 %v545, 0.0
      %v578 = vmax.f32 %v546, 0.0
      %v579 = vmax.f32 %v547, 0.0
      %v580 = vmax.f32 %v548, 0.0
      %v581 = vmax.f32 %v549, 0.0
      %v582 = vmax.f32 %v550, 0.0
      %v583 = vmax.f32 %v551, 0.0
      %v584 = vmax.f32 %v552, 0.0
      %v585 = vmax.f32 %v553, 0.0
      %v586 = vmax.f32 %v554, 0.0
      %v587 = vmax.f32 %v555, 0.0
      %v588 = vmax.f32 %v556, 0.0
      %v589 = vmax.f32 %v557, 0.0
      %v590 = vmax.f32 %v558, 0.0
      %v591 = vmax.f32 %v559, 0.0
      %v592 = vmax.f32 %v560, 0.0
      %v593 = vmax.f32 %v561, 0.0
      %v594 = vmax.f32 %v562, 0.0
      %v595 = vmax.f32 %v563, 0.0
      %v596 = vmax.f32 %v564, 0.0
      %v597 = vmax.f32 %v565, 0.0
      %v598 = vmax.f32 %v566, 0.0
      %v599 = vmax.f32 %v567, 0.0
      %v600 = vmax.f32 %v568, 0.0
      %v601 = vmax.f32 %v569, 0.0
      %v602 = vmax.f32 %v570, 0.0
      %v603 = vmax.f32 %v571, 0.0
      %v604 = vmax.f32 %v572, 0.0
      %v605 = vmax.f32 %v573, 0.0
      %v606 = vmax.f32 %v574, 0.0
      %v607 = vmax.f32 %v575, 0.0
      %v608 = vpack.c.bf16 %v577, %v576
      %v609 = vpack.c.bf16 %v579, %v578
      %v610 = vpack.c.bf16 %v581, %v580
      %v611 = vpack.c.bf16 %v583, %v582
      %v612 = vpack.c.bf16 %v585, %v584
      %v613 = vpack.c.bf16 %v587, %v586
      %v614 = vpack.c.bf16 %v589, %v588
      %v615 = vpack.c.bf16 %v591, %v590
      %v616 = vpack.c.bf16 %v593, %v592
      %v617 = vpack.c.bf16 %v595, %v594
      %v618 = vpack.c.bf16 %v597, %v596
      %v619 = vpack.c.bf16 %v599, %v598
      %v620 = vpack.c.bf16 %v601, %v600
      %v621 = vpack.c.bf16 %v603, %v602
      %v622 = vpack.c.bf16 %v605, %v604
      %v623 = vpack.c.bf16 %v607, %v606
      %vm640 = vcmask 1043456
      %v641 = vrot.slane %v608, 4
      %v642 = vrot.slane %v609, 4
      %v643 = vsel %vm640, %v641, %v642
      %v644 = vrot.slane %v610, 4
      %v645 = vsel %vm640, %v642, %v644
      %v646 = vrot.slane %v611, 4
      %v647 = vsel %vm640, %v644, %v646
      %v648 = vrot.slane %v612, 4
      %v649 = vsel %vm640, %v646, %v648
      %v650 = vrot.slane %v613, 4
      %v651 = vsel %vm640, %v648, %v650
      %v652 = vrot.slane %v614, 4
      %v653 = vsel %vm640, %v650, %v652
      %v654 = vrot.slane %v615, 4
      %v655 = vsel %vm640, %v652, %v654
      %v656 = vrot.slane %v616, 4
      %v657 = vsel %vm640, %v654, %v656
      %v658 = vrot.slane %v617, 4
      %v659 = vsel %vm640, %v656, %v658
      %v660 = vrot.slane %v618, 4
      %v661 = vsel %vm640, %v658, %v660
      %v662 = vrot.slane %v619, 4
      %v663 = vsel %vm640, %v660, %v662
      %v664 = vrot.slane %v620, 4
      %v665 = vsel %vm640, %v662, %v664
      %v666 = vrot.slane %v621, 4
      %v667 = vsel %vm640, %v664, %v666
      %v668 = vrot.slane %v622, 4
      %v669 = vsel %vm640, %v666, %v668
      %v670 = vrot.slane %v623, 4
      %v671 = vsel %vm640, %v668, %v670
      %689 = vst [vmem:[#allocation2 + $0x8] sm:$0xf0] %v641
      %690 = vst [vmem:[#allocation2 + $0x10] sm:$0xff] %v643
      %691 = vst [vmem:[#allocation2 + $0x18] sm:$0xff] %v645
      %692 = vst [vmem:[#allocation2 + $0x20] sm:$0xff] %v647
      %693 = vst [vmem:[#allocation2 + $0x28] sm:$0xff] %v649
      %694 = vst [vmem:[#allocation2 + $0x30] sm:$0xff] %v651
      %695 = vst [vmem:[#allocation2 + $0x38] sm:$0xff] %v653
      %696 = vst [vmem:[#allocation2 + $0x40] sm:$0xff] %v655
      %697 = vst [vmem:[#allocation2 + $0x48] sm:$0xff] %v657
      %698 = vst [vmem:[#allocation2 + $0x50] sm:$0xff] %v659
      %699 = vst [vmem:[#allocation2 + $0x58] sm:$0xff] %v661
      %700 = vst [vmem:[#allocation2 + $0x60] sm:$0xff] %v663
      %701 = vst [vmem:[#allocation2 + $0x68] sm:$0xff] %v665
      %702 = vst [vmem:[#allocation2 + $0x70] sm:$0xff] %v667
      %703 = vst [vmem:[#allocation2 + $0x78] sm:$0xff] %v669
      %704 = vst [vmem:[#allocation2 + $0x80] sm:$0xff] %v671
      %705 = vst [vmem:[#allocation2 + $0x88] sm:$0xf] %v670
      %p706 = scmp.eq.s32.totalorder %s23, 0
      // Predicated region
      $region41: #{upblock_forward.4} parent=39 // pred_check
        %p707 = pneg %p706
      $region42: #{upblock_forward.4} parent=39 // pred_check_branch
        %709 = sbr.rel (%p707) target = $region44
      $region43: #{upblock_forward.4} parent=39 // pred_region
        %710 = vst [vmem:[#allocation2] sm:$0xf0] 0
        %711 = vst [vmem:[#allocation2 + $0x8] sm:$0xf] 0
      $region44: #{upblock_forward.4} parent=39 // pred_fallthru
        _
      %p712 = scmp.gt.s32.totalorder %s23, 0
      // Predicated region
      $region45: #{upblock_forward.4} parent=39 // pred_check
        %p713 = pneg %p712
      $region46: #{upblock_forward.4} parent=39 // pred_check_branch
        %715 = sbr.rel (%p713) target = $region48
      $region47: #{upblock_forward.4} parent=39 // pred_region
        %v716 = vld [vmem:[%s395] sm:$0xf]
        %v717 = vld [vmem:[%s395 + $0x4] sm:$0xf]
        %v718 = vunpack.c.l.bf16 %v716
        %v719 = vunpack.c.l.bf16 %v717
        %v720 = vld [vmem:[%s4] sm:$0x1]
        %v721 = vlaneseq
        %v722 = vshrl.u32 %v721, 7
        %v723 = vsub.s32 0, %v722
        %v724 = vrot.slane %v720, %v723
        %v725 = vmul.f32 %v718, %v724
        %v726 = vmul.f32 %v719, %v724
        %v727 = vld [vmem:[%s4 + $0x1] sm:$0x1]
        %v728 = vlaneseq
        %v729 = vshrl.u32 %v728, 7
        %v730 = vsub.s32 0, %v729
        %v731 = vrot.slane %v727, %v730
        %v732 = vadd.f32 %v725, %v731
        %v733 = vadd.f32 %v726, %v731
        %v734 = vmax.f32 %v732, 0.0
        %v735 = vmax.f32 %v733, 0.0
        %v736 = vpack.c.bf16 %v735, %v734
        %v738 = vrot.slane %v736, 4
        %740 = vst [vmem:[#allocation2] sm:$0xf0] %v738
        %741 = vst [vmem:[#allocation2 + $0x8] sm:$0xf] %v738
      $region48: #{upblock_forward.4} parent=39 // pred_fallthru
        _
      // Predicated region
      $region49: #{upblock_forward.4} parent=39 // pred_check
        %p742 = pneg %p706
      $region50: #{upblock_forward.4} parent=39 // pred_check_branch
        %744 = sbr.rel (%p742) target = $region52
      $region51: #{upblock_forward.4} parent=39 // pred_region
        %745 = vst [vmem:[#allocation2 + $0x88] sm:$0xf0] 0
        %746 = vst [vmem:[#allocation2 + $0x90] sm:$0xf] 0
      $region52: #{upblock_forward.4} parent=39 // pred_fallthru
        _
      %p747 = scmp.lt.s32.totalorder %s23, 0
      // Predicated region
      $region53: #{upblock_forward.4} parent=39 // pred_check
        %p748 = pneg %p747
      $region54: #{upblock_forward.4} parent=39 // pred_check_branch
        %750 = sbr.rel (%p748) target = $region56
      $region55: #{upblock_forward.4} parent=39 // pred_region
        %v751 = vld [vmem:[%s413] sm:$0xf]
        %v752 = vld [vmem:[%s413 + $0x4] sm:$0xf]
        %v753 = vunpack.c.l.bf16 %v751
        %v754 = vunpack.c.l.bf16 %v752
        %v755 = vld [vmem:[%s4] sm:$0x1]
        %v756 = vlaneseq
        %v757 = vshrl.u32 %v756, 7
        %v758 = vsub.s32 0, %v757
        %v759 = vrot.slane %v755, %v758
        %v760 = vmul.f32 %v753, %v759
        %v761 = vmul.f32 %v754, %v759
        %v762 = vld [vmem:[%s4 + $0x1] sm:$0x1]
        %v763 = vlaneseq
        %v764 = vshrl.u32 %v763, 7
        %v765 = vsub.s32 0, %v764
        %v766 = vrot.slane %v762, %v765
        %v767 = vadd.f32 %v760, %v766
        %v768 = vadd.f32 %v761, %v766
        %v769 = vmax.f32 %v767, 0.0
        %v770 = vmax.f32 %v768, 0.0
        %v771 = vpack.c.bf16 %v770, %v769
        %v773 = vrot.slane %v771, 4
        %775 = vst [vmem:[#allocation2 + $0x88] sm:$0xf0] %v773
        %776 = vst [vmem:[#allocation2 + $0x90] sm:$0xf] %v773
      $region56: #{upblock_forward.4} parent=39 // pred_fallthru
        _
      %v777 = vlaneseq
      %v778 = vshrl.u32 %v777, 7
      %v779 = vadd.s32 %v778, 8
      %v780 = vadd.s32 %v778, 16
      %v781 = vadd.s32 %v778, 24
      %v782 = vadd.s32 %v778, 32
      %v783 = vadd.s32 %v778, 40
      %v784 = vadd.s32 %v778, 48
      %v785 = vadd.s32 %v778, 56
      %v786 = vadd.s32 %v778, 64
      %v787 = vadd.s32 %v778, 72
      %v788 = vadd.s32 %v778, 80
      %v789 = vadd.s32 %v778, 88
      %v790 = vadd.s32 %v778, 96
      %v791 = vadd.s32 %v778, 104
      %v792 = vadd.s32 %v778, 112
      %v793 = vadd.s32 %v778, 120
      %v794 = vadd.s32 %v778, 128
      %v795 = vadd.s32 %v778, 136
      %v796 = vadd.s32 %v778, 144
      %v797 = vadd.s32 %v778, 152
      %v798 = vadd.s32 %v778, 160
      %v799 = vadd.s32 %v778, 168
      %v800 = vadd.s32 %v778, 176
      %v801 = vadd.s32 %v778, 184
      %v802 = vadd.s32 %v778, 192
      %v803 = vadd.s32 %v778, 200
      %v804 = vadd.s32 %v778, 208
      %v805 = vadd.s32 %v778, 216
      %v806 = vadd.s32 %v778, 224
      %v807 = vadd.s32 %v778, 232
      %v808 = vadd.s32 %v778, 240
      %v809 = vadd.s32 %v778, 248
      %vm810 = vcmp.lt.s32.totalorder %v778, 0
      %v811 = vsub.s32 0, %v778
      %v812 = vsel %vm810, %v811, %v778
      %v813 = vshrl.u32 %v812, 4
      %v814 = vand.u32 %v812, 15
      %v815 = vsub.s32 0, %v814
      %v816 = vsel %vm810, %v815, %v814
      %vm817 = vcmp.lt.s32.totalorder %v779, 0
      %v818 = vsub.s32 0, %v779
      %v819 = vsel %vm817, %v818, %v779
      %v820 = vshrl.u32 %v819, 4
      %v821 = vand.u32 %v819, 15
      %v822 = vsub.s32 0, %v821
      %v823 = vsel %vm817, %v822, %v821
      %vm824 = vcmp.lt.s32.totalorder %v780, 0
      %v825 = vsub.s32 0, %v780
      %v826 = vsel %vm824, %v825, %v780
      %v827 = vshrl.u32 %v826, 4
      %v828 = vand.u32 %v826, 15
      %v829 = vsub.s32 0, %v828
      %v830 = vsel %vm824, %v829, %v828
      %vm831 = vcmp.lt.s32.totalorder %v781, 0
      %v832 = vsub.s32 0, %v781
      %v833 = vsel %vm831, %v832, %v781
      %v834 = vshrl.u32 %v833, 4
      %v835 = vand.u32 %v833, 15
      %v836 = vsub.s32 0, %v835
      %v837 = vsel %vm831, %v836, %v835
      %vm838 = vcmp.lt.s32.totalorder %v782, 0
      %v839 = vsub.s32 0, %v782
      %v840 = vsel %vm838, %v839, %v782
      %v841 = vshrl.u32 %v840, 4
      %v842 = vand.u32 %v840, 15
      %v843 = vsub.s32 0, %v842
      %v844 = vsel %vm838, %v843, %v842
      %vm845 = vcmp.lt.s32.totalorder %v783, 0
      %v846 = vsub.s32 0, %v783
      %v847 = vsel %vm845, %v846, %v783
      %v848 = vshrl.u32 %v847, 4
      %v849 = vand.u32 %v847, 15
      %v850 = vsub.s32 0, %v849
      %v851 = vsel %vm845, %v850, %v849
      %vm852 = vcmp.lt.s32.totalorder %v784, 0
      %v853 = vsub.s32 0, %v784
      %v854 = vsel %vm852, %v853, %v784
      %v855 = vshrl.u32 %v854, 4
      %v856 = vand.u32 %v854, 15
      %v857 = vsub.s32 0, %v856
      %v858 = vsel %vm852, %v857, %v856
      %vm859 = vcmp.lt.s32.totalorder %v785, 0
      %v860 = vsub.s32 0, %v785
      %v861 = vsel %vm859, %v860, %v785
      %v862 = vshrl.u32 %v861, 4
      %v863 = vand.u32 %v861, 15
      %v864 = vsub.s32 0, %v863
      %v865 = vsel %vm859, %v864, %v863
      %vm866 = vcmp.lt.s32.totalorder %v786, 0
      %v867 = vsub.s32 0, %v786
      %v868 = vsel %vm866, %v867, %v786
      %v869 = vshrl.u32 %v868, 4
      %v870 = vand.u32 %v868, 15
      %v871 = vsub.s32 0, %v870
      %v872 = vsel %vm866, %v871, %v870
      %vm873 = vcmp.lt.s32.totalorder %v787, 0
      %v874 = vsub.s32 0, %v787
      %v875 = vsel %vm873, %v874, %v787
      %v876 = vshrl.u32 %v875, 4
      %v877 = vand.u32 %v875, 15
      %v878 = vsub.s32 0, %v877
      %v879 = vsel %vm873, %v878, %v877
      %vm880 = vcmp.lt.s32.totalorder %v788, 0
      %v881 = vsub.s32 0, %v788
      %v882 = vsel %vm880, %v881, %v788
      %v883 = vshrl.u32 %v882, 4
      %v884 = vand.u32 %v882, 15
      %v885 = vsub.s32 0, %v884
      %v886 = vsel %vm880, %v885, %v884
      %vm887 = vcmp.lt.s32.totalorder %v789, 0
      %v888 = vsub.s32 0, %v789
      %v889 = vsel %vm887, %v888, %v789
      %v890 = vshrl.u32 %v889, 4
      %v891 = vand.u32 %v889, 15
      %v892 = vsub.s32 0, %v891
      %v893 = vsel %vm887, %v892, %v891
      %vm894 = vcmp.lt.s32.totalorder %v790, 0
      %v895 = vsub.s32 0, %v790
      %v896 = vsel %vm894, %v895, %v790
      %v897 = vshrl.u32 %v896, 4
      %v898 = vand.u32 %v896, 15
      %v899 = vsub.s32 0, %v898
      %v900 = vsel %vm894, %v899, %v898
      %vm901 = vcmp.lt.s32.totalorder %v791, 0
      %v902 = vsub.s32 0, %v791
      %v903 = vsel %vm901, %v902, %v791
      %v904 = vshrl.u32 %v903, 4
      %v905 = vand.u32 %v903, 15
      %v906 = vsub.s32 0, %v905
      %v907 = vsel %vm901, %v906, %v905
      %vm908 = vcmp.lt.s32.totalorder %v792, 0
      %v909 = vsub.s32 0, %v792
      %v910 = vsel %vm908, %v909, %v792
      %v911 = vshrl.u32 %v910, 4
      %v912 = vand.u32 %v910, 15
      %v913 = vsub.s32 0, %v912
      %v914 = vsel %vm908, %v913, %v912
      %vm915 = vcmp.lt.s32.totalorder %v793, 0
      %v916 = vsub.s32 0, %v793
      %v917 = vsel %vm915, %v916, %v793
      %v918 = vshrl.u32 %v917, 4
      %v919 = vand.u32 %v917, 15
      %v920 = vsub.s32 0, %v919
      %v921 = vsel %vm915, %v920, %v919
      %vm922 = vcmp.lt.s32.totalorder %v794, 0
      %v923 = vsub.s32 0, %v794
      %v924 = vsel %vm922, %v923, %v794
      %v925 = vshrl.u32 %v924, 4
      %v926 = vand.u32 %v924, 15
      %v927 = vsub.s32 0, %v926
      %v928 = vsel %vm922, %v927, %v926
      %vm929 = vcmp.lt.s32.totalorder %v795, 0
      %v930 = vsub.s32 0, %v795
      %v931 = vsel %vm929, %v930, %v795
      %v932 = vshrl.u32 %v931, 4
      %v933 = vand.u32 %v931, 15
      %v934 = vsub.s32 0, %v933
      %v935 = vsel %vm929, %v934, %v933
      %vm936 = vcmp.lt.s32.totalorder %v796, 0
      %v937 = vsub.s32 0, %v796
      %v938 = vsel %vm936, %v937, %v796
      %v939 = vshrl.u32 %v938, 4
      %v940 = vand.u32 %v938, 15
      %v941 = vsub.s32 0, %v940
      %v942 = vsel %vm936, %v941, %v940
      %vm943 = vcmp.lt.s32.totalorder %v797, 0
      %v944 = vsub.s32 0, %v797
      %v945 = vsel %vm943, %v944, %v797
      %v946 = vshrl.u32 %v945, 4
      %v947 = vand.u32 %v945, 15
      %v948 = vsub.s32 0, %v947
      %v949 = vsel %vm943, %v948, %v947
      %vm950 = vcmp.lt.s32.totalorder %v798, 0
      %v951 = vsub.s32 0, %v798
      %v952 = vsel %vm950, %v951, %v798
      %v953 = vshrl.u32 %v952, 4
      %v954 = vand.u32 %v952, 15
      %v955 = vsub.s32 0, %v954
      %v956 = vsel %vm950, %v955, %v954
      %vm957 = vcmp.lt.s32.totalorder %v799, 0
      %v958 = vsub.s32 0, %v799
      %v959 = vsel %vm957, %v958, %v799
      %v960 = vshrl.u32 %v959, 4
      %v961 = vand.u32 %v959, 15
      %v962 = vsub.s32 0, %v961
      %v963 = vsel %vm957, %v962, %v961
      %vm964 = vcmp.lt.s32.totalorder %v800, 0
      %v965 = vsub.s32 0, %v800
      %v966 = vsel %vm964, %v965, %v800
      %v967 = vshrl.u32 %v966, 4
      %v968 = vand.u32 %v966, 15
      %v969 = vsub.s32 0, %v968
      %v970 = vsel %vm964, %v969, %v968
      %vm971 = vcmp.lt.s32.totalorder %v801, 0
      %v972 = vsub.s32 0, %v801
      %v973 = vsel %vm971, %v972, %v801
      %v974 = vshrl.u32 %v973, 4
      %v975 = vand.u32 %v973, 15
      %v976 = vsub.s32 0, %v975
      %v977 = vsel %vm971, %v976, %v975
      %vm978 = vcmp.lt.s32.totalorder %v802, 0
      %v979 = vsub.s32 0, %v802
      %v980 = vsel %vm978, %v979, %v802
      %v981 = vshrl.u32 %v980, 4
      %v982 = vand.u32 %v980, 15
      %v983 = vsub.s32 0, %v982
      %v984 = vsel %vm978, %v983, %v982
      %vm985 = vcmp.lt.s32.totalorder %v803, 0
      %v986 = vsub.s32 0, %v803
      %v987 = vsel %vm985, %v986, %v803
      %v988 = vshrl.u32 %v987, 4
      %v989 = vand.u32 %v987, 15
      %v990 = vsub.s32 0, %v989
      %v991 = vsel %vm985, %v990, %v989
      %vm992 = vcmp.lt.s32.totalorder %v804, 0
      %v993 = vsub.s32 0, %v804
      %v994 = vsel %vm992, %v993, %v804
      %v995 = vshrl.u32 %v994, 4
      %v996 = vand.u32 %v994, 15
      %v997 = vsub.s32 0, %v996
      %v998 = vsel %vm992, %v997, %v996
      %vm999 = vcmp.lt.s32.totalorder %v805, 0
      %v1000 = vsub.s32 0, %v805
      %v1001 = vsel %vm999, %v1000, %v805
      %v1002 = vshrl.u32 %v1001, 4
      %v1003 = vand.u32 %v1001, 15
      %v1004 = vsub.s32 0, %v1003
      %v1005 = vsel %vm999, %v1004, %v1003
      %vm1006 = vcmp.lt.s32.totalorder %v806, 0
      %v1007 = vsub.s32 0, %v806
      %v1008 = vsel %vm1006, %v1007, %v806
      %v1009 = vshrl.u32 %v1008, 4
      %v1010 = vand.u32 %v1008, 15
      %v1011 = vsub.s32 0, %v1010
      %v1012 = vsel %vm1006, %v1011, %v1010
      %vm1013 = vcmp.lt.s32.totalorder %v807, 0
      %v1014 = vsub.s32 0, %v807
      %v1015 = vsel %vm1013, %v1014, %v807
      %v1016 = vshrl.u32 %v1015, 4
      %v1017 = vand.u32 %v1015, 15
      %v1018 = vsub.s32 0, %v1017
      %v1019 = vsel %vm1013, %v1018, %v1017
      %vm1020 = vcmp.lt.s32.totalorder %v808, 0
      %v1021 = vsub.s32 0, %v808
      %v1022 = vsel %vm1020, %v1021, %v808
      %v1023 = vshrl.u32 %v1022, 4
      %v1024 = vand.u32 %v1022, 15
      %v1025 = vsub.s32 0, %v1024
      %v1026 = vsel %vm1020, %v1025, %v1024
      %vm1027 = vcmp.lt.s32.totalorder %v809, 0
      %v1028 = vsub.s32 0, %v809
      %v1029 = vsel %vm1027, %v1028, %v809
      %v1030 = vshrl.u32 %v1029, 4
      %v1031 = vand.u32 %v1029, 15
      %v1032 = vsub.s32 0, %v1031
      %v1033 = vsel %vm1027, %v1032, %v1031
      %vm1034 = vcmp.ne.s32.totalorder %v816, 0
      %vm1035 = vcmp.ne.s32.totalorder %v823, 0
      %vm1036 = vcmp.ne.s32.totalorder %v830, 0
      %vm1037 = vcmp.ne.s32.totalorder %v837, 0
      %vm1038 = vcmp.ne.s32.totalorder %v844, 0
      %vm1039 = vcmp.ne.s32.totalorder %v851, 0
      %vm1040 = vcmp.ne.s32.totalorder %v858, 0
      %vm1041 = vcmp.ne.s32.totalorder %v865, 0
      %vm1042 = vcmp.ne.s32.totalorder %v872, 0
      %vm1043 = vcmp.ne.s32.totalorder %v879, 0
      %vm1044 = vcmp.ne.s32.totalorder %v886, 0
      %vm1045 = vcmp.ne.s32.totalorder %v893, 0
      %vm1046 = vcmp.ne.s32.totalorder %v900, 0
      %vm1047 = vcmp.ne.s32.totalorder %v907, 0
      %vm1048 = vcmp.ne.s32.totalorder %v914, 0
      %vm1049 = vcmp.ne.s32.totalorder %v921, 0
      %vm1050 = vcmp.ne.s32.totalorder %v928, 0
      %vm1051 = vcmp.ne.s32.totalorder %v935, 0
      %vm1052 = vcmp.ne.s32.totalorder %v942, 0
      %vm1053 = vcmp.ne.s32.totalorder %v949, 0
      %vm1054 = vcmp.ne.s32.totalorder %v956, 0
      %vm1055 = vcmp.ne.s32.totalorder %v963, 0
      %vm1056 = vcmp.ne.s32.totalorder %v970, 0
      %vm1057 = vcmp.ne.s32.totalorder %v977, 0
      %vm1058 = vcmp.ne.s32.totalorder %v984, 0
      %vm1059 = vcmp.ne.s32.totalorder %v991, 0
      %vm1060 = vcmp.ne.s32.totalorder %v998, 0
      %vm1061 = vcmp.ne.s32.totalorder %v1005, 0
      %vm1062 = vcmp.ne.s32.totalorder %v1012, 0
      %vm1063 = vcmp.ne.s32.totalorder %v1019, 0
      %vm1064 = vcmp.ne.s32.totalorder %v1026, 0
      %vm1065 = vcmp.ne.s32.totalorder %v1033, 0
      %vm1066 = vcmp.lt.s32.totalorder %v816, 0
      %vm1067 = vcmp.lt.s32.totalorder %v823, 0
      %vm1068 = vcmp.lt.s32.totalorder %v830, 0
      %vm1069 = vcmp.lt.s32.totalorder %v837, 0
      %vm1070 = vcmp.lt.s32.totalorder %v844, 0
      %vm1071 = vcmp.lt.s32.totalorder %v851, 0
      %vm1072 = vcmp.lt.s32.totalorder %v858, 0
      %vm1073 = vcmp.lt.s32.totalorder %v865, 0
      %vm1074 = vcmp.lt.s32.totalorder %v872, 0
      %vm1075 = vcmp.lt.s32.totalorder %v879, 0
      %vm1076 = vcmp.lt.s32.totalorder %v886, 0
      %vm1077 = vcmp.lt.s32.totalorder %v893, 0
      %vm1078 = vcmp.lt.s32.totalorder %v900, 0
      %vm1079 = vcmp.lt.s32.totalorder %v907, 0
      %vm1080 = vcmp.lt.s32.totalorder %v914, 0
      %vm1081 = vcmp.lt.s32.totalorder %v921, 0
      %vm1082 = vcmp.lt.s32.totalorder %v928, 0
      %vm1083 = vcmp.lt.s32.totalorder %v935, 0
      %vm1084 = vcmp.lt.s32.totalorder %v942, 0
      %vm1085 = vcmp.lt.s32.totalorder %v949, 0
      %vm1086 = vcmp.lt.s32.totalorder %v956, 0
      %vm1087 = vcmp.lt.s32.totalorder %v963, 0
      %vm1088 = vcmp.lt.s32.totalorder %v970, 0
      %vm1089 = vcmp.lt.s32.totalorder %v977, 0
      %vm1090 = vcmp.lt.s32.totalorder %v984, 0
      %vm1091 = vcmp.lt.s32.totalorder %v991, 0
      %vm1092 = vcmp.lt.s32.totalorder %v998, 0
      %vm1093 = vcmp.lt.s32.totalorder %v1005, 0
      %vm1094 = vcmp.lt.s32.totalorder %v1012, 0
      %vm1095 = vcmp.lt.s32.totalorder %v1019, 0
      %vm1096 = vcmp.lt.s32.totalorder %v1026, 0
      %vm1097 = vcmp.lt.s32.totalorder %v1033, 0
      %vm1098 = vmand %vm1066, %vm1034
      %vm1099 = vmand %vm1067, %vm1035
      %vm1100 = vmand %vm1068, %vm1036
      %vm1101 = vmand %vm1069, %vm1037
      %vm1102 = vmand %vm1070, %vm1038
      %vm1103 = vmand %vm1071, %vm1039
      %vm1104 = vmand %vm1072, %vm1040
      %vm1105 = vmand %vm1073, %vm1041
      %vm1106 = vmand %vm1074, %vm1042
      %vm1107 = vmand %vm1075, %vm1043
      %vm1108 = vmand %vm1076, %vm1044
      %vm1109 = vmand %vm1077, %vm1045
      %vm1110 = vmand %vm1078, %vm1046
      %vm1111 = vmand %vm1079, %vm1047
      %vm1112 = vmand %vm1080, %vm1048
      %vm1113 = vmand %vm1081, %vm1049
      %vm1114 = vmand %vm1082, %vm1050
      %vm1115 = vmand %vm1083, %vm1051
      %vm1116 = vmand %vm1084, %vm1052
      %vm1117 = vmand %vm1085, %vm1053
      %vm1118 = vmand %vm1086, %vm1054
      %vm1119 = vmand %vm1087, %vm1055
      %vm1120 = vmand %vm1088, %vm1056
      %vm1121 = vmand %vm1089, %vm1057
      %vm1122 = vmand %vm1090, %vm1058
      %vm1123 = vmand %vm1091, %vm1059
      %vm1124 = vmand %vm1092, %vm1060
      %vm1125 = vmand %vm1093, %vm1061
      %vm1126 = vmand %vm1094, %vm1062
      %vm1127 = vmand %vm1095, %vm1063
      %vm1128 = vmand %vm1096, %vm1064
      %vm1129 = vmand %vm1097, %vm1065
      %v1130 = vadd.s32 %v816, 16
      %v1131 = vadd.s32 %v823, 16
      %v1132 = vadd.s32 %v830, 16
      %v1133 = vadd.s32 %v837, 16
      %v1134 = vadd.s32 %v844, 16
      %v1135 = vadd.s32 %v851, 16
      %v1136 = vadd.s32 %v858, 16
      %v1137 = vadd.s32 %v865, 16
      %v1138 = vadd.s32 %v872, 16
      %v1139 = vadd.s32 %v879, 16
      %v1140 = vadd.s32 %v886, 16
      %v1141 = vadd.s32 %v893, 16
      %v1142 = vadd.s32 %v900, 16
      %v1143 = vadd.s32 %v907, 16
      %v1144 = vadd.s32 %v914, 16
      %v1145 = vadd.s32 %v921, 16
      %v1146 = vadd.s32 %v928, 16
      %v1147 = vadd.s32 %v935, 16
      %v1148 = vadd.s32 %v942, 16
      %v1149 = vadd.s32 %v949, 16
      %v1150 = vadd.s32 %v956, 16
      %v1151 = vadd.s32 %v963, 16
      %v1152 = vadd.s32 %v970, 16
      %v1153 = vadd.s32 %v977, 16
      %v1154 = vadd.s32 %v984, 16
      %v1155 = vadd.s32 %v991, 16
      %v1156 = vadd.s32 %v998, 16
      %v1157 = vadd.s32 %v1005, 16
      %v1158 = vadd.s32 %v1012, 16
      %v1159 = vadd.s32 %v1019, 16
      %v1160 = vadd.s32 %v1026, 16
      %v1161 = vadd.s32 %v1033, 16
      %v1162 = vsel %vm1098, %v1130, %v816
      %v1163 = vsel %vm1099, %v1131, %v823
      %v1164 = vsel %vm1100, %v1132, %v830
      %v1165 = vsel %vm1101, %v1133, %v837
      %v1166 = vsel %vm1102, %v1134, %v844
      %v1167 = vsel %vm1103, %v1135, %v851
      %v1168 = vsel %vm1104, %v1136, %v858
      %v1169 = vsel %vm1105, %v1137, %v865
      %v1170 = vsel %vm1106, %v1138, %v872
      %v1171 = vsel %vm1107, %v1139, %v879
      %v1172 = vsel %vm1108, %v1140, %v886
      %v1173 = vsel %vm1109, %v1141, %v893
      %v1174 = vsel %vm1110, %v1142, %v900
      %v1175 = vsel %vm1111, %v1143, %v907
      %v1176 = vsel %vm1112, %v1144, %v914
      %v1177 = vsel %vm1113, %v1145, %v921
      %v1178 = vsel %vm1114, %v1146, %v928
      %v1179 = vsel %vm1115, %v1147, %v935
      %v1180 = vsel %vm1116, %v1148, %v942
      %v1181 = vsel %vm1117, %v1149, %v949
      %v1182 = vsel %vm1118, %v1150, %v956
      %v1183 = vsel %vm1119, %v1151, %v963
      %v1184 = vsel %vm1120, %v1152, %v970
      %v1185 = vsel %vm1121, %v1153, %v977
      %v1186 = vsel %vm1122, %v1154, %v984
      %v1187 = vsel %vm1123, %v1155, %v991
      %v1188 = vsel %vm1124, %v1156, %v998
      %v1189 = vsel %vm1125, %v1157, %v1005
      %v1190 = vsel %vm1126, %v1158, %v1012
      %v1191 = vsel %vm1127, %v1159, %v1019
      %v1192 = vsel %vm1128, %v1160, %v1026
      %v1193 = vsel %vm1129, %v1161, %v1033
      %vm1194 = vcmp.ne.s32.totalorder %v1162, 0
      %vm1195 = vcmp.ne.s32.totalorder %v1163, 0
      %vm1196 = vcmp.ne.s32.totalorder %v1164, 0
      %vm1197 = vcmp.ne.s32.totalorder %v1165, 0
      %vm1198 = vcmp.ne.s32.totalorder %v1166, 0
      %vm1199 = vcmp.ne.s32.totalorder %v1167, 0
      %vm1200 = vcmp.ne.s32.totalorder %v1168, 0
      %vm1201 = vcmp.ne.s32.totalorder %v1169, 0
      %vm1202 = vcmp.ne.s32.totalorder %v1170, 0
      %vm1203 = vcmp.ne.s32.totalorder %v1171, 0
      %vm1204 = vcmp.ne.s32.totalorder %v1172, 0
      %vm1205 = vcmp.ne.s32.totalorder %v1173, 0
      %vm1206 = vcmp.ne.s32.totalorder %v1174, 0
      %vm1207 = vcmp.ne.s32.totalorder %v1175, 0
      %vm1208 = vcmp.ne.s32.totalorder %v1176, 0
      %vm1209 = vcmp.ne.s32.totalorder %v1177, 0
      %vm1210 = vcmp.ne.s32.totalorder %v1178, 0
      %vm1211 = vcmp.ne.s32.totalorder %v1179, 0
      %vm1212 = vcmp.ne.s32.totalorder %v1180, 0
      %vm1213 = vcmp.ne.s32.totalorder %v1181, 0
      %vm1214 = vcmp.ne.s32.totalorder %v1182, 0
      %vm1215 = vcmp.ne.s32.totalorder %v1183, 0
      %vm1216 = vcmp.ne.s32.totalorder %v1184, 0
      %vm1217 = vcmp.ne.s32.totalorder %v1185, 0
      %vm1218 = vcmp.ne.s32.totalorder %v1186, 0
      %vm1219 = vcmp.ne.s32.totalorder %v1187, 0
      %vm1220 = vcmp.ne.s32.totalorder %v1188, 0
      %vm1221 = vcmp.ne.s32.totalorder %v1189, 0
      %vm1222 = vcmp.ne.s32.totalorder %v1190, 0
      %vm1223 = vcmp.ne.s32.totalorder %v1191, 0
      %vm1224 = vcmp.ne.s32.totalorder %v1192, 0
      %vm1225 = vcmp.ne.s32.totalorder %v1193, 0
      %vm1226 = vcmp.ne.s32.totalorder %v1162, 15
      %vm1227 = vcmp.ne.s32.totalorder %v1163, 15
      %vm1228 = vcmp.ne.s32.totalorder %v1164, 15
      %vm1229 = vcmp.ne.s32.totalorder %v1165, 15
      %vm1230 = vcmp.ne.s32.totalorder %v1166, 15
      %vm1231 = vcmp.ne.s32.totalorder %v1167, 15
      %vm1232 = vcmp.ne.s32.totalorder %v1168, 15
      %vm1233 = vcmp.ne.s32.totalorder %v1169, 15
      %vm1234 = vcmp.ne.s32.totalorder %v1170, 15
      %vm1235 = vcmp.ne.s32.totalorder %v1171, 15
      %vm1236 = vcmp.ne.s32.totalorder %v1172, 15
      %vm1237 = vcmp.ne.s32.totalorder %v1173, 15
      %vm1238 = vcmp.ne.s32.totalorder %v1174, 15
      %vm1239 = vcmp.ne.s32.totalorder %v1175, 15
      %vm1240 = vcmp.ne.s32.totalorder %v1176, 15
      %vm1241 = vcmp.ne.s32.totalorder %v1177, 15
      %vm1242 = vcmp.ne.s32.totalorder %v1178, 15
      %vm1243 = vcmp.ne.s32.totalorder %v1179, 15
      %vm1244 = vcmp.ne.s32.totalorder %v1180, 15
      %vm1245 = vcmp.ne.s32.totalorder %v1181, 15
      %vm1246 = vcmp.ne.s32.totalorder %v1182, 15
      %vm1247 = vcmp.ne.s32.totalorder %v1183, 15
      %vm1248 = vcmp.ne.s32.totalorder %v1184, 15
      %vm1249 = vcmp.ne.s32.totalorder %v1185, 15
      %vm1250 = vcmp.ne.s32.totalorder %v1186, 15
      %vm1251 = vcmp.ne.s32.totalorder %v1187, 15
      %vm1252 = vcmp.ne.s32.totalorder %v1188, 15
      %vm1253 = vcmp.ne.s32.totalorder %v1189, 15
      %vm1254 = vcmp.ne.s32.totalorder %v1190, 15
      %vm1255 = vcmp.ne.s32.totalorder %v1191, 15
      %vm1256 = vcmp.ne.s32.totalorder %v1192, 15
      %vm1257 = vcmp.ne.s32.totalorder %v1193, 15
      %v1258 = vld [vmem:[#allocation2] sm:$0xf8]
      %v1259 = vld [vmem:[#allocation2 + $0x8] sm:$0xff]
      %v1260 = vld [vmem:[#allocation2 + $0x10] sm:$0xff]
      %v1261 = vld [vmem:[#allocation2 + $0x18] sm:$0xff]
      %v1262 = vld [vmem:[#allocation2 + $0x20] sm:$0xff]
      %v1263 = vld [vmem:[#allocation2 + $0x28] sm:$0xff]
      %v1264 = vld [vmem:[#allocation2 + $0x30] sm:$0xff]
      %v1265 = vld [vmem:[#allocation2 + $0x38] sm:$0xff]
      %v1266 = vld [vmem:[#allocation2 + $0x40] sm:$0xff]
      %v1267 = vld [vmem:[#allocation2 + $0x48] sm:$0xff]
      %v1268 = vld [vmem:[#allocation2 + $0x50] sm:$0xff]
      %v1269 = vld [vmem:[#allocation2 + $0x58] sm:$0xff]
      %v1270 = vld [vmem:[#allocation2 + $0x60] sm:$0xff]
      %v1271 = vld [vmem:[#allocation2 + $0x68] sm:$0xff]
      %v1272 = vld [vmem:[#allocation2 + $0x70] sm:$0xff]
      %v1273 = vld [vmem:[#allocation2 + $0x78] sm:$0xff]
      %v1274 = vld [vmem:[#allocation2 + $0x80] sm:$0xf]
      %v1275 = vsel %vm1194, 1, 0
      %v1276 = vsel %vm1195, 1, 0
      %v1277 = vsel %vm1196, 1, 0
      %v1278 = vsel %vm1197, 1, 0
      %v1279 = vsel %vm1198, 1, 0
      %v1280 = vsel %vm1199, 1, 0
      %v1281 = vsel %vm1200, 1, 0
      %v1282 = vsel %vm1201, 1, 0
      %v1283 = vsel %vm1202, 1, 0
      %v1284 = vsel %vm1203, 1, 0
      %v1285 = vsel %vm1204, 1, 0
      %v1286 = vsel %vm1205, 1, 0
      %v1287 = vsel %vm1206, 1, 0
      %v1288 = vsel %vm1207, 1, 0
      %v1289 = vsel %vm1208, 1, 0
      %v1290 = vsel %vm1209, 1, 0
      %v1291 = vsel %vm1210, 1, 0
      %v1292 = vsel %vm1211, 1, 0
      %v1293 = vsel %vm1212, 1, 0
      %v1294 = vsel %vm1213, 1, 0
      %v1295 = vsel %vm1214, 1, 0
      %v1296 = vsel %vm1215, 1, 0
      %v1297 = vsel %vm1216, 1, 0
      %v1298 = vsel %vm1217, 1, 0
      %v1299 = vsel %vm1218, 1, 0
      %v1300 = vsel %vm1219, 1, 0
      %v1301 = vsel %vm1220, 1, 0
      %v1302 = vsel %vm1221, 1, 0
      %v1303 = vsel %vm1222, 1, 0
      %v1304 = vsel %vm1223, 1, 0
      %v1305 = vsel %vm1224, 1, 0
      %v1306 = vsel %vm1225, 1, 0
      %vm1307 = vcmp.eq.s32.totalorder %v1275, 1
      %vm1308 = vcmp.eq.s32.totalorder %v1276, 1
      %vm1309 = vcmp.eq.s32.totalorder %v1277, 1
      %vm1310 = vcmp.eq.s32.totalorder %v1278, 1
      %vm1311 = vcmp.eq.s32.totalorder %v1279, 1
      %vm1312 = vcmp.eq.s32.totalorder %v1280, 1
      %vm1313 = vcmp.eq.s32.totalorder %v1281, 1
      %vm1314 = vcmp.eq.s32.totalorder %v1282, 1
      %vm1315 = vcmp.eq.s32.totalorder %v1283, 1
      %vm1316 = vcmp.eq.s32.totalorder %v1284, 1
      %vm1317 = vcmp.eq.s32.totalorder %v1285, 1
      %vm1318 = vcmp.eq.s32.totalorder %v1286, 1
      %vm1319 = vcmp.eq.s32.totalorder %v1287, 1
      %vm1320 = vcmp.eq.s32.totalorder %v1288, 1
      %vm1321 = vcmp.eq.s32.totalorder %v1289, 1
      %vm1322 = vcmp.eq.s32.totalorder %v1290, 1
      %vm1323 = vcmp.eq.s32.totalorder %v1291, 1
      %vm1324 = vcmp.eq.s32.totalorder %v1292, 1
      %vm1325 = vcmp.eq.s32.totalorder %v1293, 1
      %vm1326 = vcmp.eq.s32.totalorder %v1294, 1
      %vm1327 = vcmp.eq.s32.totalorder %v1295, 1
      %vm1328 = vcmp.eq.s32.totalorder %v1296, 1
      %vm1329 = vcmp.eq.s32.totalorder %v1297, 1
      %vm1330 = vcmp.eq.s32.totalorder %v1298, 1
      %vm1331 = vcmp.eq.s32.totalorder %v1299, 1
      %vm1332 = vcmp.eq.s32.totalorder %v1300, 1
      %vm1333 = vcmp.eq.s32.totalorder %v1301, 1
      %vm1334 = vcmp.eq.s32.totalorder %v1302, 1
      %vm1335 = vcmp.eq.s32.totalorder %v1303, 1
      %vm1336 = vcmp.eq.s32.totalorder %v1304, 1
      %vm1337 = vcmp.eq.s32.totalorder %v1305, 1
      %vm1338 = vcmp.eq.s32.totalorder %v1306, 1
      %vm1339 = vmpackc.low %vm1307, %vm1307
      %vm1340 = vmpackc.low %vm1308, %vm1308
      %vm1341 = vmpackc.low %vm1309, %vm1309
      %vm1342 = vmpackc.low %vm1310, %vm1310
      %vm1343 = vmpackc.low %vm1311, %vm1311
      %vm1344 = vmpackc.low %vm1312, %vm1312
      %vm1345 = vmpackc.low %vm1313, %vm1313
      %vm1346 = vmpackc.low %vm1314, %vm1314
      %vm1347 = vmpackc.low %vm1315, %vm1315
      %vm1348 = vmpackc.low %vm1316, %vm1316
      %vm1349 = vmpackc.low %vm1317, %vm1317
      %vm1350 = vmpackc.low %vm1318, %vm1318
      %vm1351 = vmpackc.low %vm1319, %vm1319
      %vm1352 = vmpackc.low %vm1320, %vm1320
      %vm1353 = vmpackc.low %vm1321, %vm1321
      %vm1354 = vmpackc.low %vm1322, %vm1322
      %vm1355 = vmpackc.low %vm1323, %vm1323
      %vm1356 = vmpackc.low %vm1324, %vm1324
      %vm1357 = vmpackc.low %vm1325, %vm1325
      %vm1358 = vmpackc.low %vm1326, %vm1326
      %vm1359 = vmpackc.low %vm1327, %vm1327
      %vm1360 = vmpackc.low %vm1328, %vm1328
      %vm1361 = vmpackc.low %vm1329, %vm1329
      %vm1362 = vmpackc.low %vm1330, %vm1330
      %vm1363 = vmpackc.low %vm1331, %vm1331
      %vm1364 = vmpackc.low %vm1332, %vm1332
      %vm1365 = vmpackc.low %vm1333, %vm1333
      %vm1366 = vmpackc.low %vm1334, %vm1334
      %vm1367 = vmpackc.low %vm1335, %vm1335
      %vm1368 = vmpackc.low %vm1336, %vm1336
      %vm1369 = vmpackc.low %vm1337, %vm1337
      %vm1370 = vmpackc.low %vm1338, %vm1338
      %v1371 = vsel %vm1339, 65537, 0
      %v1372 = vsel %vm1340, 65537, 0
      %v1373 = vsel %vm1341, 65537, 0
      %v1374 = vsel %vm1342, 65537, 0
      %v1375 = vsel %vm1343, 65537, 0
      %v1376 = vsel %vm1344, 65537, 0
      %v1377 = vsel %vm1345, 65537, 0
      %v1378 = vsel %vm1346, 65537, 0
      %v1379 = vsel %vm1347, 65537, 0
      %v1380 = vsel %vm1348, 65537, 0
      %v1381 = vsel %vm1349, 65537, 0
      %v1382 = vsel %vm1350, 65537, 0
      %v1383 = vsel %vm1351, 65537, 0
      %v1384 = vsel %vm1352, 65537, 0
      %v1385 = vsel %vm1353, 65537, 0
      %v1386 = vsel %vm1354, 65537, 0
      %v1387 = vsel %vm1355, 65537, 0
      %v1388 = vsel %vm1356, 65537, 0
      %v1389 = vsel %vm1357, 65537, 0
      %v1390 = vsel %vm1358, 65537, 0
      %v1391 = vsel %vm1359, 65537, 0
      %v1392 = vsel %vm1360, 65537, 0
      %v1393 = vsel %vm1361, 65537, 0
      %v1394 = vsel %vm1362, 65537, 0
      %v1395 = vsel %vm1363, 65537, 0
      %v1396 = vsel %vm1364, 65537, 0
      %v1397 = vsel %vm1365, 65537, 0
      %v1398 = vsel %vm1366, 65537, 0
      %v1399 = vsel %vm1367, 65537, 0
      %v1400 = vsel %vm1368, 65537, 0
      %v1401 = vsel %vm1369, 65537, 0
      %v1402 = vsel %vm1370, 65537, 0
      %v1403 = vunpack.c.l.b16 %v1371
      %v1404 = vunpack.c.l.b16 %v1372
      %v1405 = vunpack.c.l.b16 %v1373
      %v1406 = vunpack.c.l.b16 %v1374
      %v1407 = vunpack.c.l.b16 %v1375
      %v1408 = vunpack.c.l.b16 %v1376
      %v1409 = vunpack.c.l.b16 %v1377
      %v1410 = vunpack.c.l.b16 %v1378
      %v1411 = vunpack.c.l.b16 %v1379
      %v1412 = vunpack.c.l.b16 %v1380
      %v1413 = vunpack.c.l.b16 %v1381
      %v1414 = vunpack.c.l.b16 %v1382
      %v1415 = vunpack.c.l.b16 %v1383
      %v1416 = vunpack.c.l.b16 %v1384
      %v1417 = vunpack.c.l.b16 %v1385
      %v1418 = vunpack.c.l.b16 %v1386
      %v1419 = vunpack.c.l.b16 %v1387
      %v1420 = vunpack.c.l.b16 %v1388
      %v1421 = vunpack.c.l.b16 %v1389
      %v1422 = vunpack.c.l.b16 %v1390
      %v1423 = vunpack.c.l.b16 %v1391
      %v1424 = vunpack.c.l.b16 %v1392
      %v1425 = vunpack.c.l.b16 %v1393
      %v1426 = vunpack.c.l.b16 %v1394
      %v1427 = vunpack.c.l.b16 %v1395
      %v1428 = vunpack.c.l.b16 %v1396
      %v1429 = vunpack.c.l.b16 %v1397
      %v1430 = vunpack.c.l.b16 %v1398
      %v1431 = vunpack.c.l.b16 %v1399
      %v1432 = vunpack.c.l.b16 %v1400
      %v1433 = vunpack.c.l.b16 %v1401
      %v1434 = vunpack.c.l.b16 %v1402
      %v1435 = vpack.c.b16 %v1404, %v1403
      %v1436 = vpack.c.b16 %v1406, %v1405
      %v1437 = vpack.c.b16 %v1408, %v1407
      %v1438 = vpack.c.b16 %v1410, %v1409
      %v1439 = vpack.c.b16 %v1412, %v1411
      %v1440 = vpack.c.b16 %v1414, %v1413
      %v1441 = vpack.c.b16 %v1416, %v1415
      %v1442 = vpack.c.b16 %v1418, %v1417
      %v1443 = vpack.c.b16 %v1420, %v1419
      %v1444 = vpack.c.b16 %v1422, %v1421
      %v1445 = vpack.c.b16 %v1424, %v1423
      %v1446 = vpack.c.b16 %v1426, %v1425
      %v1447 = vpack.c.b16 %v1428, %v1427
      %v1448 = vpack.c.b16 %v1430, %v1429
      %v1449 = vpack.c.b16 %v1432, %v1431
      %v1450 = vpack.c.b16 %v1434, %v1433
      %vm1451 = vsmask.f32 3328
      %v1453 = vshrl.u32 %v1435, 16
      %v1455 = vrot.slane %v1453, 4
      %v1456 = vshll.u32 %v1435, 16
      %v1458 = vrot.slane %v1456, 5
      %v1459 = vor.u32 %v1455, %v1458
      %v1461 = vshrl.u32 %v1436, 16
      %v1463 = vrot.slane %v1461, 4
      %v1464 = vshll.u32 %v1436, 16
      %v1466 = vrot.slane %v1464, 5
      %v1467 = vor.u32 %v1463, %v1466
      %v1468 = vsel %vm1451, %v1459, %v1467
      %v1470 = vshrl.u32 %v1437, 16
      %v1472 = vrot.slane %v1470, 4
      %v1473 = vshll.u32 %v1437, 16
      %v1475 = vrot.slane %v1473, 5
      %v1476 = vor.u32 %v1472, %v1475
      %v1477 = vsel %vm1451, %v1467, %v1476
      %v1479 = vshrl.u32 %v1438, 16
      %v1481 = vrot.slane %v1479, 4
      %v1482 = vshll.u32 %v1438, 16
      %v1484 = vrot.slane %v1482, 5
      %v1485 = vor.u32 %v1481, %v1484
      %v1486 = vsel %vm1451, %v1476, %v1485
      %v1488 = vshrl.u32 %v1439, 16
      %v1490 = vrot.slane %v1488, 4
      %v1491 = vshll.u32 %v1439, 16
      %v1493 = vrot.slane %v1491, 5
      %v1494 = vor.u32 %v1490, %v1493
      %v1495 = vsel %vm1451, %v1485, %v1494
      %v1497 = vshrl.u32 %v1440, 16
      %v1499 = vrot.slane %v1497, 4
      %v1500 = vshll.u32 %v1440, 16
      %v1502 = vrot.slane %v1500, 5
      %v1503 = vor.u32 %v1499, %v1502
      %v1504 = vsel %vm1451, %v1494, %v1503
      %v1506 = vshrl.u32 %v1441, 16
      %v1508 = vrot.slane %v1506, 4
      %v1509 = vshll.u32 %v1441, 16
      %v1511 = vrot.slane %v1509, 5
      %v1512 = vor.u32 %v1508, %v1511
      %v1513 = vsel %vm1451, %v1503, %v1512
      %v1515 = vshrl.u32 %v1442, 16
      %v1517 = vrot.slane %v1515, 4
      %v1518 = vshll.u32 %v1442, 16
      %v1520 = vrot.slane %v1518, 5
      %v1521 = vor.u32 %v1517, %v1520
      %v1522 = vsel %vm1451, %v1512, %v1521
      %v1524 = vshrl.u32 %v1443, 16
      %v1526 = vrot.slane %v1524, 4
      %v1527 = vshll.u32 %v1443, 16
      %v1529 = vrot.slane %v1527, 5
      %v1530 = vor.u32 %v1526, %v1529
      %v1531 = vsel %vm1451, %v1521, %v1530
      %v1533 = vshrl.u32 %v1444, 16
      %v1535 = vrot.slane %v1533, 4
      %v1536 = vshll.u32 %v1444, 16
      %v1538 = vrot.slane %v1536, 5
      %v1539 = vor.u32 %v1535, %v1538
      %v1540 = vsel %vm1451, %v1530, %v1539
      %v1542 = vshrl.u32 %v1445, 16
      %v1544 = vrot.slane %v1542, 4
      %v1545 = vshll.u32 %v1445, 16
      %v1547 = vrot.slane %v1545, 5
      %v1548 = vor.u32 %v1544, %v1547
      %v1549 = vsel %vm1451, %v1539, %v1548
      %v1551 = vshrl.u32 %v1446, 16
      %v1553 = vrot.slane %v1551, 4
      %v1554 = vshll.u32 %v1446, 16
      %v1556 = vrot.slane %v1554, 5
      %v1557 = vor.u32 %v1553, %v1556
      %v1558 = vsel %vm1451, %v1548, %v1557
      %v1560 = vshrl.u32 %v1447, 16
      %v1562 = vrot.slane %v1560, 4
      %v1563 = vshll.u32 %v1447, 16
      %v1565 = vrot.slane %v1563, 5
      %v1566 = vor.u32 %v1562, %v1565
      %v1567 = vsel %vm1451, %v1557, %v1566
      %v1569 = vshrl.u32 %v1448, 16
      %v1571 = vrot.slane %v1569, 4
      %v1572 = vshll.u32 %v1448, 16
      %v1574 = vrot.slane %v1572, 5
      %v1575 = vor.u32 %v1571, %v1574
      %v1576 = vsel %vm1451, %v1566, %v1575
      %v1578 = vshrl.u32 %v1449, 16
      %v1580 = vrot.slane %v1578, 4
      %v1581 = vshll.u32 %v1449, 16
      %v1583 = vrot.slane %v1581, 5
      %v1584 = vor.u32 %v1580, %v1583
      %v1585 = vsel %vm1451, %v1575, %v1584
      %v1587 = vshrl.u32 %v1450, 16
      %v1589 = vrot.slane %v1587, 4
      %v1590 = vshll.u32 %v1450, 16
      %v1592 = vrot.slane %v1590, 5
      %v1593 = vor.u32 %v1589, %v1592
      %v1594 = vsel %vm1451, %v1584, %v1593
      %vm1595 = vcmp.ne.s16.totalorder %v1459, 0
      %vm1596 = vcmp.ne.s16.totalorder %v1468, 0
      %vm1597 = vcmp.ne.s16.totalorder %v1477, 0
      %vm1598 = vcmp.ne.s16.totalorder %v1486, 0
      %vm1599 = vcmp.ne.s16.totalorder %v1495, 0
      %vm1600 = vcmp.ne.s16.totalorder %v1504, 0
      %vm1601 = vcmp.ne.s16.totalorder %v1513, 0
      %vm1602 = vcmp.ne.s16.totalorder %v1522, 0
      %vm1603 = vcmp.ne.s16.totalorder %v1531, 0
      %vm1604 = vcmp.ne.s16.totalorder %v1540, 0
      %vm1605 = vcmp.ne.s16.totalorder %v1549, 0
      %vm1606 = vcmp.ne.s16.totalorder %v1558, 0
      %vm1607 = vcmp.ne.s16.totalorder %v1567, 0
      %vm1608 = vcmp.ne.s16.totalorder %v1576, 0
      %vm1609 = vcmp.ne.s16.totalorder %v1585, 0
      %vm1610 = vcmp.ne.s16.totalorder %v1594, 0
      %vm1611 = vcmp.ne.s16.totalorder %v1593, 0
      %v1612 = vsel %vm1595, %v1258, 0
      %v1613 = vsel %vm1596, %v1259, 0
      %v1614 = vsel %vm1597, %v1260, 0
      %v1615 = vsel %vm1598, %v1261, 0
      %v1616 = vsel %vm1599, %v1262, 0
      %v1617 = vsel %vm1600, %v1263, 0
      %v1618 = vsel %vm1601, %v1264, 0
      %v1619 = vsel %vm1602, %v1265, 0
      %v1620 = vsel %vm1603, %v1266, 0
      %v1621 = vsel %vm1604, %v1267, 0
      %v1622 = vsel %vm1605, %v1268, 0
      %v1623 = vsel %vm1606, %v1269, 0
      %v1624 = vsel %vm1607, %v1270, 0
      %v1625 = vsel %vm1608, %v1271, 0
      %v1626 = vsel %vm1609, %v1272, 0
      %v1627 = vsel %vm1610, %v1273, 0
      %v1628 = vsel %vm1611, %v1274, 0
      %v1629 = vld [vmem:[%s3] sm:$0xf]
      %v1630 = vld [vmem:[%s3 + $0x4] sm:$0xf]
      %v1631 = vld [vmem:[%s3 + $0x8] sm:$0xf]
      %v1632 = vld [vmem:[%s3 + $0xc] sm:$0xf]
      %v1633 = vld [vmem:[%s3 + $0x10] sm:$0xf]
      %v1634 = vld [vmem:[%s3 + $0x14] sm:$0xf]
      %v1635 = vld [vmem:[%s3 + $0x18] sm:$0xf]
      %v1636 = vld [vmem:[%s3 + $0x1c] sm:$0xf]
      %v1637 = vld [vmem:[%s3 + $0x20] sm:$0xf]
      %v1638 = vld [vmem:[%s3 + $0x24] sm:$0xf]
      %v1639 = vld [vmem:[%s3 + $0x28] sm:$0xf]
      %v1640 = vld [vmem:[%s3 + $0x2c] sm:$0xf]
      %v1641 = vld [vmem:[%s3 + $0x30] sm:$0xf]
      %v1642 = vld [vmem:[%s3 + $0x34] sm:$0xf]
      %v1643 = vld [vmem:[%s3 + $0x38] sm:$0xf]
      %v1644 = vld [vmem:[%s3 + $0x3c] sm:$0xf]
      %v1645 = vld [vmem:[#allocation2] sm:$0xf0]
      %s1646 = scalar_lea.vmem %s3, 64
      %v1647 = vld [vmem:[%s1646] sm:$0xf]
      %v1648 = vld [vmem:[%s1646 + $0x4] sm:$0xf]
      %v1649 = vld [vmem:[%s1646 + $0x8] sm:$0xf]
      %v1650 = vld [vmem:[%s1646 + $0xc] sm:$0xf]
      %v1651 = vld [vmem:[%s1646 + $0x10] sm:$0xf]
      %v1652 = vld [vmem:[%s1646 + $0x14] sm:$0xf]
      %v1653 = vld [vmem:[%s1646 + $0x18] sm:$0xf]
      %v1654 = vld [vmem:[%s1646 + $0x1c] sm:$0xf]
      %v1655 = vld [vmem:[%s1646 + $0x20] sm:$0xf]
      %v1656 = vld [vmem:[%s1646 + $0x24] sm:$0xf]
      %v1657 = vld [vmem:[%s1646 + $0x28] sm:$0xf]
      %v1658 = vld [vmem:[%s1646 + $0x2c] sm:$0xf]
      %v1659 = vld [vmem:[%s1646 + $0x30] sm:$0xf]
      %v1660 = vld [vmem:[%s1646 + $0x34] sm:$0xf]
      %v1661 = vld [vmem:[%s1646 + $0x38] sm:$0xf]
      %v1662 = vld [vmem:[%s1646 + $0x3c] sm:$0xf]
      %v1680 = vrot.slane %v1645, 4
      %v1681 = vrot.slane %v1259, 4
      %v1682 = vsel %vm640, %v1680, %v1681
      %v1683 = vrot.slane %v1260, 4
      %v1684 = vsel %vm640, %v1681, %v1683
      %v1685 = vrot.slane %v1261, 4
      %v1686 = vsel %vm640, %v1683, %v1685
      %v1687 = vrot.slane %v1262, 4
      %v1688 = vsel %vm640, %v1685, %v1687
      %v1689 = vrot.slane %v1263, 4
      %v1690 = vsel %vm640, %v1687, %v1689
      %v1691 = vrot.slane %v1264, 4
      %v1692 = vsel %vm640, %v1689, %v1691
      %v1693 = vrot.slane %v1265, 4
      %v1694 = vsel %vm640, %v1691, %v1693
      %v1695 = vrot.slane %v1266, 4
      %v1696 = vsel %vm640, %v1693, %v1695
      %v1697 = vrot.slane %v1267, 4
      %v1698 = vsel %vm640, %v1695, %v1697
      %v1699 = vrot.slane %v1268, 4
      %v1700 = vsel %vm640, %v1697, %v1699
      %v1701 = vrot.slane %v1269, 4
      %v1702 = vsel %vm640, %v1699, %v1701
      %v1703 = vrot.slane %v1270, 4
      %v1704 = vsel %vm640, %v1701, %v1703
      %v1705 = vrot.slane %v1271, 4
      %v1706 = vsel %vm640, %v1703, %v1705
      %v1707 = vrot.slane %v1272, 4
      %v1708 = vsel %vm640, %v1705, %v1707
      %v1709 = vrot.slane %v1273, 4
      %v1710 = vsel %vm640, %v1707, %v1709
      %v1711 = vrot.slane %v1274, 4
      %v1712 = vsel %vm640, %v1709, %v1711
      %v1745 = vunpack.c.l.b16 %v1647
      %v1746 = vunpack.c.l.b16 %v1648
      %v1747 = vunpack.c.l.b16 %v1649
      %v1748 = vunpack.c.l.b16 %v1650
      %v1749 = vunpack.c.l.b16 %v1651
      %v1750 = vunpack.c.l.b16 %v1652
      %v1751 = vunpack.c.l.b16 %v1653
      %v1752 = vunpack.c.l.b16 %v1654
      %v1753 = vunpack.c.l.b16 %v1655
      %v1754 = vunpack.c.l.b16 %v1656
      %v1755 = vunpack.c.l.b16 %v1657
      %v1756 = vunpack.c.l.b16 %v1658
      %v1757 = vunpack.c.l.b16 %v1659
      %v1758 = vunpack.c.l.b16 %v1660
      %v1759 = vunpack.c.l.b16 %v1661
      %v1760 = vunpack.c.l.b16 %v1662
      %v1761 = vpack.c.b16 %v1746, %v1745
      %v1762 = vpack.c.b16 %v1748, %v1747
      %v1763 = vpack.c.b16 %v1750, %v1749
      %v1764 = vpack.c.b16 %v1752, %v1751
      %v1765 = vpack.c.b16 %v1754, %v1753
      %v1766 = vpack.c.b16 %v1756, %v1755
      %v1767 = vpack.c.b16 %v1758, %v1757
      %v1768 = vpack.c.b16 %v1760, %v1759
      %1777 = vmatprep.subr.bf16.mxu0 0
      %1778 = vmatpush1.bf16.msra.mxu0 %v1761
      %1779 = vmatprep.subr.bf16.mxu0 0
      %1780 = vmatpush1.bf16.msra.mxu0 %v1762
      %1781 = vmatprep.subr.bf16.mxu0 0
      %1782 = vmatpush1.bf16.msra.mxu0 %v1763
      %1783 = vmatprep.subr.bf16.mxu0 0
      %1784 = vmatpush1.bf16.msra.mxu0 %v1764
      %1785 = vmatprep.subr.bf16.mxu0 0
      %1786 = vmatpush1.bf16.msra.mxu0 %v1765
      %1787 = vmatprep.subr.bf16.mxu0 0
      %1788 = vmatpush1.bf16.msra.mxu0 %v1766
      %1789 = vmatprep.subr.bf16.mxu0 0
      %1790 = vmatpush1.bf16.msra.mxu0 %v1767
      %1791 = vmatprep.subr.bf16.mxu0 0
      %1792 = vmatpush1.bf16.msra.mxu0 %v1768
      %1793 = vmatprep.subr.bf16.mxu0 0
      %1794 = vmatpush1.bf16.msra.mxu0 0
      %1795 = vmatprep.subr.bf16.mxu0 0
      %1796 = vmatpush1.bf16.msra.mxu0 0
      %1797 = vmatprep.subr.bf16.mxu0 0
      %1798 = vmatpush1.bf16.msra.mxu0 0
      %1799 = vmatprep.subr.bf16.mxu0 0
      %1800 = vmatpush1.bf16.msra.mxu0 0
      %1801 = vmatprep.subr.bf16.mxu0 0
      %1802 = vmatpush1.bf16.msra.mxu0 0
      %1803 = vmatprep.subr.bf16.mxu0 0
      %1804 = vmatpush1.bf16.msra.mxu0 0
      %1805 = vmatprep.subr.bf16.mxu0 0
      %1806 = vmatpush1.bf16.msra.mxu0 0
      %1807 = vmatprep.subr.bf16.mxu0 0
      %1808 = vmatpush1.bf16.msra.mxu0 0
      %1809 = vmatprep.mubr.bf16.mxu0 0
      %1810 = vmatmul.mubr.bf16.gmra.mrb[0].mxu0 %v1682
      %v1811 = vpop.f32.mrb[0].mxu0
      %v1812 = vadd.f32 0.0, %v1811
      %v1813 = vpop.f32.mrb[0].mxu0
      %v1814 = vpop.f32.mrb[0].mxu0
      %v1815 = vadd.f32 0.0, %v1814
      %v1816 = vpop.f32.mrb[0].mxu0
      %1817 = vmatprep.mubr.bf16.mxu0 0
      %1818 = vmatmul.mubr.bf16.gmra.mrb[0].mxu0 %v1684
      %v1819 = vpop.f32.mrb[0].mxu0
      %v1820 = vadd.f32 0.0, %v1819
      %v1821 = vpop.f32.mrb[0].mxu0
      %v1822 = vpop.f32.mrb[0].mxu0
      %v1823 = vadd.f32 0.0, %v1822
      %v1824 = vpop.f32.mrb[0].mxu0
      %1825 = vmatprep.mubr.bf16.mxu0 0
      %1826 = vmatmul.mubr.bf16.gmra.mrb[0].mxu0 %v1686
      %v1827 = vpop.f32.mrb[0].mxu0
      %v1828 = vadd.f32 0.0, %v1827
      %v1829 = vpop.f32.mrb[0].mxu0
      %v1830 = vpop.f32.mrb[0].mxu0
      %v1831 = vadd.f32 0.0, %v1830
      %v1832 = vpop.f32.mrb[0].mxu0
      %1833 = vmatprep.mubr.bf16.mxu0 0
      %1834 = vmatmul.mubr.bf16.gmra.mrb[0].mxu0 %v1688
      %v1835 = vpop.f32.mrb[0].mxu0
      %v1836 = vadd.f32 0.0, %v1835
      %v1837 = vpop.f32.mrb[0].mxu0
      %v1838 = vpop.f32.mrb[0].mxu0
      %v1839 = vadd.f32 0.0, %v1838
      %v1840 = vpop.f32.mrb[0].mxu0
      %1841 = vmatprep.mubr.bf16.mxu0 0
      %1842 = vmatmul.mubr.bf16.gmra.mrb[0].mxu0 %v1690
      %v1843 = vpop.f32.mrb[0].mxu0
      %v1844 = vadd.f32 0.0, %v1843
      %v1845 = vpop.f32.mrb[0].mxu0
      %v1846 = vpop.f32.mrb[0].mxu0
      %v1847 = vadd.f32 0.0, %v1846
      %v1848 = vpop.f32.mrb[0].mxu0
      %1849 = vmatprep.mubr.bf16.mxu0 0
      %1850 = vmatmul.mubr.bf16.gmra.mrb[0].mxu0 %v1692
      %v1851 = vpop.f32.mrb[0].mxu0
      %v1852 = vadd.f32 0.0, %v1851
      %v1853 = vpop.f32.mrb[0].mxu0
      %v1854 = vpop.f32.mrb[0].mxu0
      %v1855 = vadd.f32 0.0, %v1854
      %v1856 = vpop.f32.mrb[0].mxu0
      %1857 = vmatprep.mubr.bf16.mxu0 0
      %1858 = vmatmul.mubr.bf16.gmra.mrb[0].mxu0 %v1694
      %v1859 = vpop.f32.mrb[0].mxu0
      %v1860 = vadd.f32 0.0, %v1859
      %v1861 = vpop.f32.mrb[0].mxu0
      %v1862 = vpop.f32.mrb[0].mxu0
      %v1863 = vadd.f32 0.0, %v1862
      %v1864 = vpop.f32.mrb[0].mxu0
      %1865 = vmatprep.mubr.bf16.mxu0 0
      %1866 = vmatmul.mubr.bf16.gmra.mrb[0].mxu0 %v1696
      %v1867 = vpop.f32.mrb[0].mxu0
      %v1868 = vadd.f32 0.0, %v1867
      %v1869 = vpop.f32.mrb[0].mxu0
      %v1870 = vpop.f32.mrb[0].mxu0
      %v1871 = vadd.f32 0.0, %v1870
      %v1872 = vpop.f32.mrb[0].mxu0
      %1873 = vmatprep.mubr.bf16.mxu0 0
      %1874 = vmatmul.mubr.bf16.gmra.mrb[0].mxu0 %v1698
      %v1875 = vpop.f32.mrb[0].mxu0
      %v1876 = vadd.f32 0.0, %v1875
      %v1877 = vpop.f32.mrb[0].mxu0
      %v1878 = vpop.f32.mrb[0].mxu0
      %v1879 = vadd.f32 0.0, %v1878
      %v1880 = vpop.f32.mrb[0].mxu0
      %1881 = vmatprep.mubr.bf16.mxu0 0
      %1882 = vmatmul.mubr.bf16.gmra.mrb[0].mxu0 %v1700
      %v1883 = vpop.f32.mrb[0].mxu0
      %v1884 = vadd.f32 0.0, %v1883
      %v1885 = vpop.f32.mrb[0].mxu0
      %v1886 = vpop.f32.mrb[0].mxu0
      %v1887 = vadd.f32 0.0, %v1886
      %v1888 = vpop.f32.mrb[0].mxu0
      %1889 = vmatprep.mubr.bf16.mxu0 0
      %1890 = vmatmul.mubr.bf16.gmra.mrb[0].mxu0 %v1702
      %v1891 = vpop.f32.mrb[0].mxu0
      %v1892 = vadd.f32 0.0, %v1891
      %v1893 = vpop.f32.mrb[0].mxu0
      %v1894 = vpop.f32.mrb[0].mxu0
      %v1895 = vadd.f32 0.0, %v1894
      %v1896 = vpop.f32.mrb[0].mxu0
      %1897 = vmatprep.mubr.bf16.mxu0 0
      %1898 = vmatmul.mubr.bf16.gmra.mrb[0].mxu0 %v1704
      %v1899 = vpop.f32.mrb[0].mxu0
      %v1900 = vadd.f32 0.0, %v1899
      %v1901 = vpop.f32.mrb[0].mxu0
      %v1902 = vpop.f32.mrb[0].mxu0
      %v1903 = vadd.f32 0.0, %v1902
      %v1904 = vpop.f32.mrb[0].mxu0
      %1905 = vmatprep.mubr.bf16.mxu0 0
      %1906 = vmatmul.mubr.bf16.gmra.mrb[0].mxu0 %v1706
      %v1907 = vpop.f32.mrb[0].mxu0
      %v1908 = vadd.f32 0.0, %v1907
      %v1909 = vpop.f32.mrb[0].mxu0
      %v1910 = vpop.f32.mrb[0].mxu0
      %v1911 = vadd.f32 0.0, %v1910
      %v1912 = vpop.f32.mrb[0].mxu0
      %1913 = vmatprep.mubr.bf16.mxu0 0
      %1914 = vmatmul.mubr.bf16.gmra.mrb[0].mxu0 %v1708
      %v1915 = vpop.f32.mrb[0].mxu0
      %v1916 = vadd.f32 0.0, %v1915
      %v1917 = vpop.f32.mrb[0].mxu0
      %v1918 = vpop.f32.mrb[0].mxu0
      %v1919 = vadd.f32 0.0, %v1918
      %v1920 = vpop.f32.mrb[0].mxu0
      %1921 = vmatprep.mubr.bf16.mxu0 0
      %1922 = vmatmul.mubr.bf16.gmra.mrb[0].mxu0 %v1710
      %v1923 = vpop.f32.mrb[0].mxu0
      %v1924 = vadd.f32 0.0, %v1923
      %v1925 = vpop.f32.mrb[0].mxu0
      %v1926 = vpop.f32.mrb[0].mxu0
      %v1927 = vadd.f32 0.0, %v1926
      %v1928 = vpop.f32.mrb[0].mxu0
      %1929 = vmatprep.mubr.bf16.mxu0 0
      %1930 = vmatmul.mubr.bf16.gmra.mrb[0].mxu0 %v1712
      %v1931 = vpop.f32.mrb[0].mxu0
      %v1932 = vadd.f32 0.0, %v1931
      %v1933 = vpop.f32.mrb[0].mxu0
      %v1934 = vpop.f32.mrb[0].mxu0
      %v1935 = vadd.f32 0.0, %v1934
      %v1936 = vpop.f32.mrb[0].mxu0
      %1937 = vdwg.mxu0
      %vm1938 = vsmask.f32 4352
      %v1940 = vshrl.u32 %v1612, 16
      %v1942 = vrot.slane %v1940, 3
      %v1943 = vshll.u32 %v1612, 16
      %v1945 = vrot.slane %v1943, 4
      %v1946 = vor.u32 %v1942, %v1945
      %v1948 = vshrl.u32 %v1613, 16
      %v1950 = vrot.slane %v1948, 3
      %v1951 = vshll.u32 %v1613, 16
      %v1953 = vrot.slane %v1951, 4
      %v1954 = vor.u32 %v1950, %v1953
      %v1955 = vsel %vm1938, %v1946, %v1954
      %v1957 = vshrl.u32 %v1614, 16
      %v1959 = vrot.slane %v1957, 3
      %v1960 = vshll.u32 %v1614, 16
      %v1962 = vrot.slane %v1960, 4
      %v1963 = vor.u32 %v1959, %v1962
      %v1964 = vsel %vm1938, %v1954, %v1963
      %v1966 = vshrl.u32 %v1615, 16
      %v1968 = vrot.slane %v1966, 3
      %v1969 = vshll.u32 %v1615, 16
      %v1971 = vrot.slane %v1969, 4
      %v1972 = vor.u32 %v1968, %v1971
      %v1973 = vsel %vm1938, %v1963, %v1972
      %v1975 = vshrl.u32 %v1616, 16
      %v1977 = vrot.slane %v1975, 3
      %v1978 = vshll.u32 %v1616, 16
      %v1980 = vrot.slane %v1978, 4
      %v1981 = vor.u32 %v1977, %v1980
      %v1982 = vsel %vm1938, %v1972, %v1981
      %v1984 = vshrl.u32 %v1617, 16
      %v1986 = vrot.slane %v1984, 3
      %v1987 = vshll.u32 %v1617, 16
      %v1989 = vrot.slane %v1987, 4
      %v1990 = vor.u32 %v1986, %v1989
      %v1991 = vsel %vm1938, %v1981, %v1990
      %v1993 = vshrl.u32 %v1618, 16
      %v1995 = vrot.slane %v1993, 3
      %v1996 = vshll.u32 %v1618, 16
      %v1998 = vrot.slane %v1996, 4
      %v1999 = vor.u32 %v1995, %v1998
      %v2000 = vsel %vm1938, %v1990, %v1999
      %v2002 = vshrl.u32 %v1619, 16
      %v2004 = vrot.slane %v2002, 3
      %v2005 = vshll.u32 %v1619, 16
      %v2007 = vrot.slane %v2005, 4
      %v2008 = vor.u32 %v2004, %v2007
      %v2009 = vsel %vm1938, %v1999, %v2008
      %v2011 = vshrl.u32 %v1620, 16
      %v2013 = vrot.slane %v2011, 3
      %v2014 = vshll.u32 %v1620, 16
      %v2016 = vrot.slane %v2014, 4
      %v2017 = vor.u32 %v2013, %v2016
      %v2018 = vsel %vm1938, %v2008, %v2017
      %v2020 = vshrl.u32 %v1621, 16
      %v2022 = vrot.slane %v2020, 3
      %v2023 = vshll.u32 %v1621, 16
      %v2025 = vrot.slane %v2023, 4
      %v2026 = vor.u32 %v2022, %v2025
      %v2027 = vsel %vm1938, %v2017, %v2026
      %v2029 = vshrl.u32 %v1622, 16
      %v2031 = vrot.slane %v2029, 3
      %v2032 = vshll.u32 %v1622, 16
      %v2034 = vrot.slane %v2032, 4
      %v2035 = vor.u32 %v2031, %v2034
      %v2036 = vsel %vm1938, %v2026, %v2035
      %v2038 = vshrl.u32 %v1623, 16
      %v2040 = vrot.slane %v2038, 3
      %v2041 = vshll.u32 %v1623, 16
      %v2043 = vrot.slane %v2041, 4
      %v2044 = vor.u32 %v2040, %v2043
      %v2045 = vsel %vm1938, %v2035, %v2044
      %v2047 = vshrl.u32 %v1624, 16
      %v2049 = vrot.slane %v2047, 3
      %v2050 = vshll.u32 %v1624, 16
      %v2052 = vrot.slane %v2050, 4
      %v2053 = vor.u32 %v2049, %v2052
      %v2054 = vsel %vm1938, %v2044, %v2053
      %v2056 = vshrl.u32 %v1625, 16
      %v2058 = vrot.slane %v2056, 3
      %v2059 = vshll.u32 %v1625, 16
      %v2061 = vrot.slane %v2059, 4
      %v2062 = vor.u32 %v2058, %v2061
      %v2063 = vsel %vm1938, %v2053, %v2062
      %v2065 = vshrl.u32 %v1626, 16
      %v2067 = vrot.slane %v2065, 3
      %v2068 = vshll.u32 %v1626, 16
      %v2070 = vrot.slane %v2068, 4
      %v2071 = vor.u32 %v2067, %v2070
      %v2072 = vsel %vm1938, %v2062, %v2071
      %v2074 = vshrl.u32 %v1627, 16
      %v2076 = vrot.slane %v2074, 3
      %v2077 = vshll.u32 %v1627, 16
      %v2079 = vrot.slane %v2077, 4
      %v2080 = vor.u32 %v2076, %v2079
      %v2081 = vsel %vm1938, %v2071, %v2080
      %v2083 = vshrl.u32 %v1628, 16
      %v2085 = vrot.slane %v2083, 3
      %v2086 = vshll.u32 %v1628, 16
      %v2088 = vrot.slane %v2086, 4
      %v2089 = vor.u32 %v2085, %v2088
      %v2090 = vsel %vm1938, %v2080, %v2089
      %v2123 = vunpack.c.l.b16 %v1629
      %v2124 = vunpack.c.l.b16 %v1630
      %v2125 = vunpack.c.l.b16 %v1631
      %v2126 = vunpack.c.l.b16 %v1632
      %v2127 = vunpack.c.l.b16 %v1633
      %v2128 = vunpack.c.l.b16 %v1634
      %v2129 = vunpack.c.l.b16 %v1635
      %v2130 = vunpack.c.l.b16 %v1636
      %v2131 = vunpack.c.l.b16 %v1637
      %v2132 = vunpack.c.l.b16 %v1638
      %v2133 = vunpack.c.l.b16 %v1639
      %v2134 = vunpack.c.l.b16 %v1640
      %v2135 = vunpack.c.l.b16 %v1641
      %v2136 = vunpack.c.l.b16 %v1642
      %v2137 = vunpack.c.l.b16 %v1643
      %v2138 = vunpack.c.l.b16 %v1644
      %v2139 = vpack.c.b16 %v2124, %v2123
      %v2140 = vpack.c.b16 %v2126, %v2125
      %v2141 = vpack.c.b16 %v2128, %v2127
      %v2142 = vpack.c.b16 %v2130, %v2129
      %v2143 = vpack.c.b16 %v2132, %v2131
      %v2144 = vpack.c.b16 %v2134, %v2133
      %v2145 = vpack.c.b16 %v2136, %v2135
      %v2146 = vpack.c.b16 %v2138, %v2137
      %2155 = vmatprep.subr.bf16.mxu0 0
      %2156 = vmatpush1.bf16.msra.mxu0 %v2139
      %2157 = vmatprep.subr.bf16.mxu0 0
      %2158 = vmatpush1.bf16.msra.mxu0 %v2140
      %2159 = vmatprep.subr.bf16.mxu0 0
      %2160 = vmatpush1.bf16.msra.mxu0 %v2141
      %2161 = vmatprep.subr.bf16.mxu0 0
      %2162 = vmatpush1.bf16.msra.mxu0 %v2142
      %2163 = vmatprep.subr.bf16.mxu0 0
      %2164 = vmatpush1.bf16.msra.mxu0 %v2143
      %2165 = vmatprep.subr.bf16.mxu0 0
      %2166 = vmatpush1.bf16.msra.mxu0 %v2144
      %2167 = vmatprep.subr.bf16.mxu0 0
      %2168 = vmatpush1.bf16.msra.mxu0 %v2145
      %2169 = vmatprep.subr.bf16.mxu0 0
      %2170 = vmatpush1.bf16.msra.mxu0 %v2146
      %2171 = vmatprep.subr.bf16.mxu0 0
      %2172 = vmatpush1.bf16.msra.mxu0 0
      %2173 = vmatprep.subr.bf16.mxu0 0
      %2174 = vmatpush1.bf16.msra.mxu0 0
      %2175 = vmatprep.subr.bf16.mxu0 0
      %2176 = vmatpush1.bf16.msra.mxu0 0
      %2177 = vmatprep.subr.bf16.mxu0 0
      %2178 = vmatpush1.bf16.msra.mxu0 0
      %2179 = vmatprep.subr.bf16.mxu0 0
      %2180 = vmatpush1.bf16.msra.mxu0 0
      %2181 = vmatprep.subr.bf16.mxu0 0
      %2182 = vmatpush1.bf16.msra.mxu0 0
      %2183 = vmatprep.subr.bf16.mxu0 0
      %2184 = vmatpush1.bf16.msra.mxu0 0
      %2185 = vmatprep.subr.bf16.mxu0 0
      %2186 = vmatpush1.bf16.msra.mxu0 0
      %2187 = vmatprep.mubr.bf16.mxu0 0
      %2188 = vmatmul.mubr.bf16.gmra.mrb[0].mxu0 %v1955
      %v2189 = vpop.f32.mrb[0].mxu0
      %v2190 = vadd.f32 %v1812, %v2189
      %v2191 = vpop.f32.mrb[0].mxu0
      %v2192 = vpop.f32.mrb[0].mxu0
      %v2193 = vadd.f32 %v1815, %v2192
      %v2194 = vpop.f32.mrb[0].mxu0
      %2195 = vmatprep.mubr.bf16.mxu0 0
      %2196 = vmatmul.mubr.bf16.gmra.mrb[0].mxu0 %v1964
      %v2197 = vpop.f32.mrb[0].mxu0
      %v2198 = vadd.f32 %v1820, %v2197
      %v2199 = vpop.f32.mrb[0].mxu0
      %v2200 = vpop.f32.mrb[0].mxu0
      %v2201 = vadd.f32 %v1823, %v2200
      %v2202 = vpop.f32.mrb[0].mxu0
      %2203 = vmatprep.mubr.bf16.mxu0 0
      %2204 = vmatmul.mubr.bf16.gmra.mrb[0].mxu0 %v1973
      %v2205 = vpop.f32.mrb[0].mxu0
      %v2206 = vadd.f32 %v1828, %v2205
      %v2207 = vpop.f32.mrb[0].mxu0
      %v2208 = vpop.f32.mrb[0].mxu0
      %v2209 = vadd.f32 %v1831, %v2208
      %v2210 = vpop.f32.mrb[0].mxu0
      %2211 = vmatprep.mubr.bf16.mxu0 0
      %2212 = vmatmul.mubr.bf16.gmra.mrb[0].mxu0 %v1982
      %v2213 = vpop.f32.mrb[0].mxu0
      %v2214 = vadd.f32 %v1836, %v2213
      %v2215 = vpop.f32.mrb[0].mxu0
      %v2216 = vpop.f32.mrb[0].mxu0
      %v2217 = vadd.f32 %v1839, %v2216
      %v2218 = vpop.f32.mrb[0].mxu0
      %2219 = vmatprep.mubr.bf16.mxu0 0
      %2220 = vmatmul.mubr.bf16.gmra.mrb[0].mxu0 %v1991
      %v2221 = vpop.f32.mrb[0].mxu0
      %v2222 = vadd.f32 %v1844, %v2221
      %v2223 = vpop.f32.mrb[0].mxu0
      %v2224 = vpop.f32.mrb[0].mxu0
      %v2225 = vadd.f32 %v1847, %v2224
      %v2226 = vpop.f32.mrb[0].mxu0
      %2227 = vmatprep.mubr.bf16.mxu0 0
      %2228 = vmatmul.mubr.bf16.gmra.mrb[0].mxu0 %v2000
      %v2229 = vpop.f32.mrb[0].mxu0
      %v2230 = vadd.f32 %v1852, %v2229
      %v2231 = vpop.f32.mrb[0].mxu0
      %v2232 = vpop.f32.mrb[0].mxu0
      %v2233 = vadd.f32 %v1855, %v2232
      %v2234 = vpop.f32.mrb[0].mxu0
      %2235 = vmatprep.mubr.bf16.mxu0 0
      %2236 = vmatmul.mubr.bf16.gmra.mrb[0].mxu0 %v2009
      %v2237 = vpop.f32.mrb[0].mxu0
      %v2238 = vadd.f32 %v1860, %v2237
      %v2239 = vpop.f32.mrb[0].mxu0
      %v2240 = vpop.f32.mrb[0].mxu0
      %v2241 = vadd.f32 %v1863, %v2240
      %v2242 = vpop.f32.mrb[0].mxu0
      %2243 = vmatprep.mubr.bf16.mxu0 0
      %2244 = vmatmul.mubr.bf16.gmra.mrb[0].mxu0 %v2018
      %v2245 = vpop.f32.mrb[0].mxu0
      %v2246 = vadd.f32 %v1868, %v2245
      %v2247 = vpop.f32.mrb[0].mxu0
      %v2248 = vpop.f32.mrb[0].mxu0
      %v2249 = vadd.f32 %v1871, %v2248
      %v2250 = vpop.f32.mrb[0].mxu0
      %2251 = vmatprep.mubr.bf16.mxu0 0
      %2252 = vmatmul.mubr.bf16.gmra.mrb[0].mxu0 %v2027
      %v2253 = vpop.f32.mrb[0].mxu0
      %v2254 = vadd.f32 %v1876, %v2253
      %v2255 = vpop.f32.mrb[0].mxu0
      %v2256 = vpop.f32.mrb[0].mxu0
      %v2257 = vadd.f32 %v1879, %v2256
      %v2258 = vpop.f32.mrb[0].mxu0
      %2259 = vmatprep.mubr.bf16.mxu0 0
      %2260 = vmatmul.mubr.bf16.gmra.mrb[0].mxu0 %v2036
      %v2261 = vpop.f32.mrb[0].mxu0
      %v2262 = vadd.f32 %v1884, %v2261
      %v2263 = vpop.f32.mrb[0].mxu0
      %v2264 = vpop.f32.mrb[0].mxu0
      %v2265 = vadd.f32 %v1887, %v2264
      %v2266 = vpop.f32.mrb[0].mxu0
      %2267 = vmatprep.mubr.bf16.mxu0 0
      %2268 = vmatmul.mubr.bf16.gmra.mrb[0].mxu0 %v2045
      %v2269 = vpop.f32.mrb[0].mxu0
      %v2270 = vadd.f32 %v1892, %v2269
      %v2271 = vpop.f32.mrb[0].mxu0
      %v2272 = vpop.f32.mrb[0].mxu0
      %v2273 = vadd.f32 %v1895, %v2272
      %v2274 = vpop.f32.mrb[0].mxu0
      %2275 = vmatprep.mubr.bf16.mxu0 0
      %2276 = vmatmul.mubr.bf16.gmra.mrb[0].mxu0 %v2054
      %v2277 = vpop.f32.mrb[0].mxu0
      %v2278 = vadd.f32 %v1900, %v2277
      %v2279 = vpop.f32.mrb[0].mxu0
      %v2280 = vpop.f32.mrb[0].mxu0
      %v2281 = vadd.f32 %v1903, %v2280
      %v2282 = vpop.f32.mrb[0].mxu0
      %2283 = vmatprep.mubr.bf16.mxu0 0
      %2284 = vmatmul.mubr.bf16.gmra.mrb[0].mxu0 %v2063
      %v2285 = vpop.f32.mrb[0].mxu0
      %v2286 = vadd.f32 %v1908, %v2285
      %v2287 = vpop.f32.mrb[0].mxu0
      %v2288 = vpop.f32.mrb[0].mxu0
      %v2289 = vadd.f32 %v1911, %v2288
      %v2290 = vpop.f32.mrb[0].mxu0
      %2291 = vmatprep.mubr.bf16.mxu0 0
      %2292 = vmatmul.mubr.bf16.gmra.mrb[0].mxu0 %v2072
      %v2293 = vpop.f32.mrb[0].mxu0
      %v2294 = vadd.f32 %v1916, %v2293
      %v2295 = vpop.f32.mrb[0].mxu0
      %v2296 = vpop.f32.mrb[0].mxu0
      %v2297 = vadd.f32 %v1919, %v2296
      %v2298 = vpop.f32.mrb[0].mxu0
      %2299 = vmatprep.mubr.bf16.mxu0 0
      %2300 = vmatmul.mubr.bf16.gmra.mrb[0].mxu0 %v2081
      %v2301 = vpop.f32.mrb[0].mxu0
      %v2302 = vadd.f32 %v1924, %v2301
      %v2303 = vpop.f32.mrb[0].mxu0
      %v2304 = vpop.f32.mrb[0].mxu0
      %v2305 = vadd.f32 %v1927, %v2304
      %v2306 = vpop.f32.mrb[0].mxu0
      %2307 = vmatprep.mubr.bf16.mxu0 0
      %2308 = vmatmul.mubr.bf16.gmra.mrb[0].mxu0 %v2090
      %v2309 = vpop.f32.mrb[0].mxu0
      %v2310 = vadd.f32 %v1932, %v2309
      %v2311 = vpop.f32.mrb[0].mxu0
      %v2312 = vpop.f32.mrb[0].mxu0
      %v2313 = vadd.f32 %v1935, %v2312
      %v2314 = vpop.f32.mrb[0].mxu0
      %2315 = vdwg.mxu0
      %v2316 = vld [vmem:[#allocation2 + $0x80] sm:$0x1f]
      %v2317 = vsel %vm1226, 1, 0
      %v2318 = vsel %vm1227, 1, 0
      %v2319 = vsel %vm1228, 1, 0
      %v2320 = vsel %vm1229, 1, 0
      %v2321 = vsel %vm1230, 1, 0
      %v2322 = vsel %vm1231, 1, 0
      %v2323 = vsel %vm1232, 1, 0
      %v2324 = vsel %vm1233, 1, 0
      %v2325 = vsel %vm1234, 1, 0
      %v2326 = vsel %vm1235, 1, 0
      %v2327 = vsel %vm1236, 1, 0
      %v2328 = vsel %vm1237, 1, 0
      %v2329 = vsel %vm1238, 1, 0
      %v2330 = vsel %vm1239, 1, 0
      %v2331 = vsel %vm1240, 1, 0
      %v2332 = vsel %vm1241, 1, 0
      %v2333 = vsel %vm1242, 1, 0
      %v2334 = vsel %vm1243, 1, 0
      %v2335 = vsel %vm1244, 1, 0
      %v2336 = vsel %vm1245, 1, 0
      %v2337 = vsel %vm1246, 1, 0
      %v2338 = vsel %vm1247, 1, 0
      %v2339 = vsel %vm1248, 1, 0
      %v2340 = vsel %vm1249, 1, 0
      %v2341 = vsel %vm1250, 1, 0
      %v2342 = vsel %vm1251, 1, 0
      %v2343 = vsel %vm1252, 1, 0
      %v2344 = vsel %vm1253, 1, 0
      %v2345 = vsel %vm1254, 1, 0
      %v2346 = vsel %vm1255, 1, 0
      %v2347 = vsel %vm1256, 1, 0
      %v2348 = vsel %vm1257, 1, 0
      %vm2349 = vcmp.eq.s32.totalorder %v2317, 1
      %vm2350 = vcmp.eq.s32.totalorder %v2318, 1
      %vm2351 = vcmp.eq.s32.totalorder %v2319, 1
      %vm2352 = vcmp.eq.s32.totalorder %v2320, 1
      %vm2353 = vcmp.eq.s32.totalorder %v2321, 1
      %vm2354 = vcmp.eq.s32.totalorder %v2322, 1
      %vm2355 = vcmp.eq.s32.totalorder %v2323, 1
      %vm2356 = vcmp.eq.s32.totalorder %v2324, 1
      %vm2357 = vcmp.eq.s32.totalorder %v2325, 1
      %vm2358 = vcmp.eq.s32.totalorder %v2326, 1
      %vm2359 = vcmp.eq.s32.totalorder %v2327, 1
      %vm2360 = vcmp.eq.s32.totalorder %v2328, 1
      %vm2361 = vcmp.eq.s32.totalorder %v2329, 1
      %vm2362 = vcmp.eq.s32.totalorder %v2330, 1
      %vm2363 = vcmp.eq.s32.totalorder %v2331, 1
      %vm2364 = vcmp.eq.s32.totalorder %v2332, 1
      %vm2365 = vcmp.eq.s32.totalorder %v2333, 1
      %vm2366 = vcmp.eq.s32.totalorder %v2334, 1
      %vm2367 = vcmp.eq.s32.totalorder %v2335, 1
      %vm2368 = vcmp.eq.s32.totalorder %v2336, 1
      %vm2369 = vcmp.eq.s32.totalorder %v2337, 1
      %vm2370 = vcmp.eq.s32.totalorder %v2338, 1
      %vm2371 = vcmp.eq.s32.totalorder %v2339, 1
      %vm2372 = vcmp.eq.s32.totalorder %v2340, 1
      %vm2373 = vcmp.eq.s32.totalorder %v2341, 1
      %vm2374 = vcmp.eq.s32.totalorder %v2342, 1
      %vm2375 = vcmp.eq.s32.totalorder %v2343, 1
      %vm2376 = vcmp.eq.s32.totalorder %v2344, 1
      %vm2377 = vcmp.eq.s32.totalorder %v2345, 1
      %vm2378 = vcmp.eq.s32.totalorder %v2346, 1
      %vm2379 = vcmp.eq.s32.totalorder %v2347, 1
      %vm2380 = vcmp.eq.s32.totalorder %v2348, 1
      %vm2381 = vmpackc.low %vm2349, %vm2349
      %vm2382 = vmpackc.low %vm2350, %vm2350
      %vm2383 = vmpackc.low %vm2351, %vm2351
      %vm2384 = vmpackc.low %vm2352, %vm2352
      %vm2385 = vmpackc.low %vm2353, %vm2353
      %vm2386 = vmpackc.low %vm2354, %vm2354
      %vm2387 = vmpackc.low %vm2355, %vm2355
      %vm2388 = vmpackc.low %vm2356, %vm2356
      %vm2389 = vmpackc.low %vm2357, %vm2357
      %vm2390 = vmpackc.low %vm2358, %vm2358
      %vm2391 = vmpackc.low %vm2359, %vm2359
      %vm2392 = vmpackc.low %vm2360, %vm2360
      %vm2393 = vmpackc.low %vm2361, %vm2361
      %vm2394 = vmpackc.low %vm2362, %vm2362
      %vm2395 = vmpackc.low %vm2363, %vm2363
      %vm2396 = vmpackc.low %vm2364, %vm2364
      %vm2397 = vmpackc.low %vm2365, %vm2365
      %vm2398 = vmpackc.low %vm2366, %vm2366
      %vm2399 = vmpackc.low %vm2367, %vm2367
      %vm2400 = vmpackc.low %vm2368, %vm2368
      %vm2401 = vmpackc.low %vm2369, %vm2369
      %vm2402 = vmpackc.low %vm2370, %vm2370
      %vm2403 = vmpackc.low %vm2371, %vm2371
      %vm2404 = vmpackc.low %vm2372, %vm2372
      %vm2405 = vmpackc.low %vm2373, %vm2373
      %vm2406 = vmpackc.low %vm2374, %vm2374
      %vm2407 = vmpackc.low %vm2375, %vm2375
      %vm2408 = vmpackc.low %vm2376, %vm2376
      %vm2409 = vmpackc.low %vm2377, %vm2377
      %vm2410 = vmpackc.low %vm2378, %vm2378
      %vm2411 = vmpackc.low %vm2379, %vm2379
      %vm2412 = vmpackc.low %vm2380, %vm2380
      %v2413 = vsel %vm2381, 65537, 0
      %v2414 = vsel %vm2382, 65537, 0
      %v2415 = vsel %vm2383, 65537, 0
      %v2416 = vsel %vm2384, 65537, 0
      %v2417 = vsel %vm2385, 65537, 0
      %v2418 = vsel %vm2386, 65537, 0
      %v2419 = vsel %vm2387, 65537, 0
      %v2420 = vsel %vm2388, 65537, 0
      %v2421 = vsel %vm2389, 65537, 0
      %v2422 = vsel %vm2390, 65537, 0
      %v2423 = vsel %vm2391, 65537, 0
      %v2424 = vsel %vm2392, 65537, 0
      %v2425 = vsel %vm2393, 65537, 0
      %v2426 = vsel %vm2394, 65537, 0
      %v2427 = vsel %vm2395, 65537, 0
      %v2428 = vsel %vm2396, 65537, 0
      %v2429 = vsel %vm2397, 65537, 0
      %v2430 = vsel %vm2398, 65537, 0
      %v2431 = vsel %vm2399, 65537, 0
      %v2432 = vsel %vm2400, 65537, 0
      %v2433 = vsel %vm2401, 65537, 0
      %v2434 = vsel %vm2402, 65537, 0
      %v2435 = vsel %vm2403, 65537, 0
      %v2436 = vsel %vm2404, 65537, 0
      %v2437 = vsel %vm2405, 65537, 0
      %v2438 = vsel %vm2406, 65537, 0
      %v2439 = vsel %vm2407, 65537, 0
      %v2440 = vsel %vm2408, 65537, 0
      %v2441 = vsel %vm2409, 65537, 0
      %v2442 = vsel %vm2410, 65537, 0
      %v2443 = vsel %vm2411, 65537, 0
      %v2444 = vsel %vm2412, 65537, 0
      %v2445 = vunpack.c.l.b16 %v2413
      %v2446 = vunpack.c.l.b16 %v2414
      %v2447 = vunpack.c.l.b16 %v2415
      %v2448 = vunpack.c.l.b16 %v2416
      %v2449 = vunpack.c.l.b16 %v2417
      %v2450 = vunpack.c.l.b16 %v2418
      %v2451 = vunpack.c.l.b16 %v2419
      %v2452 = vunpack.c.l.b16 %v2420
      %v2453 = vunpack.c.l.b16 %v2421
      %v2454 = vunpack.c.l.b16 %v2422
      %v2455 = vunpack.c.l.b16 %v2423
      %v2456 = vunpack.c.l.b16 %v2424
      %v2457 = vunpack.c.l.b16 %v2425
      %v2458 = vunpack.c.l.b16 %v2426
      %v2459 = vunpack.c.l.b16 %v2427
      %v2460 = vunpack.c.l.b16 %v2428
      %v2461 = vunpack.c.l.b16 %v2429
      %v2462 = vunpack.c.l.b16 %v2430
      %v2463 = vunpack.c.l.b16 %v2431
      %v2464 = vunpack.c.l.b16 %v2432
      %v2465 = vunpack.c.l.b16 %v2433
      %v2466 = vunpack.c.l.b16 %v2434
      %v2467 = vunpack.c.l.b16 %v2435
      %v2468 = vunpack.c.l.b16 %v2436
      %v2469 = vunpack.c.l.b16 %v2437
      %v2470 = vunpack.c.l.b16 %v2438
      %v2471 = vunpack.c.l.b16 %v2439
      %v2472 = vunpack.c.l.b16 %v2440
      %v2473 = vunpack.c.l.b16 %v2441
      %v2474 = vunpack.c.l.b16 %v2442
      %v2475 = vunpack.c.l.b16 %v2443
      %v2476 = vunpack.c.l.b16 %v2444
      %v2477 = vpack.c.b16 %v2446, %v2445
      %v2478 = vpack.c.b16 %v2448, %v2447
      %v2479 = vpack.c.b16 %v2450, %v2449
      %v2480 = vpack.c.b16 %v2452, %v2451
      %v2481 = vpack.c.b16 %v2454, %v2453
      %v2482 = vpack.c.b16 %v2456, %v2455
      %v2483 = vpack.c.b16 %v2458, %v2457
      %v2484 = vpack.c.b16 %v2460, %v2459
      %v2485 = vpack.c.b16 %v2462, %v2461
      %v2486 = vpack.c.b16 %v2464, %v2463
      %v2487 = vpack.c.b16 %v2466, %v2465
      %v2488 = vpack.c.b16 %v2468, %v2467
      %v2489 = vpack.c.b16 %v2470, %v2469
      %v2490 = vpack.c.b16 %v2472, %v2471
      %v2491 = vpack.c.b16 %v2474, %v2473
      %v2492 = vpack.c.b16 %v2476, %v2475
      %v2494 = vshrl.u32 %v2477, 16
      %v2496 = vrot.slane %v2494, 3
      %v2497 = vshll.u32 %v2477, 16
      %v2499 = vrot.slane %v2497, 4
      %v2500 = vor.u32 %v2496, %v2499
      %v2502 = vshrl.u32 %v2478, 16
      %v2504 = vrot.slane %v2502, 3
      %v2505 = vshll.u32 %v2478, 16
      %v2507 = vrot.slane %v2505, 4
      %v2508 = vor.u32 %v2504, %v2507
      %v2509 = vsel %vm1938, %v2500, %v2508
      %v2511 = vshrl.u32 %v2479, 16
      %v2513 = vrot.slane %v2511, 3
      %v2514 = vshll.u32 %v2479, 16
      %v2516 = vrot.slane %v2514, 4
      %v2517 = vor.u32 %v2513, %v2516
      %v2518 = vsel %vm1938, %v2508, %v2517
      %v2520 = vshrl.u32 %v2480, 16
      %v2522 = vrot.slane %v2520, 3
      %v2523 = vshll.u32 %v2480, 16
      %v2525 = vrot.slane %v2523, 4
      %v2526 = vor.u32 %v2522, %v2525
      %v2527 = vsel %vm1938, %v2517, %v2526
      %v2529 = vshrl.u32 %v2481, 16
      %v2531 = vrot.slane %v2529, 3
      %v2532 = vshll.u32 %v2481, 16
      %v2534 = vrot.slane %v2532, 4
      %v2535 = vor.u32 %v2531, %v2534
      %v2536 = vsel %vm1938, %v2526, %v2535
      %v2538 = vshrl.u32 %v2482, 16
      %v2540 = vrot.slane %v2538, 3
      %v2541 = vshll.u32 %v2482, 16
      %v2543 = vrot.slane %v2541, 4
      %v2544 = vor.u32 %v2540, %v2543
      %v2545 = vsel %vm1938, %v2535, %v2544
      %v2547 = vshrl.u32 %v2483, 16
      %v2549 = vrot.slane %v2547, 3
      %v2550 = vshll.u32 %v2483, 16
      %v2552 = vrot.slane %v2550, 4
      %v2553 = vor.u32 %v2549, %v2552
      %v2554 = vsel %vm1938, %v2544, %v2553
      %v2556 = vshrl.u32 %v2484, 16
      %v2558 = vrot.slane %v2556, 3
      %v2559 = vshll.u32 %v2484, 16
      %v2561 = vrot.slane %v2559, 4
      %v2562 = vor.u32 %v2558, %v2561
      %v2563 = vsel %vm1938, %v2553, %v2562
      %v2565 = vshrl.u32 %v2485, 16
      %v2567 = vrot.slane %v2565, 3
      %v2568 = vshll.u32 %v2485, 16
      %v2570 = vrot.slane %v2568, 4
      %v2571 = vor.u32 %v2567, %v2570
      %v2572 = vsel %vm1938, %v2562, %v2571
      %v2574 = vshrl.u32 %v2486, 16
      %v2576 = vrot.slane %v2574, 3
      %v2577 = vshll.u32 %v2486, 16
      %v2579 = vrot.slane %v2577, 4
      %v2580 = vor.u32 %v2576, %v2579
      %v2581 = vsel %vm1938, %v2571, %v2580
      %v2583 = vshrl.u32 %v2487, 16
      %v2585 = vrot.slane %v2583, 3
      %v2586 = vshll.u32 %v2487, 16
      %v2588 = vrot.slane %v2586, 4
      %v2589 = vor.u32 %v2585, %v2588
      %v2590 = vsel %vm1938, %v2580, %v2589
      %v2592 = vshrl.u32 %v2488, 16
      %v2594 = vrot.slane %v2592, 3
      %v2595 = vshll.u32 %v2488, 16
      %v2597 = vrot.slane %v2595, 4
      %v2598 = vor.u32 %v2594, %v2597
      %v2599 = vsel %vm1938, %v2589, %v2598
      %v2601 = vshrl.u32 %v2489, 16
      %v2603 = vrot.slane %v2601, 3
      %v2604 = vshll.u32 %v2489, 16
      %v2606 = vrot.slane %v2604, 4
      %v2607 = vor.u32 %v2603, %v2606
      %v2608 = vsel %vm1938, %v2598, %v2607
      %v2610 = vshrl.u32 %v2490, 16
      %v2612 = vrot.slane %v2610, 3
      %v2613 = vshll.u32 %v2490, 16
      %v2615 = vrot.slane %v2613, 4
      %v2616 = vor.u32 %v2612, %v2615
      %v2617 = vsel %vm1938, %v2607, %v2616
      %v2619 = vshrl.u32 %v2491, 16
      %v2621 = vrot.slane %v2619, 3
      %v2622 = vshll.u32 %v2491, 16
      %v2624 = vrot.slane %v2622, 4
      %v2625 = vor.u32 %v2621, %v2624
      %v2626 = vsel %vm1938, %v2616, %v2625
      %v2628 = vshrl.u32 %v2492, 16
      %v2630 = vrot.slane %v2628, 3
      %v2631 = vshll.u32 %v2492, 16
      %v2633 = vrot.slane %v2631, 4
      %v2634 = vor.u32 %v2630, %v2633
      %v2635 = vsel %vm1938, %v2625, %v2634
      %vm2636 = vcmp.ne.s16.totalorder %v2500, 0
      %vm2637 = vcmp.ne.s16.totalorder %v2509, 0
      %vm2638 = vcmp.ne.s16.totalorder %v2518, 0
      %vm2639 = vcmp.ne.s16.totalorder %v2527, 0
      %vm2640 = vcmp.ne.s16.totalorder %v2536, 0
      %vm2641 = vcmp.ne.s16.totalorder %v2545, 0
      %vm2642 = vcmp.ne.s16.totalorder %v2554, 0
      %vm2643 = vcmp.ne.s16.totalorder %v2563, 0
      %vm2644 = vcmp.ne.s16.totalorder %v2572, 0
      %vm2645 = vcmp.ne.s16.totalorder %v2581, 0
      %vm2646 = vcmp.ne.s16.totalorder %v2590, 0
      %vm2647 = vcmp.ne.s16.totalorder %v2599, 0
      %vm2648 = vcmp.ne.s16.totalorder %v2608, 0
      %vm2649 = vcmp.ne.s16.totalorder %v2617, 0
      %vm2650 = vcmp.ne.s16.totalorder %v2626, 0
      %vm2651 = vcmp.ne.s16.totalorder %v2635, 0
      %vm2652 = vcmp.ne.s16.totalorder %v2634, 0
      %v2653 = vsel %vm2636, %v1645, 0
      %v2654 = vsel %vm2637, %v1259, 0
      %v2655 = vsel %vm2638, %v1260, 0
      %v2656 = vsel %vm2639, %v1261, 0
      %v2657 = vsel %vm2640, %v1262, 0
      %v2658 = vsel %vm2641, %v1263, 0
      %v2659 = vsel %vm2642, %v1264, 0
      %v2660 = vsel %vm2643, %v1265, 0
      %v2661 = vsel %vm2644, %v1266, 0
      %v2662 = vsel %vm2645, %v1267, 0
      %v2663 = vsel %vm2646, %v1268, 0
      %v2664 = vsel %vm2647, %v1269, 0
      %v2665 = vsel %vm2648, %v1270, 0
      %v2666 = vsel %vm2649, %v1271, 0
      %v2667 = vsel %vm2650, %v1272, 0
      %v2668 = vsel %vm2651, %v1273, 0
      %v2669 = vsel %vm2652, %v2316, 0
      %s2670 = scalar_lea.vmem %s3, 128
      %v2671 = vld [vmem:[%s2670] sm:$0xf]
      %v2672 = vld [vmem:[%s2670 + $0x4] sm:$0xf]
      %v2673 = vld [vmem:[%s2670 + $0x8] sm:$0xf]
      %v2674 = vld [vmem:[%s2670 + $0xc] sm:$0xf]
      %v2675 = vld [vmem:[%s2670 + $0x10] sm:$0xf]
      %v2676 = vld [vmem:[%s2670 + $0x14] sm:$0xf]
      %v2677 = vld [vmem:[%s2670 + $0x18] sm:$0xf]
      %v2678 = vld [vmem:[%s2670 + $0x1c] sm:$0xf]
      %v2679 = vld [vmem:[%s2670 + $0x20] sm:$0xf]
      %v2680 = vld [vmem:[%s2670 + $0x24] sm:$0xf]
      %v2681 = vld [vmem:[%s2670 + $0x28] sm:$0xf]
      %v2682 = vld [vmem:[%s2670 + $0x2c] sm:$0xf]
      %v2683 = vld [vmem:[%s2670 + $0x30] sm:$0xf]
      %v2684 = vld [vmem:[%s2670 + $0x34] sm:$0xf]
      %v2685 = vld [vmem:[%s2670 + $0x38] sm:$0xf]
      %v2686 = vld [vmem:[%s2670 + $0x3c] sm:$0xf]
      %v2688 = vshrl.u32 %v2653, 16
      %v2690 = vrot.slane %v2688, 4
      %v2691 = vshll.u32 %v2653, 16
      %v2693 = vrot.slane %v2691, 5
      %v2694 = vor.u32 %v2690, %v2693
      %v2696 = vshrl.u32 %v2654, 16
      %v2698 = vrot.slane %v2696, 4
      %v2699 = vshll.u32 %v2654, 16
      %v2701 = vrot.slane %v2699, 5
      %v2702 = vor.u32 %v2698, %v2701
      %v2703 = vsel %vm1451, %v2694, %v2702
      %v2705 = vshrl.u32 %v2655, 16
      %v2707 = vrot.slane %v2705, 4
      %v2708 = vshll.u32 %v2655, 16
      %v2710 = vrot.slane %v2708, 5
      %v2711 = vor.u32 %v2707, %v2710
      %v2712 = vsel %vm1451, %v2702, %v2711
      %v2714 = vshrl.u32 %v2656, 16
      %v2716 = vrot.slane %v2714, 4
      %v2717 = vshll.u32 %v2656, 16
      %v2719 = vrot.slane %v2717, 5
      %v2720 = vor.u32 %v2716, %v2719
      %v2721 = vsel %vm1451, %v2711, %v2720
      %v2723 = vshrl.u32 %v2657, 16
      %v2725 = vrot.slane %v2723, 4
      %v2726 = vshll.u32 %v2657, 16
      %v2728 = vrot.slane %v2726, 5
      %v2729 = vor.u32 %v2725, %v2728
      %v2730 = vsel %vm1451, %v2720, %v2729
      %v2732 = vshrl.u32 %v2658, 16
      %v2734 = vrot.slane %v2732, 4
      %v2735 = vshll.u32 %v2658, 16
      %v2737 = vrot.slane %v2735, 5
      %v2738 = vor.u32 %v2734, %v2737
      %v2739 = vsel %vm1451, %v2729, %v2738
      %v2741 = vshrl.u32 %v2659, 16
      %v2743 = vrot.slane %v2741, 4
      %v2744 = vshll.u32 %v2659, 16
      %v2746 = vrot.slane %v2744, 5
      %v2747 = vor.u32 %v2743, %v2746
      %v2748 = vsel %vm1451, %v2738, %v2747
      %v2750 = vshrl.u32 %v2660, 16
      %v2752 = vrot.slane %v2750, 4
      %v2753 = vshll.u32 %v2660, 16
      %v2755 = vrot.slane %v2753, 5
      %v2756 = vor.u32 %v2752, %v2755
      %v2757 = vsel %vm1451, %v2747, %v2756
      %v2759 = vshrl.u32 %v2661, 16
      %v2761 = vrot.slane %v2759, 4
      %v2762 = vshll.u32 %v2661, 16
      %v2764 = vrot.slane %v2762, 5
      %v2765 = vor.u32 %v2761, %v2764
      %v2766 = vsel %vm1451, %v2756, %v2765
      %v2768 = vshrl.u32 %v2662, 16
      %v2770 = vrot.slane %v2768, 4
      %v2771 = vshll.u32 %v2662, 16
      %v2773 = vrot.slane %v2771, 5
      %v2774 = vor.u32 %v2770, %v2773
      %v2775 = vsel %vm1451, %v2765, %v2774
      %v2777 = vshrl.u32 %v2663, 16
      %v2779 = vrot.slane %v2777, 4
      %v2780 = vshll.u32 %v2663, 16
      %v2782 = vrot.slane %v2780, 5
      %v2783 = vor.u32 %v2779, %v2782
      %v2784 = vsel %vm1451, %v2774, %v2783
      %v2786 = vshrl.u32 %v2664, 16
      %v2788 = vrot.slane %v2786, 4
      %v2789 = vshll.u32 %v2664, 16
      %v2791 = vrot.slane %v2789, 5
      %v2792 = vor.u32 %v2788, %v2791
      %v2793 = vsel %vm1451, %v2783, %v2792
      %v2795 = vshrl.u32 %v2665, 16
      %v2797 = vrot.slane %v2795, 4
      %v2798 = vshll.u32 %v2665, 16
      %v2800 = vrot.slane %v2798, 5
      %v2801 = vor.u32 %v2797, %v2800
      %v2802 = vsel %vm1451, %v2792, %v2801
      %v2804 = vshrl.u32 %v2666, 16
      %v2806 = vrot.slane %v2804, 4
      %v2807 = vshll.u32 %v2666, 16
      %v2809 = vrot.slane %v2807, 5
      %v2810 = vor.u32 %v2806, %v2809
      %v2811 = vsel %vm1451, %v2801, %v2810
      %v2813 = vshrl.u32 %v2667, 16
      %v2815 = vrot.slane %v2813, 4
      %v2816 = vshll.u32 %v2667, 16
      %v2818 = vrot.slane %v2816, 5
      %v2819 = vor.u32 %v2815, %v2818
      %v2820 = vsel %vm1451, %v2810, %v2819
      %v2822 = vshrl.u32 %v2668, 16
      %v2824 = vrot.slane %v2822, 4
      %v2825 = vshll.u32 %v2668, 16
      %v2827 = vrot.slane %v2825, 5
      %v2828 = vor.u32 %v2824, %v2827
      %v2829 = vsel %vm1451, %v2819, %v2828
      %v2831 = vshrl.u32 %v2669, 16
      %v2833 = vrot.slane %v2831, 4
      %v2834 = vshll.u32 %v2669, 16
      %v2836 = vrot.slane %v2834, 5
      %v2837 = vor.u32 %v2833, %v2836
      %v2838 = vsel %vm1451, %v2828, %v2837
      %v2871 = vunpack.c.l.b16 %v2671
      %v2872 = vunpack.c.l.b16 %v2672
      %v2873 = vunpack.c.l.b16 %v2673
      %v2874 = vunpack.c.l.b16 %v2674
      %v2875 = vunpack.c.l.b16 %v2675
      %v2876 = vunpack.c.l.b16 %v2676
      %v2877 = vunpack.c.l.b16 %v2677
      %v2878 = vunpack.c.l.b16 %v2678
      %v2879 = vunpack.c.l.b16 %v2679
      %v2880 = vunpack.c.l.b16 %v2680
      %v2881 = vunpack.c.l.b16 %v2681
      %v2882 = vunpack.c.l.b16 %v2682
      %v2883 = vunpack.c.l.b16 %v2683
      %v2884 = vunpack.c.l.b16 %v2684
      %v2885 = vunpack.c.l.b16 %v2685
      %v2886 = vunpack.c.l.b16 %v2686
      %v2887 = vpack.c.b16 %v2872, %v2871
      %v2888 = vpack.c.b16 %v2874, %v2873
      %v2889 = vpack.c.b16 %v2876, %v2875
      %v2890 = vpack.c.b16 %v2878, %v2877
      %v2891 = vpack.c.b16 %v2880, %v2879
      %v2892 = vpack.c.b16 %v2882, %v2881
      %v2893 = vpack.c.b16 %v2884, %v2883
      %v2894 = vpack.c.b16 %v2886, %v2885
      %2903 = vmatprep.subr.bf16.mxu0 0
      %2904 = vmatpush1.bf16.msra.mxu0 %v2887
      %2905 = vmatprep.subr.bf16.mxu0 0
      %2906 = vmatpush1.bf16.msra.mxu0 %v2888
      %2907 = vmatprep.subr.bf16.mxu0 0
      %2908 = vmatpush1.bf16.msra.mxu0 %v2889
      %2909 = vmatprep.subr.bf16.mxu0 0
      %2910 = vmatpush1.bf16.msra.mxu0 %v2890
      %2911 = vmatprep.subr.bf16.mxu0 0
      %2912 = vmatpush1.bf16.msra.mxu0 %v2891
      %2913 = vmatprep.subr.bf16.mxu0 0
      %2914 = vmatpush1.bf16.msra.mxu0 %v2892
      %2915 = vmatprep.subr.bf16.mxu0 0
      %2916 = vmatpush1.bf16.msra.mxu0 %v2893
      %2917 = vmatprep.subr.bf16.mxu0 0
      %2918 = vmatpush1.bf16.msra.mxu0 %v2894
      %2919 = vmatprep.subr.bf16.mxu0 0
      %2920 = vmatpush1.bf16.msra.mxu0 0
      %2921 = vmatprep.subr.bf16.mxu0 0
      %2922 = vmatpush1.bf16.msra.mxu0 0
      %2923 = vmatprep.subr.bf16.mxu0 0
      %2924 = vmatpush1.bf16.msra.mxu0 0
      %2925 = vmatprep.subr.bf16.mxu0 0
      %2926 = vmatpush1.bf16.msra.mxu0 0
      %2927 = vmatprep.subr.bf16.mxu0 0
      %2928 = vmatpush1.bf16.msra.mxu0 0
      %2929 = vmatprep.subr.bf16.mxu0 0
      %2930 = vmatpush1.bf16.msra.mxu0 0
      %2931 = vmatprep.subr.bf16.mxu0 0
      %2932 = vmatpush1.bf16.msra.mxu0 0
      %2933 = vmatprep.subr.bf16.mxu0 0
      %2934 = vmatpush1.bf16.msra.mxu0 0
      %2935 = vmatprep.mubr.bf16.mxu0 0
      %2936 = vmatmul.mubr.bf16.gmra.mrb[0].mxu0 %v2703
      %v2937 = vpop.f32.mrb[0].mxu0
      %v2938 = vadd.f32 0.0, %v2937
      %v2939 = vpop.f32.mrb[0].mxu0
      %v2940 = vpop.f32.mrb[0].mxu0
      %v2941 = vadd.f32 0.0, %v2940
      %v2942 = vpop.f32.mrb[0].mxu0
      %2943 = vmatprep.mubr.bf16.mxu0 0
      %2944 = vmatmul.mubr.bf16.gmra.mrb[0].mxu0 %v2712
      %v2945 = vpop.f32.mrb[0].mxu0
      %v2946 = vadd.f32 0.0, %v2945
      %v2947 = vpop.f32.mrb[0].mxu0
      %v2948 = vpop.f32.mrb[0].mxu0
      %v2949 = vadd.f32 0.0, %v2948
      %v2950 = vpop.f32.mrb[0].mxu0
      %2951 = vmatprep.mubr.bf16.mxu0 0
      %2952 = vmatmul.mubr.bf16.gmra.mrb[0].mxu0 %v2721
      %v2953 = vpop.f32.mrb[0].mxu0
      %v2954 = vadd.f32 0.0, %v2953
      %v2955 = vpop.f32.mrb[0].mxu0
      %v2956 = vpop.f32.mrb[0].mxu0
      %v2957 = vadd.f32 0.0, %v2956
      %v2958 = vpop.f32.mrb[0].mxu0
      %2959 = vmatprep.mubr.bf16.mxu0 0
      %2960 = vmatmul.mubr.bf16.gmra.mrb[0].mxu0 %v2730
      %v2961 = vpop.f32.mrb[0].mxu0
      %v2962 = vadd.f32 0.0, %v2961
      %v2963 = vpop.f32.mrb[0].mxu0
      %v2964 = vpop.f32.mrb[0].mxu0
      %v2965 = vadd.f32 0.0, %v2964
      %v2966 = vpop.f32.mrb[0].mxu0
      %2967 = vmatprep.mubr.bf16.mxu0 0
      %2968 = vmatmul.mubr.bf16.gmra.mrb[0].mxu0 %v2739
      %v2969 = vpop.f32.mrb[0].mxu0
      %v2970 = vadd.f32 0.0, %v2969
      %v2971 = vpop.f32.mrb[0].mxu0
      %v2972 = vpop.f32.mrb[0].mxu0
      %v2973 = vadd.f32 0.0, %v2972
      %v2974 = vpop.f32.mrb[0].mxu0
      %2975 = vmatprep.mubr.bf16.mxu0 0
      %2976 = vmatmul.mubr.bf16.gmra.mrb[0].mxu0 %v2748
      %v2977 = vpop.f32.mrb[0].mxu0
      %v2978 = vadd.f32 0.0, %v2977
      %v2979 = vpop.f32.mrb[0].mxu0
      %v2980 = vpop.f32.mrb[0].mxu0
      %v2981 = vadd.f32 0.0, %v2980
      %v2982 = vpop.f32.mrb[0].mxu0
      %2983 = vmatprep.mubr.bf16.mxu0 0
      %2984 = vmatmul.mubr.bf16.gmra.mrb[0].mxu0 %v2757
      %v2985 = vpop.f32.mrb[0].mxu0
      %v2986 = vadd.f32 0.0, %v2985
      %v2987 = vpop.f32.mrb[0].mxu0
      %v2988 = vpop.f32.mrb[0].mxu0
      %v2989 = vadd.f32 0.0, %v2988
      %v2990 = vpop.f32.mrb[0].mxu0
      %2991 = vmatprep.mubr.bf16.mxu0 0
      %2992 = vmatmul.mubr.bf16.gmra.mrb[0].mxu0 %v2766
      %v2993 = vpop.f32.mrb[0].mxu0
      %v2994 = vadd.f32 0.0, %v2993
      %v2995 = vpop.f32.mrb[0].mxu0
      %v2996 = vpop.f32.mrb[0].mxu0
      %v2997 = vadd.f32 0.0, %v2996
      %v2998 = vpop.f32.mrb[0].mxu0
      %2999 = vmatprep.mubr.bf16.mxu0 0
      %3000 = vmatmul.mubr.bf16.gmra.mrb[0].mxu0 %v2775
      %v3001 = vpop.f32.mrb[0].mxu0
      %v3002 = vadd.f32 0.0, %v3001
      %v3003 = vpop.f32.mrb[0].mxu0
      %v3004 = vpop.f32.mrb[0].mxu0
      %v3005 = vadd.f32 0.0, %v3004
      %v3006 = vpop.f32.mrb[0].mxu0
      %3007 = vmatprep.mubr.bf16.mxu0 0
      %3008 = vmatmul.mubr.bf16.gmra.mrb[0].mxu0 %v2784
      %v3009 = vpop.f32.mrb[0].mxu0
      %v3010 = vadd.f32 0.0, %v3009
      %v3011 = vpop.f32.mrb[0].mxu0
      %v3012 = vpop.f32.mrb[0].mxu0
      %v3013 = vadd.f32 0.0, %v3012
      %v3014 = vpop.f32.mrb[0].mxu0
      %3015 = vmatprep.mubr.bf16.mxu0 0
      %3016 = vmatmul.mubr.bf16.gmra.mrb[0].mxu0 %v2793
      %v3017 = vpop.f32.mrb[0].mxu0
      %v3018 = vadd.f32 0.0, %v3017
      %v3019 = vpop.f32.mrb[0].mxu0
      %v3020 = vpop.f32.mrb[0].mxu0
      %v3021 = vadd.f32 0.0, %v3020
      %v3022 = vpop.f32.mrb[0].mxu0
      %3023 = vmatprep.mubr.bf16.mxu0 0
      %3024 = vmatmul.mubr.bf16.gmra.mrb[0].mxu0 %v2802
      %v3025 = vpop.f32.mrb[0].mxu0
      %v3026 = vadd.f32 0.0, %v3025
      %v3027 = vpop.f32.mrb[0].mxu0
      %v3028 = vpop.f32.mrb[0].mxu0
      %v3029 = vadd.f32 0.0, %v3028
      %v3030 = vpop.f32.mrb[0].mxu0
      %3031 = vmatprep.mubr.bf16.mxu0 0
      %3032 = vmatmul.mubr.bf16.gmra.mrb[0].mxu0 %v2811
      %v3033 = vpop.f32.mrb[0].mxu0
      %v3034 = vadd.f32 0.0, %v3033
      %v3035 = vpop.f32.mrb[0].mxu0
      %v3036 = vpop.f32.mrb[0].mxu0
      %v3037 = vadd.f32 0.0, %v3036
      %v3038 = vpop.f32.mrb[0].mxu0
      %3039 = vmatprep.mubr.bf16.mxu0 0
      %3040 = vmatmul.mubr.bf16.gmra.mrb[0].mxu0 %v2820
      %v3041 = vpop.f32.mrb[0].mxu0
      %v3042 = vadd.f32 0.0, %v3041
      %v3043 = vpop.f32.mrb[0].mxu0
      %v3044 = vpop.f32.mrb[0].mxu0
      %v3045 = vadd.f32 0.0, %v3044
      %v3046 = vpop.f32.mrb[0].mxu0
      %3047 = vmatprep.mubr.bf16.mxu0 0
      %3048 = vmatmul.mubr.bf16.gmra.mrb[0].mxu0 %v2829
      %v3049 = vpop.f32.mrb[0].mxu0
      %v3050 = vadd.f32 0.0, %v3049
      %v3051 = vpop.f32.mrb[0].mxu0
      %v3052 = vpop.f32.mrb[0].mxu0
      %v3053 = vadd.f32 0.0, %v3052
      %v3054 = vpop.f32.mrb[0].mxu0
      %3055 = vmatprep.mubr.bf16.mxu0 0
      %3056 = vmatmul.mubr.bf16.gmra.mrb[0].mxu0 %v2838
      %v3057 = vpop.f32.mrb[0].mxu0
      %v3058 = vadd.f32 0.0, %v3057
      %v3059 = vpop.f32.mrb[0].mxu0
      %v3060 = vpop.f32.mrb[0].mxu0
      %v3061 = vadd.f32 0.0, %v3060
      %v3062 = vpop.f32.mrb[0].mxu0
      %3063 = vdwg.mxu0
      %v3064 = vadd.f32 %v2190, %v2938
      %v3065 = vadd.f32 %v2193, %v2941
      %v3066 = vadd.f32 %v2198, %v2946
      %v3067 = vadd.f32 %v2201, %v2949
      %v3068 = vadd.f32 %v2206, %v2954
      %v3069 = vadd.f32 %v2209, %v2957
      %v3070 = vadd.f32 %v2214, %v2962
      %v3071 = vadd.f32 %v2217, %v2965
      %v3072 = vadd.f32 %v2222, %v2970
      %v3073 = vadd.f32 %v2225, %v2973
      %v3074 = vadd.f32 %v2230, %v2978
      %v3075 = vadd.f32 %v2233, %v2981
      %v3076 = vadd.f32 %v2238, %v2986
      %v3077 = vadd.f32 %v2241, %v2989
      %v3078 = vadd.f32 %v2246, %v2994
      %v3079 = vadd.f32 %v2249, %v2997
      %v3080 = vadd.f32 %v2254, %v3002
      %v3081 = vadd.f32 %v2257, %v3005
      %v3082 = vadd.f32 %v2262, %v3010
      %v3083 = vadd.f32 %v2265, %v3013
      %v3084 = vadd.f32 %v2270, %v3018
      %v3085 = vadd.f32 %v2273, %v3021
      %v3086 = vadd.f32 %v2278, %v3026
      %v3087 = vadd.f32 %v2281, %v3029
      %v3088 = vadd.f32 %v2286, %v3034
      %v3089 = vadd.f32 %v2289, %v3037
      %v3090 = vadd.f32 %v2294, %v3042
      %v3091 = vadd.f32 %v2297, %v3045
      %v3092 = vadd.f32 %v2302, %v3050
      %v3093 = vadd.f32 %v2305, %v3053
      %v3094 = vadd.f32 %v2310, %v3058
      %v3095 = vadd.f32 %v2313, %v3061
      %v3096 = vld [vmem:[#allocation2 + $0x8] sm:$0xf8]
      %v3097 = vld [vmem:[#allocation2 + $0x10] sm:$0xff]
      %v3098 = vld [vmem:[#allocation2 + $0x18] sm:$0xff]
      %v3099 = vld [vmem:[#allocation2 + $0x20] sm:$0xff]
      %v3100 = vld [vmem:[#allocation2 + $0x28] sm:$0xff]
      %v3101 = vld [vmem:[#allocation2 + $0x30] sm:$0xff]
      %v3102 = vld [vmem:[#allocation2 + $0x38] sm:$0xff]
      %v3103 = vld [vmem:[#allocation2 + $0x40] sm:$0xff]
      %v3104 = vld [vmem:[#allocation2 + $0x48] sm:$0xff]
      %v3105 = vld [vmem:[#allocation2 + $0x50] sm:$0xff]
      %v3106 = vld [vmem:[#allocation2 + $0x58] sm:$0xff]
      %v3107 = vld [vmem:[#allocation2 + $0x60] sm:$0xff]
      %v3108 = vld [vmem:[#allocation2 + $0x68] sm:$0xff]
      %v3109 = vld [vmem:[#allocation2 + $0x70] sm:$0xff]
      %v3110 = vld [vmem:[#allocation2 + $0x78] sm:$0xff]
      %v3111 = vld [vmem:[#allocation2 + $0x80] sm:$0xff]
      %v3112 = vld [vmem:[#allocation2 + $0x88] sm:$0xf]
      %v3113 = vsel %vm1595, %v3096, 0
      %v3114 = vsel %vm1596, %v3097, 0
      %v3115 = vsel %vm1597, %v3098, 0
      %v3116 = vsel %vm1598, %v3099, 0
      %v3117 = vsel %vm1599, %v3100, 0
      %v3118 = vsel %vm1600, %v3101, 0
      %v3119 = vsel %vm1601, %v3102, 0
      %v3120 = vsel %vm1602, %v3103, 0
      %v3121 = vsel %vm1603, %v3104, 0
      %v3122 = vsel %vm1604, %v3105, 0
      %v3123 = vsel %vm1605, %v3106, 0
      %v3124 = vsel %vm1606, %v3107, 0
      %v3125 = vsel %vm1607, %v3108, 0
      %v3126 = vsel %vm1608, %v3109, 0
      %v3127 = vsel %vm1609, %v3110, 0
      %v3128 = vsel %vm1610, %v3111, 0
      %v3129 = vsel %vm1611, %v3112, 0
      %s3130 = scalar_lea.vmem %s3, 192
      %v3131 = vld [vmem:[%s3130] sm:$0xf]
      %v3132 = vld [vmem:[%s3130 + $0x4] sm:$0xf]
      %v3133 = vld [vmem:[%s3130 + $0x8] sm:$0xf]
      %v3134 = vld [vmem:[%s3130 + $0xc] sm:$0xf]
      %v3135 = vld [vmem:[%s3130 + $0x10] sm:$0xf]
      %v3136 = vld [vmem:[%s3130 + $0x14] sm:$0xf]
      %v3137 = vld [vmem:[%s3130 + $0x18] sm:$0xf]
      %v3138 = vld [vmem:[%s3130 + $0x1c] sm:$0xf]
      %v3139 = vld [vmem:[%s3130 + $0x20] sm:$0xf]
      %v3140 = vld [vmem:[%s3130 + $0x24] sm:$0xf]
      %v3141 = vld [vmem:[%s3130 + $0x28] sm:$0xf]
      %v3142 = vld [vmem:[%s3130 + $0x2c] sm:$0xf]
      %v3143 = vld [vmem:[%s3130 + $0x30] sm:$0xf]
      %v3144 = vld [vmem:[%s3130 + $0x34] sm:$0xf]
      %v3145 = vld [vmem:[%s3130 + $0x38] sm:$0xf]
      %v3146 = vld [vmem:[%s3130 + $0x3c] sm:$0xf]
      %v3148 = vshrl.u32 %v3113, 16
      %v3150 = vrot.slane %v3148, 3
      %v3151 = vshll.u32 %v3113, 16
      %v3153 = vrot.slane %v3151, 4
      %v3154 = vor.u32 %v3150, %v3153
      %v3156 = vshrl.u32 %v3114, 16
      %v3158 = vrot.slane %v3156, 3
      %v3159 = vshll.u32 %v3114, 16
      %v3161 = vrot.slane %v3159, 4
      %v3162 = vor.u32 %v3158, %v3161
      %v3163 = vsel %vm1938, %v3154, %v3162
      %v3165 = vshrl.u32 %v3115, 16
      %v3167 = vrot.slane %v3165, 3
      %v3168 = vshll.u32 %v3115, 16
      %v3170 = vrot.slane %v3168, 4
      %v3171 = vor.u32 %v3167, %v3170
      %v3172 = vsel %vm1938, %v3162, %v3171
      %v3174 = vshrl.u32 %v3116, 16
      %v3176 = vrot.slane %v3174, 3
      %v3177 = vshll.u32 %v3116, 16
      %v3179 = vrot.slane %v3177, 4
      %v3180 = vor.u32 %v3176, %v3179
      %v3181 = vsel %vm1938, %v3171, %v3180
      %v3183 = vshrl.u32 %v3117, 16
      %v3185 = vrot.slane %v3183, 3
      %v3186 = vshll.u32 %v3117, 16
      %v3188 = vrot.slane %v3186, 4
      %v3189 = vor.u32 %v3185, %v3188
      %v3190 = vsel %vm1938, %v3180, %v3189
      %v3192 = vshrl.u32 %v3118, 16
      %v3194 = vrot.slane %v3192, 3
      %v3195 = vshll.u32 %v3118, 16
      %v3197 = vrot.slane %v3195, 4
      %v3198 = vor.u32 %v3194, %v3197
      %v3199 = vsel %vm1938, %v3189, %v3198
      %v3201 = vshrl.u32 %v3119, 16
      %v3203 = vrot.slane %v3201, 3
      %v3204 = vshll.u32 %v3119, 16
      %v3206 = vrot.slane %v3204, 4
      %v3207 = vor.u32 %v3203, %v3206
      %v3208 = vsel %vm1938, %v3198, %v3207
      %v3210 = vshrl.u32 %v3120, 16
      %v3212 = vrot.slane %v3210, 3
      %v3213 = vshll.u32 %v3120, 16
      %v3215 = vrot.slane %v3213, 4
      %v3216 = vor.u32 %v3212, %v3215
      %v3217 = vsel %vm1938, %v3207, %v3216
      %v3219 = vshrl.u32 %v3121, 16
      %v3221 = vrot.slane %v3219, 3
      %v3222 = vshll.u32 %v3121, 16
      %v3224 = vrot.slane %v3222, 4
      %v3225 = vor.u32 %v3221, %v3224
      %v3226 = vsel %vm1938, %v3216, %v3225
      %v3228 = vshrl.u32 %v3122, 16
      %v3230 = vrot.slane %v3228, 3
      %v3231 = vshll.u32 %v3122, 16
      %v3233 = vrot.slane %v3231, 4
      %v3234 = vor.u32 %v3230, %v3233
      %v3235 = vsel %vm1938, %v3225, %v3234
      %v3237 = vshrl.u32 %v3123, 16
      %v3239 = vrot.slane %v3237, 3
      %v3240 = vshll.u32 %v3123, 16
      %v3242 = vrot.slane %v3240, 4
      %v3243 = vor.u32 %v3239, %v3242
      %v3244 = vsel %vm1938, %v3234, %v3243
      %v3246 = vshrl.u32 %v3124, 16
      %v3248 = vrot.slane %v3246, 3
      %v3249 = vshll.u32 %v3124, 16
      %v3251 = vrot.slane %v3249, 4
      %v3252 = vor.u32 %v3248, %v3251
      %v3253 = vsel %vm1938, %v3243, %v3252
      %v3255 = vshrl.u32 %v3125, 16
      %v3257 = vrot.slane %v3255, 3
      %v3258 = vshll.u32 %v3125, 16
      %v3260 = vrot.slane %v3258, 4
      %v3261 = vor.u32 %v3257, %v3260
      %v3262 = vsel %vm1938, %v3252, %v3261
      %v3264 = vshrl.u32 %v3126, 16
      %v3266 = vrot.slane %v3264, 3
      %v3267 = vshll.u32 %v3126, 16
      %v3269 = vrot.slane %v3267, 4
      %v3270 = vor.u32 %v3266, %v3269
      %v3271 = vsel %vm1938, %v3261, %v3270
      %v3273 = vshrl.u32 %v3127, 16
      %v3275 = vrot.slane %v3273, 3
      %v3276 = vshll.u32 %v3127, 16
      %v3278 = vrot.slane %v3276, 4
      %v3279 = vor.u32 %v3275, %v3278
      %v3280 = vsel %vm1938, %v3270, %v3279
      %v3282 = vshrl.u32 %v3128, 16
      %v3284 = vrot.slane %v3282, 3
      %v3285 = vshll.u32 %v3128, 16
      %v3287 = vrot.slane %v3285, 4
      %v3288 = vor.u32 %v3284, %v3287
      %v3289 = vsel %vm1938, %v3279, %v3288
      %v3291 = vshrl.u32 %v3129, 16
      %v3293 = vrot.slane %v3291, 3
      %v3294 = vshll.u32 %v3129, 16
      %v3296 = vrot.slane %v3294, 4
      %v3297 = vor.u32 %v3293, %v3296
      %v3298 = vsel %vm1938, %v3288, %v3297
      %v3331 = vunpack.c.l.b16 %v3131
      %v3332 = vunpack.c.l.b16 %v3132
      %v3333 = vunpack.c.l.b16 %v3133
      %v3334 = vunpack.c.l.b16 %v3134
      %v3335 = vunpack.c.l.b16 %v3135
      %v3336 = vunpack.c.l.b16 %v3136
      %v3337 = vunpack.c.l.b16 %v3137
      %v3338 = vunpack.c.l.b16 %v3138
      %v3339 = vunpack.c.l.b16 %v3139
      %v3340 = vunpack.c.l.b16 %v3140
      %v3341 = vunpack.c.l.b16 %v3141
      %v3342 = vunpack.c.l.b16 %v3142
      %v3343 = vunpack.c.l.b16 %v3143
      %v3344 = vunpack.c.l.b16 %v3144
      %v3345 = vunpack.c.l.b16 %v3145
      %v3346 = vunpack.c.l.b16 %v3146
      %v3347 = vpack.c.b16 %v3332, %v3331
      %v3348 = vpack.c.b16 %v3334, %v3333
      %v3349 = vpack.c.b16 %v3336, %v3335
      %v3350 = vpack.c.b16 %v3338, %v3337
      %v3351 = vpack.c.b16 %v3340, %v3339
      %v3352 = vpack.c.b16 %v3342, %v3341
      %v3353 = vpack.c.b16 %v3344, %v3343
      %v3354 = vpack.c.b16 %v3346, %v3345
      %3363 = vmatprep.subr.bf16.mxu0 0
      %3364 = vmatpush1.bf16.msra.mxu0 %v3347
      %3365 = vmatprep.subr.bf16.mxu0 0
      %3366 = vmatpush1.bf16.msra.mxu0 %v3348
      %3367 = vmatprep.subr.bf16.mxu0 0
      %3368 = vmatpush1.bf16.msra.mxu0 %v3349
      %3369 = vmatprep.subr.bf16.mxu0 0
      %3370 = vmatpush1.bf16.msra.mxu0 %v3350
      %3371 = vmatprep.subr.bf16.mxu0 0
      %3372 = vmatpush1.bf16.msra.mxu0 %v3351
      %3373 = vmatprep.subr.bf16.mxu0 0
      %3374 = vmatpush1.bf16.msra.mxu0 %v3352
      %3375 = vmatprep.subr.bf16.mxu0 0
      %3376 = vmatpush1.bf16.msra.mxu0 %v3353
      %3377 = vmatprep.subr.bf16.mxu0 0
      %3378 = vmatpush1.bf16.msra.mxu0 %v3354
      %3379 = vmatprep.subr.bf16.mxu0 0
      %3380 = vmatpush1.bf16.msra.mxu0 0
      %3381 = vmatprep.subr.bf16.mxu0 0
      %3382 = vmatpush1.bf16.msra.mxu0 0
      %3383 = vmatprep.subr.bf16.mxu0 0
      %3384 = vmatpush1.bf16.msra.mxu0 0
      %3385 = vmatprep.subr.bf16.mxu0 0
      %3386 = vmatpush1.bf16.msra.mxu0 0
      %3387 = vmatprep.subr.bf16.mxu0 0
      %3388 = vmatpush1.bf16.msra.mxu0 0
      %3389 = vmatprep.subr.bf16.mxu0 0
      %3390 = vmatpush1.bf16.msra.mxu0 0
      %3391 = vmatprep.subr.bf16.mxu0 0
      %3392 = vmatpush1.bf16.msra.mxu0 0
      %3393 = vmatprep.subr.bf16.mxu0 0
      %3394 = vmatpush1.bf16.msra.mxu0 0
      %3395 = vmatprep.mubr.bf16.mxu0 0
      %3396 = vmatmul.mubr.bf16.gmra.mrb[0].mxu0 %v3163
      %v3397 = vpop.f32.mrb[0].mxu0
      %v3398 = vadd.f32 0.0, %v3397
      %v3399 = vpop.f32.mrb[0].mxu0
      %v3400 = vpop.f32.mrb[0].mxu0
      %v3401 = vadd.f32 0.0, %v3400
      %v3402 = vpop.f32.mrb[0].mxu0
      %3403 = vmatprep.mubr.bf16.mxu0 0
      %3404 = vmatmul.mubr.bf16.gmra.mrb[0].mxu0 %v3172
      %v3405 = vpop.f32.mrb[0].mxu0
      %v3406 = vadd.f32 0.0, %v3405
      %v3407 = vpop.f32.mrb[0].mxu0
      %v3408 = vpop.f32.mrb[0].mxu0
      %v3409 = vadd.f32 0.0, %v3408
      %v3410 = vpop.f32.mrb[0].mxu0
      %3411 = vmatprep.mubr.bf16.mxu0 0
      %3412 = vmatmul.mubr.bf16.gmra.mrb[0].mxu0 %v3181
      %v3413 = vpop.f32.mrb[0].mxu0
      %v3414 = vadd.f32 0.0, %v3413
      %v3415 = vpop.f32.mrb[0].mxu0
      %v3416 = vpop.f32.mrb[0].mxu0
      %v3417 = vadd.f32 0.0, %v3416
      %v3418 = vpop.f32.mrb[0].mxu0
      %3419 = vmatprep.mubr.bf16.mxu0 0
      %3420 = vmatmul.mubr.bf16.gmra.mrb[0].mxu0 %v3190
      %v3421 = vpop.f32.mrb[0].mxu0
      %v3422 = vadd.f32 0.0, %v3421
      %v3423 = vpop.f32.mrb[0].mxu0
      %v3424 = vpop.f32.mrb[0].mxu0
      %v3425 = vadd.f32 0.0, %v3424
      %v3426 = vpop.f32.mrb[0].mxu0
      %3427 = vmatprep.mubr.bf16.mxu0 0
      %3428 = vmatmul.mubr.bf16.gmra.mrb[0].mxu0 %v3199
      %v3429 = vpop.f32.mrb[0].mxu0
      %v3430 = vadd.f32 0.0, %v3429
      %v3431 = vpop.f32.mrb[0].mxu0
      %v3432 = vpop.f32.mrb[0].mxu0
      %v3433 = vadd.f32 0.0, %v3432
      %v3434 = vpop.f32.mrb[0].mxu0
      %3435 = vmatprep.mubr.bf16.mxu0 0
      %3436 = vmatmul.mubr.bf16.gmra.mrb[0].mxu0 %v3208
      %v3437 = vpop.f32.mrb[0].mxu0
      %v3438 = vadd.f32 0.0, %v3437
      %v3439 = vpop.f32.mrb[0].mxu0
      %v3440 = vpop.f32.mrb[0].mxu0
      %v3441 = vadd.f32 0.0, %v3440
      %v3442 = vpop.f32.mrb[0].mxu0
      %3443 = vmatprep.mubr.bf16.mxu0 0
      %3444 = vmatmul.mubr.bf16.gmra.mrb[0].mxu0 %v3217
      %v3445 = vpop.f32.mrb[0].mxu0
      %v3446 = vadd.f32 0.0, %v3445
      %v3447 = vpop.f32.mrb[0].mxu0
      %v3448 = vpop.f32.mrb[0].mxu0
      %v3449 = vadd.f32 0.0, %v3448
      %v3450 = vpop.f32.mrb[0].mxu0
      %3451 = vmatprep.mubr.bf16.mxu0 0
      %3452 = vmatmul.mubr.bf16.gmra.mrb[0].mxu0 %v3226
      %v3453 = vpop.f32.mrb[0].mxu0
      %v3454 = vadd.f32 0.0, %v3453
      %v3455 = vpop.f32.mrb[0].mxu0
      %v3456 = vpop.f32.mrb[0].mxu0
      %v3457 = vadd.f32 0.0, %v3456
      %v3458 = vpop.f32.mrb[0].mxu0
      %3459 = vmatprep.mubr.bf16.mxu0 0
      %3460 = vmatmul.mubr.bf16.gmra.mrb[0].mxu0 %v3235
      %v3461 = vpop.f32.mrb[0].mxu0
      %v3462 = vadd.f32 0.0, %v3461
      %v3463 = vpop.f32.mrb[0].mxu0
      %v3464 = vpop.f32.mrb[0].mxu0
      %v3465 = vadd.f32 0.0, %v3464
      %v3466 = vpop.f32.mrb[0].mxu0
      %3467 = vmatprep.mubr.bf16.mxu0 0
      %3468 = vmatmul.mubr.bf16.gmra.mrb[0].mxu0 %v3244
      %v3469 = vpop.f32.mrb[0].mxu0
      %v3470 = vadd.f32 0.0, %v3469
      %v3471 = vpop.f32.mrb[0].mxu0
      %v3472 = vpop.f32.mrb[0].mxu0
      %v3473 = vadd.f32 0.0, %v3472
      %v3474 = vpop.f32.mrb[0].mxu0
      %3475 = vmatprep.mubr.bf16.mxu0 0
      %3476 = vmatmul.mubr.bf16.gmra.mrb[0].mxu0 %v3253
      %v3477 = vpop.f32.mrb[0].mxu0
      %v3478 = vadd.f32 0.0, %v3477
      %v3479 = vpop.f32.mrb[0].mxu0
      %v3480 = vpop.f32.mrb[0].mxu0
      %v3481 = vadd.f32 0.0, %v3480
      %v3482 = vpop.f32.mrb[0].mxu0
      %3483 = vmatprep.mubr.bf16.mxu0 0
      %3484 = vmatmul.mubr.bf16.gmra.mrb[0].mxu0 %v3262
      %v3485 = vpop.f32.mrb[0].mxu0
      %v3486 = vadd.f32 0.0, %v3485
      %v3487 = vpop.f32.mrb[0].mxu0
      %v3488 = vpop.f32.mrb[0].mxu0
      %v3489 = vadd.f32 0.0, %v3488
      %v3490 = vpop.f32.mrb[0].mxu0
      %3491 = vmatprep.mubr.bf16.mxu0 0
      %3492 = vmatmul.mubr.bf16.gmra.mrb[0].mxu0 %v3271
      %v3493 = vpop.f32.mrb[0].mxu0
      %v3494 = vadd.f32 0.0, %v3493
      %v3495 = vpop.f32.mrb[0].mxu0
      %v3496 = vpop.f32.mrb[0].mxu0
      %v3497 = vadd.f32 0.0, %v3496
      %v3498 = vpop.f32.mrb[0].mxu0
      %3499 = vmatprep.mubr.bf16.mxu0 0
      %3500 = vmatmul.mubr.bf16.gmra.mrb[0].mxu0 %v3280
      %v3501 = vpop.f32.mrb[0].mxu0
      %v3502 = vadd.f32 0.0, %v3501
      %v3503 = vpop.f32.mrb[0].mxu0
      %v3504 = vpop.f32.mrb[0].mxu0
      %v3505 = vadd.f32 0.0, %v3504
      %v3506 = vpop.f32.mrb[0].mxu0
      %3507 = vmatprep.mubr.bf16.mxu0 0
      %3508 = vmatmul.mubr.bf16.gmra.mrb[0].mxu0 %v3289
      %v3509 = vpop.f32.mrb[0].mxu0
      %v3510 = vadd.f32 0.0, %v3509
      %v3511 = vpop.f32.mrb[0].mxu0
      %v3512 = vpop.f32.mrb[0].mxu0
      %v3513 = vadd.f32 0.0, %v3512
      %v3514 = vpop.f32.mrb[0].mxu0
      %3515 = vmatprep.mubr.bf16.mxu0 0
      %3516 = vmatmul.mubr.bf16.gmra.mrb[0].mxu0 %v3298
      %v3517 = vpop.f32.mrb[0].mxu0
      %v3518 = vadd.f32 0.0, %v3517
      %v3519 = vpop.f32.mrb[0].mxu0
      %v3520 = vpop.f32.mrb[0].mxu0
      %v3521 = vadd.f32 0.0, %v3520
      %v3522 = vpop.f32.mrb[0].mxu0
      %3523 = vdwg.mxu0
      %v3524 = vadd.f32 %v3064, %v3398
      %v3525 = vadd.f32 %v3065, %v3401
      %v3526 = vadd.f32 %v3066, %v3406
      %v3527 = vadd.f32 %v3067, %v3409
      %v3528 = vadd.f32 %v3068, %v3414
      %v3529 = vadd.f32 %v3069, %v3417
      %v3530 = vadd.f32 %v3070, %v3422
      %v3531 = vadd.f32 %v3071, %v3425
      %v3532 = vadd.f32 %v3072, %v3430
      %v3533 = vadd.f32 %v3073, %v3433
      %v3534 = vadd.f32 %v3074, %v3438
      %v3535 = vadd.f32 %v3075, %v3441
      %v3536 = vadd.f32 %v3076, %v3446
      %v3537 = vadd.f32 %v3077, %v3449
      %v3538 = vadd.f32 %v3078, %v3454
      %v3539 = vadd.f32 %v3079, %v3457
      %v3540 = vadd.f32 %v3080, %v3462
      %v3541 = vadd.f32 %v3081, %v3465
      %v3542 = vadd.f32 %v3082, %v3470
      %v3543 = vadd.f32 %v3083, %v3473
      %v3544 = vadd.f32 %v3084, %v3478
      %v3545 = vadd.f32 %v3085, %v3481
      %v3546 = vadd.f32 %v3086, %v3486
      %v3547 = vadd.f32 %v3087, %v3489
      %v3548 = vadd.f32 %v3088, %v3494
      %v3549 = vadd.f32 %v3089, %v3497
      %v3550 = vadd.f32 %v3090, %v3502
      %v3551 = vadd.f32 %v3091, %v3505
      %v3552 = vadd.f32 %v3092, %v3510
      %v3553 = vadd.f32 %v3093, %v3513
      %v3554 = vadd.f32 %v3094, %v3518
      %v3555 = vadd.f32 %v3095, %v3521
      %v3556 = vld [vmem:[#allocation2 + $0x8] sm:$0xf0]
      %s3557 = scalar_lea.vmem %s3, 256
      %v3558 = vld [vmem:[%s3557] sm:$0xf]
      %v3559 = vld [vmem:[%s3557 + $0x4] sm:$0xf]
      %v3560 = vld [vmem:[%s3557 + $0x8] sm:$0xf]
      %v3561 = vld [vmem:[%s3557 + $0xc] sm:$0xf]
      %v3562 = vld [vmem:[%s3557 + $0x10] sm:$0xf]
      %v3563 = vld [vmem:[%s3557 + $0x14] sm:$0xf]
      %v3564 = vld [vmem:[%s3557 + $0x18] sm:$0xf]
      %v3565 = vld [vmem:[%s3557 + $0x1c] sm:$0xf]
      %v3566 = vld [vmem:[%s3557 + $0x20] sm:$0xf]
      %v3567 = vld [vmem:[%s3557 + $0x24] sm:$0xf]
      %v3568 = vld [vmem:[%s3557 + $0x28] sm:$0xf]
      %v3569 = vld [vmem:[%s3557 + $0x2c] sm:$0xf]
      %v3570 = vld [vmem:[%s3557 + $0x30] sm:$0xf]
      %v3571 = vld [vmem:[%s3557 + $0x34] sm:$0xf]
      %v3572 = vld [vmem:[%s3557 + $0x38] sm:$0xf]
      %v3573 = vld [vmem:[%s3557 + $0x3c] sm:$0xf]
      %v3591 = vrot.slane %v3556, 4
      %v3592 = vrot.slane %v3097, 4
      %v3593 = vsel %vm640, %v3591, %v3592
      %v3594 = vrot.slane %v3098, 4
      %v3595 = vsel %vm640, %v3592, %v3594
      %v3596 = vrot.slane %v3099, 4
      %v3597 = vsel %vm640, %v3594, %v3596
      %v3598 = vrot.slane %v3100, 4
      %v3599 = vsel %vm640, %v3596, %v3598
      %v3600 = vrot.slane %v3101, 4
      %v3601 = vsel %vm640, %v3598, %v3600
      %v3602 = vrot.slane %v3102, 4
      %v3603 = vsel %vm640, %v3600, %v3602
      %v3604 = vrot.slane %v3103, 4
      %v3605 = vsel %vm640, %v3602, %v3604
      %v3606 = vrot.slane %v3104, 4
      %v3607 = vsel %vm640, %v3604, %v3606
      %v3608 = vrot.slane %v3105, 4
      %v3609 = vsel %vm640, %v3606, %v3608
      %v3610 = vrot.slane %v3106, 4
      %v3611 = vsel %vm640, %v3608, %v3610
      %v3612 = vrot.slane %v3107, 4
      %v3613 = vsel %vm640, %v3610, %v3612
      %v3614 = vrot.slane %v3108, 4
      %v3615 = vsel %vm640, %v3612, %v3614
      %v3616 = vrot.slane %v3109, 4
      %v3617 = vsel %vm640, %v3614, %v3616
      %v3618 = vrot.slane %v3110, 4
      %v3619 = vsel %vm640, %v3616, %v3618
      %v3620 = vrot.slane %v3111, 4
      %v3621 = vsel %vm640, %v3618, %v3620
      %v3622 = vrot.slane %v3112, 4
      %v3623 = vsel %vm640, %v3620, %v3622
      %v3656 = vunpack.c.l.b16 %v3558
      %v3657 = vunpack.c.l.b16 %v3559
      %v3658 = vunpack.c.l.b16 %v3560
      %v3659 = vunpack.c.l.b16 %v3561
      %v3660 = vunpack.c.l.b16 %v3562
      %v3661 = vunpack.c.l.b16 %v3563
      %v3662 = vunpack.c.l.b16 %v3564
      %v3663 = vunpack.c.l.b16 %v3565
      %v3664 = vunpack.c.l.b16 %v3566
      %v3665 = vunpack.c.l.b16 %v3567
      %v3666 = vunpack.c.l.b16 %v3568
      %v3667 = vunpack.c.l.b16 %v3569
      %v3668 = vunpack.c.l.b16 %v3570
      %v3669 = vunpack.c.l.b16 %v3571
      %v3670 = vunpack.c.l.b16 %v3572
      %v3671 = vunpack.c.l.b16 %v3573
      %v3672 = vpack.c.b16 %v3657, %v3656
      %v3673 = vpack.c.b16 %v3659, %v3658
      %v3674 = vpack.c.b16 %v3661, %v3660
      %v3675 = vpack.c.b16 %v3663, %v3662
      %v3676 = vpack.c.b16 %v3665, %v3664
      %v3677 = vpack.c.b16 %v3667, %v3666
      %v3678 = vpack.c.b16 %v3669, %v3668
      %v3679 = vpack.c.b16 %v3671, %v3670
      %3688 = vmatprep.subr.bf16.mxu0 0
      %3689 = vmatpush1.bf16.msra.mxu0 %v3672
      %3690 = vmatprep.subr.bf16.mxu0 0
      %3691 = vmatpush1.bf16.msra.mxu0 %v3673
      %3692 = vmatprep.subr.bf16.mxu0 0
      %3693 = vmatpush1.bf16.msra.mxu0 %v3674
      %3694 = vmatprep.subr.bf16.mxu0 0
      %3695 = vmatpush1.bf16.msra.mxu0 %v3675
      %3696 = vmatprep.subr.bf16.mxu0 0
      %3697 = vmatpush1.bf16.msra.mxu0 %v3676
      %3698 = vmatprep.subr.bf16.mxu0 0
      %3699 = vmatpush1.bf16.msra.mxu0 %v3677
      %3700 = vmatprep.subr.bf16.mxu0 0
      %3701 = vmatpush1.bf16.msra.mxu0 %v3678
      %3702 = vmatprep.subr.bf16.mxu0 0
      %3703 = vmatpush1.bf16.msra.mxu0 %v3679
      %3704 = vmatprep.subr.bf16.mxu0 0
      %3705 = vmatpush1.bf16.msra.mxu0 0
      %3706 = vmatprep.subr.bf16.mxu0 0
      %3707 = vmatpush1.bf16.msra.mxu0 0
      %3708 = vmatprep.subr.bf16.mxu0 0
      %3709 = vmatpush1.bf16.msra.mxu0 0
      %3710 = vmatprep.subr.bf16.mxu0 0
      %3711 = vmatpush1.bf16.msra.mxu0 0
      %3712 = vmatprep.subr.bf16.mxu0 0
      %3713 = vmatpush1.bf16.msra.mxu0 0
      %3714 = vmatprep.subr.bf16.mxu0 0
      %3715 = vmatpush1.bf16.msra.mxu0 0
      %3716 = vmatprep.subr.bf16.mxu0 0
      %3717 = vmatpush1.bf16.msra.mxu0 0
      %3718 = vmatprep.subr.bf16.mxu0 0
      %3719 = vmatpush1.bf16.msra.mxu0 0
      %3720 = vmatprep.mubr.bf16.mxu0 0
      %3721 = vmatmul.mubr.bf16.gmra.mrb[0].mxu0 %v3593
      %v3722 = vpop.f32.mrb[0].mxu0
      %v3723 = vadd.f32 0.0, %v3722
      %v3724 = vpop.f32.mrb[0].mxu0
      %v3725 = vpop.f32.mrb[0].mxu0
      %v3726 = vadd.f32 0.0, %v3725
      %v3727 = vpop.f32.mrb[0].mxu0
      %3728 = vmatprep.mubr.bf16.mxu0 0
      %3729 = vmatmul.mubr.bf16.gmra.mrb[0].mxu0 %v3595
      %v3730 = vpop.f32.mrb[0].mxu0
      %v3731 = vadd.f32 0.0, %v3730
      %v3732 = vpop.f32.mrb[0].mxu0
      %v3733 = vpop.f32.mrb[0].mxu0
      %v3734 = vadd.f32 0.0, %v3733
      %v3735 = vpop.f32.mrb[0].mxu0
      %3736 = vmatprep.mubr.bf16.mxu0 0
      %3737 = vmatmul.mubr.bf16.gmra.mrb[0].mxu0 %v3597
      %v3738 = vpop.f32.mrb[0].mxu0
      %v3739 = vadd.f32 0.0, %v3738
      %v3740 = vpop.f32.mrb[0].mxu0
      %v3741 = vpop.f32.mrb[0].mxu0
      %v3742 = vadd.f32 0.0, %v3741
      %v3743 = vpop.f32.mrb[0].mxu0
      %3744 = vmatprep.mubr.bf16.mxu0 0
      %3745 = vmatmul.mubr.bf16.gmra.mrb[0].mxu0 %v3599
      %v3746 = vpop.f32.mrb[0].mxu0
      %v3747 = vadd.f32 0.0, %v3746
      %v3748 = vpop.f32.mrb[0].mxu0
      %v3749 = vpop.f32.mrb[0].mxu0
      %v3750 = vadd.f32 0.0, %v3749
      %v3751 = vpop.f32.mrb[0].mxu0
      %3752 = vmatprep.mubr.bf16.mxu0 0
      %3753 = vmatmul.mubr.bf16.gmra.mrb[0].mxu0 %v3601
      %v3754 = vpop.f32.mrb[0].mxu0
      %v3755 = vadd.f32 0.0, %v3754
      %v3756 = vpop.f32.mrb[0].mxu0
      %v3757 = vpop.f32.mrb[0].mxu0
      %v3758 = vadd.f32 0.0, %v3757
      %v3759 = vpop.f32.mrb[0].mxu0
      %3760 = vmatprep.mubr.bf16.mxu0 0
      %3761 = vmatmul.mubr.bf16.gmra.mrb[0].mxu0 %v3603
      %v3762 = vpop.f32.mrb[0].mxu0
      %v3763 = vadd.f32 0.0, %v3762
      %v3764 = vpop.f32.mrb[0].mxu0
      %v3765 = vpop.f32.mrb[0].mxu0
      %v3766 = vadd.f32 0.0, %v3765
      %v3767 = vpop.f32.mrb[0].mxu0
      %3768 = vmatprep.mubr.bf16.mxu0 0
      %3769 = vmatmul.mubr.bf16.gmra.mrb[0].mxu0 %v3605
      %v3770 = vpop.f32.mrb[0].mxu0
      %v3771 = vadd.f32 0.0, %v3770
      %v3772 = vpop.f32.mrb[0].mxu0
      %v3773 = vpop.f32.mrb[0].mxu0
      %v3774 = vadd.f32 0.0, %v3773
      %v3775 = vpop.f32.mrb[0].mxu0
      %3776 = vmatprep.mubr.bf16.mxu0 0
      %3777 = vmatmul.mubr.bf16.gmra.mrb[0].mxu0 %v3607
      %v3778 = vpop.f32.mrb[0].mxu0
      %v3779 = vadd.f32 0.0, %v3778
      %v3780 = vpop.f32.mrb[0].mxu0
      %v3781 = vpop.f32.mrb[0].mxu0
      %v3782 = vadd.f32 0.0, %v3781
      %v3783 = vpop.f32.mrb[0].mxu0
      %3784 = vmatprep.mubr.bf16.mxu0 0
      %3785 = vmatmul.mubr.bf16.gmra.mrb[0].mxu0 %v3609
      %v3786 = vpop.f32.mrb[0].mxu0
      %v3787 = vadd.f32 0.0, %v3786
      %v3788 = vpop.f32.mrb[0].mxu0
      %v3789 = vpop.f32.mrb[0].mxu0
      %v3790 = vadd.f32 0.0, %v3789
      %v3791 = vpop.f32.mrb[0].mxu0
      %3792 = vmatprep.mubr.bf16.mxu0 0
      %3793 = vmatmul.mubr.bf16.gmra.mrb[0].mxu0 %v3611
      %v3794 = vpop.f32.mrb[0].mxu0
      %v3795 = vadd.f32 0.0, %v3794
      %v3796 = vpop.f32.mrb[0].mxu0
      %v3797 = vpop.f32.mrb[0].mxu0
      %v3798 = vadd.f32 0.0, %v3797
      %v3799 = vpop.f32.mrb[0].mxu0
      %3800 = vmatprep.mubr.bf16.mxu0 0
      %3801 = vmatmul.mubr.bf16.gmra.mrb[0].mxu0 %v3613
      %v3802 = vpop.f32.mrb[0].mxu0
      %v3803 = vadd.f32 0.0, %v3802
      %v3804 = vpop.f32.mrb[0].mxu0
      %v3805 = vpop.f32.mrb[0].mxu0
      %v3806 = vadd.f32 0.0, %v3805
      %v3807 = vpop.f32.mrb[0].mxu0
      %3808 = vmatprep.mubr.bf16.mxu0 0
      %3809 = vmatmul.mubr.bf16.gmra.mrb[0].mxu0 %v3615
      %v3810 = vpop.f32.mrb[0].mxu0
      %v3811 = vadd.f32 0.0, %v3810
      %v3812 = vpop.f32.mrb[0].mxu0
      %v3813 = vpop.f32.mrb[0].mxu0
      %v3814 = vadd.f32 0.0, %v3813
      %v3815 = vpop.f32.mrb[0].mxu0
      %3816 = vmatprep.mubr.bf16.mxu0 0
      %3817 = vmatmul.mubr.bf16.gmra.mrb[0].mxu0 %v3617
      %v3818 = vpop.f32.mrb[0].mxu0
      %v3819 = vadd.f32 0.0, %v3818
      %v3820 = vpop.f32.mrb[0].mxu0
      %v3821 = vpop.f32.mrb[0].mxu0
      %v3822 = vadd.f32 0.0, %v3821
      %v3823 = vpop.f32.mrb[0].mxu0
      %3824 = vmatprep.mubr.bf16.mxu0 0
      %3825 = vmatmul.mubr.bf16.gmra.mrb[0].mxu0 %v3619
      %v3826 = vpop.f32.mrb[0].mxu0
      %v3827 = vadd.f32 0.0, %v3826
      %v3828 = vpop.f32.mrb[0].mxu0
      %v3829 = vpop.f32.mrb[0].mxu0
      %v3830 = vadd.f32 0.0, %v3829
      %v3831 = vpop.f32.mrb[0].mxu0
      %3832 = vmatprep.mubr.bf16.mxu0 0
      %3833 = vmatmul.mubr.bf16.gmra.mrb[0].mxu0 %v3621
      %v3834 = vpop.f32.mrb[0].mxu0
      %v3835 = vadd.f32 0.0, %v3834
      %v3836 = vpop.f32.mrb[0].mxu0
      %v3837 = vpop.f32.mrb[0].mxu0
      %v3838 = vadd.f32 0.0, %v3837
      %v3839 = vpop.f32.mrb[0].mxu0
      %3840 = vmatprep.mubr.bf16.mxu0 0
      %3841 = vmatmul.mubr.bf16.gmra.mrb[0].mxu0 %v3623
      %v3842 = vpop.f32.mrb[0].mxu0
      %v3843 = vadd.f32 0.0, %v3842
      %v3844 = vpop.f32.mrb[0].mxu0
      %v3845 = vpop.f32.mrb[0].mxu0
      %v3846 = vadd.f32 0.0, %v3845
      %v3847 = vpop.f32.mrb[0].mxu0
      %3848 = vdwg.mxu0
      %v3849 = vadd.f32 %v3524, %v3723
      %v3850 = vadd.f32 %v3525, %v3726
      %v3851 = vadd.f32 %v3526, %v3731
      %v3852 = vadd.f32 %v3527, %v3734
      %v3853 = vadd.f32 %v3528, %v3739
      %v3854 = vadd.f32 %v3529, %v3742
      %v3855 = vadd.f32 %v3530, %v3747
      %v3856 = vadd.f32 %v3531, %v3750
      %v3857 = vadd.f32 %v3532, %v3755
      %v3858 = vadd.f32 %v3533, %v3758
      %v3859 = vadd.f32 %v3534, %v3763
      %v3860 = vadd.f32 %v3535, %v3766
      %v3861 = vadd.f32 %v3536, %v3771
      %v3862 = vadd.f32 %v3537, %v3774
      %v3863 = vadd.f32 %v3538, %v3779
      %v3864 = vadd.f32 %v3539, %v3782
      %v3865 = vadd.f32 %v3540, %v3787
      %v3866 = vadd.f32 %v3541, %v3790
      %v3867 = vadd.f32 %v3542, %v3795
      %v3868 = vadd.f32 %v3543, %v3798
      %v3869 = vadd.f32 %v3544, %v3803
      %v3870 = vadd.f32 %v3545, %v3806
      %v3871 = vadd.f32 %v3546, %v3811
      %v3872 = vadd.f32 %v3547, %v3814
      %v3873 = vadd.f32 %v3548, %v3819
      %v3874 = vadd.f32 %v3549, %v3822
      %v3875 = vadd.f32 %v3550, %v3827
      %v3876 = vadd.f32 %v3551, %v3830
      %v3877 = vadd.f32 %v3552, %v3835
      %v3878 = vadd.f32 %v3553, %v3838
      %v3879 = vadd.f32 %v3554, %v3843
      %v3880 = vadd.f32 %v3555, %v3846
      %v3881 = vld [vmem:[#allocation2 + $0x88] sm:$0x1f]
      %v3882 = vsel %vm2636, %v3556, 0
      %v3883 = vsel %vm2637, %v3097, 0
      %v3884 = vsel %vm2638, %v3098, 0
      %v3885 = vsel %vm2639, %v3099, 0
      %v3886 = vsel %vm2640, %v3100, 0
      %v3887 = vsel %vm2641, %v3101, 0
      %v3888 = vsel %vm2642, %v3102, 0
      %v3889 = vsel %vm2643, %v3103, 0
      %v3890 = vsel %vm2644, %v3104, 0
      %v3891 = vsel %vm2645, %v3105, 0
      %v3892 = vsel %vm2646, %v3106, 0
      %v3893 = vsel %vm2647, %v3107, 0
      %v3894 = vsel %vm2648, %v3108, 0
      %v3895 = vsel %vm2649, %v3109, 0
      %v3896 = vsel %vm2650, %v3110, 0
      %v3897 = vsel %vm2651, %v3111, 0
      %v3898 = vsel %vm2652, %v3881, 0
      %s3899 = scalar_lea.vmem %s3, 320
      %v3900 = vld [vmem:[%s3899] sm:$0xf]
      %v3901 = vld [vmem:[%s3899 + $0x4] sm:$0xf]
      %v3902 = vld [vmem:[%s3899 + $0x8] sm:$0xf]
      %v3903 = vld [vmem:[%s3899 + $0xc] sm:$0xf]
      %v3904 = vld [vmem:[%s3899 + $0x10] sm:$0xf]
      %v3905 = vld [vmem:[%s3899 + $0x14] sm:$0xf]
      %v3906 = vld [vmem:[%s3899 + $0x18] sm:$0xf]
      %v3907 = vld [vmem:[%s3899 + $0x1c] sm:$0xf]
      %v3908 = vld [vmem:[%s3899 + $0x20] sm:$0xf]
      %v3909 = vld [vmem:[%s3899 + $0x24] sm:$0xf]
      %v3910 = vld [vmem:[%s3899 + $0x28] sm:$0xf]
      %v3911 = vld [vmem:[%s3899 + $0x2c] sm:$0xf]
      %v3912 = vld [vmem:[%s3899 + $0x30] sm:$0xf]
      %v3913 = vld [vmem:[%s3899 + $0x34] sm:$0xf]
      %v3914 = vld [vmem:[%s3899 + $0x38] sm:$0xf]
      %v3915 = vld [vmem:[%s3899 + $0x3c] sm:$0xf]
      %v3917 = vshrl.u32 %v3882, 16
      %v3919 = vrot.slane %v3917, 4
      %v3920 = vshll.u32 %v3882, 16
      %v3922 = vrot.slane %v3920, 5
      %v3923 = vor.u32 %v3919, %v3922
      %v3925 = vshrl.u32 %v3883, 16
      %v3927 = vrot.slane %v3925, 4
      %v3928 = vshll.u32 %v3883, 16
      %v3930 = vrot.slane %v3928, 5
      %v3931 = vor.u32 %v3927, %v3930
      %v3932 = vsel %vm1451, %v3923, %v3931
      %v3934 = vshrl.u32 %v3884, 16
      %v3936 = vrot.slane %v3934, 4
      %v3937 = vshll.u32 %v3884, 16
      %v3939 = vrot.slane %v3937, 5
      %v3940 = vor.u32 %v3936, %v3939
      %v3941 = vsel %vm1451, %v3931, %v3940
      %v3943 = vshrl.u32 %v3885, 16
      %v3945 = vrot.slane %v3943, 4
      %v3946 = vshll.u32 %v3885, 16
      %v3948 = vrot.slane %v3946, 5
      %v3949 = vor.u32 %v3945, %v3948
      %v3950 = vsel %vm1451, %v3940, %v3949
      %v3952 = vshrl.u32 %v3886, 16
      %v3954 = vrot.slane %v3952, 4
      %v3955 = vshll.u32 %v3886, 16
      %v3957 = vrot.slane %v3955, 5
      %v3958 = vor.u32 %v3954, %v3957
      %v3959 = vsel %vm1451, %v3949, %v3958
      %v3961 = vshrl.u32 %v3887, 16
      %v3963 = vrot.slane %v3961, 4
      %v3964 = vshll.u32 %v3887, 16
      %v3966 = vrot.slane %v3964, 5
      %v3967 = vor.u32 %v3963, %v3966
      %v3968 = vsel %vm1451, %v3958, %v3967
      %v3970 = vshrl.u32 %v3888, 16
      %v3972 = vrot.slane %v3970, 4
      %v3973 = vshll.u32 %v3888, 16
      %v3975 = vrot.slane %v3973, 5
      %v3976 = vor.u32 %v3972, %v3975
      %v3977 = vsel %vm1451, %v3967, %v3976
      %v3979 = vshrl.u32 %v3889, 16
      %v3981 = vrot.slane %v3979, 4
      %v3982 = vshll.u32 %v3889, 16
      %v3984 = vrot.slane %v3982, 5
      %v3985 = vor.u32 %v3981, %v3984
      %v3986 = vsel %vm1451, %v3976, %v3985
      %v3988 = vshrl.u32 %v3890, 16
      %v3990 = vrot.slane %v3988, 4
      %v3991 = vshll.u32 %v3890, 16
      %v3993 = vrot.slane %v3991, 5
      %v3994 = vor.u32 %v3990, %v3993
      %v3995 = vsel %vm1451, %v3985, %v3994
      %v3997 = vshrl.u32 %v3891, 16
      %v3999 = vrot.slane %v3997, 4
      %v4000 = vshll.u32 %v3891, 16
      %v4002 = vrot.slane %v4000, 5
      %v4003 = vor.u32 %v3999, %v4002
      %v4004 = vsel %vm1451, %v3994, %v4003
      %v4006 = vshrl.u32 %v3892, 16
      %v4008 = vrot.slane %v4006, 4
      %v4009 = vshll.u32 %v3892, 16
      %v4011 = vrot.slane %v4009, 5
      %v4012 = vor.u32 %v4008, %v4011
      %v4013 = vsel %vm1451, %v4003, %v4012
      %v4015 = vshrl.u32 %v3893, 16
      %v4017 = vrot.slane %v4015, 4
      %v4018 = vshll.u32 %v3893, 16
      %v4020 = vrot.slane %v4018, 5
      %v4021 = vor.u32 %v4017, %v4020
      %v4022 = vsel %vm1451, %v4012, %v4021
      %v4024 = vshrl.u32 %v3894, 16
      %v4026 = vrot.slane %v4024, 4
      %v4027 = vshll.u32 %v3894, 16
      %v4029 = vrot.slane %v4027, 5
      %v4030 = vor.u32 %v4026, %v4029
      %v4031 = vsel %vm1451, %v4021, %v4030
      %v4033 = vshrl.u32 %v3895, 16
      %v4035 = vrot.slane %v4033, 4
      %v4036 = vshll.u32 %v3895, 16
      %v4038 = vrot.slane %v4036, 5
      %v4039 = vor.u32 %v4035, %v4038
      %v4040 = vsel %vm1451, %v4030, %v4039
      %v4042 = vshrl.u32 %v3896, 16
      %v4044 = vrot.slane %v4042, 4
      %v4045 = vshll.u32 %v3896, 16
      %v4047 = vrot.slane %v4045, 5
      %v4048 = vor.u32 %v4044, %v4047
      %v4049 = vsel %vm1451, %v4039, %v4048
      %v4051 = vshrl.u32 %v3897, 16
      %v4053 = vrot.slane %v4051, 4
      %v4054 = vshll.u32 %v3897, 16
      %v4056 = vrot.slane %v4054, 5
      %v4057 = vor.u32 %v4053, %v4056
      %v4058 = vsel %vm1451, %v4048, %v4057
      %v4060 = vshrl.u32 %v3898, 16
      %v4062 = vrot.slane %v4060, 4
      %v4063 = vshll.u32 %v3898, 16
      %v4065 = vrot.slane %v4063, 5
      %v4066 = vor.u32 %v4062, %v4065
      %v4067 = vsel %vm1451, %v4057, %v4066
      %v4100 = vunpack.c.l.b16 %v3900
      %v4101 = vunpack.c.l.b16 %v3901
      %v4102 = vunpack.c.l.b16 %v3902
      %v4103 = vunpack.c.l.b16 %v3903
      %v4104 = vunpack.c.l.b16 %v3904
      %v4105 = vunpack.c.l.b16 %v3905
      %v4106 = vunpack.c.l.b16 %v3906
      %v4107 = vunpack.c.l.b16 %v3907
      %v4108 = vunpack.c.l.b16 %v3908
      %v4109 = vunpack.c.l.b16 %v3909
      %v4110 = vunpack.c.l.b16 %v3910
      %v4111 = vunpack.c.l.b16 %v3911
      %v4112 = vunpack.c.l.b16 %v3912
      %v4113 = vunpack.c.l.b16 %v3913
      %v4114 = vunpack.c.l.b16 %v3914
      %v4115 = vunpack.c.l.b16 %v3915
      %v4116 = vpack.c.b16 %v4101, %v4100
      %v4117 = vpack.c.b16 %v4103, %v4102
      %v4118 = vpack.c.b16 %v4105, %v4104
      %v4119 = vpack.c.b16 %v4107, %v4106
      %v4120 = vpack.c.b16 %v4109, %v4108
      %v4121 = vpack.c.b16 %v4111, %v4110
      %v4122 = vpack.c.b16 %v4113, %v4112
      %v4123 = vpack.c.b16 %v4115, %v4114
      %4132 = vmatprep.subr.bf16.mxu0 0
      %4133 = vmatpush1.bf16.msra.mxu0 %v4116
      %4134 = vmatprep.subr.bf16.mxu0 0
      %4135 = vmatpush1.bf16.msra.mxu0 %v4117
      %4136 = vmatprep.subr.bf16.mxu0 0
      %4137 = vmatpush1.bf16.msra.mxu0 %v4118
      %4138 = vmatprep.subr.bf16.mxu0 0
      %4139 = vmatpush1.bf16.msra.mxu0 %v4119
      %4140 = vmatprep.subr.bf16.mxu0 0
      %4141 = vmatpush1.bf16.msra.mxu0 %v4120
      %4142 = vmatprep.subr.bf16.mxu0 0
      %4143 = vmatpush1.bf16.msra.mxu0 %v4121
      %4144 = vmatprep.subr.bf16.mxu0 0
      %4145 = vmatpush1.bf16.msra.mxu0 %v4122
      %4146 = vmatprep.subr.bf16.mxu0 0
      %4147 = vmatpush1.bf16.msra.mxu0 %v4123
      %4148 = vmatprep.subr.bf16.mxu0 0
      %4149 = vmatpush1.bf16.msra.mxu0 0
      %4150 = vmatprep.subr.bf16.mxu0 0
      %4151 = vmatpush1.bf16.msra.mxu0 0
      %4152 = vmatprep.subr.bf16.mxu0 0
      %4153 = vmatpush1.bf16.msra.mxu0 0
      %4154 = vmatprep.subr.bf16.mxu0 0
      %4155 = vmatpush1.bf16.msra.mxu0 0
      %4156 = vmatprep.subr.bf16.mxu0 0
      %4157 = vmatpush1.bf16.msra.mxu0 0
      %4158 = vmatprep.subr.bf16.mxu0 0
      %4159 = vmatpush1.bf16.msra.mxu0 0
      %4160 = vmatprep.subr.bf16.mxu0 0
      %4161 = vmatpush1.bf16.msra.mxu0 0
      %4162 = vmatprep.subr.bf16.mxu0 0
      %4163 = vmatpush1.bf16.msra.mxu0 0
      %4164 = vmatprep.mubr.bf16.mxu0 0
      %4165 = vmatmul.mubr.bf16.gmra.mrb[0].mxu0 %v3932
      %v4166 = vpop.f32.mrb[0].mxu0
      %v4167 = vadd.f32 0.0, %v4166
      %v4168 = vpop.f32.mrb[0].mxu0
      %v4169 = vpop.f32.mrb[0].mxu0
      %v4170 = vadd.f32 0.0, %v4169
      %v4171 = vpop.f32.mrb[0].mxu0
      %4172 = vmatprep.mubr.bf16.mxu0 0
      %4173 = vmatmul.mubr.bf16.gmra.mrb[0].mxu0 %v3941
      %v4174 = vpop.f32.mrb[0].mxu0
      %v4175 = vadd.f32 0.0, %v4174
      %v4176 = vpop.f32.mrb[0].mxu0
      %v4177 = vpop.f32.mrb[0].mxu0
      %v4178 = vadd.f32 0.0, %v4177
      %v4179 = vpop.f32.mrb[0].mxu0
      %4180 = vmatprep.mubr.bf16.mxu0 0
      %4181 = vmatmul.mubr.bf16.gmra.mrb[0].mxu0 %v3950
      %v4182 = vpop.f32.mrb[0].mxu0
      %v4183 = vadd.f32 0.0, %v4182
      %v4184 = vpop.f32.mrb[0].mxu0
      %v4185 = vpop.f32.mrb[0].mxu0
      %v4186 = vadd.f32 0.0, %v4185
      %v4187 = vpop.f32.mrb[0].mxu0
      %4188 = vmatprep.mubr.bf16.mxu0 0
      %4189 = vmatmul.mubr.bf16.gmra.mrb[0].mxu0 %v3959
      %v4190 = vpop.f32.mrb[0].mxu0
      %v4191 = vadd.f32 0.0, %v4190
      %v4192 = vpop.f32.mrb[0].mxu0
      %v4193 = vpop.f32.mrb[0].mxu0
      %v4194 = vadd.f32 0.0, %v4193
      %v4195 = vpop.f32.mrb[0].mxu0
      %4196 = vmatprep.mubr.bf16.mxu0 0
      %4197 = vmatmul.mubr.bf16.gmra.mrb[0].mxu0 %v3968
      %v4198 = vpop.f32.mrb[0].mxu0
      %v4199 = vadd.f32 0.0, %v4198
      %v4200 = vpop.f32.mrb[0].mxu0
      %v4201 = vpop.f32.mrb[0].mxu0
      %v4202 = vadd.f32 0.0, %v4201
      %v4203 = vpop.f32.mrb[0].mxu0
      %4204 = vmatprep.mubr.bf16.mxu0 0
      %4205 = vmatmul.mubr.bf16.gmra.mrb[0].mxu0 %v3977
      %v4206 = vpop.f32.mrb[0].mxu0
      %v4207 = vadd.f32 0.0, %v4206
      %v4208 = vpop.f32.mrb[0].mxu0
      %v4209 = vpop.f32.mrb[0].mxu0
      %v4210 = vadd.f32 0.0, %v4209
      %v4211 = vpop.f32.mrb[0].mxu0
      %4212 = vmatprep.mubr.bf16.mxu0 0
      %4213 = vmatmul.mubr.bf16.gmra.mrb[0].mxu0 %v3986
      %v4214 = vpop.f32.mrb[0].mxu0
      %v4215 = vadd.f32 0.0, %v4214
      %v4216 = vpop.f32.mrb[0].mxu0
      %v4217 = vpop.f32.mrb[0].mxu0
      %v4218 = vadd.f32 0.0, %v4217
      %v4219 = vpop.f32.mrb[0].mxu0
      %4220 = vmatprep.mubr.bf16.mxu0 0
      %4221 = vmatmul.mubr.bf16.gmra.mrb[0].mxu0 %v3995
      %v4222 = vpop.f32.mrb[0].mxu0
      %v4223 = vadd.f32 0.0, %v4222
      %v4224 = vpop.f32.mrb[0].mxu0
      %v4225 = vpop.f32.mrb[0].mxu0
      %v4226 = vadd.f32 0.0, %v4225
      %v4227 = vpop.f32.mrb[0].mxu0
      %4228 = vmatprep.mubr.bf16.mxu0 0
      %4229 = vmatmul.mubr.bf16.gmra.mrb[0].mxu0 %v4004
      %v4230 = vpop.f32.mrb[0].mxu0
      %v4231 = vadd.f32 0.0, %v4230
      %v4232 = vpop.f32.mrb[0].mxu0
      %v4233 = vpop.f32.mrb[0].mxu0
      %v4234 = vadd.f32 0.0, %v4233
      %v4235 = vpop.f32.mrb[0].mxu0
      %4236 = vmatprep.mubr.bf16.mxu0 0
      %4237 = vmatmul.mubr.bf16.gmra.mrb[0].mxu0 %v4013
      %v4238 = vpop.f32.mrb[0].mxu0
      %v4239 = vadd.f32 0.0, %v4238
      %v4240 = vpop.f32.mrb[0].mxu0
      %v4241 = vpop.f32.mrb[0].mxu0
      %v4242 = vadd.f32 0.0, %v4241
      %v4243 = vpop.f32.mrb[0].mxu0
      %4244 = vmatprep.mubr.bf16.mxu0 0
      %4245 = vmatmul.mubr.bf16.gmra.mrb[0].mxu0 %v4022
      %v4246 = vpop.f32.mrb[0].mxu0
      %v4247 = vadd.f32 0.0, %v4246
      %v4248 = vpop.f32.mrb[0].mxu0
      %v4249 = vpop.f32.mrb[0].mxu0
      %v4250 = vadd.f32 0.0, %v4249
      %v4251 = vpop.f32.mrb[0].mxu0
      %4252 = vmatprep.mubr.bf16.mxu0 0
      %4253 = vmatmul.mubr.bf16.gmra.mrb[0].mxu0 %v4031
      %v4254 = vpop.f32.mrb[0].mxu0
      %v4255 = vadd.f32 0.0, %v4254
      %v4256 = vpop.f32.mrb[0].mxu0
      %v4257 = vpop.f32.mrb[0].mxu0
      %v4258 = vadd.f32 0.0, %v4257
      %v4259 = vpop.f32.mrb[0].mxu0
      %4260 = vmatprep.mubr.bf16.mxu0 0
      %4261 = vmatmul.mubr.bf16.gmra.mrb[0].mxu0 %v4040
      %v4262 = vpop.f32.mrb[0].mxu0
      %v4263 = vadd.f32 0.0, %v4262
      %v4264 = vpop.f32.mrb[0].mxu0
      %v4265 = vpop.f32.mrb[0].mxu0
      %v4266 = vadd.f32 0.0, %v4265
      %v4267 = vpop.f32.mrb[0].mxu0
      %4268 = vmatprep.mubr.bf16.mxu0 0
      %4269 = vmatmul.mubr.bf16.gmra.mrb[0].mxu0 %v4049
      %v4270 = vpop.f32.mrb[0].mxu0
      %v4271 = vadd.f32 0.0, %v4270
      %v4272 = vpop.f32.mrb[0].mxu0
      %v4273 = vpop.f32.mrb[0].mxu0
      %v4274 = vadd.f32 0.0, %v4273
      %v4275 = vpop.f32.mrb[0].mxu0
      %4276 = vmatprep.mubr.bf16.mxu0 0
      %4277 = vmatmul.mubr.bf16.gmra.mrb[0].mxu0 %v4058
      %v4278 = vpop.f32.mrb[0].mxu0
      %v4279 = vadd.f32 0.0, %v4278
      %v4280 = vpop.f32.mrb[0].mxu0
      %v4281 = vpop.f32.mrb[0].mxu0
      %v4282 = vadd.f32 0.0, %v4281
      %v4283 = vpop.f32.mrb[0].mxu0
      %4284 = vmatprep.mubr.bf16.mxu0 0
      %4285 = vmatmul.mubr.bf16.gmra.mrb[0].mxu0 %v4067
      %v4286 = vpop.f32.mrb[0].mxu0
      %v4287 = vadd.f32 0.0, %v4286
      %v4288 = vpop.f32.mrb[0].mxu0
      %v4289 = vpop.f32.mrb[0].mxu0
      %v4290 = vadd.f32 0.0, %v4289
      %v4291 = vpop.f32.mrb[0].mxu0
      %4292 = vdwg.mxu0
      %v4293 = vadd.f32 %v3849, %v4167
      %v4294 = vadd.f32 %v3850, %v4170
      %v4295 = vadd.f32 %v3851, %v4175
      %v4296 = vadd.f32 %v3852, %v4178
      %v4297 = vadd.f32 %v3853, %v4183
      %v4298 = vadd.f32 %v3854, %v4186
      %v4299 = vadd.f32 %v3855, %v4191
      %v4300 = vadd.f32 %v3856, %v4194
      %v4301 = vadd.f32 %v3857, %v4199
      %v4302 = vadd.f32 %v3858, %v4202
      %v4303 = vadd.f32 %v3859, %v4207
      %v4304 = vadd.f32 %v3860, %v4210
      %v4305 = vadd.f32 %v3861, %v4215
      %v4306 = vadd.f32 %v3862, %v4218
      %v4307 = vadd.f32 %v3863, %v4223
      %v4308 = vadd.f32 %v3864, %v4226
      %v4309 = vadd.f32 %v3865, %v4231
      %v4310 = vadd.f32 %v3866, %v4234
      %v4311 = vadd.f32 %v3867, %v4239
      %v4312 = vadd.f32 %v3868, %v4242
      %v4313 = vadd.f32 %v3869, %v4247
      %v4314 = vadd.f32 %v3870, %v4250
      %v4315 = vadd.f32 %v3871, %v4255
      %v4316 = vadd.f32 %v3872, %v4258
      %v4317 = vadd.f32 %v3873, %v4263
      %v4318 = vadd.f32 %v3874, %v4266
      %v4319 = vadd.f32 %v3875, %v4271
      %v4320 = vadd.f32 %v3876, %v4274
      %v4321 = vadd.f32 %v3877, %v4279
      %v4322 = vadd.f32 %v3878, %v4282
      %v4323 = vadd.f32 %v3879, %v4287
      %v4324 = vadd.f32 %v3880, %v4290
      %v4325 = vld [vmem:[#allocation2 + $0x10] sm:$0xf8]
      %v4326 = vld [vmem:[#allocation2 + $0x18] sm:$0xff]
      %v4327 = vld [vmem:[#allocation2 + $0x20] sm:$0xff]
      %v4328 = vld [vmem:[#allocation2 + $0x28] sm:$0xff]
      %v4329 = vld [vmem:[#allocation2 + $0x30] sm:$0xff]
      %v4330 = vld [vmem:[#allocation2 + $0x38] sm:$0xff]
      %v4331 = vld [vmem:[#allocation2 + $0x40] sm:$0xff]
      %v4332 = vld [vmem:[#allocation2 + $0x48] sm:$0xff]
      %v4333 = vld [vmem:[#allocation2 + $0x50] sm:$0xff]
      %v4334 = vld [vmem:[#allocation2 + $0x58] sm:$0xff]
      %v4335 = vld [vmem:[#allocation2 + $0x60] sm:$0xff]
      %v4336 = vld [vmem:[#allocation2 + $0x68] sm:$0xff]
      %v4337 = vld [vmem:[#allocation2 + $0x70] sm:$0xff]
      %v4338 = vld [vmem:[#allocation2 + $0x78] sm:$0xff]
      %v4339 = vld [vmem:[#allocation2 + $0x80] sm:$0xff]
      %v4340 = vld [vmem:[#allocation2 + $0x88] sm:$0xff]
      %v4341 = vld [vmem:[#allocation2 + $0x90] sm:$0xf]
      %v4342 = vsel %vm1595, %v4325, 0
      %v4343 = vsel %vm1596, %v4326, 0
      %v4344 = vsel %vm1597, %v4327, 0
      %v4345 = vsel %vm1598, %v4328, 0
      %v4346 = vsel %vm1599, %v4329, 0
      %v4347 = vsel %vm1600, %v4330, 0
      %v4348 = vsel %vm1601, %v4331, 0
      %v4349 = vsel %vm1602, %v4332, 0
      %v4350 = vsel %vm1603, %v4333, 0
      %v4351 = vsel %vm1604, %v4334, 0
      %v4352 = vsel %vm1605, %v4335, 0
      %v4353 = vsel %vm1606, %v4336, 0
      %v4354 = vsel %vm1607, %v4337, 0
      %v4355 = vsel %vm1608, %v4338, 0
      %v4356 = vsel %vm1609, %v4339, 0
      %v4357 = vsel %vm1610, %v4340, 0
      %v4358 = vsel %vm1611, %v4341, 0
      %s4359 = scalar_lea.vmem %s3, 384
      %v4360 = vld [vmem:[%s4359] sm:$0xf]
      %v4361 = vld [vmem:[%s4359 + $0x4] sm:$0xf]
      %v4362 = vld [vmem:[%s4359 + $0x8] sm:$0xf]
      %v4363 = vld [vmem:[%s4359 + $0xc] sm:$0xf]
      %v4364 = vld [vmem:[%s4359 + $0x10] sm:$0xf]
      %v4365 = vld [vmem:[%s4359 + $0x14] sm:$0xf]
      %v4366 = vld [vmem:[%s4359 + $0x18] sm:$0xf]
      %v4367 = vld [vmem:[%s4359 + $0x1c] sm:$0xf]
      %v4368 = vld [vmem:[%s4359 + $0x20] sm:$0xf]
      %v4369 = vld [vmem:[%s4359 + $0x24] sm:$0xf]
      %v4370 = vld [vmem:[%s4359 + $0x28] sm:$0xf]
      %v4371 = vld [vmem:[%s4359 + $0x2c] sm:$0xf]
      %v4372 = vld [vmem:[%s4359 + $0x30] sm:$0xf]
      %v4373 = vld [vmem:[%s4359 + $0x34] sm:$0xf]
      %v4374 = vld [vmem:[%s4359 + $0x38] sm:$0xf]
      %v4375 = vld [vmem:[%s4359 + $0x3c] sm:$0xf]
      %v4377 = vshrl.u32 %v4342, 16
      %v4379 = vrot.slane %v4377, 3
      %v4380 = vshll.u32 %v4342, 16
      %v4382 = vrot.slane %v4380, 4
      %v4383 = vor.u32 %v4379, %v4382
      %v4385 = vshrl.u32 %v4343, 16
      %v4387 = vrot.slane %v4385, 3
      %v4388 = vshll.u32 %v4343, 16
      %v4390 = vrot.slane %v4388, 4
      %v4391 = vor.u32 %v4387, %v4390
      %v4392 = vsel %vm1938, %v4383, %v4391
      %v4394 = vshrl.u32 %v4344, 16
      %v4396 = vrot.slane %v4394, 3
      %v4397 = vshll.u32 %v4344, 16
      %v4399 = vrot.slane %v4397, 4
      %v4400 = vor.u32 %v4396, %v4399
      %v4401 = vsel %vm1938, %v4391, %v4400
      %v4403 = vshrl.u32 %v4345, 16
      %v4405 = vrot.slane %v4403, 3
      %v4406 = vshll.u32 %v4345, 16
      %v4408 = vrot.slane %v4406, 4
      %v4409 = vor.u32 %v4405, %v4408
      %v4410 = vsel %vm1938, %v4400, %v4409
      %v4412 = vshrl.u32 %v4346, 16
      %v4414 = vrot.slane %v4412, 3
      %v4415 = vshll.u32 %v4346, 16
      %v4417 = vrot.slane %v4415, 4
      %v4418 = vor.u32 %v4414, %v4417
      %v4419 = vsel %vm1938, %v4409, %v4418
      %v4421 = vshrl.u32 %v4347, 16
      %v4423 = vrot.slane %v4421, 3
      %v4424 = vshll.u32 %v4347, 16
      %v4426 = vrot.slane %v4424, 4
      %v4427 = vor.u32 %v4423, %v4426
      %v4428 = vsel %vm1938, %v4418, %v4427
      %v4430 = vshrl.u32 %v4348, 16
      %v4432 = vrot.slane %v4430, 3
      %v4433 = vshll.u32 %v4348, 16
      %v4435 = vrot.slane %v4433, 4
      %v4436 = vor.u32 %v4432, %v4435
      %v4437 = vsel %vm1938, %v4427, %v4436
      %v4439 = vshrl.u32 %v4349, 16
      %v4441 = vrot.slane %v4439, 3
      %v4442 = vshll.u32 %v4349, 16
      %v4444 = vrot.slane %v4442, 4
      %v4445 = vor.u32 %v4441, %v4444
      %v4446 = vsel %vm1938, %v4436, %v4445
      %v4448 = vshrl.u32 %v4350, 16
      %v4450 = vrot.slane %v4448, 3
      %v4451 = vshll.u32 %v4350, 16
      %v4453 = vrot.slane %v4451, 4
      %v4454 = vor.u32 %v4450, %v4453
      %v4455 = vsel %vm1938, %v4445, %v4454
      %v4457 = vshrl.u32 %v4351, 16
      %v4459 = vrot.slane %v4457, 3
      %v4460 = vshll.u32 %v4351, 16
      %v4462 = vrot.slane %v4460, 4
      %v4463 = vor.u32 %v4459, %v4462
      %v4464 = vsel %vm1938, %v4454, %v4463
      %v4466 = vshrl.u32 %v4352, 16
      %v4468 = vrot.slane %v4466, 3
      %v4469 = vshll.u32 %v4352, 16
      %v4471 = vrot.slane %v4469, 4
      %v4472 = vor.u32 %v4468, %v4471
      %v4473 = vsel %vm1938, %v4463, %v4472
      %v4475 = vshrl.u32 %v4353, 16
      %v4477 = vrot.slane %v4475, 3
      %v4478 = vshll.u32 %v4353, 16
      %v4480 = vrot.slane %v4478, 4
      %v4481 = vor.u32 %v4477, %v4480
      %v4482 = vsel %vm1938, %v4472, %v4481
      %v4484 = vshrl.u32 %v4354, 16
      %v4486 = vrot.slane %v4484, 3
      %v4487 = vshll.u32 %v4354, 16
      %v4489 = vrot.slane %v4487, 4
      %v4490 = vor.u32 %v4486, %v4489
      %v4491 = vsel %vm1938, %v4481, %v4490
      %v4493 = vshrl.u32 %v4355, 16
      %v4495 = vrot.slane %v4493, 3
      %v4496 = vshll.u32 %v4355, 16
      %v4498 = vrot.slane %v4496, 4
      %v4499 = vor.u32 %v4495, %v4498
      %v4500 = vsel %vm1938, %v4490, %v4499
      %v4502 = vshrl.u32 %v4356, 16
      %v4504 = vrot.slane %v4502, 3
      %v4505 = vshll.u32 %v4356, 16
      %v4507 = vrot.slane %v4505, 4
      %v4508 = vor.u32 %v4504, %v4507
      %v4509 = vsel %vm1938, %v4499, %v4508
      %v4511 = vshrl.u32 %v4357, 16
      %v4513 = vrot.slane %v4511, 3
      %v4514 = vshll.u32 %v4357, 16
      %v4516 = vrot.slane %v4514, 4
      %v4517 = vor.u32 %v4513, %v4516
      %v4518 = vsel %vm1938, %v4508, %v4517
      %v4520 = vshrl.u32 %v4358, 16
      %v4522 = vrot.slane %v4520, 3
      %v4523 = vshll.u32 %v4358, 16
      %v4525 = vrot.slane %v4523, 4
      %v4526 = vor.u32 %v4522, %v4525
      %v4527 = vsel %vm1938, %v4517, %v4526
      %v4560 = vunpack.c.l.b16 %v4360
      %v4561 = vunpack.c.l.b16 %v4361
      %v4562 = vunpack.c.l.b16 %v4362
      %v4563 = vunpack.c.l.b16 %v4363
      %v4564 = vunpack.c.l.b16 %v4364
      %v4565 = vunpack.c.l.b16 %v4365
      %v4566 = vunpack.c.l.b16 %v4366
      %v4567 = vunpack.c.l.b16 %v4367
      %v4568 = vunpack.c.l.b16 %v4368
      %v4569 = vunpack.c.l.b16 %v4369
      %v4570 = vunpack.c.l.b16 %v4370
      %v4571 = vunpack.c.l.b16 %v4371
      %v4572 = vunpack.c.l.b16 %v4372
      %v4573 = vunpack.c.l.b16 %v4373
      %v4574 = vunpack.c.l.b16 %v4374
      %v4575 = vunpack.c.l.b16 %v4375
      %v4576 = vpack.c.b16 %v4561, %v4560
      %v4577 = vpack.c.b16 %v4563, %v4562
      %v4578 = vpack.c.b16 %v4565, %v4564
      %v4579 = vpack.c.b16 %v4567, %v4566
      %v4580 = vpack.c.b16 %v4569, %v4568
      %v4581 = vpack.c.b16 %v4571, %v4570
      %v4582 = vpack.c.b16 %v4573, %v4572
      %v4583 = vpack.c.b16 %v4575, %v4574
      %4592 = vmatprep.subr.bf16.mxu0 0
      %4593 = vmatpush1.bf16.msra.mxu0 %v4576
      %4594 = vmatprep.subr.bf16.mxu0 0
      %4595 = vmatpush1.bf16.msra.mxu0 %v4577
      %4596 = vmatprep.subr.bf16.mxu0 0
      %4597 = vmatpush1.bf16.msra.mxu0 %v4578
      %4598 = vmatprep.subr.bf16.mxu0 0
      %4599 = vmatpush1.bf16.msra.mxu0 %v4579
      %4600 = vmatprep.subr.bf16.mxu0 0
      %4601 = vmatpush1.bf16.msra.mxu0 %v4580
      %4602 = vmatprep.subr.bf16.mxu0 0
      %4603 = vmatpush1.bf16.msra.mxu0 %v4581
      %4604 = vmatprep.subr.bf16.mxu0 0
      %4605 = vmatpush1.bf16.msra.mxu0 %v4582
      %4606 = vmatprep.subr.bf16.mxu0 0
      %4607 = vmatpush1.bf16.msra.mxu0 %v4583
      %4608 = vmatprep.subr.bf16.mxu0 0
      %4609 = vmatpush1.bf16.msra.mxu0 0
      %4610 = vmatprep.subr.bf16.mxu0 0
      %4611 = vmatpush1.bf16.msra.mxu0 0
      %4612 = vmatprep.subr.bf16.mxu0 0
      %4613 = vmatpush1.bf16.msra.mxu0 0
      %4614 = vmatprep.subr.bf16.mxu0 0
      %4615 = vmatpush1.bf16.msra.mxu0 0
      %4616 = vmatprep.subr.bf16.mxu0 0
      %4617 = vmatpush1.bf16.msra.mxu0 0
      %4618 = vmatprep.subr.bf16.mxu0 0
      %4619 = vmatpush1.bf16.msra.mxu0 0
      %4620 = vmatprep.subr.bf16.mxu0 0
      %4621 = vmatpush1.bf16.msra.mxu0 0
      %4622 = vmatprep.subr.bf16.mxu0 0
      %4623 = vmatpush1.bf16.msra.mxu0 0
      %4624 = vmatprep.mubr.bf16.mxu0 0
      %4625 = vmatmul.mubr.bf16.gmra.mrb[0].mxu0 %v4392
      %v4626 = vpop.f32.mrb[0].mxu0
      %v4627 = vadd.f32 0.0, %v4626
      %v4628 = vpop.f32.mrb[0].mxu0
      %v4629 = vpop.f32.mrb[0].mxu0
      %v4630 = vadd.f32 0.0, %v4629
      %v4631 = vpop.f32.mrb[0].mxu0
      %4632 = vmatprep.mubr.bf16.mxu0 0
      %4633 = vmatmul.mubr.bf16.gmra.mrb[0].mxu0 %v4401
      %v4634 = vpop.f32.mrb[0].mxu0
      %v4635 = vadd.f32 0.0, %v4634
      %v4636 = vpop.f32.mrb[0].mxu0
      %v4637 = vpop.f32.mrb[0].mxu0
      %v4638 = vadd.f32 0.0, %v4637
      %v4639 = vpop.f32.mrb[0].mxu0
      %4640 = vmatprep.mubr.bf16.mxu0 0
      %4641 = vmatmul.mubr.bf16.gmra.mrb[0].mxu0 %v4410
      %v4642 = vpop.f32.mrb[0].mxu0
      %v4643 = vadd.f32 0.0, %v4642
      %v4644 = vpop.f32.mrb[0].mxu0
      %v4645 = vpop.f32.mrb[0].mxu0
      %v4646 = vadd.f32 0.0, %v4645
      %v4647 = vpop.f32.mrb[0].mxu0
      %4648 = vmatprep.mubr.bf16.mxu0 0
      %4649 = vmatmul.mubr.bf16.gmra.mrb[0].mxu0 %v4419
      %v4650 = vpop.f32.mrb[0].mxu0
      %v4651 = vadd.f32 0.0, %v4650
      %v4652 = vpop.f32.mrb[0].mxu0
      %v4653 = vpop.f32.mrb[0].mxu0
      %v4654 = vadd.f32 0.0, %v4653
      %v4655 = vpop.f32.mrb[0].mxu0
      %4656 = vmatprep.mubr.bf16.mxu0 0
      %4657 = vmatmul.mubr.bf16.gmra.mrb[0].mxu0 %v4428
      %v4658 = vpop.f32.mrb[0].mxu0
      %v4659 = vadd.f32 0.0, %v4658
      %v4660 = vpop.f32.mrb[0].mxu0
      %v4661 = vpop.f32.mrb[0].mxu0
      %v4662 = vadd.f32 0.0, %v4661
      %v4663 = vpop.f32.mrb[0].mxu0
      %4664 = vmatprep.mubr.bf16.mxu0 0
      %4665 = vmatmul.mubr.bf16.gmra.mrb[0].mxu0 %v4437
      %v4666 = vpop.f32.mrb[0].mxu0
      %v4667 = vadd.f32 0.0, %v4666
      %v4668 = vpop.f32.mrb[0].mxu0
      %v4669 = vpop.f32.mrb[0].mxu0
      %v4670 = vadd.f32 0.0, %v4669
      %v4671 = vpop.f32.mrb[0].mxu0
      %4672 = vmatprep.mubr.bf16.mxu0 0
      %4673 = vmatmul.mubr.bf16.gmra.mrb[0].mxu0 %v4446
      %v4674 = vpop.f32.mrb[0].mxu0
      %v4675 = vadd.f32 0.0, %v4674
      %v4676 = vpop.f32.mrb[0].mxu0
      %v4677 = vpop.f32.mrb[0].mxu0
      %v4678 = vadd.f32 0.0, %v4677
      %v4679 = vpop.f32.mrb[0].mxu0
      %4680 = vmatprep.mubr.bf16.mxu0 0
      %4681 = vmatmul.mubr.bf16.gmra.mrb[0].mxu0 %v4455
      %v4682 = vpop.f32.mrb[0].mxu0
      %v4683 = vadd.f32 0.0, %v4682
      %v4684 = vpop.f32.mrb[0].mxu0
      %v4685 = vpop.f32.mrb[0].mxu0
      %v4686 = vadd.f32 0.0, %v4685
      %v4687 = vpop.f32.mrb[0].mxu0
      %4688 = vmatprep.mubr.bf16.mxu0 0
      %4689 = vmatmul.mubr.bf16.gmra.mrb[0].mxu0 %v4464
      %v4690 = vpop.f32.mrb[0].mxu0
      %v4691 = vadd.f32 0.0, %v4690
      %v4692 = vpop.f32.mrb[0].mxu0
      %v4693 = vpop.f32.mrb[0].mxu0
      %v4694 = vadd.f32 0.0, %v4693
      %v4695 = vpop.f32.mrb[0].mxu0
      %4696 = vmatprep.mubr.bf16.mxu0 0
      %4697 = vmatmul.mubr.bf16.gmra.mrb[0].mxu0 %v4473
      %v4698 = vpop.f32.mrb[0].mxu0
      %v4699 = vadd.f32 0.0, %v4698
      %v4700 = vpop.f32.mrb[0].mxu0
      %v4701 = vpop.f32.mrb[0].mxu0
      %v4702 = vadd.f32 0.0, %v4701
      %v4703 = vpop.f32.mrb[0].mxu0
      %4704 = vmatprep.mubr.bf16.mxu0 0
      %4705 = vmatmul.mubr.bf16.gmra.mrb[0].mxu0 %v4482
      %v4706 = vpop.f32.mrb[0].mxu0
      %v4707 = vadd.f32 0.0, %v4706
      %v4708 = vpop.f32.mrb[0].mxu0
      %v4709 = vpop.f32.mrb[0].mxu0
      %v4710 = vadd.f32 0.0, %v4709
      %v4711 = vpop.f32.mrb[0].mxu0
      %4712 = vmatprep.mubr.bf16.mxu0 0
      %4713 = vmatmul.mubr.bf16.gmra.mrb[0].mxu0 %v4491
      %v4714 = vpop.f32.mrb[0].mxu0
      %v4715 = vadd.f32 0.0, %v4714
      %v4716 = vpop.f32.mrb[0].mxu0
      %v4717 = vpop.f32.mrb[0].mxu0
      %v4718 = vadd.f32 0.0, %v4717
      %v4719 = vpop.f32.mrb[0].mxu0
      %4720 = vmatprep.mubr.bf16.mxu0 0
      %4721 = vmatmul.mubr.bf16.gmra.mrb[0].mxu0 %v4500
      %v4722 = vpop.f32.mrb[0].mxu0
      %v4723 = vadd.f32 0.0, %v4722
      %v4724 = vpop.f32.mrb[0].mxu0
      %v4725 = vpop.f32.mrb[0].mxu0
      %v4726 = vadd.f32 0.0, %v4725
      %v4727 = vpop.f32.mrb[0].mxu0
      %4728 = vmatprep.mubr.bf16.mxu0 0
      %4729 = vmatmul.mubr.bf16.gmra.mrb[0].mxu0 %v4509
      %v4730 = vpop.f32.mrb[0].mxu0
      %v4731 = vadd.f32 0.0, %v4730
      %v4732 = vpop.f32.mrb[0].mxu0
      %v4733 = vpop.f32.mrb[0].mxu0
      %v4734 = vadd.f32 0.0, %v4733
      %v4735 = vpop.f32.mrb[0].mxu0
      %4736 = vmatprep.mubr.bf16.mxu0 0
      %4737 = vmatmul.mubr.bf16.gmra.mrb[0].mxu0 %v4518
      %v4738 = vpop.f32.mrb[0].mxu0
      %v4739 = vadd.f32 0.0, %v4738
      %v4740 = vpop.f32.mrb[0].mxu0
      %v4741 = vpop.f32.mrb[0].mxu0
      %v4742 = vadd.f32 0.0, %v4741
      %v4743 = vpop.f32.mrb[0].mxu0
      %4744 = vmatprep.mubr.bf16.mxu0 0
      %4745 = vmatmul.mubr.bf16.gmra.mrb[0].mxu0 %v4527
      %v4746 = vpop.f32.mrb[0].mxu0
      %v4747 = vadd.f32 0.0, %v4746
      %v4748 = vpop.f32.mrb[0].mxu0
      %v4749 = vpop.f32.mrb[0].mxu0
      %v4750 = vadd.f32 0.0, %v4749
      %v4751 = vpop.f32.mrb[0].mxu0
      %4752 = vdwg.mxu0
      %v4753 = vadd.f32 %v4293, %v4627
      %v4754 = vadd.f32 %v4294, %v4630
      %v4755 = vadd.f32 %v4295, %v4635
      %v4756 = vadd.f32 %v4296, %v4638
      %v4757 = vadd.f32 %v4297, %v4643
      %v4758 = vadd.f32 %v4298, %v4646
      %v4759 = vadd.f32 %v4299, %v4651
      %v4760 = vadd.f32 %v4300, %v4654
      %v4761 = vadd.f32 %v4301, %v4659
      %v4762 = vadd.f32 %v4302, %v4662
      %v4763 = vadd.f32 %v4303, %v4667
      %v4764 = vadd.f32 %v4304, %v4670
      %v4765 = vadd.f32 %v4305, %v4675
      %v4766 = vadd.f32 %v4306, %v4678
      %v4767 = vadd.f32 %v4307, %v4683
      %v4768 = vadd.f32 %v4308, %v4686
      %v4769 = vadd.f32 %v4309, %v4691
      %v4770 = vadd.f32 %v4310, %v4694
      %v4771 = vadd.f32 %v4311, %v4699
      %v4772 = vadd.f32 %v4312, %v4702
      %v4773 = vadd.f32 %v4313, %v4707
      %v4774 = vadd.f32 %v4314, %v4710
      %v4775 = vadd.f32 %v4315, %v4715
      %v4776 = vadd.f32 %v4316, %v4718
      %v4777 = vadd.f32 %v4317, %v4723
      %v4778 = vadd.f32 %v4318, %v4726
      %v4779 = vadd.f32 %v4319, %v4731
      %v4780 = vadd.f32 %v4320, %v4734
      %v4781 = vadd.f32 %v4321, %v4739
      %v4782 = vadd.f32 %v4322, %v4742
      %v4783 = vadd.f32 %v4323, %v4747
      %v4784 = vadd.f32 %v4324, %v4750
      %v4785 = vld [vmem:[#allocation2 + $0x10] sm:$0xf0]
      %s4786 = scalar_lea.vmem %s3, 448
      %v4787 = vld [vmem:[%s4786] sm:$0xf]
      %v4788 = vld [vmem:[%s4786 + $0x4] sm:$0xf]
      %v4789 = vld [vmem:[%s4786 + $0x8] sm:$0xf]
      %v4790 = vld [vmem:[%s4786 + $0xc] sm:$0xf]
      %v4791 = vld [vmem:[%s4786 + $0x10] sm:$0xf]
      %v4792 = vld [vmem:[%s4786 + $0x14] sm:$0xf]
      %v4793 = vld [vmem:[%s4786 + $0x18] sm:$0xf]
      %v4794 = vld [vmem:[%s4786 + $0x1c] sm:$0xf]
      %v4795 = vld [vmem:[%s4786 + $0x20] sm:$0xf]
      %v4796 = vld [vmem:[%s4786 + $0x24] sm:$0xf]
      %v4797 = vld [vmem:[%s4786 + $0x28] sm:$0xf]
      %v4798 = vld [vmem:[%s4786 + $0x2c] sm:$0xf]
      %v4799 = vld [vmem:[%s4786 + $0x30] sm:$0xf]
      %v4800 = vld [vmem:[%s4786 + $0x34] sm:$0xf]
      %v4801 = vld [vmem:[%s4786 + $0x38] sm:$0xf]
      %v4802 = vld [vmem:[%s4786 + $0x3c] sm:$0xf]
      %v4820 = vrot.slane %v4785, 4
      %v4821 = vrot.slane %v4326, 4
      %v4822 = vsel %vm640, %v4820, %v4821
      %v4823 = vrot.slane %v4327, 4
      %v4824 = vsel %vm640, %v4821, %v4823
      %v4825 = vrot.slane %v4328, 4
      %v4826 = vsel %vm640, %v4823, %v4825
      %v4827 = vrot.slane %v4329, 4
      %v4828 = vsel %vm640, %v4825, %v4827
      %v4829 = vrot.slane %v4330, 4
      %v4830 = vsel %vm640, %v4827, %v4829
      %v4831 = vrot.slane %v4331, 4
      %v4832 = vsel %vm640, %v4829, %v4831
      %v4833 = vrot.slane %v4332, 4
      %v4834 = vsel %vm640, %v4831, %v4833
      %v4835 = vrot.slane %v4333, 4
      %v4836 = vsel %vm640, %v4833, %v4835
      %v4837 = vrot.slane %v4334, 4
      %v4838 = vsel %vm640, %v4835, %v4837
      %v4839 = vrot.slane %v4335, 4
      %v4840 = vsel %vm640, %v4837, %v4839
      %v4841 = vrot.slane %v4336, 4
      %v4842 = vsel %vm640, %v4839, %v4841
      %v4843 = vrot.slane %v4337, 4
      %v4844 = vsel %vm640, %v4841, %v4843
      %v4845 = vrot.slane %v4338, 4
      %v4846 = vsel %vm640, %v4843, %v4845
      %v4847 = vrot.slane %v4339, 4
      %v4848 = vsel %vm640, %v4845, %v4847
      %v4849 = vrot.slane %v4340, 4
      %v4850 = vsel %vm640, %v4847, %v4849
      %v4851 = vrot.slane %v4341, 4
      %v4852 = vsel %vm640, %v4849, %v4851
      %v4885 = vunpack.c.l.b16 %v4787
      %v4886 = vunpack.c.l.b16 %v4788
      %v4887 = vunpack.c.l.b16 %v4789
      %v4888 = vunpack.c.l.b16 %v4790
      %v4889 = vunpack.c.l.b16 %v4791
      %v4890 = vunpack.c.l.b16 %v4792
      %v4891 = vunpack.c.l.b16 %v4793
      %v4892 = vunpack.c.l.b16 %v4794
      %v4893 = vunpack.c.l.b16 %v4795
      %v4894 = vunpack.c.l.b16 %v4796
      %v4895 = vunpack.c.l.b16 %v4797
      %v4896 = vunpack.c.l.b16 %v4798
      %v4897 = vunpack.c.l.b16 %v4799
      %v4898 = vunpack.c.l.b16 %v4800
      %v4899 = vunpack.c.l.b16 %v4801
      %v4900 = vunpack.c.l.b16 %v4802
      %v4901 = vpack.c.b16 %v4886, %v4885
      %v4902 = vpack.c.b16 %v4888, %v4887
      %v4903 = vpack.c.b16 %v4890, %v4889
      %v4904 = vpack.c.b16 %v4892, %v4891
      %v4905 = vpack.c.b16 %v4894, %v4893
      %v4906 = vpack.c.b16 %v4896, %v4895
      %v4907 = vpack.c.b16 %v4898, %v4897
      %v4908 = vpack.c.b16 %v4900, %v4899
      %4917 = vmatprep.subr.bf16.mxu0 0
      %4918 = vmatpush1.bf16.msra.mxu0 %v4901
      %4919 = vmatprep.subr.bf16.mxu0 0
      %4920 = vmatpush1.bf16.msra.mxu0 %v4902
      %4921 = vmatprep.subr.bf16.mxu0 0
      %4922 = vmatpush1.bf16.msra.mxu0 %v4903
      %4923 = vmatprep.subr.bf16.mxu0 0
      %4924 = vmatpush1.bf16.msra.mxu0 %v4904
      %4925 = vmatprep.subr.bf16.mxu0 0
      %4926 = vmatpush1.bf16.msra.mxu0 %v4905
      %4927 = vmatprep.subr.bf16.mxu0 0
      %4928 = vmatpush1.bf16.msra.mxu0 %v4906
      %4929 = vmatprep.subr.bf16.mxu0 0
      %4930 = vmatpush1.bf16.msra.mxu0 %v4907
      %4931 = vmatprep.subr.bf16.mxu0 0
      %4932 = vmatpush1.bf16.msra.mxu0 %v4908
      %4933 = vmatprep.subr.bf16.mxu0 0
      %4934 = vmatpush1.bf16.msra.mxu0 0
      %4935 = vmatprep.subr.bf16.mxu0 0
      %4936 = vmatpush1.bf16.msra.mxu0 0
      %4937 = vmatprep.subr.bf16.mxu0 0
      %4938 = vmatpush1.bf16.msra.mxu0 0
      %4939 = vmatprep.subr.bf16.mxu0 0
      %4940 = vmatpush1.bf16.msra.mxu0 0
      %4941 = vmatprep.subr.bf16.mxu0 0
      %4942 = vmatpush1.bf16.msra.mxu0 0
      %4943 = vmatprep.subr.bf16.mxu0 0
      %4944 = vmatpush1.bf16.msra.mxu0 0
      %4945 = vmatprep.subr.bf16.mxu0 0
      %4946 = vmatpush1.bf16.msra.mxu0 0
      %4947 = vmatprep.subr.bf16.mxu0 0
      %4948 = vmatpush1.bf16.msra.mxu0 0
      %4949 = vmatprep.mubr.bf16.mxu0 0
      %4950 = vmatmul.mubr.bf16.gmra.mrb[0].mxu0 %v4822
      %v4951 = vpop.f32.mrb[0].mxu0
      %v4952 = vadd.f32 0.0, %v4951
      %v4953 = vpop.f32.mrb[0].mxu0
      %v4954 = vpop.f32.mrb[0].mxu0
      %v4955 = vadd.f32 0.0, %v4954
      %v4956 = vpop.f32.mrb[0].mxu0
      %4957 = vmatprep.mubr.bf16.mxu0 0
      %4958 = vmatmul.mubr.bf16.gmra.mrb[0].mxu0 %v4824
      %v4959 = vpop.f32.mrb[0].mxu0
      %v4960 = vadd.f32 0.0, %v4959
      %v4961 = vpop.f32.mrb[0].mxu0
      %v4962 = vpop.f32.mrb[0].mxu0
      %v4963 = vadd.f32 0.0, %v4962
      %v4964 = vpop.f32.mrb[0].mxu0
      %4965 = vmatprep.mubr.bf16.mxu0 0
      %4966 = vmatmul.mubr.bf16.gmra.mrb[0].mxu0 %v4826
      %v4967 = vpop.f32.mrb[0].mxu0
      %v4968 = vadd.f32 0.0, %v4967
      %v4969 = vpop.f32.mrb[0].mxu0
      %v4970 = vpop.f32.mrb[0].mxu0
      %v4971 = vadd.f32 0.0, %v4970
      %v4972 = vpop.f32.mrb[0].mxu0
      %4973 = vmatprep.mubr.bf16.mxu0 0
      %4974 = vmatmul.mubr.bf16.gmra.mrb[0].mxu0 %v4828
      %v4975 = vpop.f32.mrb[0].mxu0
      %v4976 = vadd.f32 0.0, %v4975
      %v4977 = vpop.f32.mrb[0].mxu0
      %v4978 = vpop.f32.mrb[0].mxu0
      %v4979 = vadd.f32 0.0, %v4978
      %v4980 = vpop.f32.mrb[0].mxu0
      %4981 = vmatprep.mubr.bf16.mxu0 0
      %4982 = vmatmul.mubr.bf16.gmra.mrb[0].mxu0 %v4830
      %v4983 = vpop.f32.mrb[0].mxu0
      %v4984 = vadd.f32 0.0, %v4983
      %v4985 = vpop.f32.mrb[0].mxu0
      %v4986 = vpop.f32.mrb[0].mxu0
      %v4987 = vadd.f32 0.0, %v4986
      %v4988 = vpop.f32.mrb[0].mxu0
      %4989 = vmatprep.mubr.bf16.mxu0 0
      %4990 = vmatmul.mubr.bf16.gmra.mrb[0].mxu0 %v4832
      %v4991 = vpop.f32.mrb[0].mxu0
      %v4992 = vadd.f32 0.0, %v4991
      %v4993 = vpop.f32.mrb[0].mxu0
      %v4994 = vpop.f32.mrb[0].mxu0
      %v4995 = vadd.f32 0.0, %v4994
      %v4996 = vpop.f32.mrb[0].mxu0
      %4997 = vmatprep.mubr.bf16.mxu0 0
      %4998 = vmatmul.mubr.bf16.gmra.mrb[0].mxu0 %v4834
      %v4999 = vpop.f32.mrb[0].mxu0
      %v5000 = vadd.f32 0.0, %v4999
      %v5001 = vpop.f32.mrb[0].mxu0
      %v5002 = vpop.f32.mrb[0].mxu0
      %v5003 = vadd.f32 0.0, %v5002
      %v5004 = vpop.f32.mrb[0].mxu0
      %5005 = vmatprep.mubr.bf16.mxu0 0
      %5006 = vmatmul.mubr.bf16.gmra.mrb[0].mxu0 %v4836
      %v5007 = vpop.f32.mrb[0].mxu0
      %v5008 = vadd.f32 0.0, %v5007
      %v5009 = vpop.f32.mrb[0].mxu0
      %v5010 = vpop.f32.mrb[0].mxu0
      %v5011 = vadd.f32 0.0, %v5010
      %v5012 = vpop.f32.mrb[0].mxu0
      %5013 = vmatprep.mubr.bf16.mxu0 0
      %5014 = vmatmul.mubr.bf16.gmra.mrb[0].mxu0 %v4838
      %v5015 = vpop.f32.mrb[0].mxu0
      %v5016 = vadd.f32 0.0, %v5015
      %v5017 = vpop.f32.mrb[0].mxu0
      %v5018 = vpop.f32.mrb[0].mxu0
      %v5019 = vadd.f32 0.0, %v5018
      %v5020 = vpop.f32.mrb[0].mxu0
      %5021 = vmatprep.mubr.bf16.mxu0 0
      %5022 = vmatmul.mubr.bf16.gmra.mrb[0].mxu0 %v4840
      %v5023 = vpop.f32.mrb[0].mxu0
      %v5024 = vadd.f32 0.0, %v5023
      %v5025 = vpop.f32.mrb[0].mxu0
      %v5026 = vpop.f32.mrb[0].mxu0
      %v5027 = vadd.f32 0.0, %v5026
      %v5028 = vpop.f32.mrb[0].mxu0
      %5029 = vmatprep.mubr.bf16.mxu0 0
      %5030 = vmatmul.mubr.bf16.gmra.mrb[0].mxu0 %v4842
      %v5031 = vpop.f32.mrb[0].mxu0
      %v5032 = vadd.f32 0.0, %v5031
      %v5033 = vpop.f32.mrb[0].mxu0
      %v5034 = vpop.f32.mrb[0].mxu0
      %v5035 = vadd.f32 0.0, %v5034
      %v5036 = vpop.f32.mrb[0].mxu0
      %5037 = vmatprep.mubr.bf16.mxu0 0
      %5038 = vmatmul.mubr.bf16.gmra.mrb[0].mxu0 %v4844
      %v5039 = vpop.f32.mrb[0].mxu0
      %v5040 = vadd.f32 0.0, %v5039
      %v5041 = vpop.f32.mrb[0].mxu0
      %v5042 = vpop.f32.mrb[0].mxu0
      %v5043 = vadd.f32 0.0, %v5042
      %v5044 = vpop.f32.mrb[0].mxu0
      %5045 = vmatprep.mubr.bf16.mxu0 0
      %5046 = vmatmul.mubr.bf16.gmra.mrb[0].mxu0 %v4846
      %v5047 = vpop.f32.mrb[0].mxu0
      %v5048 = vadd.f32 0.0, %v5047
      %v5049 = vpop.f32.mrb[0].mxu0
      %v5050 = vpop.f32.mrb[0].mxu0
      %v5051 = vadd.f32 0.0, %v5050
      %v5052 = vpop.f32.mrb[0].mxu0
      %5053 = vmatprep.mubr.bf16.mxu0 0
      %5054 = vmatmul.mubr.bf16.gmra.mrb[0].mxu0 %v4848
      %v5055 = vpop.f32.mrb[0].mxu0
      %v5056 = vadd.f32 0.0, %v5055
      %v5057 = vpop.f32.mrb[0].mxu0
      %v5058 = vpop.f32.mrb[0].mxu0
      %v5059 = vadd.f32 0.0, %v5058
      %v5060 = vpop.f32.mrb[0].mxu0
      %5061 = vmatprep.mubr.bf16.mxu0 0
      %5062 = vmatmul.mubr.bf16.gmra.mrb[0].mxu0 %v4850
      %v5063 = vpop.f32.mrb[0].mxu0
      %v5064 = vadd.f32 0.0, %v5063
      %v5065 = vpop.f32.mrb[0].mxu0
      %v5066 = vpop.f32.mrb[0].mxu0
      %v5067 = vadd.f32 0.0, %v5066
      %v5068 = vpop.f32.mrb[0].mxu0
      %5069 = vmatprep.mubr.bf16.mxu0 0
      %5070 = vmatmul.mubr.bf16.gmra.mrb[0].mxu0 %v4852
      %v5071 = vpop.f32.mrb[0].mxu0
      %v5072 = vadd.f32 0.0, %v5071
      %v5073 = vpop.f32.mrb[0].mxu0
      %v5074 = vpop.f32.mrb[0].mxu0
      %v5075 = vadd.f32 0.0, %v5074
      %v5076 = vpop.f32.mrb[0].mxu0
      %5077 = vdwg.mxu0
      %v5078 = vadd.f32 %v4753, %v4952
      %v5079 = vadd.f32 %v4754, %v4955
      %v5080 = vadd.f32 %v4755, %v4960
      %v5081 = vadd.f32 %v4756, %v4963
      %v5082 = vadd.f32 %v4757, %v4968
      %v5083 = vadd.f32 %v4758, %v4971
      %v5084 = vadd.f32 %v4759, %v4976
      %v5085 = vadd.f32 %v4760, %v4979
      %v5086 = vadd.f32 %v4761, %v4984
      %v5087 = vadd.f32 %v4762, %v4987
      %v5088 = vadd.f32 %v4763, %v4992
      %v5089 = vadd.f32 %v4764, %v4995
      %v5090 = vadd.f32 %v4765, %v5000
      %v5091 = vadd.f32 %v4766, %v5003
      %v5092 = vadd.f32 %v4767, %v5008
      %v5093 = vadd.f32 %v4768, %v5011
      %v5094 = vadd.f32 %v4769, %v5016
      %v5095 = vadd.f32 %v4770, %v5019
      %v5096 = vadd.f32 %v4771, %v5024
      %v5097 = vadd.f32 %v4772, %v5027
      %v5098 = vadd.f32 %v4773, %v5032
      %v5099 = vadd.f32 %v4774, %v5035
      %v5100 = vadd.f32 %v4775, %v5040
      %v5101 = vadd.f32 %v4776, %v5043
      %v5102 = vadd.f32 %v4777, %v5048
      %v5103 = vadd.f32 %v4778, %v5051
      %v5104 = vadd.f32 %v4779, %v5056
      %v5105 = vadd.f32 %v4780, %v5059
      %v5106 = vadd.f32 %v4781, %v5064
      %v5107 = vadd.f32 %v4782, %v5067
      %v5108 = vadd.f32 %v4783, %v5072
      %v5109 = vadd.f32 %v4784, %v5075
      %v5110 = vld [vmem:[#allocation2 + $0x90] sm:$0x1f]
      %v5111 = vsel %vm2636, %v4785, 0
      %v5112 = vsel %vm2637, %v4326, 0
      %v5113 = vsel %vm2638, %v4327, 0
      %v5114 = vsel %vm2639, %v4328, 0
      %v5115 = vsel %vm2640, %v4329, 0
      %v5116 = vsel %vm2641, %v4330, 0
      %v5117 = vsel %vm2642, %v4331, 0
      %v5118 = vsel %vm2643, %v4332, 0
      %v5119 = vsel %vm2644, %v4333, 0
      %v5120 = vsel %vm2645, %v4334, 0
      %v5121 = vsel %vm2646, %v4335, 0
      %v5122 = vsel %vm2647, %v4336, 0
      %v5123 = vsel %vm2648, %v4337, 0
      %v5124 = vsel %vm2649, %v4338, 0
      %v5125 = vsel %vm2650, %v4339, 0
      %v5126 = vsel %vm2651, %v4340, 0
      %v5127 = vsel %vm2652, %v5110, 0
      %s5128 = scalar_lea.vmem %s3, 512
      %v5129 = vld [vmem:[%s5128] sm:$0xf]
      %v5130 = vld [vmem:[%s5128 + $0x4] sm:$0xf]
      %v5131 = vld [vmem:[%s5128 + $0x8] sm:$0xf]
      %v5132 = vld [vmem:[%s5128 + $0xc] sm:$0xf]
      %v5133 = vld [vmem:[%s5128 + $0x10] sm:$0xf]
      %v5134 = vld [vmem:[%s5128 + $0x14] sm:$0xf]
      %v5135 = vld [vmem:[%s5128 + $0x18] sm:$0xf]
      %v5136 = vld [vmem:[%s5128 + $0x1c] sm:$0xf]
      %v5137 = vld [vmem:[%s5128 + $0x20] sm:$0xf]
      %v5138 = vld [vmem:[%s5128 + $0x24] sm:$0xf]
      %v5139 = vld [vmem:[%s5128 + $0x28] sm:$0xf]
      %v5140 = vld [vmem:[%s5128 + $0x2c] sm:$0xf]
      %v5141 = vld [vmem:[%s5128 + $0x30] sm:$0xf]
      %v5142 = vld [vmem:[%s5128 + $0x34] sm:$0xf]
      %v5143 = vld [vmem:[%s5128 + $0x38] sm:$0xf]
      %v5144 = vld [vmem:[%s5128 + $0x3c] sm:$0xf]
      %v5146 = vshrl.u32 %v5111, 16
      %v5148 = vrot.slane %v5146, 4
      %v5149 = vshll.u32 %v5111, 16
      %v5151 = vrot.slane %v5149, 5
      %v5152 = vor.u32 %v5148, %v5151
      %v5154 = vshrl.u32 %v5112, 16
      %v5156 = vrot.slane %v5154, 4
      %v5157 = vshll.u32 %v5112, 16
      %v5159 = vrot.slane %v5157, 5
      %v5160 = vor.u32 %v5156, %v5159
      %v5161 = vsel %vm1451, %v5152, %v5160
      %v5163 = vshrl.u32 %v5113, 16
      %v5165 = vrot.slane %v5163, 4
      %v5166 = vshll.u32 %v5113, 16
      %v5168 = vrot.slane %v5166, 5
      %v5169 = vor.u32 %v5165, %v5168
      %v5170 = vsel %vm1451, %v5160, %v5169
      %v5172 = vshrl.u32 %v5114, 16
      %v5174 = vrot.slane %v5172, 4
      %v5175 = vshll.u32 %v5114, 16
      %v5177 = vrot.slane %v5175, 5
      %v5178 = vor.u32 %v5174, %v5177
      %v5179 = vsel %vm1451, %v5169, %v5178
      %v5181 = vshrl.u32 %v5115, 16
      %v5183 = vrot.slane %v5181, 4
      %v5184 = vshll.u32 %v5115, 16
      %v5186 = vrot.slane %v5184, 5
      %v5187 = vor.u32 %v5183, %v5186
      %v5188 = vsel %vm1451, %v5178, %v5187
      %v5190 = vshrl.u32 %v5116, 16
      %v5192 = vrot.slane %v5190, 4
      %v5193 = vshll.u32 %v5116, 16
      %v5195 = vrot.slane %v5193, 5
      %v5196 = vor.u32 %v5192, %v5195
      %v5197 = vsel %vm1451, %v5187, %v5196
      %v5199 = vshrl.u32 %v5117, 16
      %v5201 = vrot.slane %v5199, 4
      %v5202 = vshll.u32 %v5117, 16
      %v5204 = vrot.slane %v5202, 5
      %v5205 = vor.u32 %v5201, %v5204
      %v5206 = vsel %vm1451, %v5196, %v5205
      %v5208 = vshrl.u32 %v5118, 16
      %v5210 = vrot.slane %v5208, 4
      %v5211 = vshll.u32 %v5118, 16
      %v5213 = vrot.slane %v5211, 5
      %v5214 = vor.u32 %v5210, %v5213
      %v5215 = vsel %vm1451, %v5205, %v5214
      %v5217 = vshrl.u32 %v5119, 16
      %v5219 = vrot.slane %v5217, 4
      %v5220 = vshll.u32 %v5119, 16
      %v5222 = vrot.slane %v5220, 5
      %v5223 = vor.u32 %v5219, %v5222
      %v5224 = vsel %vm1451, %v5214, %v5223
      %v5226 = vshrl.u32 %v5120, 16
      %v5228 = vrot.slane %v5226, 4
      %v5229 = vshll.u32 %v5120, 16
      %v5231 = vrot.slane %v5229, 5
      %v5232 = vor.u32 %v5228, %v5231
      %v5233 = vsel %vm1451, %v5223, %v5232
      %v5235 = vshrl.u32 %v5121, 16
      %v5237 = vrot.slane %v5235, 4
      %v5238 = vshll.u32 %v5121, 16
      %v5240 = vrot.slane %v5238, 5
      %v5241 = vor.u32 %v5237, %v5240
      %v5242 = vsel %vm1451, %v5232, %v5241
      %v5244 = vshrl.u32 %v5122, 16
      %v5246 = vrot.slane %v5244, 4
      %v5247 = vshll.u32 %v5122, 16
      %v5249 = vrot.slane %v5247, 5
      %v5250 = vor.u32 %v5246, %v5249
      %v5251 = vsel %vm1451, %v5241, %v5250
      %v5253 = vshrl.u32 %v5123, 16
      %v5255 = vrot.slane %v5253, 4
      %v5256 = vshll.u32 %v5123, 16
      %v5258 = vrot.slane %v5256, 5
      %v5259 = vor.u32 %v5255, %v5258
      %v5260 = vsel %vm1451, %v5250, %v5259
      %v5262 = vshrl.u32 %v5124, 16
      %v5264 = vrot.slane %v5262, 4
      %v5265 = vshll.u32 %v5124, 16
      %v5267 = vrot.slane %v5265, 5
      %v5268 = vor.u32 %v5264, %v5267
      %v5269 = vsel %vm1451, %v5259, %v5268
      %v5271 = vshrl.u32 %v5125, 16
      %v5273 = vrot.slane %v5271, 4
      %v5274 = vshll.u32 %v5125, 16
      %v5276 = vrot.slane %v5274, 5
      %v5277 = vor.u32 %v5273, %v5276
      %v5278 = vsel %vm1451, %v5268, %v5277
      %v5280 = vshrl.u32 %v5126, 16
      %v5282 = vrot.slane %v5280, 4
      %v5283 = vshll.u32 %v5126, 16
      %v5285 = vrot.slane %v5283, 5
      %v5286 = vor.u32 %v5282, %v5285
      %v5287 = vsel %vm1451, %v5277, %v5286
      %v5289 = vshrl.u32 %v5127, 16
      %v5291 = vrot.slane %v5289, 4
      %v5292 = vshll.u32 %v5127, 16
      %v5294 = vrot.slane %v5292, 5
      %v5295 = vor.u32 %v5291, %v5294
      %v5296 = vsel %vm1451, %v5286, %v5295
      %v5329 = vunpack.c.l.b16 %v5129
      %v5330 = vunpack.c.l.b16 %v5130
      %v5331 = vunpack.c.l.b16 %v5131
      %v5332 = vunpack.c.l.b16 %v5132
      %v5333 = vunpack.c.l.b16 %v5133
      %v5334 = vunpack.c.l.b16 %v5134
      %v5335 = vunpack.c.l.b16 %v5135
      %v5336 = vunpack.c.l.b16 %v5136
      %v5337 = vunpack.c.l.b16 %v5137
      %v5338 = vunpack.c.l.b16 %v5138
      %v5339 = vunpack.c.l.b16 %v5139
      %v5340 = vunpack.c.l.b16 %v5140
      %v5341 = vunpack.c.l.b16 %v5141
      %v5342 = vunpack.c.l.b16 %v5142
      %v5343 = vunpack.c.l.b16 %v5143
      %v5344 = vunpack.c.l.b16 %v5144
      %v5345 = vpack.c.b16 %v5330, %v5329
      %v5346 = vpack.c.b16 %v5332, %v5331
      %v5347 = vpack.c.b16 %v5334, %v5333
      %v5348 = vpack.c.b16 %v5336, %v5335
      %v5349 = vpack.c.b16 %v5338, %v5337
      %v5350 = vpack.c.b16 %v5340, %v5339
      %v5351 = vpack.c.b16 %v5342, %v5341
      %v5352 = vpack.c.b16 %v5344, %v5343
      %5361 = vmatprep.subr.bf16.mxu0 0
      %5362 = vmatpush1.bf16.msra.mxu0 %v5345
      %5363 = vmatprep.subr.bf16.mxu0 0
      %5364 = vmatpush1.bf16.msra.mxu0 %v5346
      %5365 = vmatprep.subr.bf16.mxu0 0
      %5366 = vmatpush1.bf16.msra.mxu0 %v5347
      %5367 = vmatprep.subr.bf16.mxu0 0
      %5368 = vmatpush1.bf16.msra.mxu0 %v5348
      %5369 = vmatprep.subr.bf16.mxu0 0
      %5370 = vmatpush1.bf16.msra.mxu0 %v5349
      %5371 = vmatprep.subr.bf16.mxu0 0
      %5372 = vmatpush1.bf16.msra.mxu0 %v5350
      %5373 = vmatprep.subr.bf16.mxu0 0
      %5374 = vmatpush1.bf16.msra.mxu0 %v5351
      %5375 = vmatprep.subr.bf16.mxu0 0
      %5376 = vmatpush1.bf16.msra.mxu0 %v5352
      %5377 = vmatprep.subr.bf16.mxu0 0
      %5378 = vmatpush1.bf16.msra.mxu0 0
      %5379 = vmatprep.subr.bf16.mxu0 0
      %5380 = vmatpush1.bf16.msra.mxu0 0
      %5381 = vmatprep.subr.bf16.mxu0 0
      %5382 = vmatpush1.bf16.msra.mxu0 0
      %5383 = vmatprep.subr.bf16.mxu0 0
      %5384 = vmatpush1.bf16.msra.mxu0 0
      %5385 = vmatprep.subr.bf16.mxu0 0
      %5386 = vmatpush1.bf16.msra.mxu0 0
      %5387 = vmatprep.subr.bf16.mxu0 0
      %5388 = vmatpush1.bf16.msra.mxu0 0
      %5389 = vmatprep.subr.bf16.mxu0 0
      %5390 = vmatpush1.bf16.msra.mxu0 0
      %5391 = vmatprep.subr.bf16.mxu0 0
      %5392 = vmatpush1.bf16.msra.mxu0 0
      %5393 = vmatprep.mubr.bf16.mxu0 0
      %5394 = vmatmul.mubr.bf16.gmra.mrb[0].mxu0 %v5161
      %v5395 = vpop.f32.mrb[0].mxu0
      %v5396 = vadd.f32 0.0, %v5395
      %v5397 = vpop.f32.mrb[0].mxu0
      %v5398 = vpop.f32.mrb[0].mxu0
      %v5399 = vadd.f32 0.0, %v5398
      %v5400 = vpop.f32.mrb[0].mxu0
      %5401 = vmatprep.mubr.bf16.mxu0 0
      %5402 = vmatmul.mubr.bf16.gmra.mrb[0].mxu0 %v5170
      %v5403 = vpop.f32.mrb[0].mxu0
      %v5404 = vadd.f32 0.0, %v5403
      %v5405 = vpop.f32.mrb[0].mxu0
      %v5406 = vpop.f32.mrb[0].mxu0
      %v5407 = vadd.f32 0.0, %v5406
      %v5408 = vpop.f32.mrb[0].mxu0
      %5409 = vmatprep.mubr.bf16.mxu0 0
      %5410 = vmatmul.mubr.bf16.gmra.mrb[0].mxu0 %v5179
      %v5411 = vpop.f32.mrb[0].mxu0
      %v5412 = vadd.f32 0.0, %v5411
      %v5413 = vpop.f32.mrb[0].mxu0
      %v5414 = vpop.f32.mrb[0].mxu0
      %v5415 = vadd.f32 0.0, %v5414
      %v5416 = vpop.f32.mrb[0].mxu0
      %5417 = vmatprep.mubr.bf16.mxu0 0
      %5418 = vmatmul.mubr.bf16.gmra.mrb[0].mxu0 %v5188
      %v5419 = vpop.f32.mrb[0].mxu0
      %v5420 = vadd.f32 0.0, %v5419
      %v5421 = vpop.f32.mrb[0].mxu0
      %v5422 = vpop.f32.mrb[0].mxu0
      %v5423 = vadd.f32 0.0, %v5422
      %v5424 = vpop.f32.mrb[0].mxu0
      %5425 = vmatprep.mubr.bf16.mxu0 0
      %5426 = vmatmul.mubr.bf16.gmra.mrb[0].mxu0 %v5197
      %v5427 = vpop.f32.mrb[0].mxu0
      %v5428 = vadd.f32 0.0, %v5427
      %v5429 = vpop.f32.mrb[0].mxu0
      %v5430 = vpop.f32.mrb[0].mxu0
      %v5431 = vadd.f32 0.0, %v5430
      %v5432 = vpop.f32.mrb[0].mxu0
      %5433 = vmatprep.mubr.bf16.mxu0 0
      %5434 = vmatmul.mubr.bf16.gmra.mrb[0].mxu0 %v5206
      %v5435 = vpop.f32.mrb[0].mxu0
      %v5436 = vadd.f32 0.0, %v5435
      %v5437 = vpop.f32.mrb[0].mxu0
      %v5438 = vpop.f32.mrb[0].mxu0
      %v5439 = vadd.f32 0.0, %v5438
      %v5440 = vpop.f32.mrb[0].mxu0
      %5441 = vmatprep.mubr.bf16.mxu0 0
      %5442 = vmatmul.mubr.bf16.gmra.mrb[0].mxu0 %v5215
      %v5443 = vpop.f32.mrb[0].mxu0
      %v5444 = vadd.f32 0.0, %v5443
      %v5445 = vpop.f32.mrb[0].mxu0
      %v5446 = vpop.f32.mrb[0].mxu0
      %v5447 = vadd.f32 0.0, %v5446
      %v5448 = vpop.f32.mrb[0].mxu0
      %5449 = vmatprep.mubr.bf16.mxu0 0
      %5450 = vmatmul.mubr.bf16.gmra.mrb[0].mxu0 %v5224
      %v5451 = vpop.f32.mrb[0].mxu0
      %v5452 = vadd.f32 0.0, %v5451
      %v5453 = vpop.f32.mrb[0].mxu0
      %v5454 = vpop.f32.mrb[0].mxu0
      %v5455 = vadd.f32 0.0, %v5454
      %v5456 = vpop.f32.mrb[0].mxu0
      %5457 = vmatprep.mubr.bf16.mxu0 0
      %5458 = vmatmul.mubr.bf16.gmra.mrb[0].mxu0 %v5233
      %v5459 = vpop.f32.mrb[0].mxu0
      %v5460 = vadd.f32 0.0, %v5459
      %v5461 = vpop.f32.mrb[0].mxu0
      %v5462 = vpop.f32.mrb[0].mxu0
      %v5463 = vadd.f32 0.0, %v5462
      %v5464 = vpop.f32.mrb[0].mxu0
      %5465 = vmatprep.mubr.bf16.mxu0 0
      %5466 = vmatmul.mubr.bf16.gmra.mrb[0].mxu0 %v5242
      %v5467 = vpop.f32.mrb[0].mxu0
      %v5468 = vadd.f32 0.0, %v5467
      %v5469 = vpop.f32.mrb[0].mxu0
      %v5470 = vpop.f32.mrb[0].mxu0
      %v5471 = vadd.f32 0.0, %v5470
      %v5472 = vpop.f32.mrb[0].mxu0
      %5473 = vmatprep.mubr.bf16.mxu0 0
      %5474 = vmatmul.mubr.bf16.gmra.mrb[0].mxu0 %v5251
      %v5475 = vpop.f32.mrb[0].mxu0
      %v5476 = vadd.f32 0.0, %v5475
      %v5477 = vpop.f32.mrb[0].mxu0
      %v5478 = vpop.f32.mrb[0].mxu0
      %v5479 = vadd.f32 0.0, %v5478
      %v5480 = vpop.f32.mrb[0].mxu0
      %5481 = vmatprep.mubr.bf16.mxu0 0
      %5482 = vmatmul.mubr.bf16.gmra.mrb[0].mxu0 %v5260
      %v5483 = vpop.f32.mrb[0].mxu0
      %v5484 = vadd.f32 0.0, %v5483
      %v5485 = vpop.f32.mrb[0].mxu0
      %v5486 = vpop.f32.mrb[0].mxu0
      %v5487 = vadd.f32 0.0, %v5486
      %v5488 = vpop.f32.mrb[0].mxu0
      %5489 = vmatprep.mubr.bf16.mxu0 0
      %5490 = vmatmul.mubr.bf16.gmra.mrb[0].mxu0 %v5269
      %v5491 = vpop.f32.mrb[0].mxu0
      %v5492 = vadd.f32 0.0, %v5491
      %v5493 = vpop.f32.mrb[0].mxu0
      %v5494 = vpop.f32.mrb[0].mxu0
      %v5495 = vadd.f32 0.0, %v5494
      %v5496 = vpop.f32.mrb[0].mxu0
      %5497 = vmatprep.mubr.bf16.mxu0 0
      %5498 = vmatmul.mubr.bf16.gmra.mrb[0].mxu0 %v5278
      %v5499 = vpop.f32.mrb[0].mxu0
      %v5500 = vadd.f32 0.0, %v5499
      %v5501 = vpop.f32.mrb[0].mxu0
      %v5502 = vpop.f32.mrb[0].mxu0
      %v5503 = vadd.f32 0.0, %v5502
      %v5504 = vpop.f32.mrb[0].mxu0
      %5505 = vmatprep.mubr.bf16.mxu0 0
      %5506 = vmatmul.mubr.bf16.gmra.mrb[0].mxu0 %v5287
      %v5507 = vpop.f32.mrb[0].mxu0
      %v5508 = vadd.f32 0.0, %v5507
      %v5509 = vpop.f32.mrb[0].mxu0
      %v5510 = vpop.f32.mrb[0].mxu0
      %v5511 = vadd.f32 0.0, %v5510
      %v5512 = vpop.f32.mrb[0].mxu0
      %5513 = vmatprep.mubr.bf16.mxu0 0
      %5514 = vmatmul.mubr.bf16.gmra.mrb[0].mxu0 %v5296
      %v5515 = vpop.f32.mrb[0].mxu0
      %v5516 = vadd.f32 0.0, %v5515
      %v5517 = vpop.f32.mrb[0].mxu0
      %v5518 = vpop.f32.mrb[0].mxu0
      %v5519 = vadd.f32 0.0, %v5518
      %v5520 = vpop.f32.mrb[0].mxu0
      %5521 = vdwg.mxu0
      %v5522 = vadd.f32 %v5078, %v5396
      %v5523 = vadd.f32 %v5079, %v5399
      %v5524 = vadd.f32 %v5080, %v5404
      %v5525 = vadd.f32 %v5081, %v5407
      %v5526 = vadd.f32 %v5082, %v5412
      %v5527 = vadd.f32 %v5083, %v5415
      %v5528 = vadd.f32 %v5084, %v5420
      %v5529 = vadd.f32 %v5085, %v5423
      %v5530 = vadd.f32 %v5086, %v5428
      %v5531 = vadd.f32 %v5087, %v5431
      %v5532 = vadd.f32 %v5088, %v5436
      %v5533 = vadd.f32 %v5089, %v5439
      %v5534 = vadd.f32 %v5090, %v5444
      %v5535 = vadd.f32 %v5091, %v5447
      %v5536 = vadd.f32 %v5092, %v5452
      %v5537 = vadd.f32 %v5093, %v5455
      %v5538 = vadd.f32 %v5094, %v5460
      %v5539 = vadd.f32 %v5095, %v5463
      %v5540 = vadd.f32 %v5096, %v5468
      %v5541 = vadd.f32 %v5097, %v5471
      %v5542 = vadd.f32 %v5098, %v5476
      %v5543 = vadd.f32 %v5099, %v5479
      %v5544 = vadd.f32 %v5100, %v5484
      %v5545 = vadd.f32 %v5101, %v5487
      %v5546 = vadd.f32 %v5102, %v5492
      %v5547 = vadd.f32 %v5103, %v5495
      %v5548 = vadd.f32 %v5104, %v5500
      %v5549 = vadd.f32 %v5105, %v5503
      %v5550 = vadd.f32 %v5106, %v5508
      %v5551 = vadd.f32 %v5107, %v5511
      %v5552 = vadd.f32 %v5108, %v5516
      %v5553 = vadd.f32 %v5109, %v5519
      %v5554 = vpack.c.bf16 %v5523, %v5522
      %v5555 = vpack.c.bf16 %v5525, %v5524
      %v5556 = vpack.c.bf16 %v5527, %v5526
      %v5557 = vpack.c.bf16 %v5529, %v5528
      %v5558 = vpack.c.bf16 %v5531, %v5530
      %v5559 = vpack.c.bf16 %v5533, %v5532
      %v5560 = vpack.c.bf16 %v5535, %v5534
      %v5561 = vpack.c.bf16 %v5537, %v5536
      %v5562 = vpack.c.bf16 %v5539, %v5538
      %v5563 = vpack.c.bf16 %v5541, %v5540
      %v5564 = vpack.c.bf16 %v5543, %v5542
      %v5565 = vpack.c.bf16 %v5545, %v5544
      %v5566 = vpack.c.bf16 %v5547, %v5546
      %v5567 = vpack.c.bf16 %v5549, %v5548
      %v5568 = vpack.c.bf16 %v5551, %v5550
      %v5569 = vpack.c.bf16 %v5553, %v5552
      %v5586 = vunpack.c.l.b16 %v5554
      %v5587 = vunpack.c.h.b16 %v5554
      %v5588 = vunpack.c.l.b16 %v5555
      %v5589 = vunpack.c.h.b16 %v5555
      %v5590 = vunpack.c.l.b16 %v5556
      %v5591 = vunpack.c.h.b16 %v5556
      %v5592 = vunpack.c.l.b16 %v5557
      %v5593 = vunpack.c.h.b16 %v5557
      %v5594 = vunpack.c.l.b16 %v5558
      %v5595 = vunpack.c.h.b16 %v5558
      %v5596 = vunpack.c.l.b16 %v5559
      %v5597 = vunpack.c.h.b16 %v5559
      %v5598 = vunpack.c.l.b16 %v5560
      %v5599 = vunpack.c.h.b16 %v5560
      %v5600 = vunpack.c.l.b16 %v5561
      %v5601 = vunpack.c.h.b16 %v5561
      %v5602 = vunpack.c.l.b16 %v5562
      %v5603 = vunpack.c.h.b16 %v5562
      %v5604 = vunpack.c.l.b16 %v5563
      %v5605 = vunpack.c.h.b16 %v5563
      %v5606 = vunpack.c.l.b16 %v5564
      %v5607 = vunpack.c.h.b16 %v5564
      %v5608 = vunpack.c.l.b16 %v5565
      %v5609 = vunpack.c.h.b16 %v5565
      %v5610 = vunpack.c.l.b16 %v5566
      %v5611 = vunpack.c.h.b16 %v5566
      %v5612 = vunpack.c.l.b16 %v5567
      %v5613 = vunpack.c.h.b16 %v5567
      %v5614 = vunpack.c.l.b16 %v5568
      %v5615 = vunpack.c.h.b16 %v5568
      %v5616 = vunpack.c.l.b16 %v5569
      %v5617 = vunpack.c.h.b16 %v5569
      %v5618 = vpack.c.b16 %v5586, %v5586
      %v5619 = vpack.c.b16 %v5587, %v5587
      %v5620 = vpack.c.b16 %v5588, %v5588
      %v5621 = vpack.c.b16 %v5589, %v5589
      %v5622 = vpack.c.b16 %v5590, %v5590
      %v5623 = vpack.c.b16 %v5591, %v5591
      %v5624 = vpack.c.b16 %v5592, %v5592
      %v5625 = vpack.c.b16 %v5593, %v5593
      %v5626 = vpack.c.b16 %v5594, %v5594
      %v5627 = vpack.c.b16 %v5595, %v5595
      %v5628 = vpack.c.b16 %v5596, %v5596
      %v5629 = vpack.c.b16 %v5597, %v5597
      %v5630 = vpack.c.b16 %v5598, %v5598
      %v5631 = vpack.c.b16 %v5599, %v5599
      %v5632 = vpack.c.b16 %v5600, %v5600
      %v5633 = vpack.c.b16 %v5601, %v5601
      %v5634 = vpack.c.b16 %v5602, %v5602
      %v5635 = vpack.c.b16 %v5603, %v5603
      %v5636 = vpack.c.b16 %v5604, %v5604
      %v5637 = vpack.c.b16 %v5605, %v5605
      %v5638 = vpack.c.b16 %v5606, %v5606
      %v5639 = vpack.c.b16 %v5607, %v5607
      %v5640 = vpack.c.b16 %v5608, %v5608
      %v5641 = vpack.c.b16 %v5609, %v5609
      %v5642 = vpack.c.b16 %v5610, %v5610
      %v5643 = vpack.c.b16 %v5611, %v5611
      %v5644 = vpack.c.b16 %v5612, %v5612
      %v5645 = vpack.c.b16 %v5613, %v5613
      %v5646 = vpack.c.b16 %v5614, %v5614
      %v5647 = vpack.c.b16 %v5615, %v5615
      %v5648 = vpack.c.b16 %v5616, %v5616
      %v5649 = vpack.c.b16 %v5617, %v5617
      %5682 = vst [vmem:[%s427] sm:$0xf] %v5618
      %5683 = vst [vmem:[%s427 + $0x4] sm:$0xf] %v5619
      %5684 = vst [vmem:[%s427 + $0x8] sm:$0xf] %v5620
      %5685 = vst [vmem:[%s427 + $0xc] sm:$0xf] %v5621
      %5686 = vst [vmem:[%s427 + $0x10] sm:$0xf] %v5622
      %5687 = vst [vmem:[%s427 + $0x14] sm:$0xf] %v5623
      %5688 = vst [vmem:[%s427 + $0x18] sm:$0xf] %v5624
      %5689 = vst [vmem:[%s427 + $0x1c] sm:$0xf] %v5625
      %5690 = vst [vmem:[%s427 + $0x20] sm:$0xf] %v5626
      %5691 = vst [vmem:[%s427 + $0x24] sm:$0xf] %v5627
      %5692 = vst [vmem:[%s427 + $0x28] sm:$0xf] %v5628
      %5693 = vst [vmem:[%s427 + $0x2c] sm:$0xf] %v5629
      %5694 = vst [vmem:[%s427 + $0x30] sm:$0xf] %v5630
      %5695 = vst [vmem:[%s427 + $0x34] sm:$0xf] %v5631
      %5696 = vst [vmem:[%s427 + $0x38] sm:$0xf] %v5632
      %5697 = vst [vmem:[%s427 + $0x3c] sm:$0xf] %v5633
      %5698 = vst [vmem:[%s427 + $0x40] sm:$0xf] %v5634
      %5699 = vst [vmem:[%s427 + $0x44] sm:$0xf] %v5635
      %5700 = vst [vmem:[%s427 + $0x48] sm:$0xf] %v5636
      %5701 = vst [vmem:[%s427 + $0x4c] sm:$0xf] %v5637
      %5702 = vst [vmem:[%s427 + $0x50] sm:$0xf] %v5638
      %5703 = vst [vmem:[%s427 + $0x54] sm:$0xf] %v5639
      %5704 = vst [vmem:[%s427 + $0x58] sm:$0xf] %v5640
      %5705 = vst [vmem:[%s427 + $0x5c] sm:$0xf] %v5641
      %5706 = vst [vmem:[%s427 + $0x60] sm:$0xf] %v5642
      %5707 = vst [vmem:[%s427 + $0x64] sm:$0xf] %v5643
      %5708 = vst [vmem:[%s427 + $0x68] sm:$0xf] %v5644
      %5709 = vst [vmem:[%s427 + $0x6c] sm:$0xf] %v5645
      %5710 = vst [vmem:[%s427 + $0x70] sm:$0xf] %v5646
      %5711 = vst [vmem:[%s427 + $0x74] sm:$0xf] %v5647
      %5712 = vst [vmem:[%s427 + $0x78] sm:$0xf] %v5648
      %5713 = vst [vmem:[%s427 + $0x7c] sm:$0xf] %v5649
      %v5714 = vadd.f32 %v5522, %v5523
      %v5715 = vadd.f32 %v5714, %v5524
      %v5716 = vadd.f32 %v5715, %v5525
      %v5717 = vadd.f32 %v5716, %v5526
      %v5718 = vadd.f32 %v5717, %v5527
      %v5719 = vadd.f32 %v5718, %v5528
      %v5720 = vadd.f32 %v5719, %v5529
      %v5721 = vadd.f32 %v5720, %v5530
      %v5722 = vadd.f32 %v5721, %v5531
      %v5723 = vadd.f32 %v5722, %v5532
      %v5724 = vadd.f32 %v5723, %v5533
      %v5725 = vadd.f32 %v5724, %v5534
      %v5726 = vadd.f32 %v5725, %v5535
      %v5727 = vadd.f32 %v5726, %v5536
      %v5728 = vadd.f32 %v5727, %v5537
      %v5729 = vadd.f32 %v5728, %v5538
      %v5730 = vadd.f32 %v5729, %v5539
      %v5731 = vadd.f32 %v5730, %v5540
      %v5732 = vadd.f32 %v5731, %v5541
      %v5733 = vadd.f32 %v5732, %v5542
      %v5734 = vadd.f32 %v5733, %v5543
      %v5735 = vadd.f32 %v5734, %v5544
      %v5736 = vadd.f32 %v5735, %v5545
      %v5737 = vadd.f32 %v5736, %v5546
      %v5738 = vadd.f32 %v5737, %v5547
      %v5739 = vadd.f32 %v5738, %v5548
      %v5740 = vadd.f32 %v5739, %v5549
      %v5741 = vadd.f32 %v5740, %v5550
      %v5742 = vadd.f32 %v5741, %v5551
      %v5743 = vadd.f32 %v5742, %v5552
      %v5744 = vadd.f32 %v5743, %v5553
      %v5745 = vrot.slane %v5744, 4
      %v5746 = vadd.f32 %v5744, %v5745
      %v5747 = vrot.slane %v5746, 2
      %v5748 = vadd.f32 %v5746, %v5747
      %v5749 = vrot.slane %v5748, 1
      %v5750 = vadd.f32 %v5748, %v5749
      %v5751 = vadd.f32 %v5750, 0.0
      %v5752 = vmul.f32 %v5522, %v5522
      %v5753 = vmul.f32 %v5523, %v5523
      %v5754 = vmul.f32 %v5524, %v5524
      %v5755 = vmul.f32 %v5525, %v5525
      %v5756 = vmul.f32 %v5526, %v5526
      %v5757 = vmul.f32 %v5527, %v5527
      %v5758 = vmul.f32 %v5528, %v5528
      %v5759 = vmul.f32 %v5529, %v5529
      %v5760 = vmul.f32 %v5530, %v5530
      %v5761 = vmul.f32 %v5531, %v5531
      %v5762 = vmul.f32 %v5532, %v5532
      %v5763 = vmul.f32 %v5533, %v5533
      %v5764 = vmul.f32 %v5534, %v5534
      %v5765 = vmul.f32 %v5535, %v5535
      %v5766 = vmul.f32 %v5536, %v5536
      %v5767 = vmul.f32 %v5537, %v5537
      %v5768 = vmul.f32 %v5538, %v5538
      %v5769 = vmul.f32 %v5539, %v5539
      %v5770 = vmul.f32 %v5540, %v5540
      %v5771 = vmul.f32 %v5541, %v5541
      %v5772 = vmul.f32 %v5542, %v5542
      %v5773 = vmul.f32 %v5543, %v5543
      %v5774 = vmul.f32 %v5544, %v5544
      %v5775 = vmul.f32 %v5545, %v5545
      %v5776 = vmul.f32 %v5546, %v5546
      %v5777 = vmul.f32 %v5547, %v5547
      %v5778 = vmul.f32 %v5548, %v5548
      %v5779 = vmul.f32 %v5549, %v5549
      %v5780 = vmul.f32 %v5550, %v5550
      %v5781 = vmul.f32 %v5551, %v5551
      %v5782 = vmul.f32 %v5552, %v5552
      %v5783 = vmul.f32 %v5553, %v5553
      %v5784 = vadd.f32 %v5752, %v5753
      %v5785 = vadd.f32 %v5784, %v5754
      %v5786 = vadd.f32 %v5785, %v5755
      %v5787 = vadd.f32 %v5786, %v5756
      %v5788 = vadd.f32 %v5787, %v5757
      %v5789 = vadd.f32 %v5788, %v5758
      %v5790 = vadd.f32 %v5789, %v5759
      %v5791 = vadd.f32 %v5790, %v5760
      %v5792 = vadd.f32 %v5791, %v5761
      %v5793 = vadd.f32 %v5792, %v5762
      %v5794 = vadd.f32 %v5793, %v5763
      %v5795 = vadd.f32 %v5794, %v5764
      %v5796 = vadd.f32 %v5795, %v5765
      %v5797 = vadd.f32 %v5796, %v5766
      %v5798 = vadd.f32 %v5797, %v5767
      %v5799 = vadd.f32 %v5798, %v5768
      %v5800 = vadd.f32 %v5799, %v5769
      %v5801 = vadd.f32 %v5800, %v5770
      %v5802 = vadd.f32 %v5801, %v5771
      %v5803 = vadd.f32 %v5802, %v5772
      %v5804 = vadd.f32 %v5803, %v5773
      %v5805 = vadd.f32 %v5804, %v5774
      %v5806 = vadd.f32 %v5805, %v5775
      %v5807 = vadd.f32 %v5806, %v5776
      %v5808 = vadd.f32 %v5807, %v5777
      %v5809 = vadd.f32 %v5808, %v5778
      %v5810 = vadd.f32 %v5809, %v5779
      %v5811 = vadd.f32 %v5810, %v5780
      %v5812 = vadd.f32 %v5811, %v5781
      %v5813 = vadd.f32 %v5812, %v5782
      %v5814 = vadd.f32 %v5813, %v5783
      %v5815 = vrot.slane %v5814, 4
      %v5816 = vadd.f32 %v5814, %v5815
      %v5817 = vrot.slane %v5816, 2
      %v5818 = vadd.f32 %v5816, %v5817
      %v5819 = vrot.slane %v5818, 1
      %v5820 = vadd.f32 %v5818, %v5819
      %v5821 = vadd.f32 %v5820, 0.0
      %vm5822 = vcmask 1040384
      %v5823 = vsel %vm5822, %v5751, %v5821
      %5824 = vst [vmem:[%s433] sm:$0x3] %v5823
      %s5825 = smul.u32 32, %s23
      %p5826 = scmp.lt.s32.totalorder %s22, 1
      %s5827 = scalar_select %p5826, %s22, 1
      %p5828 = scmp.lt.s32.totalorder %s5825, 31
      %s5829 = scalar_select %p5828, %s5825, 31
      %s5830 = smul.addr %s5827, 32
      %s5831 = sadd.s32 %s5829, %s5830
      %s5832 = smul.addr %s5831, 4
      %s5833 = scalar_lea.vmem %s5, %s5832
      %s5834 = sadd.s32 %s22, %s23
      %p5835 = scmp.lt.s32.totalorder %s5834, 1
      %s5836 = scalar_select %p5835, %s5834, 1
      %s5837 = smul.addr %s5836, 2
      %s5838 = scalar_lea.vmem %s6, %s5837
      // Predicated region
      $region57: #{upblock_forward.4} parent=39 // pred_check
        %p5839 = pneg %p192
      $region58: #{upblock_forward.4} parent=39 // pred_check_branch
        %5841 = sbr.rel (%p5839) target = $region60
      $region59: #{upblock_forward.4} parent=39 // pred_region
        %s5842 = smul.u32 32, %s23
      $region60: #{upblock_forward.4} parent=39 // pred_fallthru
        _
      // Predicated region
      $region61: #{upblock_forward.4} parent=39 // pred_check
        %p5843 = pneg %p220
      $region62: #{upblock_forward.4} parent=39 // pred_check_branch
        %5845 = sbr.rel (%p5843) target = $region64
      $region63: #{upblock_forward.4} parent=39 // pred_region
        %s5846 = sadd.s32 %s22, %s23
      $region64: #{upblock_forward.4} parent=39 // pred_fallthru
        _
    $region40: #{upblock_forward.4} parent=5 // pred_fallthru
      _
    %p5847 = scmp.le.s32.totalorder 2, %s13
    // Predicated region
    $region65: #{upblock_forward.4} parent=5 // pred_check
      %p5848 = pneg %p5847
    $region66: #{upblock_forward.4} parent=5 // pred_check_branch
      %5850 = sbr.rel (%p5848) target = $region68
    $region67: #{upblock_forward.4} parent=5 // pred_region
      %s5851 = ssub.s32 %s13, 2
      // Predicated region
      $region69: #{upblock_forward.4} parent=67 // pred_check
        %p5852 = pneg %p198
      $region70: #{upblock_forward.4} parent=67 // pred_check_branch
        %5854 = sbr.rel (%p5852) target = $region72
      $region71: #{upblock_forward.4} parent=67 // pred_region
        %s5855 = smul.u32 32, %s25
        %p5856 = scmp.lt.s32.totalorder %s24, 1
        %s5857 = scalar_select %p5856, %s24, 1
        %p5858 = scmp.lt.s32.totalorder %s5855, 31
        %s5859 = scalar_select %p5858, %s5855, 31
        %s5860 = smul.addr %s5857, 32
        %s5861 = sadd.s32 %s5859, %s5860
        %s5862 = smul.addr %s5861, 4
        %s5863 = scalar_lea.vmem %s5, %s5862
      $region72: #{upblock_forward.4} parent=67 // pred_fallthru
        _
      // Predicated region
      $region73: #{upblock_forward.4} parent=67 // pred_check
        %p5864 = pneg %p226
      $region74: #{upblock_forward.4} parent=67 // pred_check_branch
        %5866 = sbr.rel (%p5864) target = $region76
      $region75: #{upblock_forward.4} parent=67 // pred_region
        %s5867 = sadd.s32 %s24, %s25
        %p5868 = scmp.lt.s32.totalorder %s5867, 1
        %s5869 = scalar_select %p5868, %s5867, 1
        %s5870 = smul.addr %s5869, 2
        %s5871 = scalar_lea.vmem %s6, %s5870
      $region76: #{upblock_forward.4} parent=67 // pred_fallthru
        _
    $region68: #{upblock_forward.4} parent=5 // pred_fallthru
      _
  $region6: #{upblock_forward.4} parent=0 // loop_footer
    %s17 = sadd.s32 1, %s13
  $region7: #{upblock_forward.4} parent=0 // loop_footer_branch
    %12 = sbr.rel target = $region3
  $region8: #{upblock_forward.4} parent=0 // loop_exit
    _

</llo_original>
